<compile_context>
chip_gen: v7x
topology: tpu7x:2x2x1
jax: 0.10.0
libtpu: 0.0.40
codegen_flags: <defaults>
</compile_context>

<pallas_src>
import numpy as np
import jax
import jax.numpy as jnp
from jax.experimental import pallas as pl
from jax.experimental.pallas import tpu as pltpu

# ----------------------------------------------------------------------------
# Configuration (matches the chosen ConvNet instantiation)
# ----------------------------------------------------------------------------
N_CONV = 2
CONV_CH = [8, 16]
FILTER_SIZE = [3, 3]
POOL = 2
N_FC = 2
FC_SIZE = [32]
INPUT_SIZE = 16
INPUT_CHANNELS = 4
N_CLASSES = 10

# Derived static sizes (square feature maps, as in the module's own bookkeeping).
S0, C0 = INPUT_SIZE, INPUT_CHANNELS          # 16, 4
K1, K2 = FILTER_SIZE                         # 3, 3
C1, C2 = CONV_CH                             # 8, 16
S1C = S0 - K1 + 1                            # 14  (conv1 out)
PAD1 = S1C % POOL                            # 0   (pool1 pad, from x.shape[-1] % p)
S1 = (S1C + 2 * PAD1 - POOL) // POOL + 1     # 7   (pool1 out)
S2C = S1 - K2 + 1                            # 5   (conv2 out)
PAD2 = S2C % POOL                            # 1   (pool2 pad)
S2 = (S2C + 2 * PAD2 - POOL) // POOL + 1     # 3   (pool2 out)
FC1 = FC_SIZE[0]                             # 32
FLAT = C2 * S2 * S2                          # 144
OUT_PAD = 128                                # lane-dense padded logits width

# Samples per grid step.  Stacked conv1 M = B_TILE*16 - 2 ~ 1022 rows:
#   v5e  (4x128 MXU): >= 128 rows needed  -> OK
#   v6e/v7x (2x256) : >= 256 rows wanted  -> OK
# Sweepable (32..256); VMEM use is ~3 MB total, far under every chip's scoped limit.
B_TILE = 64

assert N_CONV == 2 and N_FC == 2 and POOL == 2 and K1 == 3 and K2 == 3
assert PAD1 == 0 and PAD2 == 1 and FLAT == C2 * S2 * S2


# ----------------------------------------------------------------------------
# Fused, batch-tiled Pallas kernel.
# Activation layout: samples stacked on the sublane axis, (rows, W*C) with channels
# fastest on the lane axis.  Per-sample row pitch: 16 (conv1) -> 8 (pool1 onward).
# ----------------------------------------------------------------------------
def _make_kernel(b):
    r0 = b * S0                 # input rows per tile          (pitch 16 / sample)
    r1 = b * (S0 // 2)          # rows after pool1             (pitch 8 / sample)
    m1_rows = r0 - (K1 - 1)     # conv1 output rows (last 2 per sample are junk)
    m2_rows = r1 - (K2 - 1)     # conv2 output rows
    f32 = jnp.float32
    bf16 = jnp.bfloat16

    def kernel(x_ref, m1_ref, b1r_ref, sw1_ref, m2_ref, b2r_ref, sw2_ref,
               wfc1_ref, bfc1_ref, wout_ref, bout_ref, out_ref,
               cm1_ref, cm2_ref):
        x = x_ref[...]                                              # (r0, 64) f32

        # ---- conv1 + bias + ReLU: 3 block-Toeplitz row-tap matmuls over the tile ----
        z1 = jnp.dot(x[0:m1_rows, :].astype(bf16), m1_ref[0],
                     preferred_element_type=f32)
        for t in range(1, K1):
            z1 = z1 + jnp.dot(x[t:t + m1_rows, :].astype(bf16), m1_ref[t],
                              preferred_element_type=f32)
        a1 = jnp.maximum(z1 + b1r_ref[...], 0.0).astype(bf16)       # (m1_rows, 112)

        # ---- maxpool1, width (2/2, pad 0): exact 0/1 selection matmuls ----
        cm1 = jnp.dot(a1, sw1_ref[0], preferred_element_type=f32)
        cm1 = jnp.maximum(cm1, jnp.dot(a1, sw1_ref[1], preferred_element_type=f32))
        cm1_ref[0:m1_rows, :] = cm1                                  # (m1_rows, 56)

        # ---- maxpool1, height: stride-2 sublane reads (pitch 16 -> 8 per sample) ----
        # Per-sample rows 0..6 are valid pool1 rows; row 7 of each pitch-8 slot is junk
        # that is provably never read by any later output-producing op.
        p1 = jnp.maximum(cm1_ref[pl.ds(0, r1, 2), :],
                         cm1_ref[pl.ds(1, r1, 2), :])                # (r1, 56) f32

        # ---- conv2 + bias + ReLU ----
        z2 = jnp.dot(p1[0:m2_rows, :].astype(bf16), m2_ref[0],
                     preferred_element_type=f32)
        for t in range(1, K2):
            z2 = z2 + jnp.dot(p1[t:t + m2_rows, :].astype(bf16), m2_ref[t],
                              preferred_element_type=f32)
        a2 = jnp.maximum(z2 + b2r_ref[...], 0.0).astype(bf16)       # (m2_rows, 80)

        # ---- maxpool2, width (2/2, pad 1): selection matmuls whose pad positions are
        # all-zero columns (exact because a2 >= 0 post-ReLU; no -inf canvas needed). ----
        cm2 = jnp.dot(a2, sw2_ref[0], preferred_element_type=f32)
        cm2 = jnp.maximum(cm2, jnp.dot(a2, sw2_ref[1], preferred_element_type=f32))
        cm2_ref[0:m2_rows, :] = cm2                                  # (m2_rows, 48)

        # ---- maxpool2 height + flatten + FC1, fused.  conv2 rows of sample s live at
        # per-sample pitch 8 (positions 0..4 valid); a stride-8 read gathers one spatial
        # row across the whole batch tile.  The top pad row contributes nothing, so
        # pooled row 0 is just conv2 row 0. ----
        r_h0 = cm2_ref[pl.ds(0, b, 8), :]                            # (b, 48)
        r_h1 = jnp.maximum(cm2_ref[pl.ds(1, b, 8), :],
                           cm2_ref[pl.ds(2, b, 8), :])
        r_h2 = jnp.maximum(cm2_ref[pl.ds(3, b, 8), :],
                           cm2_ref[pl.ds(4, b, 8), :])
        y = jnp.dot(r_h0.astype(bf16), wfc1_ref[0], preferred_element_type=f32)
        y = y + jnp.dot(r_h1.astype(bf16), wfc1_ref[1], preferred_element_type=f32)
        y = y + jnp.dot(r_h2.astype(bf16), wfc1_ref[2], preferred_element_type=f32)
        y = jnp.maximum(y + bfc1_ref[...], 0.0)                      # (b, 32) f32

        # ---- output layer (no activation), lane-dense 128-wide store ----
        out_ref[...] = (jnp.dot(y.astype(bf16), wout_ref[...],
                                preferred_element_type=f32) + bout_ref[...])

    return kernel


# ----------------------------------------------------------------------------
# Host-side, one-time preparation of kernel operands
# ----------------------------------------------------------------------------
def build_kernel_operands(params):
    """Toeplitz conv matrices, 0/1 width-pooling selections (zero columns stand in for
    pad positions), tiled bias rows, flatten-permuted FC1 weight, and a 128-lane-padded
    output layer — computed once from PyTorch-layout parameters (bf16 matmul operands)."""
    (w1, b1), (w2, b2) = params["conv"]       # conv weights: (Cout, Cin, KH, KW)
    wfc1, bfc1 = params["fc1"]                # (FLAT, FC1), rows in torch (c,h,w) order
    wout, bout = params["out"]                # (FC1, N_CLASSES)

    def toeplitz(w_pt, s_in, s_out):
        # M[t][(w+kw)*Cin + ci, w*Cout + co] = W[co, ci, t, kw]
        w_np = np.asarray(w_pt)
        cout, cin, kh, kw = w_np.shape
        m = np.zeros((kh, s_in * cin, s_out * cout), np.float32)
        for t in range(kh):
            for w in range(s_out):
                for k in range(kw):
                    m[t, (w + k) * cin:(w + k + 1) * cin,
                      w * cout:(w + 1) * cout] = w_np[:, :, t, k].T
        return m

    def pool_width_select(w_in, w_out, c, pad):
        # Out column-group i gets max over d of input column (2*i - pad + d);
        # out-of-range (pad) positions map to all-zero columns (safe post-ReLU).
        sw = np.zeros((POOL, w_in * c, w_out * c), np.float32)
        for d in range(POOL):
            for i in range(w_out):
                src = POOL * i - pad + d
                if 0 <= src < w_in:
                    for ch in range(c):
                        sw[d, src * c + ch, i * c + ch] = 1.0
        return sw

    m1 = toeplitz(w1, S0, S1C)                    # (3, 64, 112)
    m2 = toeplitz(w2, S1, S2C)                    # (3, 56, 80)
    sw1 = pool_width_select(S1C, S1, C1, PAD1)    # (2, 112, 56)
    sw2 = pool_width_select(S2C, S2, C2, PAD2)    # (2, 80, 48)

    b1r = np.tile(np.asarray(b1), S1C).reshape(1, S1C * C1).astype(np.float32)
    b2r = np.tile(np.asarray(b2), S2C).reshape(1, S2C * C2).astype(np.float32)

    # FC1 weight: permute rows from torch flatten order (c,h,w) to kernel (h,w,c),
    # split per spatial row h so flatten+FC1 is three (B, 48) @ (48, 32) matmuls.
    wfc1_np = np.asarray(wfc1)
    wfc1_k = np.zeros((S2, S2 * C2, FC1), np.float32)
    for h in range(S2):
        for w in range(S2):
            for c in range(C2):
                wfc1_k[h, w * C2 + c, :] = wfc1_np[c * S2 * S2 + h * S2 + w, :]

    # Output layer padded to 128 lanes (lane-dense output stores).
    wout_pad = np.zeros((FC1, OUT_PAD), np.float32)
    wout_pad[:, :N_CLASSES] = np.asarray(wout)
    bout_pad = np.zeros((1, OUT_PAD), np.float32)
    bout_pad[0, :N_CLASSES] = np.asarray(bout)

    bf16 = jnp.bfloat16
    return dict(
        m1=jnp.asarray(m1, bf16), b1r=jnp.asarray(b1r, jnp.float32),
        sw1=jnp.asarray(sw1, bf16),
        m2=jnp.asarray(m2, bf16), b2r=jnp.asarray(b2r, jnp.float32),
        sw2=jnp.asarray(sw2, bf16),
        wfc1=jnp.asarray(wfc1_k, bf16),
        bfc1=jnp.asarray(np.asarray(bfc1).reshape(1, FC1), jnp.float32),
        wout=jnp.asarray(wout_pad, bf16),
        bout=jnp.asarray(bout_pad, jnp.float32),
    )


# ----------------------------------------------------------------------------
# Forward: single fused pallas_call, grid over batch tiles of B_TILE samples
# ----------------------------------------------------------------------------
def convnet_forward(x_nchw, ops, b_tile=B_TILE):
    assert b_tile % 8 == 0
    n = x_nchw.shape[0]
    n_pad = ((n + b_tile - 1) // b_tile) * b_tile

    # Layout: NCHW -> (N, H, W*C) channels-last, stacked along rows into one
    # lane-dense 2-D slab (n_pad*16, 64).  (If the upstream producer could emit
    # NHWC directly this transpose would disappear — it is an input-sized HBM
    # round trip in XLA before the kernel runs.)
    x = jnp.transpose(x_nchw, (0, 2, 3, 1)).astype(jnp.float32).reshape(n, S0, S0 * C0)
    if n_pad != n:
        x = jnp.concatenate(
            [x, jnp.zeros((n_pad - n, S0, S0 * C0), jnp.float32)], axis=0)
    x2d = x.reshape(n_pad * S0, S0 * C0)

    tiles = n_pad // b_tile
    r0 = b_tile * S0
    r1 = b_tile * (S0 // 2)
    m1_rows = r0 - (K1 - 1)
    m2_rows = r1 - (K2 - 1)

    # Advisory cost estimate (matmul MACs actually issued per tile).
    macs = tiles * (
        K1 * m1_rows * (S0 * C0) * (S1C * C1)
        + POOL * m1_rows * (S1C * C1) * (S1 * C1)
        + K2 * m2_rows * (S1 * C1) * (S2C * C2)
        + POOL * m2_rows * (S2C * C2) * (S2 * C2)
        + S2 * b_tile * (S2 * C2) * FC1
        + b_tile * FC1 * OUT_PAD)
    bytes_accessed = (x2d.size * x2d.dtype.itemsize
                      + sum(int(v.size) * v.dtype.itemsize for v in ops.values())
                      + n_pad * OUT_PAD * 4)
    cost = pl.CostEstimate(flops=int(2 * macs), transcendentals=0,
                           bytes_accessed=int(bytes_accessed))

    def const_spec(arr):
        zeros = (0,) * arr.ndim
        return pl.BlockSpec(arr.shape, lambda i, _z=zeros: _z)

    weights = (ops["m1"], ops["b1r"], ops["sw1"], ops["m2"], ops["b2r"],
               ops["sw2"], ops["wfc1"], ops["bfc1"], ops["wout"], ops["bout"])

    out = pl.pallas_call(
        _make_kernel(b_tile),
        out_shape=jax.ShapeDtypeStruct((n_pad, OUT_PAD), jnp.float32),
        grid=(tiles,),
        in_specs=[pl.BlockSpec((r0, S0 * C0), lambda i: (i, 0))]
                 + [const_spec(w) for w in weights],
        out_specs=pl.BlockSpec((b_tile, OUT_PAD), lambda i: (i, 0)),
        scratch_shapes=[pltpu.VMEM((r0, S1 * C1), jnp.float32),   # width-pooled conv1
                        pltpu.VMEM((r1, S2 * C2), jnp.float32)],  # width-pooled conv2
        compiler_params=pltpu.CompilerParams(
            dimension_semantics=("parallel",)),   # v7x: split batch tiles across TCs
        cost_estimate=cost,
    )(x2d, *weights)
    return out[:n, :N_CLASSES]


# ----------------------------------------------------------------------------
# Deterministic PyTorch-style parameter init + pure-JAX reference
# ----------------------------------------------------------------------------
def init_params(key):
    params = {"conv": []}
    in_ch = INPUT_CHANNELS
    for i in range(N_CONV):
        key, kw_, kb_ = jax.random.split(key, 3)
        k = FILTER_SIZE[i]
        bound = 1.0 / np.sqrt(in_ch * k * k)
        w = jax.random.uniform(kw_, (CONV_CH[i], in_ch, k, k), jnp.float32, -bound, bound)
        b = jax.random.uniform(kb_, (CONV_CH[i],), jnp.float32, -bound, bound)
        params["conv"].append((w, b))
        in_ch = CONV_CH[i]

    key, kw_, kb_ = jax.random.split(key, 3)
    bound = 1.0 / np.sqrt(FLAT)
    params["fc1"] = (
        jax.random.uniform(kw_, (FLAT, FC1), jnp.float32, -bound, bound),
        jax.random.uniform(kb_, (FC1,), jnp.float32, -bound, bound))

    key, kw_, kb_ = jax.random.split(key, 3)
    bound = 1.0 / np.sqrt(FC1)
    params["out"] = (
        jax.random.uniform(kw_, (FC1, N_CLASSES), jnp.float32, -bound, bound),
        jax.random.uniform(kb_, (N_CLASSES,), jnp.float32, -bound, bound))
    return params


def reference_forward(x_nchw, params):
    """Plain-JAX replica of the PyTorch forward (structural correctness check)."""
    x = x_nchw.astype(jnp.float32)
    for (w, b) in params["conv"]:
        x = jax.lax.conv_general_dilated(
            x, w, window_strides=(1, 1), padding="VALID",
            dimension_numbers=("NCHW", "OIHW", "NCHW"))
        x = jnp.maximum(x + b[None, :, None, None], 0.0)
        pad = x.shape[-1] % POOL
        x = jax.lax.reduce_window(
            x, -jnp.inf, jax.lax.max,
            window_dimensions=(1, 1, POOL, POOL),
            window_strides=(1, 1, POOL, POOL),
            padding=((0, 0), (0, 0), (pad, pad), (pad, pad)))
    x = x.reshape(x.shape[0], -1)
    w, b = params["fc1"]
    x = jnp.maximum(x @ w + b, 0.0)
    w, b = params["out"]
    return x @ w + b


if __name__ == "__main__":
    key = jax.random.PRNGKey(0)
    kx, kx2, kp = jax.random.split(key, 3)
    params = init_params(kp)
    ops = build_kernel_operands(params)

    fwd = jax.jit(convnet_forward)

    # Small-shape check (batch=2, channels=4, spatial=16), as in the module.
    x_small = jax.random.normal(kx, (2, INPUT_CHANNELS, INPUT_SIZE, INPUT_SIZE),
                                dtype=jnp.float32)
    logits_small = fwd(x_small, ops)
    jax.block_until_ready(logits_small)
    assert logits_small.shape == (2, N_CLASSES), logits_small.shape
    assert logits_small.dtype == jnp.float32
    ref_small = reference_forward(x_small, params)
    # Tolerance sized for the bf16 MXU path (expected ~1e-2 worst case); structural
    # errors would show up as O(0.1+) mismatches.
    assert jnp.allclose(logits_small, ref_small, rtol=3e-2, atol=3e-2), \
        float(jnp.max(jnp.abs(logits_small - ref_small)))

    # Multi-tile check (batch 70 -> padded to 2 grid tiles of 64 samples).
    x_big = jax.random.normal(kx2, (70, INPUT_CHANNELS, INPUT_SIZE, INPUT_SIZE),
                              dtype=jnp.float32)
    logits_big = fwd(x_big, ops)
    jax.block_until_ready(logits_big)
    assert logits_big.shape == (70, N_CLASSES), logits_big.shape
    ref_big = reference_forward(x_big, params)
    assert jnp.allclose(logits_big, ref_big, rtol=3e-2, atol=3e-2), \
        float(jnp.max(jnp.abs(logits_big - ref_big)))

    print("KERNEL_OK")
</pallas_src>

<mosaic_0001>
module attributes {stable_mosaic.version = 11 : i64} {
  func.func @kernel(%arg0: i32, %arg1: memref<1024x64xf32, #tpu.memory_space<vmem>>, %arg2: memref<3x64x112xbf16, #tpu.memory_space<vmem>>, %arg3: memref<1x112xf32, #tpu.memory_space<vmem>>, %arg4: memref<2x112x56xbf16, #tpu.memory_space<vmem>>, %arg5: memref<3x56x80xbf16, #tpu.memory_space<vmem>>, %arg6: memref<1x80xf32, #tpu.memory_space<vmem>>, %arg7: memref<2x80x48xbf16, #tpu.memory_space<vmem>>, %arg8: memref<3x48x32xbf16, #tpu.memory_space<vmem>>, %arg9: memref<1x32xf32, #tpu.memory_space<vmem>>, %arg10: memref<32x128xbf16, #tpu.memory_space<vmem>>, %arg11: memref<1x128xf32, #tpu.memory_space<vmem>>, %arg12: memref<64x128xf32, #tpu.memory_space<vmem>>, %arg13: memref<1024x56xf32, #tpu.memory_space<vmem>>, %arg14: memref<512x48xf32, #tpu.memory_space<vmem>>) attributes {dimension_semantics = [#tpu.dimension_semantics<parallel>], iteration_bounds = array<i64: 1>, scalar_prefetch = 0 : i64, scratch_operands = 2 : i64, tpu.core_type = #tpu.core_type<tc>, window_params = [{transform_indices = @transform_0, window_bounds = array<i64: 1024, 64>}, {pipeline_mode = #tpu.pipeline_mode<synchronous>, transform_indices = @transform_1, window_bounds = array<i64: 3, 64, 112>}, {pipeline_mode = #tpu.pipeline_mode<synchronous>, transform_indices = @transform_2, window_bounds = array<i64: 1, 112>}, {pipeline_mode = #tpu.pipeline_mode<synchronous>, transform_indices = @transform_3, window_bounds = array<i64: 2, 112, 56>}, {pipeline_mode = #tpu.pipeline_mode<synchronous>, transform_indices = @transform_4, window_bounds = array<i64: 3, 56, 80>}, {pipeline_mode = #tpu.pipeline_mode<synchronous>, transform_indices = @transform_5, window_bounds = array<i64: 1, 80>}, {pipeline_mode = #tpu.pipeline_mode<synchronous>, transform_indices = @transform_6, window_bounds = array<i64: 2, 80, 48>}, {pipeline_mode = #tpu.pipeline_mode<synchronous>, transform_indices = @transform_7, window_bounds = array<i64: 3, 48, 32>}, {pipeline_mode = #tpu.pipeline_mode<synchronous>, transform_indices = @transform_8, window_bounds = array<i64: 1, 32>}, {pipeline_mode = #tpu.pipeline_mode<synchronous>, transform_indices = @transform_9, window_bounds = array<i64: 32, 128>}, {pipeline_mode = #tpu.pipeline_mode<synchronous>, transform_indices = @transform_10, window_bounds = array<i64: 1, 128>}, {transform_indices = @transform_11, window_bounds = array<i64: 64, 128>}]} {
    %c0 = arith.constant 0 : index
    %c0_0 = arith.constant 0 : index
    %0 = vector.load %arg1[%c0, %c0_0] : memref<1024x64xf32, #tpu.memory_space<vmem>>, vector<1024x64xf32>
    %1 = vector.extract_strided_slice %0 {offsets = [0, 0], sizes = [1022, 64], strides = [1, 1]} : vector<1024x64xf32> to vector<1022x64xf32>
    %2 = arith.truncf %1 : vector<1022x64xf32> to vector<1022x64xbf16>
    %c0_1 = arith.constant 0 : index
    %c0_2 = arith.constant 0 : index
    %c0_3 = arith.constant 0 : index
    %3 = vector.load %arg2[%c0_1, %c0_2, %c0_3] : memref<3x64x112xbf16, #tpu.memory_space<vmem>>, vector<1x64x112xbf16>
    %4 = vector.shape_cast %3 : vector<1x64x112xbf16> to vector<64x112xbf16>
    %cst = arith.constant dense<0.000000e+00> : vector<1022x112xf32>
    %5 = tpu.matmul %2, %4, %cst {dimension_numbers = #tpu.dot_dimension_numbers<[1], [0], [0], [1], [0, 0, 1, 1], [], []>} : vector<1022x64xbf16>, vector<64x112xbf16>, vector<1022x112xf32> -> vector<1022x112xf32>
    %6 = vector.extract_strided_slice %0 {offsets = [1, 0], sizes = [1022, 64], strides = [1, 1]} : vector<1024x64xf32> to vector<1022x64xf32>
    %7 = arith.truncf %6 : vector<1022x64xf32> to vector<1022x64xbf16>
    %c1 = arith.constant 1 : index
    %c0_4 = arith.constant 0 : index
    %c0_5 = arith.constant 0 : index
    %8 = vector.load %arg2[%c1, %c0_4, %c0_5] : memref<3x64x112xbf16, #tpu.memory_space<vmem>>, vector<1x64x112xbf16>
    %9 = vector.shape_cast %8 : vector<1x64x112xbf16> to vector<64x112xbf16>
    %cst_6 = arith.constant dense<0.000000e+00> : vector<1022x112xf32>
    %10 = tpu.matmul %7, %9, %cst_6 {dimension_numbers = #tpu.dot_dimension_numbers<[1], [0], [0], [1], [0, 0, 1, 1], [], []>} : vector<1022x64xbf16>, vector<64x112xbf16>, vector<1022x112xf32> -> vector<1022x112xf32>
    %11 = arith.addf %5, %10 : vector<1022x112xf32>
    %12 = vector.extract_strided_slice %0 {offsets = [2, 0], sizes = [1022, 64], strides = [1, 1]} : vector<1024x64xf32> to vector<1022x64xf32>
    %13 = arith.truncf %12 : vector<1022x64xf32> to vector<1022x64xbf16>
    %c2 = arith.constant 2 : index
    %c0_7 = arith.constant 0 : index
    %c0_8 = arith.constant 0 : index
    %14 = vector.load %arg2[%c2, %c0_7, %c0_8] : memref<3x64x112xbf16, #tpu.memory_space<vmem>>, vector<1x64x112xbf16>
    %15 = vector.shape_cast %14 : vector<1x64x112xbf16> to vector<64x112xbf16>
    %cst_9 = arith.constant dense<0.000000e+00> : vector<1022x112xf32>
    %16 = tpu.matmul %13, %15, %cst_9 {dimension_numbers = #tpu.dot_dimension_numbers<[1], [0], [0], [1], [0, 0, 1, 1], [], []>} : vector<1022x64xbf16>, vector<64x112xbf16>, vector<1022x112xf32> -> vector<1022x112xf32>
    %17 = arith.addf %11, %16 : vector<1022x112xf32>
    %c0_10 = arith.constant 0 : index
    %c0_11 = arith.constant 0 : index
    %18 = vector.load %arg3[%c0_10, %c0_11] : memref<1x112xf32, #tpu.memory_space<vmem>>, vector<1x112xf32>
    %19 = vector.broadcast %18 : vector<1x112xf32> to vector<1022x112xf32>
    %20 = arith.addf %17, %19 : vector<1022x112xf32>
    %cst_12 = arith.constant 0.000000e+00 : f32
    %21 = vector.broadcast %cst_12 : f32 to vector<1022x112xf32>
    %22 = arith.maximumf %20, %21 : vector<1022x112xf32>
    %23 = arith.truncf %22 : vector<1022x112xf32> to vector<1022x112xbf16>
    %c0_13 = arith.constant 0 : index
    %c0_14 = arith.constant 0 : index
    %c0_15 = arith.constant 0 : index
    %24 = vector.load %arg4[%c0_13, %c0_14, %c0_15] : memref<2x112x56xbf16, #tpu.memory_space<vmem>>, vector<1x112x56xbf16>
    %25 = vector.shape_cast %24 : vector<1x112x56xbf16> to vector<112x56xbf16>
    %cst_16 = arith.constant dense<0.000000e+00> : vector<1022x56xf32>
    %26 = tpu.matmul %23, %25, %cst_16 {dimension_numbers = #tpu.dot_dimension_numbers<[1], [0], [0], [1], [0, 0, 1, 1], [], []>} : vector<1022x112xbf16>, vector<112x56xbf16>, vector<1022x56xf32> -> vector<1022x56xf32>
    %c1_17 = arith.constant 1 : index
    %c0_18 = arith.constant 0 : index
    %c0_19 = arith.constant 0 : index
    %27 = vector.load %arg4[%c1_17, %c0_18, %c0_19] : memref<2x112x56xbf16, #tpu.memory_space<vmem>>, vector<1x112x56xbf16>
    %28 = vector.shape_cast %27 : vector<1x112x56xbf16> to vector<112x56xbf16>
    %cst_20 = arith.constant dense<0.000000e+00> : vector<1022x56xf32>
    %29 = tpu.matmul %23, %28, %cst_20 {dimension_numbers = #tpu.dot_dimension_numbers<[1], [0], [0], [1], [0, 0, 1, 1], [], []>} : vector<1022x112xbf16>, vector<112x56xbf16>, vector<1022x56xf32> -> vector<1022x56xf32>
    %30 = arith.maximumf %26, %29 : vector<1022x56xf32>
    %c0_21 = arith.constant 0 : index
    %c0_22 = arith.constant 0 : index
    %31 = vector.load %arg13[%c0_21, %c0_22] : memref<1024x56xf32, #tpu.memory_space<vmem>>, vector<1022x56xf32>
    tpu.vector_store %arg13[%c0_21, %c0_22], %30 {strides = array<i32>} : memref<1024x56xf32, #tpu.memory_space<vmem>>, vector<1022x56xf32>,
    %c0_23 = arith.constant 0 : index
    %c0_24 = arith.constant 0 : index
    %32 = tpu.strided_load %arg13[%c0_23, %c0_24] {strides = array<i32: 2, 1>} : memref<1024x56xf32, #tpu.memory_space<vmem>>, vector<512x56xf32>
    %c1_25 = arith.constant 1 : index
    %c0_26 = arith.constant 0 : index
    %33 = tpu.strided_load %arg13[%c1_25, %c0_26] {strides = array<i32: 2, 1>} : memref<1024x56xf32, #tpu.memory_space<vmem>>, vector<512x56xf32>
    %34 = arith.maximumf %32, %33 : vector<512x56xf32>
    %35 = vector.extract_strided_slice %34 {offsets = [0, 0], sizes = [510, 56], strides = [1, 1]} : vector<512x56xf32> to vector<510x56xf32>
    %36 = arith.truncf %35 : vector<510x56xf32> to vector<510x56xbf16>
    %c0_27 = arith.constant 0 : index
    %c0_28 = arith.constant 0 : index
    %c0_29 = arith.constant 0 : index
    %37 = vector.load %arg5[%c0_27, %c0_28, %c0_29] : memref<3x56x80xbf16, #tpu.memory_space<vmem>>, vector<1x56x80xbf16>
    %38 = vector.shape_cast %37 : vector<1x56x80xbf16> to vector<56x80xbf16>
    %cst_30 = arith.constant dense<0.000000e+00> : vector<510x80xf32>
    %39 = tpu.matmul %36, %38, %cst_30 {dimension_numbers = #tpu.dot_dimension_numbers<[1], [0], [0], [1], [0, 0, 1, 1], [], []>} : vector<510x56xbf16>, vector<56x80xbf16>, vector<510x80xf32> -> vector<510x80xf32>
    %40 = vector.extract_strided_slice %34 {offsets = [1, 0], sizes = [510, 56], strides = [1, 1]} : vector<512x56xf32> to vector<510x56xf32>
    %41 = arith.truncf %40 : vector<510x56xf32> to vector<510x56xbf16>
    %c1_31 = arith.constant 1 : index
    %c0_32 = arith.constant 0 : index
    %c0_33 = arith.constant 0 : index
    %42 = vector.load %arg5[%c1_31, %c0_32, %c0_33] : memref<3x56x80xbf16, #tpu.memory_space<vmem>>, vector<1x56x80xbf16>
    %43 = vector.shape_cast %42 : vector<1x56x80xbf16> to vector<56x80xbf16>
    %cst_34 = arith.constant dense<0.000000e+00> : vector<510x80xf32>
    %44 = tpu.matmul %41, %43, %cst_34 {dimension_numbers = #tpu.dot_dimension_numbers<[1], [0], [0], [1], [0, 0, 1, 1], [], []>} : vector<510x56xbf16>, vector<56x80xbf16>, vector<510x80xf32> -> vector<510x80xf32>
    %45 = arith.addf %39, %44 : vector<510x80xf32>
    %46 = vector.extract_strided_slice %34 {offsets = [2, 0], sizes = [510, 56], strides = [1, 1]} : vector<512x56xf32> to vector<510x56xf32>
    %47 = arith.truncf %46 : vector<510x56xf32> to vector<510x56xbf16>
    %c2_35 = arith.constant 2 : index
    %c0_36 = arith.constant 0 : index
    %c0_37 = arith.constant 0 : index
    %48 = vector.load %arg5[%c2_35, %c0_36, %c0_37] : memref<3x56x80xbf16, #tpu.memory_space<vmem>>, vector<1x56x80xbf16>
    %49 = vector.shape_cast %48 : vector<1x56x80xbf16> to vector<56x80xbf16>
    %cst_38 = arith.constant dense<0.000000e+00> : vector<510x80xf32>
    %50 = tpu.matmul %47, %49, %cst_38 {dimension_numbers = #tpu.dot_dimension_numbers<[1], [0], [0], [1], [0, 0, 1, 1], [], []>} : vector<510x56xbf16>, vector<56x80xbf16>, vector<510x80xf32> -> vector<510x80xf32>
    %51 = arith.addf %45, %50 : vector<510x80xf32>
    %c0_39 = arith.constant 0 : index
    %c0_40 = arith.constant 0 : index
    %52 = vector.load %arg6[%c0_39, %c0_40] : memref<1x80xf32, #tpu.memory_space<vmem>>, vector<1x80xf32>
    %53 = vector.broadcast %52 : vector<1x80xf32> to vector<510x80xf32>
    %54 = arith.addf %51, %53 : vector<510x80xf32>
    %cst_41 = arith.constant 0.000000e+00 : f32
    %55 = vector.broadcast %cst_41 : f32 to vector<510x80xf32>
    %56 = arith.maximumf %54, %55 : vector<510x80xf32>
    %57 = arith.truncf %56 : vector<510x80xf32> to vector<510x80xbf16>
    %c0_42 = arith.constant 0 : index
    %c0_43 = arith.constant 0 : index
    %c0_44 = arith.constant 0 : index
    %58 = vector.load %arg7[%c0_42, %c0_43, %c0_44] : memref<2x80x48xbf16, #tpu.memory_space<vmem>>, vector<1x80x48xbf16>
    %59 = vector.shape_cast %58 : vector<1x80x48xbf16> to vector<80x48xbf16>
    %cst_45 = arith.constant dense<0.000000e+00> : vector<510x48xf32>
    %60 = tpu.matmul %57, %59, %cst_45 {dimension_numbers = #tpu.dot_dimension_numbers<[1], [0], [0], [1], [0, 0, 1, 1], [], []>} : vector<510x80xbf16>, vector<80x48xbf16>, vector<510x48xf32> -> vector<510x48xf32>
    %c1_46 = arith.constant 1 : index
    %c0_47 = arith.constant 0 : index
    %c0_48 = arith.constant 0 : index
    %61 = vector.load %arg7[%c1_46, %c0_47, %c0_48] : memref<2x80x48xbf16, #tpu.memory_space<vmem>>, vector<1x80x48xbf16>
    %62 = vector.shape_cast %61 : vector<1x80x48xbf16> to vector<80x48xbf16>
    %cst_49 = arith.constant dense<0.000000e+00> : vector<510x48xf32>
    %63 = tpu.matmul %57, %62, %cst_49 {dimension_numbers = #tpu.dot_dimension_numbers<[1], [0], [0], [1], [0, 0, 1, 1], [], []>} : vector<510x80xbf16>, vector<80x48xbf16>, vector<510x48xf32> -> vector<510x48xf32>
    %64 = arith.maximumf %60, %63 : vector<510x48xf32>
    %c0_50 = arith.constant 0 : index
    %c0_51 = arith.constant 0 : index
    %65 = vector.load %arg14[%c0_50, %c0_51] : memref<512x48xf32, #tpu.memory_space<vmem>>, vector<510x48xf32>
    tpu.vector_store %arg14[%c0_50, %c0_51], %64 {strides = array<i32>} : memref<512x48xf32, #tpu.memory_space<vmem>>, vector<510x48xf32>,
    %c0_52 = arith.constant 0 : index
    %c0_53 = arith.constant 0 : index
    %66 = tpu.strided_load %arg14[%c0_52, %c0_53] {strides = array<i32: 8, 1>} : memref<512x48xf32, #tpu.memory_space<vmem>>, vector<64x48xf32>
    %c1_54 = arith.constant 1 : index
    %c0_55 = arith.constant 0 : index
    %67 = tpu.strided_load %arg14[%c1_54, %c0_55] {strides = array<i32: 8, 1>} : memref<512x48xf32, #tpu.memory_space<vmem>>, vector<64x48xf32>
    %c2_56 = arith.constant 2 : index
    %c0_57 = arith.constant 0 : index
    %68 = tpu.strided_load %arg14[%c2_56, %c0_57] {strides = array<i32: 8, 1>} : memref<512x48xf32, #tpu.memory_space<vmem>>, vector<64x48xf32>
    %69 = arith.maximumf %67, %68 : vector<64x48xf32>
    %c3 = arith.constant 3 : index
    %c0_58 = arith.constant 0 : index
    %70 = tpu.strided_load %arg14[%c3, %c0_58] {strides = array<i32: 8, 1>} : memref<512x48xf32, #tpu.memory_space<vmem>>, vector<64x48xf32>
    %c4 = arith.constant 4 : index
    %c0_59 = arith.constant 0 : index
    %71 = tpu.strided_load %arg14[%c4, %c0_59] {strides = array<i32: 8, 1>} : memref<512x48xf32, #tpu.memory_space<vmem>>, vector<64x48xf32>
    %72 = arith.maximumf %70, %71 : vector<64x48xf32>
    %73 = arith.truncf %66 : vector<64x48xf32> to vector<64x48xbf16>
    %c0_60 = arith.constant 0 : index
    %c0_61 = arith.constant 0 : index
    %c0_62 = arith.constant 0 : index
    %74 = vector.load %arg8[%c0_60, %c0_61, %c0_62] : memref<3x48x32xbf16, #tpu.memory_space<vmem>>, vector<1x48x32xbf16>
    %75 = vector.shape_cast %74 : vector<1x48x32xbf16> to vector<48x32xbf16>
    %cst_63 = arith.constant dense<0.000000e+00> : vector<64x32xf32>
    %76 = tpu.matmul %73, %75, %cst_63 {dimension_numbers = #tpu.dot_dimension_numbers<[1], [0], [0], [1], [0, 0, 1, 1], [], []>} : vector<64x48xbf16>, vector<48x32xbf16>, vector<64x32xf32> -> vector<64x32xf32>
    %77 = arith.truncf %69 : vector<64x48xf32> to vector<64x48xbf16>
    %c1_64 = arith.constant 1 : index
    %c0_65 = arith.constant 0 : index
    %c0_66 = arith.constant 0 : index
    %78 = vector.load %arg8[%c1_64, %c0_65, %c0_66] : memref<3x48x32xbf16, #tpu.memory_space<vmem>>, vector<1x48x32xbf16>
    %79 = vector.shape_cast %78 : vector<1x48x32xbf16> to vector<48x32xbf16>
    %cst_67 = arith.constant dense<0.000000e+00> : vector<64x32xf32>
    %80 = tpu.matmul %77, %79, %cst_67 {dimension_numbers = #tpu.dot_dimension_numbers<[1], [0], [0], [1], [0, 0, 1, 1], [], []>} : vector<64x48xbf16>, vector<48x32xbf16>, vector<64x32xf32> -> vector<64x32xf32>
    %81 = arith.addf %76, %80 : vector<64x32xf32>
    %82 = arith.truncf %72 : vector<64x48xf32> to vector<64x48xbf16>
    %c2_68 = arith.constant 2 : index
    %c0_69 = arith.constant 0 : index
    %c0_70 = arith.constant 0 : index
    %83 = vector.load %arg8[%c2_68, %c0_69, %c0_70] : memref<3x48x32xbf16, #tpu.memory_space<vmem>>, vector<1x48x32xbf16>
    %84 = vector.shape_cast %83 : vector<1x48x32xbf16> to vector<48x32xbf16>
    %cst_71 = arith.constant dense<0.000000e+00> : vector<64x32xf32>
    %85 = tpu.matmul %82, %84, %cst_71 {dimension_numbers = #tpu.dot_dimension_numbers<[1], [0], [0], [1], [0, 0, 1, 1], [], []>} : vector<64x48xbf16>, vector<48x32xbf16>, vector<64x32xf32> -> vector<64x32xf32>
    %86 = arith.addf %81, %85 : vector<64x32xf32>
    %c0_72 = arith.constant 0 : index
    %c0_73 = arith.constant 0 : index
    %87 = vector.load %arg9[%c0_72, %c0_73] : memref<1x32xf32, #tpu.memory_space<vmem>>, vector<1x32xf32>
    %88 = vector.broadcast %87 : vector<1x32xf32> to vector<64x32xf32>
    %89 = arith.addf %86, %88 : vector<64x32xf32>
    %cst_74 = arith.constant 0.000000e+00 : f32
    %90 = vector.broadcast %cst_74 : f32 to vector<64x32xf32>
    %91 = arith.maximumf %89, %90 : vector<64x32xf32>
    %92 = arith.truncf %91 : vector<64x32xf32> to vector<64x32xbf16>
    %c0_75 = arith.constant 0 : index
    %c0_76 = arith.constant 0 : index
    %93 = vector.load %arg10[%c0_75, %c0_76] : memref<32x128xbf16, #tpu.memory_space<vmem>>, vector<32x128xbf16>
    %cst_77 = arith.constant dense<0.000000e+00> : vector<64x128xf32>
    %94 = tpu.matmul %92, %93, %cst_77 {dimension_numbers = #tpu.dot_dimension_numbers<[1], [0], [0], [1], [0, 0, 1, 1], [], []>} : vector<64x32xbf16>, vector<32x128xbf16>, vector<64x128xf32> -> vector<64x128xf32>
    %c0_78 = arith.constant 0 : index
    %c0_79 = arith.constant 0 : index
    %95 = vector.load %arg11[%c0_78, %c0_79] : memref<1x128xf32, #tpu.memory_space<vmem>>, vector<1x128xf32>
    %96 = vector.broadcast %95 : vector<1x128xf32> to vector<64x128xf32>
    %97 = arith.addf %94, %96 : vector<64x128xf32>
    %c0_80 = arith.constant 0 : index
    %c0_81 = arith.constant 0 : index
    %98 = vector.load %arg12[%c0_80, %c0_81] : memref<64x128xf32, #tpu.memory_space<vmem>>, vector<64x128xf32>
    tpu.vector_store %arg12[%c0_80, %c0_81], %97 {strides = array<i32>} : memref<64x128xf32, #tpu.memory_space<vmem>>, vector<64x128xf32>,
    return
  }
  func.func @transform_0(%arg0: i32) -> (i32, i32) {
    %c0_i32 = arith.constant 0 : i32
    %c0_i32_0 = arith.constant 0 : i32
    return %arg0, %c0_i32 : i32, i32
  }
  func.func @transform_1(%arg0: i32) -> (i32, i32, i32) {
    %c0_i32 = arith.constant 0 : i32
    %c0_i32_0 = arith.constant 0 : i32
    %c0_i32_1 = arith.constant 0 : i32
    %c0_i32_2 = arith.constant 0 : i32
    return %c0_i32, %c0_i32_0, %c0_i32_1 : i32, i32, i32
  }
  func.func @transform_2(%arg0: i32) -> (i32, i32) {
    %c0_i32 = arith.constant 0 : i32
    %c0_i32_0 = arith.constant 0 : i32
    %c0_i32_1 = arith.constant 0 : i32
    return %c0_i32, %c0_i32_0 : i32, i32
  }
  func.func @transform_3(%arg0: i32) -> (i32, i32, i32) {
    %c0_i32 = arith.constant 0 : i32
    %c0_i32_0 = arith.constant 0 : i32
    %c0_i32_1 = arith.constant 0 : i32
    %c0_i32_2 = arith.constant 0 : i32
    return %c0_i32, %c0_i32_0, %c0_i32_1 : i32, i32, i32
  }
  func.func @transform_4(%arg0: i32) -> (i32, i32, i32) {
    %c0_i32 = arith.constant 0 : i32
    %c0_i32_0 = arith.constant 0 : i32
    %c0_i32_1 = arith.constant 0 : i32
    %c0_i32_2 = arith.constant 0 : i32
    return %c0_i32, %c0_i32_0, %c0_i32_1 : i32, i32, i32
  }
  func.func @transform_5(%arg0: i32) -> (i32, i32) {
    %c0_i32 = arith.constant 0 : i32
    %c0_i32_0 = arith.constant 0 : i32
    %c0_i32_1 = arith.constant 0 : i32
    return %c0_i32, %c0_i32_0 : i32, i32
  }
  func.func @transform_6(%arg0: i32) -> (i32, i32, i32) {
    %c0_i32 = arith.constant 0 : i32
    %c0_i32_0 = arith.constant 0 : i32
    %c0_i32_1 = arith.constant 0 : i32
    %c0_i32_2 = arith.constant 0 : i32
    return %c0_i32, %c0_i32_0, %c0_i32_1 : i32, i32, i32
  }
  func.func @transform_7(%arg0: i32) -> (i32, i32, i32) {
    %c0_i32 = arith.constant 0 : i32
    %c0_i32_0 = arith.constant 0 : i32
    %c0_i32_1 = arith.constant 0 : i32
    %c0_i32_2 = arith.constant 0 : i32
    return %c0_i32, %c0_i32_0, %c0_i32_1 : i32, i32, i32
  }
  func.func @transform_8(%arg0: i32) -> (i32, i32) {
    %c0_i32 = arith.constant 0 : i32
    %c0_i32_0 = arith.constant 0 : i32
    %c0_i32_1 = arith.constant 0 : i32
    return %c0_i32, %c0_i32_0 : i32, i32
  }
  func.func @transform_9(%arg0: i32) -> (i32, i32) {
    %c0_i32 = arith.constant 0 : i32
    %c0_i32_0 = arith.constant 0 : i32
    %c0_i32_1 = arith.constant 0 : i32
    return %c0_i32, %c0_i32_0 : i32, i32
  }
  func.func @transform_10(%arg0: i32) -> (i32, i32) {
    %c0_i32 = arith.constant 0 : i32
    %c0_i32_0 = arith.constant 0 : i32
    %c0_i32_1 = arith.constant 0 : i32
    return %c0_i32, %c0_i32_0 : i32, i32
  }
  func.func @transform_11(%arg0: i32) -> (i32, i32) {
    %c0_i32 = arith.constant 0 : i32
    %c0_i32_0 = arith.constant 0 : i32
    return %arg0, %c0_i32 : i32, i32
  }
}

</mosaic_0001>

<llo_original>
// kernel: convnet_forward.1
$region0: #{convnet_forward.1}
  #allocation0 [shape = 'u32[]', space=smem, size = 0x4, offset = 0x4, fixed_abs, tag = 'smem constant byte address 0x4 - core index']
  #allocation1 [shape = 'u32[144,128]{1,0:T(1,128)}', space=vmem, size = 0x12000, scoped, tag = 'internal scratch']
  #allocation2 [shape = 'f32[1024,56]{1,0:T(8,128)}', space=vmem, size = 0x80000, scoped, tag = 'scratch operand']
  #allocation3 [shape = 'f32[512,48]{1,0:T(8,128)}', space=vmem, size = 0x40000, scoped, tag = 'scratch operand']
  %s0 = inlined_call_operand.vmem [shape: f32[1024,64], index: 0, kind: input, shape index: {}]
  %s1 = inlined_call_operand.vmem [shape: bf16[3,64,112], index: 1, kind: input, shape index: {}]
  %s2 = inlined_call_operand.vmem [shape: f32[1,112], index: 2, kind: input, shape index: {}]
  %s3 = inlined_call_operand.vmem [shape: bf16[2,112,56], index: 3, kind: input, shape index: {}]
  %s4 = inlined_call_operand.vmem [shape: bf16[3,56,80], index: 4, kind: input, shape index: {}]
  %s5 = inlined_call_operand.vmem [shape: f32[1,80], index: 5, kind: input, shape index: {}]
  %s6 = inlined_call_operand.vmem [shape: bf16[2,80,48], index: 6, kind: input, shape index: {}]
  %s7 = inlined_call_operand.vmem [shape: bf16[3,48,32], index: 7, kind: input, shape index: {}]
  %s8 = inlined_call_operand.vmem [shape: f32[1,32], index: 8, kind: input, shape index: {}]
  %s9 = inlined_call_operand.vmem [shape: bf16[32,128], index: 9, kind: input, shape index: {}]
  %s10 = inlined_call_operand.vmem [shape: f32[1,128], index: 10, kind: input, shape index: {}]
  %s11 = inlined_call_operand.vmem [shape: f32[64,128], index: 11, kind: output, shape index: {}]
  %s12 = sld [smem:[#allocation0]]
  $region54: #{convnet_forward.1} parent=0
    _
  %s14 = ssub.s32 1, %s12
  %s15 = scalar_select 0, %s14, %s12
  // Predicated region
  $region2: #{convnet_forward.1} parent=0 // pred_check
    _
  $region3: #{convnet_forward.1} parent=0 // pred_check_branch
    %17 = sbr.rel (0) target = $region5
  $region4: #{convnet_forward.1} parent=0 // pred_region
    _
  $region5: #{convnet_forward.1} parent=0 // pred_fallthru
    _
  // Predicated region
  $region6: #{convnet_forward.1} parent=0 // pred_check
    _
  $region7: #{convnet_forward.1} parent=0 // pred_check_branch
    %19 = sbr.rel (0) target = $region9
  $region8: #{convnet_forward.1} parent=0 // pred_region
    _
  $region9: #{convnet_forward.1} parent=0 // pred_fallthru
    _
  // Predicated region
  $region10: #{convnet_forward.1} parent=0 // pred_check
    _
  $region11: #{convnet_forward.1} parent=0 // pred_check_branch
    %21 = sbr.rel (0) target = $region13
  $region12: #{convnet_forward.1} parent=0 // pred_region
    _
  $region13: #{convnet_forward.1} parent=0 // pred_fallthru
    _
  // Predicated region
  $region14: #{convnet_forward.1} parent=0 // pred_check
    _
  $region15: #{convnet_forward.1} parent=0 // pred_check_branch
    %23 = sbr.rel (0) target = $region17
  $region16: #{convnet_forward.1} parent=0 // pred_region
    _
  $region17: #{convnet_forward.1} parent=0 // pred_fallthru
    _
  // Predicated region
  $region18: #{convnet_forward.1} parent=0 // pred_check
    _
  $region19: #{convnet_forward.1} parent=0 // pred_check_branch
    %25 = sbr.rel (0) target = $region21
  $region20: #{convnet_forward.1} parent=0 // pred_region
    _
  $region21: #{convnet_forward.1} parent=0 // pred_fallthru
    _
  // Predicated region
  $region22: #{convnet_forward.1} parent=0 // pred_check
    _
  $region23: #{convnet_forward.1} parent=0 // pred_check_branch
    %27 = sbr.rel (0) target = $region25
  $region24: #{convnet_forward.1} parent=0 // pred_region
    _
  $region25: #{convnet_forward.1} parent=0 // pred_fallthru
    _
  // Predicated region
  $region26: #{convnet_forward.1} parent=0 // pred_check
    _
  $region27: #{convnet_forward.1} parent=0 // pred_check_branch
    %29 = sbr.rel (0) target = $region29
  $region28: #{convnet_forward.1} parent=0 // pred_region
    _
  $region29: #{convnet_forward.1} parent=0 // pred_fallthru
    _
  // Predicated region
  $region30: #{convnet_forward.1} parent=0 // pred_check
    _
  $region31: #{convnet_forward.1} parent=0 // pred_check_branch
    %31 = sbr.rel (0) target = $region33
  $region32: #{convnet_forward.1} parent=0 // pred_region
    _
  $region33: #{convnet_forward.1} parent=0 // pred_fallthru
    _
  // Predicated region
  $region34: #{convnet_forward.1} parent=0 // pred_check
    _
  $region35: #{convnet_forward.1} parent=0 // pred_check_branch
    %33 = sbr.rel (0) target = $region37
  $region36: #{convnet_forward.1} parent=0 // pred_region
    _
  $region37: #{convnet_forward.1} parent=0 // pred_fallthru
    _
  // Predicated region
  $region38: #{convnet_forward.1} parent=0 // pred_check
    _
  $region39: #{convnet_forward.1} parent=0 // pred_check_branch
    %35 = sbr.rel (0) target = $region41
  $region40: #{convnet_forward.1} parent=0 // pred_region
    _
  $region41: #{convnet_forward.1} parent=0 // pred_fallthru
    _
  // Predicated region
  $region42: #{convnet_forward.1} parent=0 // pred_check
    _
  $region43: #{convnet_forward.1} parent=0 // pred_check_branch
    %37 = sbr.rel (0) target = $region45
  $region44: #{convnet_forward.1} parent=0 // pred_region
    _
  $region45: #{convnet_forward.1} parent=0 // pred_fallthru
    _
  %v39 = vld [vmem:[%s0] sm:$0xff]
  %v40 = vld [vmem:[%s0 + $0x8] sm:$0xff]
  %v41 = vld [vmem:[%s0 + $0x10] sm:$0xff]
  %v42 = vld [vmem:[%s0 + $0x18] sm:$0xff]
  %v43 = vld [vmem:[%s0 + $0x20] sm:$0xff]
  %v44 = vld [vmem:[%s0 + $0x28] sm:$0xff]
  %v45 = vld [vmem:[%s0 + $0x30] sm:$0xff]
  %v46 = vld [vmem:[%s0 + $0x38] sm:$0xff]
  %v47 = vld [vmem:[%s0 + $0x40] sm:$0xff]
  %v48 = vld [vmem:[%s0 + $0x48] sm:$0xff]
  %v49 = vld [vmem:[%s0 + $0x50] sm:$0xff]
  %v50 = vld [vmem:[%s0 + $0x58] sm:$0xff]
  %v51 = vld [vmem:[%s0 + $0x60] sm:$0xff]
  %v52 = vld [vmem:[%s0 + $0x68] sm:$0xff]
  %v53 = vld [vmem:[%s0 + $0x70] sm:$0xff]
  %v54 = vld [vmem:[%s0 + $0x78] sm:$0xff]
  %v55 = vld [vmem:[%s0 + $0x80] sm:$0xff]
  %v56 = vld [vmem:[%s0 + $0x88] sm:$0xff]
  %v57 = vld [vmem:[%s0 + $0x90] sm:$0xff]
  %v58 = vld [vmem:[%s0 + $0x98] sm:$0xff]
  %v59 = vld [vmem:[%s0 + $0xa0] sm:$0xff]
  %v60 = vld [vmem:[%s0 + $0xa8] sm:$0xff]
  %v61 = vld [vmem:[%s0 + $0xb0] sm:$0xff]
  %v62 = vld [vmem:[%s0 + $0xb8] sm:$0xff]
  %v63 = vld [vmem:[%s0 + $0xc0] sm:$0xff]
  %v64 = vld [vmem:[%s0 + $0xc8] sm:$0xff]
  %v65 = vld [vmem:[%s0 + $0xd0] sm:$0xff]
  %v66 = vld [vmem:[%s0 + $0xd8] sm:$0xff]
  %v67 = vld [vmem:[%s0 + $0xe0] sm:$0xff]
  %v68 = vld [vmem:[%s0 + $0xe8] sm:$0xff]
  %v69 = vld [vmem:[%s0 + $0xf0] sm:$0xff]
  %v70 = vld [vmem:[%s0 + $0xf8] sm:$0xff]
  %v71 = vld [vmem:[%s0 + $0x100] sm:$0xff]
  %v72 = vld [vmem:[%s0 + $0x108] sm:$0xff]
  %v73 = vld [vmem:[%s0 + $0x110] sm:$0xff]
  %v74 = vld [vmem:[%s0 + $0x118] sm:$0xff]
  %v75 = vld [vmem:[%s0 + $0x120] sm:$0xff]
  %v76 = vld [vmem:[%s0 + $0x128] sm:$0xff]
  %v77 = vld [vmem:[%s0 + $0x130] sm:$0xff]
  %v78 = vld [vmem:[%s0 + $0x138] sm:$0xff]
  %v79 = vld [vmem:[%s0 + $0x140] sm:$0xff]
  %v80 = vld [vmem:[%s0 + $0x148] sm:$0xff]
  %v81 = vld [vmem:[%s0 + $0x150] sm:$0xff]
  %v82 = vld [vmem:[%s0 + $0x158] sm:$0xff]
  %v83 = vld [vmem:[%s0 + $0x160] sm:$0xff]
  %v84 = vld [vmem:[%s0 + $0x168] sm:$0xff]
  %v85 = vld [vmem:[%s0 + $0x170] sm:$0xff]
  %v86 = vld [vmem:[%s0 + $0x178] sm:$0xff]
  %v87 = vld [vmem:[%s0 + $0x180] sm:$0xff]
  %v88 = vld [vmem:[%s0 + $0x188] sm:$0xff]
  %v89 = vld [vmem:[%s0 + $0x190] sm:$0xff]
  %v90 = vld [vmem:[%s0 + $0x198] sm:$0xff]
  %v91 = vld [vmem:[%s0 + $0x1a0] sm:$0xff]
  %v92 = vld [vmem:[%s0 + $0x1a8] sm:$0xff]
  %v93 = vld [vmem:[%s0 + $0x1b0] sm:$0xff]
  %v94 = vld [vmem:[%s0 + $0x1b8] sm:$0xff]
  %v95 = vld [vmem:[%s0 + $0x1c0] sm:$0xff]
  %v96 = vld [vmem:[%s0 + $0x1c8] sm:$0xff]
  %v97 = vld [vmem:[%s0 + $0x1d0] sm:$0xff]
  %v98 = vld [vmem:[%s0 + $0x1d8] sm:$0xff]
  %v99 = vld [vmem:[%s0 + $0x1e0] sm:$0xff]
  %v100 = vld [vmem:[%s0 + $0x1e8] sm:$0xff]
  %v101 = vld [vmem:[%s0 + $0x1f0] sm:$0xff]
  %v102 = vld [vmem:[%s0 + $0x1f8] sm:$0xff]
  %v103 = vld [vmem:[%s0 + $0x200] sm:$0xff]
  %v104 = vld [vmem:[%s0 + $0x208] sm:$0xff]
  %v105 = vld [vmem:[%s0 + $0x210] sm:$0xff]
  %v106 = vld [vmem:[%s0 + $0x218] sm:$0xff]
  %v107 = vld [vmem:[%s0 + $0x220] sm:$0xff]
  %v108 = vld [vmem:[%s0 + $0x228] sm:$0xff]
  %v109 = vld [vmem:[%s0 + $0x230] sm:$0xff]
  %v110 = vld [vmem:[%s0 + $0x238] sm:$0xff]
  %v111 = vld [vmem:[%s0 + $0x240] sm:$0xff]
  %v112 = vld [vmem:[%s0 + $0x248] sm:$0xff]
  %v113 = vld [vmem:[%s0 + $0x250] sm:$0xff]
  %v114 = vld [vmem:[%s0 + $0x258] sm:$0xff]
  %v115 = vld [vmem:[%s0 + $0x260] sm:$0xff]
  %v116 = vld [vmem:[%s0 + $0x268] sm:$0xff]
  %v117 = vld [vmem:[%s0 + $0x270] sm:$0xff]
  %v118 = vld [vmem:[%s0 + $0x278] sm:$0xff]
  %v119 = vld [vmem:[%s0 + $0x280] sm:$0xff]
  %v120 = vld [vmem:[%s0 + $0x288] sm:$0xff]
  %v121 = vld [vmem:[%s0 + $0x290] sm:$0xff]
  %v122 = vld [vmem:[%s0 + $0x298] sm:$0xff]
  %v123 = vld [vmem:[%s0 + $0x2a0] sm:$0xff]
  %v124 = vld [vmem:[%s0 + $0x2a8] sm:$0xff]
  %v125 = vld [vmem:[%s0 + $0x2b0] sm:$0xff]
  %v126 = vld [vmem:[%s0 + $0x2b8] sm:$0xff]
  %v127 = vld [vmem:[%s0 + $0x2c0] sm:$0xff]
  %v128 = vld [vmem:[%s0 + $0x2c8] sm:$0xff]
  %v129 = vld [vmem:[%s0 + $0x2d0] sm:$0xff]
  %v130 = vld [vmem:[%s0 + $0x2d8] sm:$0xff]
  %v131 = vld [vmem:[%s0 + $0x2e0] sm:$0xff]
  %v132 = vld [vmem:[%s0 + $0x2e8] sm:$0xff]
  %v133 = vld [vmem:[%s0 + $0x2f0] sm:$0xff]
  %v134 = vld [vmem:[%s0 + $0x2f8] sm:$0xff]
  %v135 = vld [vmem:[%s0 + $0x300] sm:$0xff]
  %v136 = vld [vmem:[%s0 + $0x308] sm:$0xff]
  %v137 = vld [vmem:[%s0 + $0x310] sm:$0xff]
  %v138 = vld [vmem:[%s0 + $0x318] sm:$0xff]
  %v139 = vld [vmem:[%s0 + $0x320] sm:$0xff]
  %v140 = vld [vmem:[%s0 + $0x328] sm:$0xff]
  %v141 = vld [vmem:[%s0 + $0x330] sm:$0xff]
  %v142 = vld [vmem:[%s0 + $0x338] sm:$0xff]
  %v143 = vld [vmem:[%s0 + $0x340] sm:$0xff]
  %v144 = vld [vmem:[%s0 + $0x348] sm:$0xff]
  %v145 = vld [vmem:[%s0 + $0x350] sm:$0xff]
  %v146 = vld [vmem:[%s0 + $0x358] sm:$0xff]
  %v147 = vld [vmem:[%s0 + $0x360] sm:$0xff]
  %v148 = vld [vmem:[%s0 + $0x368] sm:$0xff]
  %v149 = vld [vmem:[%s0 + $0x370] sm:$0xff]
  %v150 = vld [vmem:[%s0 + $0x378] sm:$0xff]
  %v151 = vld [vmem:[%s0 + $0x380] sm:$0xff]
  %v152 = vld [vmem:[%s0 + $0x388] sm:$0xff]
  %v153 = vld [vmem:[%s0 + $0x390] sm:$0xff]
  %v154 = vld [vmem:[%s0 + $0x398] sm:$0xff]
  %v155 = vld [vmem:[%s0 + $0x3a0] sm:$0xff]
  %v156 = vld [vmem:[%s0 + $0x3a8] sm:$0xff]
  %v157 = vld [vmem:[%s0 + $0x3b0] sm:$0xff]
  %v158 = vld [vmem:[%s0 + $0x3b8] sm:$0xff]
  %v159 = vld [vmem:[%s0 + $0x3c0] sm:$0xff]
  %v160 = vld [vmem:[%s0 + $0x3c8] sm:$0xff]
  %v161 = vld [vmem:[%s0 + $0x3d0] sm:$0xff]
  %v162 = vld [vmem:[%s0 + $0x3d8] sm:$0xff]
  %v163 = vld [vmem:[%s0 + $0x3e0] sm:$0xff]
  %v164 = vld [vmem:[%s0 + $0x3e8] sm:$0xff]
  %v165 = vld [vmem:[%s0 + $0x3f0] sm:$0xff]
  %v166 = vld [vmem:[%s0 + $0x3f8] sm:$0xff]
  %v167 = vpack.c.bf16 %v40, %v39
  %v168 = vpack.c.bf16 %v42, %v41
  %v169 = vpack.c.bf16 %v44, %v43
  %v170 = vpack.c.bf16 %v46, %v45
  %v171 = vpack.c.bf16 %v48, %v47
  %v172 = vpack.c.bf16 %v50, %v49
  %v173 = vpack.c.bf16 %v52, %v51
  %v174 = vpack.c.bf16 %v54, %v53
  %v175 = vpack.c.bf16 %v56, %v55
  %v176 = vpack.c.bf16 %v58, %v57
  %v177 = vpack.c.bf16 %v60, %v59
  %v178 = vpack.c.bf16 %v62, %v61
  %v179 = vpack.c.bf16 %v64, %v63
  %v180 = vpack.c.bf16 %v66, %v65
  %v181 = vpack.c.bf16 %v68, %v67
  %v182 = vpack.c.bf16 %v70, %v69
  %v183 = vpack.c.bf16 %v72, %v71
  %v184 = vpack.c.bf16 %v74, %v73
  %v185 = vpack.c.bf16 %v76, %v75
  %v186 = vpack.c.bf16 %v78, %v77
  %v187 = vpack.c.bf16 %v80, %v79
  %v188 = vpack.c.bf16 %v82, %v81
  %v189 = vpack.c.bf16 %v84, %v83
  %v190 = vpack.c.bf16 %v86, %v85
  %v191 = vpack.c.bf16 %v88, %v87
  %v192 = vpack.c.bf16 %v90, %v89
  %v193 = vpack.c.bf16 %v92, %v91
  %v194 = vpack.c.bf16 %v94, %v93
  %v195 = vpack.c.bf16 %v96, %v95
  %v196 = vpack.c.bf16 %v98, %v97
  %v197 = vpack.c.bf16 %v100, %v99
  %v198 = vpack.c.bf16 %v102, %v101
  %v199 = vpack.c.bf16 %v104, %v103
  %v200 = vpack.c.bf16 %v106, %v105
  %v201 = vpack.c.bf16 %v108, %v107
  %v202 = vpack.c.bf16 %v110, %v109
  %v203 = vpack.c.bf16 %v112, %v111
  %v204 = vpack.c.bf16 %v114, %v113
  %v205 = vpack.c.bf16 %v116, %v115
  %v206 = vpack.c.bf16 %v118, %v117
  %v207 = vpack.c.bf16 %v120, %v119
  %v208 = vpack.c.bf16 %v122, %v121
  %v209 = vpack.c.bf16 %v124, %v123
  %v210 = vpack.c.bf16 %v126, %v125
  %v211 = vpack.c.bf16 %v128, %v127
  %v212 = vpack.c.bf16 %v130, %v129
  %v213 = vpack.c.bf16 %v132, %v131
  %v214 = vpack.c.bf16 %v134, %v133
  %v215 = vpack.c.bf16 %v136, %v135
  %v216 = vpack.c.bf16 %v138, %v137
  %v217 = vpack.c.bf16 %v140, %v139
  %v218 = vpack.c.bf16 %v142, %v141
  %v219 = vpack.c.bf16 %v144, %v143
  %v220 = vpack.c.bf16 %v146, %v145
  %v221 = vpack.c.bf16 %v148, %v147
  %v222 = vpack.c.bf16 %v150, %v149
  %v223 = vpack.c.bf16 %v152, %v151
  %v224 = vpack.c.bf16 %v154, %v153
  %v225 = vpack.c.bf16 %v156, %v155
  %v226 = vpack.c.bf16 %v158, %v157
  %v227 = vpack.c.bf16 %v160, %v159
  %v228 = vpack.c.bf16 %v162, %v161
  %v229 = vpack.c.bf16 %v164, %v163
  %v230 = vpack.c.bf16 %v166, %v165
  %v231 = vld [vmem:[%s1] sm:$0xf]
  %v232 = vld [vmem:[%s1 + $0x4] sm:$0xf]
  %v233 = vld [vmem:[%s1 + $0x8] sm:$0xf]
  %v234 = vld [vmem:[%s1 + $0xc] sm:$0xf]
  %v235 = vld [vmem:[%s1 + $0x10] sm:$0xf]
  %v236 = vld [vmem:[%s1 + $0x14] sm:$0xf]
  %v237 = vld [vmem:[%s1 + $0x18] sm:$0xf]
  %v238 = vld [vmem:[%s1 + $0x1c] sm:$0xf]
  %s239 = scalar_lea.vmem %s1, 32
  %v240 = vld [vmem:[%s239] sm:$0xf]
  %v241 = vld [vmem:[%s239 + $0x4] sm:$0xf]
  %v242 = vld [vmem:[%s239 + $0x8] sm:$0xf]
  %v243 = vld [vmem:[%s239 + $0xc] sm:$0xf]
  %v244 = vld [vmem:[%s239 + $0x10] sm:$0xf]
  %v245 = vld [vmem:[%s239 + $0x14] sm:$0xf]
  %v246 = vld [vmem:[%s239 + $0x18] sm:$0xf]
  %v247 = vld [vmem:[%s239 + $0x1c] sm:$0xf]
  %vm248 = vsmask.f32 7424
  %v250 = vshrl.u32 %v167, 16
  %v252 = vshll.u32 %v167, 16
  %v254 = vrot.slane %v252, 1
  %v255 = vor.u32 %v250, %v254
  %v257 = vshll.u32 %v168, 16
  %v259 = vrot.slane %v257, 1
  %v260 = vsel %vm248, %v255, %v259
  %v261 = vshrl.u32 %v168, 16
  %v263 = vor.u32 %v261, %v259
  %v265 = vshll.u32 %v169, 16
  %v267 = vrot.slane %v265, 1
  %v268 = vsel %vm248, %v263, %v267
  %v269 = vshrl.u32 %v169, 16
  %v271 = vor.u32 %v269, %v267
  %v273 = vshll.u32 %v170, 16
  %v275 = vrot.slane %v273, 1
  %v276 = vsel %vm248, %v271, %v275
  %v277 = vshrl.u32 %v170, 16
  %v279 = vor.u32 %v277, %v275
  %v281 = vshll.u32 %v171, 16
  %v283 = vrot.slane %v281, 1
  %v284 = vsel %vm248, %v279, %v283
  %v285 = vshrl.u32 %v171, 16
  %v287 = vor.u32 %v285, %v283
  %v289 = vshll.u32 %v172, 16
  %v291 = vrot.slane %v289, 1
  %v292 = vsel %vm248, %v287, %v291
  %v293 = vshrl.u32 %v172, 16
  %v295 = vor.u32 %v293, %v291
  %v297 = vshll.u32 %v173, 16
  %v299 = vrot.slane %v297, 1
  %v300 = vsel %vm248, %v295, %v299
  %v301 = vshrl.u32 %v173, 16
  %v303 = vor.u32 %v301, %v299
  %v305 = vshll.u32 %v174, 16
  %v307 = vrot.slane %v305, 1
  %v308 = vsel %vm248, %v303, %v307
  %v309 = vshrl.u32 %v174, 16
  %v311 = vor.u32 %v309, %v307
  %v313 = vshll.u32 %v175, 16
  %v315 = vrot.slane %v313, 1
  %v316 = vsel %vm248, %v311, %v315
  %v317 = vshrl.u32 %v175, 16
  %v319 = vor.u32 %v317, %v315
  %v321 = vshll.u32 %v176, 16
  %v323 = vrot.slane %v321, 1
  %v324 = vsel %vm248, %v319, %v323
  %v325 = vshrl.u32 %v176, 16
  %v327 = vor.u32 %v325, %v323
  %v329 = vshll.u32 %v177, 16
  %v331 = vrot.slane %v329, 1
  %v332 = vsel %vm248, %v327, %v331
  %v333 = vshrl.u32 %v177, 16
  %v335 = vor.u32 %v333, %v331
  %v337 = vshll.u32 %v178, 16
  %v339 = vrot.slane %v337, 1
  %v340 = vsel %vm248, %v335, %v339
  %v341 = vshrl.u32 %v178, 16
  %v343 = vor.u32 %v341, %v339
  %v345 = vshll.u32 %v179, 16
  %v347 = vrot.slane %v345, 1
  %v348 = vsel %vm248, %v343, %v347
  %v349 = vshrl.u32 %v179, 16
  %v351 = vor.u32 %v349, %v347
  %v353 = vshll.u32 %v180, 16
  %v355 = vrot.slane %v353, 1
  %v356 = vsel %vm248, %v351, %v355
  %v357 = vshrl.u32 %v180, 16
  %v359 = vor.u32 %v357, %v355
  %v361 = vshll.u32 %v181, 16
  %v363 = vrot.slane %v361, 1
  %v364 = vsel %vm248, %v359, %v363
  %v365 = vshrl.u32 %v181, 16
  %v367 = vor.u32 %v365, %v363
  %v369 = vshll.u32 %v182, 16
  %v371 = vrot.slane %v369, 1
  %v372 = vsel %vm248, %v367, %v371
  %v373 = vshrl.u32 %v182, 16
  %v375 = vor.u32 %v373, %v371
  %v377 = vshll.u32 %v183, 16
  %v379 = vrot.slane %v377, 1
  %v380 = vsel %vm248, %v375, %v379
  %v381 = vshrl.u32 %v183, 16
  %v383 = vor.u32 %v381, %v379
  %v385 = vshll.u32 %v184, 16
  %v387 = vrot.slane %v385, 1
  %v388 = vsel %vm248, %v383, %v387
  %v389 = vshrl.u32 %v184, 16
  %v391 = vor.u32 %v389, %v387
  %v393 = vshll.u32 %v185, 16
  %v395 = vrot.slane %v393, 1
  %v396 = vsel %vm248, %v391, %v395
  %v397 = vshrl.u32 %v185, 16
  %v399 = vor.u32 %v397, %v395
  %v401 = vshll.u32 %v186, 16
  %v403 = vrot.slane %v401, 1
  %v404 = vsel %vm248, %v399, %v403
  %v405 = vshrl.u32 %v186, 16
  %v407 = vor.u32 %v405, %v403
  %v409 = vshll.u32 %v187, 16
  %v411 = vrot.slane %v409, 1
  %v412 = vsel %vm248, %v407, %v411
  %v413 = vshrl.u32 %v187, 16
  %v415 = vor.u32 %v413, %v411
  %v417 = vshll.u32 %v188, 16
  %v419 = vrot.slane %v417, 1
  %v420 = vsel %vm248, %v415, %v419
  %v421 = vshrl.u32 %v188, 16
  %v423 = vor.u32 %v421, %v419
  %v425 = vshll.u32 %v189, 16
  %v427 = vrot.slane %v425, 1
  %v428 = vsel %vm248, %v423, %v427
  %v429 = vshrl.u32 %v189, 16
  %v431 = vor.u32 %v429, %v427
  %v433 = vshll.u32 %v190, 16
  %v435 = vrot.slane %v433, 1
  %v436 = vsel %vm248, %v431, %v435
  %v437 = vshrl.u32 %v190, 16
  %v439 = vor.u32 %v437, %v435
  %v441 = vshll.u32 %v191, 16
  %v443 = vrot.slane %v441, 1
  %v444 = vsel %vm248, %v439, %v443
  %v445 = vshrl.u32 %v191, 16
  %v447 = vor.u32 %v445, %v443
  %v449 = vshll.u32 %v192, 16
  %v451 = vrot.slane %v449, 1
  %v452 = vsel %vm248, %v447, %v451
  %v453 = vshrl.u32 %v192, 16
  %v455 = vor.u32 %v453, %v451
  %v457 = vshll.u32 %v193, 16
  %v459 = vrot.slane %v457, 1
  %v460 = vsel %vm248, %v455, %v459
  %v461 = vshrl.u32 %v193, 16
  %v463 = vor.u32 %v461, %v459
  %v465 = vshll.u32 %v194, 16
  %v467 = vrot.slane %v465, 1
  %v468 = vsel %vm248, %v463, %v467
  %v469 = vshrl.u32 %v194, 16
  %v471 = vor.u32 %v469, %v467
  %v473 = vshll.u32 %v195, 16
  %v475 = vrot.slane %v473, 1
  %v476 = vsel %vm248, %v471, %v475
  %v477 = vshrl.u32 %v195, 16
  %v479 = vor.u32 %v477, %v475
  %v481 = vshll.u32 %v196, 16
  %v483 = vrot.slane %v481, 1
  %v484 = vsel %vm248, %v479, %v483
  %v485 = vshrl.u32 %v196, 16
  %v487 = vor.u32 %v485, %v483
  %v489 = vshll.u32 %v197, 16
  %v491 = vrot.slane %v489, 1
  %v492 = vsel %vm248, %v487, %v491
  %v493 = vshrl.u32 %v197, 16
  %v495 = vor.u32 %v493, %v491
  %v497 = vshll.u32 %v198, 16
  %v499 = vrot.slane %v497, 1
  %v500 = vsel %vm248, %v495, %v499
  %v501 = vshrl.u32 %v198, 16
  %v503 = vor.u32 %v501, %v499
  %v505 = vshll.u32 %v199, 16
  %v507 = vrot.slane %v505, 1
  %v508 = vsel %vm248, %v503, %v507
  %v509 = vshrl.u32 %v199, 16
  %v511 = vor.u32 %v509, %v507
  %v513 = vshll.u32 %v200, 16
  %v515 = vrot.slane %v513, 1
  %v516 = vsel %vm248, %v511, %v515
  %v517 = vshrl.u32 %v200, 16
  %v519 = vor.u32 %v517, %v515
  %v521 = vshll.u32 %v201, 16
  %v523 = vrot.slane %v521, 1
  %v524 = vsel %vm248, %v519, %v523
  %v525 = vshrl.u32 %v201, 16
  %v527 = vor.u32 %v525, %v523
  %v529 = vshll.u32 %v202, 16
  %v531 = vrot.slane %v529, 1
  %v532 = vsel %vm248, %v527, %v531
  %v533 = vshrl.u32 %v202, 16
  %v535 = vor.u32 %v533, %v531
  %v537 = vshll.u32 %v203, 16
  %v539 = vrot.slane %v537, 1
  %v540 = vsel %vm248, %v535, %v539
  %v541 = vshrl.u32 %v203, 16
  %v543 = vor.u32 %v541, %v539
  %v545 = vshll.u32 %v204, 16
  %v547 = vrot.slane %v545, 1
  %v548 = vsel %vm248, %v543, %v547
  %v549 = vshrl.u32 %v204, 16
  %v551 = vor.u32 %v549, %v547
  %v553 = vshll.u32 %v205, 16
  %v555 = vrot.slane %v553, 1
  %v556 = vsel %vm248, %v551, %v555
  %v557 = vshrl.u32 %v205, 16
  %v559 = vor.u32 %v557, %v555
  %v561 = vshll.u32 %v206, 16
  %v563 = vrot.slane %v561, 1
  %v564 = vsel %vm248, %v559, %v563
  %v565 = vshrl.u32 %v206, 16
  %v567 = vor.u32 %v565, %v563
  %v569 = vshll.u32 %v207, 16
  %v571 = vrot.slane %v569, 1
  %v572 = vsel %vm248, %v567, %v571
  %v573 = vshrl.u32 %v207, 16
  %v575 = vor.u32 %v573, %v571
  %v577 = vshll.u32 %v208, 16
  %v579 = vrot.slane %v577, 1
  %v580 = vsel %vm248, %v575, %v579
  %v581 = vshrl.u32 %v208, 16
  %v583 = vor.u32 %v581, %v579
  %v585 = vshll.u32 %v209, 16
  %v587 = vrot.slane %v585, 1
  %v588 = vsel %vm248, %v583, %v587
  %v589 = vshrl.u32 %v209, 16
  %v591 = vor.u32 %v589, %v587
  %v593 = vshll.u32 %v210, 16
  %v595 = vrot.slane %v593, 1
  %v596 = vsel %vm248, %v591, %v595
  %v597 = vshrl.u32 %v210, 16
  %v599 = vor.u32 %v597, %v595
  %v601 = vshll.u32 %v211, 16
  %v603 = vrot.slane %v601, 1
  %v604 = vsel %vm248, %v599, %v603
  %v605 = vshrl.u32 %v211, 16
  %v607 = vor.u32 %v605, %v603
  %v609 = vshll.u32 %v212, 16
  %v611 = vrot.slane %v609, 1
  %v612 = vsel %vm248, %v607, %v611
  %v613 = vshrl.u32 %v212, 16
  %v615 = vor.u32 %v613, %v611
  %v617 = vshll.u32 %v213, 16
  %v619 = vrot.slane %v617, 1
  %v620 = vsel %vm248, %v615, %v619
  %v621 = vshrl.u32 %v213, 16
  %v623 = vor.u32 %v621, %v619
  %v625 = vshll.u32 %v214, 16
  %v627 = vrot.slane %v625, 1
  %v628 = vsel %vm248, %v623, %v627
  %v629 = vshrl.u32 %v214, 16
  %v631 = vor.u32 %v629, %v627
  %v633 = vshll.u32 %v215, 16
  %v635 = vrot.slane %v633, 1
  %v636 = vsel %vm248, %v631, %v635
  %v637 = vshrl.u32 %v215, 16
  %v639 = vor.u32 %v637, %v635
  %v641 = vshll.u32 %v216, 16
  %v643 = vrot.slane %v641, 1
  %v644 = vsel %vm248, %v639, %v643
  %v645 = vshrl.u32 %v216, 16
  %v647 = vor.u32 %v645, %v643
  %v649 = vshll.u32 %v217, 16
  %v651 = vrot.slane %v649, 1
  %v652 = vsel %vm248, %v647, %v651
  %v653 = vshrl.u32 %v217, 16
  %v655 = vor.u32 %v653, %v651
  %v657 = vshll.u32 %v218, 16
  %v659 = vrot.slane %v657, 1
  %v660 = vsel %vm248, %v655, %v659
  %v661 = vshrl.u32 %v218, 16
  %v663 = vor.u32 %v661, %v659
  %v665 = vshll.u32 %v219, 16
  %v667 = vrot.slane %v665, 1
  %v668 = vsel %vm248, %v663, %v667
  %v669 = vshrl.u32 %v219, 16
  %v671 = vor.u32 %v669, %v667
  %v673 = vshll.u32 %v220, 16
  %v675 = vrot.slane %v673, 1
  %v676 = vsel %vm248, %v671, %v675
  %v677 = vshrl.u32 %v220, 16
  %v679 = vor.u32 %v677, %v675
  %v681 = vshll.u32 %v221, 16
  %v683 = vrot.slane %v681, 1
  %v684 = vsel %vm248, %v679, %v683
  %v685 = vshrl.u32 %v221, 16
  %v687 = vor.u32 %v685, %v683
  %v689 = vshll.u32 %v222, 16
  %v691 = vrot.slane %v689, 1
  %v692 = vsel %vm248, %v687, %v691
  %v693 = vshrl.u32 %v222, 16
  %v695 = vor.u32 %v693, %v691
  %v697 = vshll.u32 %v223, 16
  %v699 = vrot.slane %v697, 1
  %v700 = vsel %vm248, %v695, %v699
  %v701 = vshrl.u32 %v223, 16
  %v703 = vor.u32 %v701, %v699
  %v705 = vshll.u32 %v224, 16
  %v707 = vrot.slane %v705, 1
  %v708 = vsel %vm248, %v703, %v707
  %v709 = vshrl.u32 %v224, 16
  %v711 = vor.u32 %v709, %v707
  %v713 = vshll.u32 %v225, 16
  %v715 = vrot.slane %v713, 1
  %v716 = vsel %vm248, %v711, %v715
  %v717 = vshrl.u32 %v225, 16
  %v719 = vor.u32 %v717, %v715
  %v721 = vshll.u32 %v226, 16
  %v723 = vrot.slane %v721, 1
  %v724 = vsel %vm248, %v719, %v723
  %v725 = vshrl.u32 %v226, 16
  %v727 = vor.u32 %v725, %v723
  %v729 = vshll.u32 %v227, 16
  %v731 = vrot.slane %v729, 1
  %v732 = vsel %vm248, %v727, %v731
  %v733 = vshrl.u32 %v227, 16
  %v735 = vor.u32 %v733, %v731
  %v737 = vshll.u32 %v228, 16
  %v739 = vrot.slane %v737, 1
  %v740 = vsel %vm248, %v735, %v739
  %v741 = vshrl.u32 %v228, 16
  %v743 = vor.u32 %v741, %v739
  %v745 = vshll.u32 %v229, 16
  %v747 = vrot.slane %v745, 1
  %v748 = vsel %vm248, %v743, %v747
  %v749 = vshrl.u32 %v229, 16
  %v751 = vor.u32 %v749, %v747
  %v753 = vshll.u32 %v230, 16
  %v755 = vrot.slane %v753, 1
  %v756 = vsel %vm248, %v751, %v755
  %v757 = vshrl.u32 %v230, 16
  %v759 = vor.u32 %v757, %v755
  %v768 = vunpack.c.l.b16 %v240
  %v769 = vunpack.c.l.b16 %v241
  %v770 = vunpack.c.l.b16 %v242
  %v771 = vunpack.c.l.b16 %v243
  %v772 = vunpack.c.l.b16 %v244
  %v773 = vunpack.c.l.b16 %v245
  %v774 = vunpack.c.l.b16 %v246
  %v775 = vunpack.c.l.b16 %v247
  %v776 = vpack.c.b16 %v769, %v768
  %v777 = vpack.c.b16 %v771, %v770
  %v778 = vpack.c.b16 %v773, %v772
  %v779 = vpack.c.b16 %v775, %v774
  %vm784 = vcmask 523264
  %v786 = vsel %vm784, %v260, 0
  %v789 = vsel %vm784, %v268, 0
  %v792 = vsel %vm784, %v276, 0
  %v795 = vsel %vm784, %v284, 0
  %v798 = vsel %vm784, %v292, 0
  %v801 = vsel %vm784, %v300, 0
  %v804 = vsel %vm784, %v308, 0
  %v807 = vsel %vm784, %v316, 0
  %v810 = vsel %vm784, %v324, 0
  %v813 = vsel %vm784, %v332, 0
  %v816 = vsel %vm784, %v340, 0
  %v819 = vsel %vm784, %v348, 0
  %v822 = vsel %vm784, %v356, 0
  %v825 = vsel %vm784, %v364, 0
  %v828 = vsel %vm784, %v372, 0
  %v831 = vsel %vm784, %v380, 0
  %v834 = vsel %vm784, %v388, 0
  %v837 = vsel %vm784, %v396, 0
  %v840 = vsel %vm784, %v404, 0
  %v843 = vsel %vm784, %v412, 0
  %v846 = vsel %vm784, %v420, 0
  %v849 = vsel %vm784, %v428, 0
  %v852 = vsel %vm784, %v436, 0
  %v855 = vsel %vm784, %v444, 0
  %v858 = vsel %vm784, %v452, 0
  %v861 = vsel %vm784, %v460, 0
  %v864 = vsel %vm784, %v468, 0
  %v867 = vsel %vm784, %v476, 0
  %v870 = vsel %vm784, %v484, 0
  %v873 = vsel %vm784, %v492, 0
  %v876 = vsel %vm784, %v500, 0
  %v879 = vsel %vm784, %v508, 0
  %v882 = vsel %vm784, %v516, 0
  %v885 = vsel %vm784, %v524, 0
  %v888 = vsel %vm784, %v532, 0
  %v891 = vsel %vm784, %v540, 0
  %v894 = vsel %vm784, %v548, 0
  %v897 = vsel %vm784, %v556, 0
  %v900 = vsel %vm784, %v564, 0
  %v903 = vsel %vm784, %v572, 0
  %v906 = vsel %vm784, %v580, 0
  %v909 = vsel %vm784, %v588, 0
  %v912 = vsel %vm784, %v596, 0
  %v915 = vsel %vm784, %v604, 0
  %v918 = vsel %vm784, %v612, 0
  %v921 = vsel %vm784, %v620, 0
  %v924 = vsel %vm784, %v628, 0
  %v927 = vsel %vm784, %v636, 0
  %v930 = vsel %vm784, %v644, 0
  %v933 = vsel %vm784, %v652, 0
  %v936 = vsel %vm784, %v660, 0
  %v939 = vsel %vm784, %v668, 0
  %v942 = vsel %vm784, %v676, 0
  %v945 = vsel %vm784, %v684, 0
  %v948 = vsel %vm784, %v692, 0
  %v951 = vsel %vm784, %v700, 0
  %v954 = vsel %vm784, %v708, 0
  %v957 = vsel %vm784, %v716, 0
  %v960 = vsel %vm784, %v724, 0
  %v963 = vsel %vm784, %v732, 0
  %v966 = vsel %vm784, %v740, 0
  %v969 = vsel %vm784, %v748, 0
  %v972 = vsel %vm784, %v756, 0
  %v975 = vsel %vm784, %v759, 0
  %977 = vmatprep.subr.bf16.mxu0 0
  %978 = vmatpush1.bf16.msra.mxu0 %v776
  %979 = vmatprep.subr.bf16.mxu0 0
  %980 = vmatpush1.bf16.msra.mxu0 %v777
  %981 = vmatprep.subr.bf16.mxu0 0
  %982 = vmatpush1.bf16.msra.mxu0 %v778
  %983 = vmatprep.subr.bf16.mxu0 0
  %984 = vmatpush1.bf16.msra.mxu0 %v779
  %985 = vmatprep.subr.bf16.mxu0 0
  %986 = vmatpush1.bf16.msra.mxu0 0
  %987 = vmatprep.subr.bf16.mxu0 0
  %988 = vmatpush1.bf16.msra.mxu0 0
  %989 = vmatprep.subr.bf16.mxu0 0
  %990 = vmatpush1.bf16.msra.mxu0 0
  %991 = vmatprep.subr.bf16.mxu0 0
  %992 = vmatpush1.bf16.msra.mxu0 0
  %993 = vmatprep.subr.bf16.mxu0 0
  %994 = vmatpush1.bf16.msra.mxu0 0
  %995 = vmatprep.subr.bf16.mxu0 0
  %996 = vmatpush1.bf16.msra.mxu0 0
  %997 = vmatprep.subr.bf16.mxu0 0
  %998 = vmatpush1.bf16.msra.mxu0 0
  %999 = vmatprep.subr.bf16.mxu0 0
  %1000 = vmatpush1.bf16.msra.mxu0 0
  %1001 = vmatprep.subr.bf16.mxu0 0
  %1002 = vmatpush1.bf16.msra.mxu0 0
  %1003 = vmatprep.subr.bf16.mxu0 0
  %1004 = vmatpush1.bf16.msra.mxu0 0
  %1005 = vmatprep.subr.bf16.mxu0 0
  %1006 = vmatpush1.bf16.msra.mxu0 0
  %1007 = vmatprep.subr.bf16.mxu0 0
  %1008 = vmatpush1.bf16.msra.mxu0 0
  %1009 = vmatprep.mubr.bf16.mxu0 0
  %1010 = vmatmul.mubr.bf16.gmra.mrb[0].mxu0 %v786
  %v1011 = vpop.f32.mrb[0].mxu0
  %v1012 = vadd.f32 0.0, %v1011
  %v1013 = vpop.f32.mrb[0].mxu0
  %v1014 = vpop.f32.mrb[0].mxu0
  %v1015 = vadd.f32 0.0, %v1014
  %v1016 = vpop.f32.mrb[0].mxu0
  %1017 = vmatprep.mubr.bf16.mxu0 0
  %1018 = vmatmul.mubr.bf16.gmra.mrb[0].mxu0 %v789
  %v1019 = vpop.f32.mrb[0].mxu0
  %v1020 = vadd.f32 0.0, %v1019
  %v1021 = vpop.f32.mrb[0].mxu0
  %v1022 = vpop.f32.mrb[0].mxu0
  %v1023 = vadd.f32 0.0, %v1022
  %v1024 = vpop.f32.mrb[0].mxu0
  %1025 = vmatprep.mubr.bf16.mxu0 0
  %1026 = vmatmul.mubr.bf16.gmra.mrb[0].mxu0 %v792
  %v1027 = vpop.f32.mrb[0].mxu0
  %v1028 = vadd.f32 0.0, %v1027
  %v1029 = vpop.f32.mrb[0].mxu0
  %v1030 = vpop.f32.mrb[0].mxu0
  %v1031 = vadd.f32 0.0, %v1030
  %v1032 = vpop.f32.mrb[0].mxu0
  %1033 = vmatprep.mubr.bf16.mxu0 0
  %1034 = vmatmul.mubr.bf16.gmra.mrb[0].mxu0 %v795
  %v1035 = vpop.f32.mrb[0].mxu0
  %v1036 = vadd.f32 0.0, %v1035
  %v1037 = vpop.f32.mrb[0].mxu0
  %v1038 = vpop.f32.mrb[0].mxu0
  %v1039 = vadd.f32 0.0, %v1038
  %v1040 = vpop.f32.mrb[0].mxu0
  %1041 = vmatprep.mubr.bf16.mxu0 0
  %1042 = vmatmul.mubr.bf16.gmra.mrb[0].mxu0 %v798
  %v1043 = vpop.f32.mrb[0].mxu0
  %v1044 = vadd.f32 0.0, %v1043
  %v1045 = vpop.f32.mrb[0].mxu0
  %v1046 = vpop.f32.mrb[0].mxu0
  %v1047 = vadd.f32 0.0, %v1046
  %v1048 = vpop.f32.mrb[0].mxu0
  %1049 = vmatprep.mubr.bf16.mxu0 0
  %1050 = vmatmul.mubr.bf16.gmra.mrb[0].mxu0 %v801
  %v1051 = vpop.f32.mrb[0].mxu0
  %v1052 = vadd.f32 0.0, %v1051
  %v1053 = vpop.f32.mrb[0].mxu0
  %v1054 = vpop.f32.mrb[0].mxu0
  %v1055 = vadd.f32 0.0, %v1054
  %v1056 = vpop.f32.mrb[0].mxu0
  %1057 = vmatprep.mubr.bf16.mxu0 0
  %1058 = vmatmul.mubr.bf16.gmra.mrb[0].mxu0 %v804
  %v1059 = vpop.f32.mrb[0].mxu0
  %v1060 = vadd.f32 0.0, %v1059
  %v1061 = vpop.f32.mrb[0].mxu0
  %v1062 = vpop.f32.mrb[0].mxu0
  %v1063 = vadd.f32 0.0, %v1062
  %v1064 = vpop.f32.mrb[0].mxu0
  %1065 = vmatprep.mubr.bf16.mxu0 0
  %1066 = vmatmul.mubr.bf16.gmra.mrb[0].mxu0 %v807
  %v1067 = vpop.f32.mrb[0].mxu0
  %v1068 = vadd.f32 0.0, %v1067
  %v1069 = vpop.f32.mrb[0].mxu0
  %v1070 = vpop.f32.mrb[0].mxu0
  %v1071 = vadd.f32 0.0, %v1070
  %v1072 = vpop.f32.mrb[0].mxu0
  %1073 = vmatprep.mubr.bf16.mxu0 0
  %1074 = vmatmul.mubr.bf16.gmra.mrb[0].mxu0 %v810
  %v1075 = vpop.f32.mrb[0].mxu0
  %v1076 = vadd.f32 0.0, %v1075
  %v1077 = vpop.f32.mrb[0].mxu0
  %v1078 = vpop.f32.mrb[0].mxu0
  %v1079 = vadd.f32 0.0, %v1078
  %v1080 = vpop.f32.mrb[0].mxu0
  %1081 = vmatprep.mubr.bf16.mxu0 0
  %1082 = vmatmul.mubr.bf16.gmra.mrb[0].mxu0 %v813
  %v1083 = vpop.f32.mrb[0].mxu0
  %v1084 = vadd.f32 0.0, %v1083
  %v1085 = vpop.f32.mrb[0].mxu0
  %v1086 = vpop.f32.mrb[0].mxu0
  %v1087 = vadd.f32 0.0, %v1086
  %v1088 = vpop.f32.mrb[0].mxu0
  %1089 = vmatprep.mubr.bf16.mxu0 0
  %1090 = vmatmul.mubr.bf16.gmra.mrb[0].mxu0 %v816
  %v1091 = vpop.f32.mrb[0].mxu0
  %v1092 = vadd.f32 0.0, %v1091
  %v1093 = vpop.f32.mrb[0].mxu0
  %v1094 = vpop.f32.mrb[0].mxu0
  %v1095 = vadd.f32 0.0, %v1094
  %v1096 = vpop.f32.mrb[0].mxu0
  %1097 = vmatprep.mubr.bf16.mxu0 0
  %1098 = vmatmul.mubr.bf16.gmra.mrb[0].mxu0 %v819
  %v1099 = vpop.f32.mrb[0].mxu0
  %v1100 = vadd.f32 0.0, %v1099
  %v1101 = vpop.f32.mrb[0].mxu0
  %v1102 = vpop.f32.mrb[0].mxu0
  %v1103 = vadd.f32 0.0, %v1102
  %v1104 = vpop.f32.mrb[0].mxu0
  %1105 = vmatprep.mubr.bf16.mxu0 0
  %1106 = vmatmul.mubr.bf16.gmra.mrb[0].mxu0 %v822
  %v1107 = vpop.f32.mrb[0].mxu0
  %v1108 = vadd.f32 0.0, %v1107
  %v1109 = vpop.f32.mrb[0].mxu0
  %v1110 = vpop.f32.mrb[0].mxu0
  %v1111 = vadd.f32 0.0, %v1110
  %v1112 = vpop.f32.mrb[0].mxu0
  %1113 = vmatprep.mubr.bf16.mxu0 0
  %1114 = vmatmul.mubr.bf16.gmra.mrb[0].mxu0 %v825
  %v1115 = vpop.f32.mrb[0].mxu0
  %v1116 = vadd.f32 0.0, %v1115
  %v1117 = vpop.f32.mrb[0].mxu0
  %v1118 = vpop.f32.mrb[0].mxu0
  %v1119 = vadd.f32 0.0, %v1118
  %v1120 = vpop.f32.mrb[0].mxu0
  %1121 = vmatprep.mubr.bf16.mxu0 0
  %1122 = vmatmul.mubr.bf16.gmra.mrb[0].mxu0 %v828
  %v1123 = vpop.f32.mrb[0].mxu0
  %v1124 = vadd.f32 0.0, %v1123
  %v1125 = vpop.f32.mrb[0].mxu0
  %v1126 = vpop.f32.mrb[0].mxu0
  %v1127 = vadd.f32 0.0, %v1126
  %v1128 = vpop.f32.mrb[0].mxu0
  %1129 = vmatprep.mubr.bf16.mxu0 0
  %1130 = vmatmul.mubr.bf16.gmra.mrb[0].mxu0 %v831
  %v1131 = vpop.f32.mrb[0].mxu0
  %v1132 = vadd.f32 0.0, %v1131
  %v1133 = vpop.f32.mrb[0].mxu0
  %v1134 = vpop.f32.mrb[0].mxu0
  %v1135 = vadd.f32 0.0, %v1134
  %v1136 = vpop.f32.mrb[0].mxu0
  %1137 = vmatprep.mubr.bf16.mxu0 0
  %1138 = vmatmul.mubr.bf16.gmra.mrb[0].mxu0 %v834
  %v1139 = vpop.f32.mrb[0].mxu0
  %v1140 = vadd.f32 0.0, %v1139
  %v1141 = vpop.f32.mrb[0].mxu0
  %v1142 = vpop.f32.mrb[0].mxu0
  %v1143 = vadd.f32 0.0, %v1142
  %v1144 = vpop.f32.mrb[0].mxu0
  %1145 = vmatprep.mubr.bf16.mxu0 0
  %1146 = vmatmul.mubr.bf16.gmra.mrb[0].mxu0 %v837
  %v1147 = vpop.f32.mrb[0].mxu0
  %v1148 = vadd.f32 0.0, %v1147
  %v1149 = vpop.f32.mrb[0].mxu0
  %v1150 = vpop.f32.mrb[0].mxu0
  %v1151 = vadd.f32 0.0, %v1150
  %v1152 = vpop.f32.mrb[0].mxu0
  %1153 = vmatprep.mubr.bf16.mxu0 0
  %1154 = vmatmul.mubr.bf16.gmra.mrb[0].mxu0 %v840
  %v1155 = vpop.f32.mrb[0].mxu0
  %v1156 = vadd.f32 0.0, %v1155
  %v1157 = vpop.f32.mrb[0].mxu0
  %v1158 = vpop.f32.mrb[0].mxu0
  %v1159 = vadd.f32 0.0, %v1158
  %v1160 = vpop.f32.mrb[0].mxu0
  %1161 = vmatprep.mubr.bf16.mxu0 0
  %1162 = vmatmul.mubr.bf16.gmra.mrb[0].mxu0 %v843
  %v1163 = vpop.f32.mrb[0].mxu0
  %v1164 = vadd.f32 0.0, %v1163
  %v1165 = vpop.f32.mrb[0].mxu0
  %v1166 = vpop.f32.mrb[0].mxu0
  %v1167 = vadd.f32 0.0, %v1166
  %v1168 = vpop.f32.mrb[0].mxu0
  %1169 = vmatprep.mubr.bf16.mxu0 0
  %1170 = vmatmul.mubr.bf16.gmra.mrb[0].mxu0 %v846
  %v1171 = vpop.f32.mrb[0].mxu0
  %v1172 = vadd.f32 0.0, %v1171
  %v1173 = vpop.f32.mrb[0].mxu0
  %v1174 = vpop.f32.mrb[0].mxu0
  %v1175 = vadd.f32 0.0, %v1174
  %v1176 = vpop.f32.mrb[0].mxu0
  %1177 = vmatprep.mubr.bf16.mxu0 0
  %1178 = vmatmul.mubr.bf16.gmra.mrb[0].mxu0 %v849
  %v1179 = vpop.f32.mrb[0].mxu0
  %v1180 = vadd.f32 0.0, %v1179
  %v1181 = vpop.f32.mrb[0].mxu0
  %v1182 = vpop.f32.mrb[0].mxu0
  %v1183 = vadd.f32 0.0, %v1182
  %v1184 = vpop.f32.mrb[0].mxu0
  %1185 = vmatprep.mubr.bf16.mxu0 0
  %1186 = vmatmul.mubr.bf16.gmra.mrb[0].mxu0 %v852
  %v1187 = vpop.f32.mrb[0].mxu0
  %v1188 = vadd.f32 0.0, %v1187
  %v1189 = vpop.f32.mrb[0].mxu0
  %v1190 = vpop.f32.mrb[0].mxu0
  %v1191 = vadd.f32 0.0, %v1190
  %v1192 = vpop.f32.mrb[0].mxu0
  %1193 = vmatprep.mubr.bf16.mxu0 0
  %1194 = vmatmul.mubr.bf16.gmra.mrb[0].mxu0 %v855
  %v1195 = vpop.f32.mrb[0].mxu0
  %v1196 = vadd.f32 0.0, %v1195
  %v1197 = vpop.f32.mrb[0].mxu0
  %v1198 = vpop.f32.mrb[0].mxu0
  %v1199 = vadd.f32 0.0, %v1198
  %v1200 = vpop.f32.mrb[0].mxu0
  %1201 = vmatprep.mubr.bf16.mxu0 0
  %1202 = vmatmul.mubr.bf16.gmra.mrb[0].mxu0 %v858
  %v1203 = vpop.f32.mrb[0].mxu0
  %v1204 = vadd.f32 0.0, %v1203
  %v1205 = vpop.f32.mrb[0].mxu0
  %v1206 = vpop.f32.mrb[0].mxu0
  %v1207 = vadd.f32 0.0, %v1206
  %v1208 = vpop.f32.mrb[0].mxu0
  %1209 = vmatprep.mubr.bf16.mxu0 0
  %1210 = vmatmul.mubr.bf16.gmra.mrb[0].mxu0 %v861
  %v1211 = vpop.f32.mrb[0].mxu0
  %v1212 = vadd.f32 0.0, %v1211
  %v1213 = vpop.f32.mrb[0].mxu0
  %v1214 = vpop.f32.mrb[0].mxu0
  %v1215 = vadd.f32 0.0, %v1214
  %v1216 = vpop.f32.mrb[0].mxu0
  %1217 = vmatprep.mubr.bf16.mxu0 0
  %1218 = vmatmul.mubr.bf16.gmra.mrb[0].mxu0 %v864
  %v1219 = vpop.f32.mrb[0].mxu0
  %v1220 = vadd.f32 0.0, %v1219
  %v1221 = vpop.f32.mrb[0].mxu0
  %v1222 = vpop.f32.mrb[0].mxu0
  %v1223 = vadd.f32 0.0, %v1222
  %v1224 = vpop.f32.mrb[0].mxu0
  %1225 = vmatprep.mubr.bf16.mxu0 0
  %1226 = vmatmul.mubr.bf16.gmra.mrb[0].mxu0 %v867
  %v1227 = vpop.f32.mrb[0].mxu0
  %v1228 = vadd.f32 0.0, %v1227
  %v1229 = vpop.f32.mrb[0].mxu0
  %v1230 = vpop.f32.mrb[0].mxu0
  %v1231 = vadd.f32 0.0, %v1230
  %v1232 = vpop.f32.mrb[0].mxu0
  %1233 = vmatprep.mubr.bf16.mxu0 0
  %1234 = vmatmul.mubr.bf16.gmra.mrb[0].mxu0 %v870
  %v1235 = vpop.f32.mrb[0].mxu0
  %v1236 = vadd.f32 0.0, %v1235
  %v1237 = vpop.f32.mrb[0].mxu0
  %v1238 = vpop.f32.mrb[0].mxu0
  %v1239 = vadd.f32 0.0, %v1238
  %v1240 = vpop.f32.mrb[0].mxu0
  %1241 = vmatprep.mubr.bf16.mxu0 0
  %1242 = vmatmul.mubr.bf16.gmra.mrb[0].mxu0 %v873
  %v1243 = vpop.f32.mrb[0].mxu0
  %v1244 = vadd.f32 0.0, %v1243
  %v1245 = vpop.f32.mrb[0].mxu0
  %v1246 = vpop.f32.mrb[0].mxu0
  %v1247 = vadd.f32 0.0, %v1246
  %v1248 = vpop.f32.mrb[0].mxu0
  %1249 = vmatprep.mubr.bf16.mxu0 0
  %1250 = vmatmul.mubr.bf16.gmra.mrb[0].mxu0 %v876
  %v1251 = vpop.f32.mrb[0].mxu0
  %v1252 = vadd.f32 0.0, %v1251
  %v1253 = vpop.f32.mrb[0].mxu0
  %v1254 = vpop.f32.mrb[0].mxu0
  %v1255 = vadd.f32 0.0, %v1254
  %v1256 = vpop.f32.mrb[0].mxu0
  %1257 = vmatprep.mubr.bf16.mxu0 0
  %1258 = vmatmul.mubr.bf16.gmra.mrb[0].mxu0 %v879
  %v1259 = vpop.f32.mrb[0].mxu0
  %v1260 = vadd.f32 0.0, %v1259
  %v1261 = vpop.f32.mrb[0].mxu0
  %v1262 = vpop.f32.mrb[0].mxu0
  %v1263 = vadd.f32 0.0, %v1262
  %v1264 = vpop.f32.mrb[0].mxu0
  %1265 = vmatprep.mubr.bf16.mxu0 0
  %1266 = vmatmul.mubr.bf16.gmra.mrb[0].mxu0 %v882
  %v1267 = vpop.f32.mrb[0].mxu0
  %v1268 = vadd.f32 0.0, %v1267
  %v1269 = vpop.f32.mrb[0].mxu0
  %v1270 = vpop.f32.mrb[0].mxu0
  %v1271 = vadd.f32 0.0, %v1270
  %v1272 = vpop.f32.mrb[0].mxu0
  %1273 = vmatprep.mubr.bf16.mxu0 0
  %1274 = vmatmul.mubr.bf16.gmra.mrb[0].mxu0 %v885
  %v1275 = vpop.f32.mrb[0].mxu0
  %v1276 = vadd.f32 0.0, %v1275
  %v1277 = vpop.f32.mrb[0].mxu0
  %v1278 = vpop.f32.mrb[0].mxu0
  %v1279 = vadd.f32 0.0, %v1278
  %v1280 = vpop.f32.mrb[0].mxu0
  %1281 = vmatprep.mubr.bf16.mxu0 0
  %1282 = vmatmul.mubr.bf16.gmra.mrb[0].mxu0 %v888
  %v1283 = vpop.f32.mrb[0].mxu0
  %v1284 = vadd.f32 0.0, %v1283
  %v1285 = vpop.f32.mrb[0].mxu0
  %v1286 = vpop.f32.mrb[0].mxu0
  %v1287 = vadd.f32 0.0, %v1286
  %v1288 = vpop.f32.mrb[0].mxu0
  %1289 = vmatprep.mubr.bf16.mxu0 0
  %1290 = vmatmul.mubr.bf16.gmra.mrb[0].mxu0 %v891
  %v1291 = vpop.f32.mrb[0].mxu0
  %v1292 = vadd.f32 0.0, %v1291
  %v1293 = vpop.f32.mrb[0].mxu0
  %v1294 = vpop.f32.mrb[0].mxu0
  %v1295 = vadd.f32 0.0, %v1294
  %v1296 = vpop.f32.mrb[0].mxu0
  %1297 = vmatprep.mubr.bf16.mxu0 0
  %1298 = vmatmul.mubr.bf16.gmra.mrb[0].mxu0 %v894
  %v1299 = vpop.f32.mrb[0].mxu0
  %v1300 = vadd.f32 0.0, %v1299
  %v1301 = vpop.f32.mrb[0].mxu0
  %v1302 = vpop.f32.mrb[0].mxu0
  %v1303 = vadd.f32 0.0, %v1302
  %v1304 = vpop.f32.mrb[0].mxu0
  %1305 = vmatprep.mubr.bf16.mxu0 0
  %1306 = vmatmul.mubr.bf16.gmra.mrb[0].mxu0 %v897
  %v1307 = vpop.f32.mrb[0].mxu0
  %v1308 = vadd.f32 0.0, %v1307
  %v1309 = vpop.f32.mrb[0].mxu0
  %v1310 = vpop.f32.mrb[0].mxu0
  %v1311 = vadd.f32 0.0, %v1310
  %v1312 = vpop.f32.mrb[0].mxu0
  %1313 = vmatprep.mubr.bf16.mxu0 0
  %1314 = vmatmul.mubr.bf16.gmra.mrb[0].mxu0 %v900
  %v1315 = vpop.f32.mrb[0].mxu0
  %v1316 = vadd.f32 0.0, %v1315
  %v1317 = vpop.f32.mrb[0].mxu0
  %v1318 = vpop.f32.mrb[0].mxu0
  %v1319 = vadd.f32 0.0, %v1318
  %v1320 = vpop.f32.mrb[0].mxu0
  %1321 = vmatprep.mubr.bf16.mxu0 0
  %1322 = vmatmul.mubr.bf16.gmra.mrb[0].mxu0 %v903
  %v1323 = vpop.f32.mrb[0].mxu0
  %v1324 = vadd.f32 0.0, %v1323
  %v1325 = vpop.f32.mrb[0].mxu0
  %v1326 = vpop.f32.mrb[0].mxu0
  %v1327 = vadd.f32 0.0, %v1326
  %v1328 = vpop.f32.mrb[0].mxu0
  %1329 = vmatprep.mubr.bf16.mxu0 0
  %1330 = vmatmul.mubr.bf16.gmra.mrb[0].mxu0 %v906
  %v1331 = vpop.f32.mrb[0].mxu0
  %v1332 = vadd.f32 0.0, %v1331
  %v1333 = vpop.f32.mrb[0].mxu0
  %v1334 = vpop.f32.mrb[0].mxu0
  %v1335 = vadd.f32 0.0, %v1334
  %v1336 = vpop.f32.mrb[0].mxu0
  %1337 = vmatprep.mubr.bf16.mxu0 0
  %1338 = vmatmul.mubr.bf16.gmra.mrb[0].mxu0 %v909
  %v1339 = vpop.f32.mrb[0].mxu0
  %v1340 = vadd.f32 0.0, %v1339
  %v1341 = vpop.f32.mrb[0].mxu0
  %v1342 = vpop.f32.mrb[0].mxu0
  %v1343 = vadd.f32 0.0, %v1342
  %v1344 = vpop.f32.mrb[0].mxu0
  %1345 = vmatprep.mubr.bf16.mxu0 0
  %1346 = vmatmul.mubr.bf16.gmra.mrb[0].mxu0 %v912
  %v1347 = vpop.f32.mrb[0].mxu0
  %v1348 = vadd.f32 0.0, %v1347
  %v1349 = vpop.f32.mrb[0].mxu0
  %v1350 = vpop.f32.mrb[0].mxu0
  %v1351 = vadd.f32 0.0, %v1350
  %v1352 = vpop.f32.mrb[0].mxu0
  %1353 = vmatprep.mubr.bf16.mxu0 0
  %1354 = vmatmul.mubr.bf16.gmra.mrb[0].mxu0 %v915
  %v1355 = vpop.f32.mrb[0].mxu0
  %v1356 = vadd.f32 0.0, %v1355
  %v1357 = vpop.f32.mrb[0].mxu0
  %v1358 = vpop.f32.mrb[0].mxu0
  %v1359 = vadd.f32 0.0, %v1358
  %v1360 = vpop.f32.mrb[0].mxu0
  %1361 = vmatprep.mubr.bf16.mxu0 0
  %1362 = vmatmul.mubr.bf16.gmra.mrb[0].mxu0 %v918
  %v1363 = vpop.f32.mrb[0].mxu0
  %v1364 = vadd.f32 0.0, %v1363
  %v1365 = vpop.f32.mrb[0].mxu0
  %v1366 = vpop.f32.mrb[0].mxu0
  %v1367 = vadd.f32 0.0, %v1366
  %v1368 = vpop.f32.mrb[0].mxu0
  %1369 = vmatprep.mubr.bf16.mxu0 0
  %1370 = vmatmul.mubr.bf16.gmra.mrb[0].mxu0 %v921
  %v1371 = vpop.f32.mrb[0].mxu0
  %v1372 = vadd.f32 0.0, %v1371
  %v1373 = vpop.f32.mrb[0].mxu0
  %v1374 = vpop.f32.mrb[0].mxu0
  %v1375 = vadd.f32 0.0, %v1374
  %v1376 = vpop.f32.mrb[0].mxu0
  %1377 = vmatprep.mubr.bf16.mxu0 0
  %1378 = vmatmul.mubr.bf16.gmra.mrb[0].mxu0 %v924
  %v1379 = vpop.f32.mrb[0].mxu0
  %v1380 = vadd.f32 0.0, %v1379
  %v1381 = vpop.f32.mrb[0].mxu0
  %v1382 = vpop.f32.mrb[0].mxu0
  %v1383 = vadd.f32 0.0, %v1382
  %v1384 = vpop.f32.mrb[0].mxu0
  %1385 = vmatprep.mubr.bf16.mxu0 0
  %1386 = vmatmul.mubr.bf16.gmra.mrb[0].mxu0 %v927
  %v1387 = vpop.f32.mrb[0].mxu0
  %v1388 = vadd.f32 0.0, %v1387
  %v1389 = vpop.f32.mrb[0].mxu0
  %v1390 = vpop.f32.mrb[0].mxu0
  %v1391 = vadd.f32 0.0, %v1390
  %v1392 = vpop.f32.mrb[0].mxu0
  %1393 = vmatprep.mubr.bf16.mxu0 0
  %1394 = vmatmul.mubr.bf16.gmra.mrb[0].mxu0 %v930
  %v1395 = vpop.f32.mrb[0].mxu0
  %v1396 = vadd.f32 0.0, %v1395
  %v1397 = vpop.f32.mrb[0].mxu0
  %v1398 = vpop.f32.mrb[0].mxu0
  %v1399 = vadd.f32 0.0, %v1398
  %v1400 = vpop.f32.mrb[0].mxu0
  %1401 = vmatprep.mubr.bf16.mxu0 0
  %1402 = vmatmul.mubr.bf16.gmra.mrb[0].mxu0 %v933
  %v1403 = vpop.f32.mrb[0].mxu0
  %v1404 = vadd.f32 0.0, %v1403
  %v1405 = vpop.f32.mrb[0].mxu0
  %v1406 = vpop.f32.mrb[0].mxu0
  %v1407 = vadd.f32 0.0, %v1406
  %v1408 = vpop.f32.mrb[0].mxu0
  %1409 = vmatprep.mubr.bf16.mxu0 0
  %1410 = vmatmul.mubr.bf16.gmra.mrb[0].mxu0 %v936
  %v1411 = vpop.f32.mrb[0].mxu0
  %v1412 = vadd.f32 0.0, %v1411
  %v1413 = vpop.f32.mrb[0].mxu0
  %v1414 = vpop.f32.mrb[0].mxu0
  %v1415 = vadd.f32 0.0, %v1414
  %v1416 = vpop.f32.mrb[0].mxu0
  %1417 = vmatprep.mubr.bf16.mxu0 0
  %1418 = vmatmul.mubr.bf16.gmra.mrb[0].mxu0 %v939
  %v1419 = vpop.f32.mrb[0].mxu0
  %v1420 = vadd.f32 0.0, %v1419
  %v1421 = vpop.f32.mrb[0].mxu0
  %v1422 = vpop.f32.mrb[0].mxu0
  %v1423 = vadd.f32 0.0, %v1422
  %v1424 = vpop.f32.mrb[0].mxu0
  %1425 = vmatprep.mubr.bf16.mxu0 0
  %1426 = vmatmul.mubr.bf16.gmra.mrb[0].mxu0 %v942
  %v1427 = vpop.f32.mrb[0].mxu0
  %v1428 = vadd.f32 0.0, %v1427
  %v1429 = vpop.f32.mrb[0].mxu0
  %v1430 = vpop.f32.mrb[0].mxu0
  %v1431 = vadd.f32 0.0, %v1430
  %v1432 = vpop.f32.mrb[0].mxu0
  %1433 = vmatprep.mubr.bf16.mxu0 0
  %1434 = vmatmul.mubr.bf16.gmra.mrb[0].mxu0 %v945
  %v1435 = vpop.f32.mrb[0].mxu0
  %v1436 = vadd.f32 0.0, %v1435
  %v1437 = vpop.f32.mrb[0].mxu0
  %v1438 = vpop.f32.mrb[0].mxu0
  %v1439 = vadd.f32 0.0, %v1438
  %v1440 = vpop.f32.mrb[0].mxu0
  %1441 = vmatprep.mubr.bf16.mxu0 0
  %1442 = vmatmul.mubr.bf16.gmra.mrb[0].mxu0 %v948
  %v1443 = vpop.f32.mrb[0].mxu0
  %v1444 = vadd.f32 0.0, %v1443
  %v1445 = vpop.f32.mrb[0].mxu0
  %v1446 = vpop.f32.mrb[0].mxu0
  %v1447 = vadd.f32 0.0, %v1446
  %v1448 = vpop.f32.mrb[0].mxu0
  %1449 = vmatprep.mubr.bf16.mxu0 0
  %1450 = vmatmul.mubr.bf16.gmra.mrb[0].mxu0 %v951
  %v1451 = vpop.f32.mrb[0].mxu0
  %v1452 = vadd.f32 0.0, %v1451
  %v1453 = vpop.f32.mrb[0].mxu0
  %v1454 = vpop.f32.mrb[0].mxu0
  %v1455 = vadd.f32 0.0, %v1454
  %v1456 = vpop.f32.mrb[0].mxu0
  %1457 = vmatprep.mubr.bf16.mxu0 0
  %1458 = vmatmul.mubr.bf16.gmra.mrb[0].mxu0 %v954
  %v1459 = vpop.f32.mrb[0].mxu0
  %v1460 = vadd.f32 0.0, %v1459
  %v1461 = vpop.f32.mrb[0].mxu0
  %v1462 = vpop.f32.mrb[0].mxu0
  %v1463 = vadd.f32 0.0, %v1462
  %v1464 = vpop.f32.mrb[0].mxu0
  %1465 = vmatprep.mubr.bf16.mxu0 0
  %1466 = vmatmul.mubr.bf16.gmra.mrb[0].mxu0 %v957
  %v1467 = vpop.f32.mrb[0].mxu0
  %v1468 = vadd.f32 0.0, %v1467
  %v1469 = vpop.f32.mrb[0].mxu0
  %v1470 = vpop.f32.mrb[0].mxu0
  %v1471 = vadd.f32 0.0, %v1470
  %v1472 = vpop.f32.mrb[0].mxu0
  %1473 = vmatprep.mubr.bf16.mxu0 0
  %1474 = vmatmul.mubr.bf16.gmra.mrb[0].mxu0 %v960
  %v1475 = vpop.f32.mrb[0].mxu0
  %v1476 = vadd.f32 0.0, %v1475
  %v1477 = vpop.f32.mrb[0].mxu0
  %v1478 = vpop.f32.mrb[0].mxu0
  %v1479 = vadd.f32 0.0, %v1478
  %v1480 = vpop.f32.mrb[0].mxu0
  %1481 = vmatprep.mubr.bf16.mxu0 0
  %1482 = vmatmul.mubr.bf16.gmra.mrb[0].mxu0 %v963
  %v1483 = vpop.f32.mrb[0].mxu0
  %v1484 = vadd.f32 0.0, %v1483
  %v1485 = vpop.f32.mrb[0].mxu0
  %v1486 = vpop.f32.mrb[0].mxu0
  %v1487 = vadd.f32 0.0, %v1486
  %v1488 = vpop.f32.mrb[0].mxu0
  %1489 = vmatprep.mubr.bf16.mxu0 0
  %1490 = vmatmul.mubr.bf16.gmra.mrb[0].mxu0 %v966
  %v1491 = vpop.f32.mrb[0].mxu0
  %v1492 = vadd.f32 0.0, %v1491
  %v1493 = vpop.f32.mrb[0].mxu0
  %v1494 = vpop.f32.mrb[0].mxu0
  %v1495 = vadd.f32 0.0, %v1494
  %v1496 = vpop.f32.mrb[0].mxu0
  %1497 = vmatprep.mubr.bf16.mxu0 0
  %1498 = vmatmul.mubr.bf16.gmra.mrb[0].mxu0 %v969
  %v1499 = vpop.f32.mrb[0].mxu0
  %v1500 = vadd.f32 0.0, %v1499
  %v1501 = vpop.f32.mrb[0].mxu0
  %v1502 = vpop.f32.mrb[0].mxu0
  %v1503 = vadd.f32 0.0, %v1502
  %v1504 = vpop.f32.mrb[0].mxu0
  %1505 = vmatprep.mubr.bf16.mxu0 0
  %1506 = vmatmul.mubr.bf16.gmra.mrb[0].mxu0 %v972
  %v1507 = vpop.f32.mrb[0].mxu0
  %v1508 = vadd.f32 0.0, %v1507
  %v1509 = vpop.f32.mrb[0].mxu0
  %v1510 = vpop.f32.mrb[0].mxu0
  %v1511 = vadd.f32 0.0, %v1510
  %v1512 = vpop.f32.mrb[0].mxu0
  %1513 = vmatprep.mubr.bf16.mxu0 0
  %1514 = vmatmul.mubr.bf16.gmra.mrb[0].mxu0 %v975
  %v1515 = vpop.f32.mrb[0].mxu0
  %v1516 = vadd.f32 0.0, %v1515
  %v1517 = vpop.f32.mrb[0].mxu0
  %v1518 = vpop.f32.mrb[0].mxu0
  %v1519 = vadd.f32 0.0, %v1518
  %v1520 = vpop.f32.mrb[0].mxu0
  %1521 = vdwg.mxu0
  %v1530 = vunpack.c.l.b16 %v231
  %v1531 = vunpack.c.l.b16 %v232
  %v1532 = vunpack.c.l.b16 %v233
  %v1533 = vunpack.c.l.b16 %v234
  %v1534 = vunpack.c.l.b16 %v235
  %v1535 = vunpack.c.l.b16 %v236
  %v1536 = vunpack.c.l.b16 %v237
  %v1537 = vunpack.c.l.b16 %v238
  %v1538 = vpack.c.b16 %v1531, %v1530
  %v1539 = vpack.c.b16 %v1533, %v1532
  %v1540 = vpack.c.b16 %v1535, %v1534
  %v1541 = vpack.c.b16 %v1537, %v1536
  %v1546 = vsel %vm784, %v167, 0
  %v1548 = vsel %vm784, %v168, 0
  %v1550 = vsel %vm784, %v169, 0
  %v1552 = vsel %vm784, %v170, 0
  %v1554 = vsel %vm784, %v171, 0
  %v1556 = vsel %vm784, %v172, 0
  %v1558 = vsel %vm784, %v173, 0
  %v1560 = vsel %vm784, %v174, 0
  %v1562 = vsel %vm784, %v175, 0
  %v1564 = vsel %vm784, %v176, 0
  %v1566 = vsel %vm784, %v177, 0
  %v1568 = vsel %vm784, %v178, 0
  %v1570 = vsel %vm784, %v179, 0
  %v1572 = vsel %vm784, %v180, 0
  %v1574 = vsel %vm784, %v181, 0
  %v1576 = vsel %vm784, %v182, 0
  %v1578 = vsel %vm784, %v183, 0
  %v1580 = vsel %vm784, %v184, 0
  %v1582 = vsel %vm784, %v185, 0
  %v1584 = vsel %vm784, %v186, 0
  %v1586 = vsel %vm784, %v187, 0
  %v1588 = vsel %vm784, %v188, 0
  %v1590 = vsel %vm784, %v189, 0
  %v1592 = vsel %vm784, %v190, 0
  %v1594 = vsel %vm784, %v191, 0
  %v1596 = vsel %vm784, %v192, 0
  %v1598 = vsel %vm784, %v193, 0
  %v1600 = vsel %vm784, %v194, 0
  %v1602 = vsel %vm784, %v195, 0
  %v1604 = vsel %vm784, %v196, 0
  %v1606 = vsel %vm784, %v197, 0
  %v1608 = vsel %vm784, %v198, 0
  %v1610 = vsel %vm784, %v199, 0
  %v1612 = vsel %vm784, %v200, 0
  %v1614 = vsel %vm784, %v201, 0
  %v1616 = vsel %vm784, %v202, 0
  %v1618 = vsel %vm784, %v203, 0
  %v1620 = vsel %vm784, %v204, 0
  %v1622 = vsel %vm784, %v205, 0
  %v1624 = vsel %vm784, %v206, 0
  %v1626 = vsel %vm784, %v207, 0
  %v1628 = vsel %vm784, %v208, 0
  %v1630 = vsel %vm784, %v209, 0
  %v1632 = vsel %vm784, %v210, 0
  %v1634 = vsel %vm784, %v211, 0
  %v1636 = vsel %vm784, %v212, 0
  %v1638 = vsel %vm784, %v213, 0
  %v1640 = vsel %vm784, %v214, 0
  %v1642 = vsel %vm784, %v215, 0
  %v1644 = vsel %vm784, %v216, 0
  %v1646 = vsel %vm784, %v217, 0
  %v1648 = vsel %vm784, %v218, 0
  %v1650 = vsel %vm784, %v219, 0
  %v1652 = vsel %vm784, %v220, 0
  %v1654 = vsel %vm784, %v221, 0
  %v1656 = vsel %vm784, %v222, 0
  %v1658 = vsel %vm784, %v223, 0
  %v1660 = vsel %vm784, %v224, 0
  %v1662 = vsel %vm784, %v225, 0
  %v1664 = vsel %vm784, %v226, 0
  %v1666 = vsel %vm784, %v227, 0
  %v1668 = vsel %vm784, %v228, 0
  %v1670 = vsel %vm784, %v229, 0
  %v1672 = vsel %vm784, %v230, 0
  %1674 = vmatprep.subr.bf16.mxu0 0
  %1675 = vmatpush1.bf16.msra.mxu0 %v1538
  %1676 = vmatprep.subr.bf16.mxu0 0
  %1677 = vmatpush1.bf16.msra.mxu0 %v1539
  %1678 = vmatprep.subr.bf16.mxu0 0
  %1679 = vmatpush1.bf16.msra.mxu0 %v1540
  %1680 = vmatprep.subr.bf16.mxu0 0
  %1681 = vmatpush1.bf16.msra.mxu0 %v1541
  %1682 = vmatprep.subr.bf16.mxu0 0
  %1683 = vmatpush1.bf16.msra.mxu0 0
  %1684 = vmatprep.subr.bf16.mxu0 0
  %1685 = vmatpush1.bf16.msra.mxu0 0
  %1686 = vmatprep.subr.bf16.mxu0 0
  %1687 = vmatpush1.bf16.msra.mxu0 0
  %1688 = vmatprep.subr.bf16.mxu0 0
  %1689 = vmatpush1.bf16.msra.mxu0 0
  %1690 = vmatprep.subr.bf16.mxu0 0
  %1691 = vmatpush1.bf16.msra.mxu0 0
  %1692 = vmatprep.subr.bf16.mxu0 0
  %1693 = vmatpush1.bf16.msra.mxu0 0
  %1694 = vmatprep.subr.bf16.mxu0 0
  %1695 = vmatpush1.bf16.msra.mxu0 0
  %1696 = vmatprep.subr.bf16.mxu0 0
  %1697 = vmatpush1.bf16.msra.mxu0 0
  %1698 = vmatprep.subr.bf16.mxu0 0
  %1699 = vmatpush1.bf16.msra.mxu0 0
  %1700 = vmatprep.subr.bf16.mxu0 0
  %1701 = vmatpush1.bf16.msra.mxu0 0
  %1702 = vmatprep.subr.bf16.mxu0 0
  %1703 = vmatpush1.bf16.msra.mxu0 0
  %1704 = vmatprep.subr.bf16.mxu0 0
  %1705 = vmatpush1.bf16.msra.mxu0 0
  %1706 = vmatprep.mubr.bf16.mxu0 0
  %1707 = vmatmul.mubr.bf16.gmra.mrb[0].mxu0 %v1546
  %v1708 = vpop.f32.mrb[0].mxu0
  %v1709 = vadd.f32 %v1012, %v1708
  %v1710 = vpop.f32.mrb[0].mxu0
  %v1711 = vpop.f32.mrb[0].mxu0
  %v1712 = vadd.f32 %v1015, %v1711
  %v1713 = vpop.f32.mrb[0].mxu0
  %1714 = vmatprep.mubr.bf16.mxu0 0
  %1715 = vmatmul.mubr.bf16.gmra.mrb[0].mxu0 %v1548
  %v1716 = vpop.f32.mrb[0].mxu0
  %v1717 = vadd.f32 %v1020, %v1716
  %v1718 = vpop.f32.mrb[0].mxu0
  %v1719 = vpop.f32.mrb[0].mxu0
  %v1720 = vadd.f32 %v1023, %v1719
  %v1721 = vpop.f32.mrb[0].mxu0
  %1722 = vmatprep.mubr.bf16.mxu0 0
  %1723 = vmatmul.mubr.bf16.gmra.mrb[0].mxu0 %v1550
  %v1724 = vpop.f32.mrb[0].mxu0
  %v1725 = vadd.f32 %v1028, %v1724
  %v1726 = vpop.f32.mrb[0].mxu0
  %v1727 = vpop.f32.mrb[0].mxu0
  %v1728 = vadd.f32 %v1031, %v1727
  %v1729 = vpop.f32.mrb[0].mxu0
  %1730 = vmatprep.mubr.bf16.mxu0 0
  %1731 = vmatmul.mubr.bf16.gmra.mrb[0].mxu0 %v1552
  %v1732 = vpop.f32.mrb[0].mxu0
  %v1733 = vadd.f32 %v1036, %v1732
  %v1734 = vpop.f32.mrb[0].mxu0
  %v1735 = vpop.f32.mrb[0].mxu0
  %v1736 = vadd.f32 %v1039, %v1735
  %v1737 = vpop.f32.mrb[0].mxu0
  %1738 = vmatprep.mubr.bf16.mxu0 0
  %1739 = vmatmul.mubr.bf16.gmra.mrb[0].mxu0 %v1554
  %v1740 = vpop.f32.mrb[0].mxu0
  %v1741 = vadd.f32 %v1044, %v1740
  %v1742 = vpop.f32.mrb[0].mxu0
  %v1743 = vpop.f32.mrb[0].mxu0
  %v1744 = vadd.f32 %v1047, %v1743
  %v1745 = vpop.f32.mrb[0].mxu0
  %1746 = vmatprep.mubr.bf16.mxu0 0
  %1747 = vmatmul.mubr.bf16.gmra.mrb[0].mxu0 %v1556
  %v1748 = vpop.f32.mrb[0].mxu0
  %v1749 = vadd.f32 %v1052, %v1748
  %v1750 = vpop.f32.mrb[0].mxu0
  %v1751 = vpop.f32.mrb[0].mxu0
  %v1752 = vadd.f32 %v1055, %v1751
  %v1753 = vpop.f32.mrb[0].mxu0
  %1754 = vmatprep.mubr.bf16.mxu0 0
  %1755 = vmatmul.mubr.bf16.gmra.mrb[0].mxu0 %v1558
  %v1756 = vpop.f32.mrb[0].mxu0
  %v1757 = vadd.f32 %v1060, %v1756
  %v1758 = vpop.f32.mrb[0].mxu0
  %v1759 = vpop.f32.mrb[0].mxu0
  %v1760 = vadd.f32 %v1063, %v1759
  %v1761 = vpop.f32.mrb[0].mxu0
  %1762 = vmatprep.mubr.bf16.mxu0 0
  %1763 = vmatmul.mubr.bf16.gmra.mrb[0].mxu0 %v1560
  %v1764 = vpop.f32.mrb[0].mxu0
  %v1765 = vadd.f32 %v1068, %v1764
  %v1766 = vpop.f32.mrb[0].mxu0
  %v1767 = vpop.f32.mrb[0].mxu0
  %v1768 = vadd.f32 %v1071, %v1767
  %v1769 = vpop.f32.mrb[0].mxu0
  %1770 = vmatprep.mubr.bf16.mxu0 0
  %1771 = vmatmul.mubr.bf16.gmra.mrb[0].mxu0 %v1562
  %v1772 = vpop.f32.mrb[0].mxu0
  %v1773 = vadd.f32 %v1076, %v1772
  %v1774 = vpop.f32.mrb[0].mxu0
  %v1775 = vpop.f32.mrb[0].mxu0
  %v1776 = vadd.f32 %v1079, %v1775
  %v1777 = vpop.f32.mrb[0].mxu0
  %1778 = vmatprep.mubr.bf16.mxu0 0
  %1779 = vmatmul.mubr.bf16.gmra.mrb[0].mxu0 %v1564
  %v1780 = vpop.f32.mrb[0].mxu0
  %v1781 = vadd.f32 %v1084, %v1780
  %v1782 = vpop.f32.mrb[0].mxu0
  %v1783 = vpop.f32.mrb[0].mxu0
  %v1784 = vadd.f32 %v1087, %v1783
  %v1785 = vpop.f32.mrb[0].mxu0
  %1786 = vmatprep.mubr.bf16.mxu0 0
  %1787 = vmatmul.mubr.bf16.gmra.mrb[0].mxu0 %v1566
  %v1788 = vpop.f32.mrb[0].mxu0
  %v1789 = vadd.f32 %v1092, %v1788
  %v1790 = vpop.f32.mrb[0].mxu0
  %v1791 = vpop.f32.mrb[0].mxu0
  %v1792 = vadd.f32 %v1095, %v1791
  %v1793 = vpop.f32.mrb[0].mxu0
  %1794 = vmatprep.mubr.bf16.mxu0 0
  %1795 = vmatmul.mubr.bf16.gmra.mrb[0].mxu0 %v1568
  %v1796 = vpop.f32.mrb[0].mxu0
  %v1797 = vadd.f32 %v1100, %v1796
  %v1798 = vpop.f32.mrb[0].mxu0
  %v1799 = vpop.f32.mrb[0].mxu0
  %v1800 = vadd.f32 %v1103, %v1799
  %v1801 = vpop.f32.mrb[0].mxu0
  %1802 = vmatprep.mubr.bf16.mxu0 0
  %1803 = vmatmul.mubr.bf16.gmra.mrb[0].mxu0 %v1570
  %v1804 = vpop.f32.mrb[0].mxu0
  %v1805 = vadd.f32 %v1108, %v1804
  %v1806 = vpop.f32.mrb[0].mxu0
  %v1807 = vpop.f32.mrb[0].mxu0
  %v1808 = vadd.f32 %v1111, %v1807
  %v1809 = vpop.f32.mrb[0].mxu0
  %1810 = vmatprep.mubr.bf16.mxu0 0
  %1811 = vmatmul.mubr.bf16.gmra.mrb[0].mxu0 %v1572
  %v1812 = vpop.f32.mrb[0].mxu0
  %v1813 = vadd.f32 %v1116, %v1812
  %v1814 = vpop.f32.mrb[0].mxu0
  %v1815 = vpop.f32.mrb[0].mxu0
  %v1816 = vadd.f32 %v1119, %v1815
  %v1817 = vpop.f32.mrb[0].mxu0
  %1818 = vmatprep.mubr.bf16.mxu0 0
  %1819 = vmatmul.mubr.bf16.gmra.mrb[0].mxu0 %v1574
  %v1820 = vpop.f32.mrb[0].mxu0
  %v1821 = vadd.f32 %v1124, %v1820
  %v1822 = vpop.f32.mrb[0].mxu0
  %v1823 = vpop.f32.mrb[0].mxu0
  %v1824 = vadd.f32 %v1127, %v1823
  %v1825 = vpop.f32.mrb[0].mxu0
  %1826 = vmatprep.mubr.bf16.mxu0 0
  %1827 = vmatmul.mubr.bf16.gmra.mrb[0].mxu0 %v1576
  %v1828 = vpop.f32.mrb[0].mxu0
  %v1829 = vadd.f32 %v1132, %v1828
  %v1830 = vpop.f32.mrb[0].mxu0
  %v1831 = vpop.f32.mrb[0].mxu0
  %v1832 = vadd.f32 %v1135, %v1831
  %v1833 = vpop.f32.mrb[0].mxu0
  %1834 = vmatprep.mubr.bf16.mxu0 0
  %1835 = vmatmul.mubr.bf16.gmra.mrb[0].mxu0 %v1578
  %v1836 = vpop.f32.mrb[0].mxu0
  %v1837 = vadd.f32 %v1140, %v1836
  %v1838 = vpop.f32.mrb[0].mxu0
  %v1839 = vpop.f32.mrb[0].mxu0
  %v1840 = vadd.f32 %v1143, %v1839
  %v1841 = vpop.f32.mrb[0].mxu0
  %1842 = vmatprep.mubr.bf16.mxu0 0
  %1843 = vmatmul.mubr.bf16.gmra.mrb[0].mxu0 %v1580
  %v1844 = vpop.f32.mrb[0].mxu0
  %v1845 = vadd.f32 %v1148, %v1844
  %v1846 = vpop.f32.mrb[0].mxu0
  %v1847 = vpop.f32.mrb[0].mxu0
  %v1848 = vadd.f32 %v1151, %v1847
  %v1849 = vpop.f32.mrb[0].mxu0
  %1850 = vmatprep.mubr.bf16.mxu0 0
  %1851 = vmatmul.mubr.bf16.gmra.mrb[0].mxu0 %v1582
  %v1852 = vpop.f32.mrb[0].mxu0
  %v1853 = vadd.f32 %v1156, %v1852
  %v1854 = vpop.f32.mrb[0].mxu0
  %v1855 = vpop.f32.mrb[0].mxu0
  %v1856 = vadd.f32 %v1159, %v1855
  %v1857 = vpop.f32.mrb[0].mxu0
  %1858 = vmatprep.mubr.bf16.mxu0 0
  %1859 = vmatmul.mubr.bf16.gmra.mrb[0].mxu0 %v1584
  %v1860 = vpop.f32.mrb[0].mxu0
  %v1861 = vadd.f32 %v1164, %v1860
  %v1862 = vpop.f32.mrb[0].mxu0
  %v1863 = vpop.f32.mrb[0].mxu0
  %v1864 = vadd.f32 %v1167, %v1863
  %v1865 = vpop.f32.mrb[0].mxu0
  %1866 = vmatprep.mubr.bf16.mxu0 0
  %1867 = vmatmul.mubr.bf16.gmra.mrb[0].mxu0 %v1586
  %v1868 = vpop.f32.mrb[0].mxu0
  %v1869 = vadd.f32 %v1172, %v1868
  %v1870 = vpop.f32.mrb[0].mxu0
  %v1871 = vpop.f32.mrb[0].mxu0
  %v1872 = vadd.f32 %v1175, %v1871
  %v1873 = vpop.f32.mrb[0].mxu0
  %1874 = vmatprep.mubr.bf16.mxu0 0
  %1875 = vmatmul.mubr.bf16.gmra.mrb[0].mxu0 %v1588
  %v1876 = vpop.f32.mrb[0].mxu0
  %v1877 = vadd.f32 %v1180, %v1876
  %v1878 = vpop.f32.mrb[0].mxu0
  %v1879 = vpop.f32.mrb[0].mxu0
  %v1880 = vadd.f32 %v1183, %v1879
  %v1881 = vpop.f32.mrb[0].mxu0
  %1882 = vmatprep.mubr.bf16.mxu0 0
  %1883 = vmatmul.mubr.bf16.gmra.mrb[0].mxu0 %v1590
  %v1884 = vpop.f32.mrb[0].mxu0
  %v1885 = vadd.f32 %v1188, %v1884
  %v1886 = vpop.f32.mrb[0].mxu0
  %v1887 = vpop.f32.mrb[0].mxu0
  %v1888 = vadd.f32 %v1191, %v1887
  %v1889 = vpop.f32.mrb[0].mxu0
  %1890 = vmatprep.mubr.bf16.mxu0 0
  %1891 = vmatmul.mubr.bf16.gmra.mrb[0].mxu0 %v1592
  %v1892 = vpop.f32.mrb[0].mxu0
  %v1893 = vadd.f32 %v1196, %v1892
  %v1894 = vpop.f32.mrb[0].mxu0
  %v1895 = vpop.f32.mrb[0].mxu0
  %v1896 = vadd.f32 %v1199, %v1895
  %v1897 = vpop.f32.mrb[0].mxu0
  %1898 = vmatprep.mubr.bf16.mxu0 0
  %1899 = vmatmul.mubr.bf16.gmra.mrb[0].mxu0 %v1594
  %v1900 = vpop.f32.mrb[0].mxu0
  %v1901 = vadd.f32 %v1204, %v1900
  %v1902 = vpop.f32.mrb[0].mxu0
  %v1903 = vpop.f32.mrb[0].mxu0
  %v1904 = vadd.f32 %v1207, %v1903
  %v1905 = vpop.f32.mrb[0].mxu0
  %1906 = vmatprep.mubr.bf16.mxu0 0
  %1907 = vmatmul.mubr.bf16.gmra.mrb[0].mxu0 %v1596
  %v1908 = vpop.f32.mrb[0].mxu0
  %v1909 = vadd.f32 %v1212, %v1908
  %v1910 = vpop.f32.mrb[0].mxu0
  %v1911 = vpop.f32.mrb[0].mxu0
  %v1912 = vadd.f32 %v1215, %v1911
  %v1913 = vpop.f32.mrb[0].mxu0
  %1914 = vmatprep.mubr.bf16.mxu0 0
  %1915 = vmatmul.mubr.bf16.gmra.mrb[0].mxu0 %v1598
  %v1916 = vpop.f32.mrb[0].mxu0
  %v1917 = vadd.f32 %v1220, %v1916
  %v1918 = vpop.f32.mrb[0].mxu0
  %v1919 = vpop.f32.mrb[0].mxu0
  %v1920 = vadd.f32 %v1223, %v1919
  %v1921 = vpop.f32.mrb[0].mxu0
  %1922 = vmatprep.mubr.bf16.mxu0 0
  %1923 = vmatmul.mubr.bf16.gmra.mrb[0].mxu0 %v1600
  %v1924 = vpop.f32.mrb[0].mxu0
  %v1925 = vadd.f32 %v1228, %v1924
  %v1926 = vpop.f32.mrb[0].mxu0
  %v1927 = vpop.f32.mrb[0].mxu0
  %v1928 = vadd.f32 %v1231, %v1927
  %v1929 = vpop.f32.mrb[0].mxu0
  %1930 = vmatprep.mubr.bf16.mxu0 0
  %1931 = vmatmul.mubr.bf16.gmra.mrb[0].mxu0 %v1602
  %v1932 = vpop.f32.mrb[0].mxu0
  %v1933 = vadd.f32 %v1236, %v1932
  %v1934 = vpop.f32.mrb[0].mxu0
  %v1935 = vpop.f32.mrb[0].mxu0
  %v1936 = vadd.f32 %v1239, %v1935
  %v1937 = vpop.f32.mrb[0].mxu0
  %1938 = vmatprep.mubr.bf16.mxu0 0
  %1939 = vmatmul.mubr.bf16.gmra.mrb[0].mxu0 %v1604
  %v1940 = vpop.f32.mrb[0].mxu0
  %v1941 = vadd.f32 %v1244, %v1940
  %v1942 = vpop.f32.mrb[0].mxu0
  %v1943 = vpop.f32.mrb[0].mxu0
  %v1944 = vadd.f32 %v1247, %v1943
  %v1945 = vpop.f32.mrb[0].mxu0
  %1946 = vmatprep.mubr.bf16.mxu0 0
  %1947 = vmatmul.mubr.bf16.gmra.mrb[0].mxu0 %v1606
  %v1948 = vpop.f32.mrb[0].mxu0
  %v1949 = vadd.f32 %v1252, %v1948
  %v1950 = vpop.f32.mrb[0].mxu0
  %v1951 = vpop.f32.mrb[0].mxu0
  %v1952 = vadd.f32 %v1255, %v1951
  %v1953 = vpop.f32.mrb[0].mxu0
  %1954 = vmatprep.mubr.bf16.mxu0 0
  %1955 = vmatmul.mubr.bf16.gmra.mrb[0].mxu0 %v1608
  %v1956 = vpop.f32.mrb[0].mxu0
  %v1957 = vadd.f32 %v1260, %v1956
  %v1958 = vpop.f32.mrb[0].mxu0
  %v1959 = vpop.f32.mrb[0].mxu0
  %v1960 = vadd.f32 %v1263, %v1959
  %v1961 = vpop.f32.mrb[0].mxu0
  %1962 = vmatprep.mubr.bf16.mxu0 0
  %1963 = vmatmul.mubr.bf16.gmra.mrb[0].mxu0 %v1610
  %v1964 = vpop.f32.mrb[0].mxu0
  %v1965 = vadd.f32 %v1268, %v1964
  %v1966 = vpop.f32.mrb[0].mxu0
  %v1967 = vpop.f32.mrb[0].mxu0
  %v1968 = vadd.f32 %v1271, %v1967
  %v1969 = vpop.f32.mrb[0].mxu0
  %1970 = vmatprep.mubr.bf16.mxu0 0
  %1971 = vmatmul.mubr.bf16.gmra.mrb[0].mxu0 %v1612
  %v1972 = vpop.f32.mrb[0].mxu0
  %v1973 = vadd.f32 %v1276, %v1972
  %v1974 = vpop.f32.mrb[0].mxu0
  %v1975 = vpop.f32.mrb[0].mxu0
  %v1976 = vadd.f32 %v1279, %v1975
  %v1977 = vpop.f32.mrb[0].mxu0
  %1978 = vmatprep.mubr.bf16.mxu0 0
  %1979 = vmatmul.mubr.bf16.gmra.mrb[0].mxu0 %v1614
  %v1980 = vpop.f32.mrb[0].mxu0
  %v1981 = vadd.f32 %v1284, %v1980
  %v1982 = vpop.f32.mrb[0].mxu0
  %v1983 = vpop.f32.mrb[0].mxu0
  %v1984 = vadd.f32 %v1287, %v1983
  %v1985 = vpop.f32.mrb[0].mxu0
  %1986 = vmatprep.mubr.bf16.mxu0 0
  %1987 = vmatmul.mubr.bf16.gmra.mrb[0].mxu0 %v1616
  %v1988 = vpop.f32.mrb[0].mxu0
  %v1989 = vadd.f32 %v1292, %v1988
  %v1990 = vpop.f32.mrb[0].mxu0
  %v1991 = vpop.f32.mrb[0].mxu0
  %v1992 = vadd.f32 %v1295, %v1991
  %v1993 = vpop.f32.mrb[0].mxu0
  %1994 = vmatprep.mubr.bf16.mxu0 0
  %1995 = vmatmul.mubr.bf16.gmra.mrb[0].mxu0 %v1618
  %v1996 = vpop.f32.mrb[0].mxu0
  %v1997 = vadd.f32 %v1300, %v1996
  %v1998 = vpop.f32.mrb[0].mxu0
  %v1999 = vpop.f32.mrb[0].mxu0
  %v2000 = vadd.f32 %v1303, %v1999
  %v2001 = vpop.f32.mrb[0].mxu0
  %2002 = vmatprep.mubr.bf16.mxu0 0
  %2003 = vmatmul.mubr.bf16.gmra.mrb[0].mxu0 %v1620
  %v2004 = vpop.f32.mrb[0].mxu0
  %v2005 = vadd.f32 %v1308, %v2004
  %v2006 = vpop.f32.mrb[0].mxu0
  %v2007 = vpop.f32.mrb[0].mxu0
  %v2008 = vadd.f32 %v1311, %v2007
  %v2009 = vpop.f32.mrb[0].mxu0
  %2010 = vmatprep.mubr.bf16.mxu0 0
  %2011 = vmatmul.mubr.bf16.gmra.mrb[0].mxu0 %v1622
  %v2012 = vpop.f32.mrb[0].mxu0
  %v2013 = vadd.f32 %v1316, %v2012
  %v2014 = vpop.f32.mrb[0].mxu0
  %v2015 = vpop.f32.mrb[0].mxu0
  %v2016 = vadd.f32 %v1319, %v2015
  %v2017 = vpop.f32.mrb[0].mxu0
  %2018 = vmatprep.mubr.bf16.mxu0 0
  %2019 = vmatmul.mubr.bf16.gmra.mrb[0].mxu0 %v1624
  %v2020 = vpop.f32.mrb[0].mxu0
  %v2021 = vadd.f32 %v1324, %v2020
  %v2022 = vpop.f32.mrb[0].mxu0
  %v2023 = vpop.f32.mrb[0].mxu0
  %v2024 = vadd.f32 %v1327, %v2023
  %v2025 = vpop.f32.mrb[0].mxu0
  %2026 = vmatprep.mubr.bf16.mxu0 0
  %2027 = vmatmul.mubr.bf16.gmra.mrb[0].mxu0 %v1626
  %v2028 = vpop.f32.mrb[0].mxu0
  %v2029 = vadd.f32 %v1332, %v2028
  %v2030 = vpop.f32.mrb[0].mxu0
  %v2031 = vpop.f32.mrb[0].mxu0
  %v2032 = vadd.f32 %v1335, %v2031
  %v2033 = vpop.f32.mrb[0].mxu0
  %2034 = vmatprep.mubr.bf16.mxu0 0
  %2035 = vmatmul.mubr.bf16.gmra.mrb[0].mxu0 %v1628
  %v2036 = vpop.f32.mrb[0].mxu0
  %v2037 = vadd.f32 %v1340, %v2036
  %v2038 = vpop.f32.mrb[0].mxu0
  %v2039 = vpop.f32.mrb[0].mxu0
  %v2040 = vadd.f32 %v1343, %v2039
  %v2041 = vpop.f32.mrb[0].mxu0
  %2042 = vmatprep.mubr.bf16.mxu0 0
  %2043 = vmatmul.mubr.bf16.gmra.mrb[0].mxu0 %v1630
  %v2044 = vpop.f32.mrb[0].mxu0
  %v2045 = vadd.f32 %v1348, %v2044
  %v2046 = vpop.f32.mrb[0].mxu0
  %v2047 = vpop.f32.mrb[0].mxu0
  %v2048 = vadd.f32 %v1351, %v2047
  %v2049 = vpop.f32.mrb[0].mxu0
  %2050 = vmatprep.mubr.bf16.mxu0 0
  %2051 = vmatmul.mubr.bf16.gmra.mrb[0].mxu0 %v1632
  %v2052 = vpop.f32.mrb[0].mxu0
  %v2053 = vadd.f32 %v1356, %v2052
  %v2054 = vpop.f32.mrb[0].mxu0
  %v2055 = vpop.f32.mrb[0].mxu0
  %v2056 = vadd.f32 %v1359, %v2055
  %v2057 = vpop.f32.mrb[0].mxu0
  %2058 = vmatprep.mubr.bf16.mxu0 0
  %2059 = vmatmul.mubr.bf16.gmra.mrb[0].mxu0 %v1634
  %v2060 = vpop.f32.mrb[0].mxu0
  %v2061 = vadd.f32 %v1364, %v2060
  %v2062 = vpop.f32.mrb[0].mxu0
  %v2063 = vpop.f32.mrb[0].mxu0
  %v2064 = vadd.f32 %v1367, %v2063
  %v2065 = vpop.f32.mrb[0].mxu0
  %2066 = vmatprep.mubr.bf16.mxu0 0
  %2067 = vmatmul.mubr.bf16.gmra.mrb[0].mxu0 %v1636
  %v2068 = vpop.f32.mrb[0].mxu0
  %v2069 = vadd.f32 %v1372, %v2068
  %v2070 = vpop.f32.mrb[0].mxu0
  %v2071 = vpop.f32.mrb[0].mxu0
  %v2072 = vadd.f32 %v1375, %v2071
  %v2073 = vpop.f32.mrb[0].mxu0
  %2074 = vmatprep.mubr.bf16.mxu0 0
  %2075 = vmatmul.mubr.bf16.gmra.mrb[0].mxu0 %v1638
  %v2076 = vpop.f32.mrb[0].mxu0
  %v2077 = vadd.f32 %v1380, %v2076
  %v2078 = vpop.f32.mrb[0].mxu0
  %v2079 = vpop.f32.mrb[0].mxu0
  %v2080 = vadd.f32 %v1383, %v2079
  %v2081 = vpop.f32.mrb[0].mxu0
  %2082 = vmatprep.mubr.bf16.mxu0 0
  %2083 = vmatmul.mubr.bf16.gmra.mrb[0].mxu0 %v1640
  %v2084 = vpop.f32.mrb[0].mxu0
  %v2085 = vadd.f32 %v1388, %v2084
  %v2086 = vpop.f32.mrb[0].mxu0
  %v2087 = vpop.f32.mrb[0].mxu0
  %v2088 = vadd.f32 %v1391, %v2087
  %v2089 = vpop.f32.mrb[0].mxu0
  %2090 = vmatprep.mubr.bf16.mxu0 0
  %2091 = vmatmul.mubr.bf16.gmra.mrb[0].mxu0 %v1642
  %v2092 = vpop.f32.mrb[0].mxu0
  %v2093 = vadd.f32 %v1396, %v2092
  %v2094 = vpop.f32.mrb[0].mxu0
  %v2095 = vpop.f32.mrb[0].mxu0
  %v2096 = vadd.f32 %v1399, %v2095
  %v2097 = vpop.f32.mrb[0].mxu0
  %2098 = vmatprep.mubr.bf16.mxu0 0
  %2099 = vmatmul.mubr.bf16.gmra.mrb[0].mxu0 %v1644
  %v2100 = vpop.f32.mrb[0].mxu0
  %v2101 = vadd.f32 %v1404, %v2100
  %v2102 = vpop.f32.mrb[0].mxu0
  %v2103 = vpop.f32.mrb[0].mxu0
  %v2104 = vadd.f32 %v1407, %v2103
  %v2105 = vpop.f32.mrb[0].mxu0
  %2106 = vmatprep.mubr.bf16.mxu0 0
  %2107 = vmatmul.mubr.bf16.gmra.mrb[0].mxu0 %v1646
  %v2108 = vpop.f32.mrb[0].mxu0
  %v2109 = vadd.f32 %v1412, %v2108
  %v2110 = vpop.f32.mrb[0].mxu0
  %v2111 = vpop.f32.mrb[0].mxu0
  %v2112 = vadd.f32 %v1415, %v2111
  %v2113 = vpop.f32.mrb[0].mxu0
  %2114 = vmatprep.mubr.bf16.mxu0 0
  %2115 = vmatmul.mubr.bf16.gmra.mrb[0].mxu0 %v1648
  %v2116 = vpop.f32.mrb[0].mxu0
  %v2117 = vadd.f32 %v1420, %v2116
  %v2118 = vpop.f32.mrb[0].mxu0
  %v2119 = vpop.f32.mrb[0].mxu0
  %v2120 = vadd.f32 %v1423, %v2119
  %v2121 = vpop.f32.mrb[0].mxu0
  %2122 = vmatprep.mubr.bf16.mxu0 0
  %2123 = vmatmul.mubr.bf16.gmra.mrb[0].mxu0 %v1650
  %v2124 = vpop.f32.mrb[0].mxu0
  %v2125 = vadd.f32 %v1428, %v2124
  %v2126 = vpop.f32.mrb[0].mxu0
  %v2127 = vpop.f32.mrb[0].mxu0
  %v2128 = vadd.f32 %v1431, %v2127
  %v2129 = vpop.f32.mrb[0].mxu0
  %2130 = vmatprep.mubr.bf16.mxu0 0
  %2131 = vmatmul.mubr.bf16.gmra.mrb[0].mxu0 %v1652
  %v2132 = vpop.f32.mrb[0].mxu0
  %v2133 = vadd.f32 %v1436, %v2132
  %v2134 = vpop.f32.mrb[0].mxu0
  %v2135 = vpop.f32.mrb[0].mxu0
  %v2136 = vadd.f32 %v1439, %v2135
  %v2137 = vpop.f32.mrb[0].mxu0
  %2138 = vmatprep.mubr.bf16.mxu0 0
  %2139 = vmatmul.mubr.bf16.gmra.mrb[0].mxu0 %v1654
  %v2140 = vpop.f32.mrb[0].mxu0
  %v2141 = vadd.f32 %v1444, %v2140
  %v2142 = vpop.f32.mrb[0].mxu0
  %v2143 = vpop.f32.mrb[0].mxu0
  %v2144 = vadd.f32 %v1447, %v2143
  %v2145 = vpop.f32.mrb[0].mxu0
  %2146 = vmatprep.mubr.bf16.mxu0 0
  %2147 = vmatmul.mubr.bf16.gmra.mrb[0].mxu0 %v1656
  %v2148 = vpop.f32.mrb[0].mxu0
  %v2149 = vadd.f32 %v1452, %v2148
  %v2150 = vpop.f32.mrb[0].mxu0
  %v2151 = vpop.f32.mrb[0].mxu0
  %v2152 = vadd.f32 %v1455, %v2151
  %v2153 = vpop.f32.mrb[0].mxu0
  %2154 = vmatprep.mubr.bf16.mxu0 0
  %2155 = vmatmul.mubr.bf16.gmra.mrb[0].mxu0 %v1658
  %v2156 = vpop.f32.mrb[0].mxu0
  %v2157 = vadd.f32 %v1460, %v2156
  %v2158 = vpop.f32.mrb[0].mxu0
  %v2159 = vpop.f32.mrb[0].mxu0
  %v2160 = vadd.f32 %v1463, %v2159
  %v2161 = vpop.f32.mrb[0].mxu0
  %2162 = vmatprep.mubr.bf16.mxu0 0
  %2163 = vmatmul.mubr.bf16.gmra.mrb[0].mxu0 %v1660
  %v2164 = vpop.f32.mrb[0].mxu0
  %v2165 = vadd.f32 %v1468, %v2164
  %v2166 = vpop.f32.mrb[0].mxu0
  %v2167 = vpop.f32.mrb[0].mxu0
  %v2168 = vadd.f32 %v1471, %v2167
  %v2169 = vpop.f32.mrb[0].mxu0
  %2170 = vmatprep.mubr.bf16.mxu0 0
  %2171 = vmatmul.mubr.bf16.gmra.mrb[0].mxu0 %v1662
  %v2172 = vpop.f32.mrb[0].mxu0
  %v2173 = vadd.f32 %v1476, %v2172
  %v2174 = vpop.f32.mrb[0].mxu0
  %v2175 = vpop.f32.mrb[0].mxu0
  %v2176 = vadd.f32 %v1479, %v2175
  %v2177 = vpop.f32.mrb[0].mxu0
  %2178 = vmatprep.mubr.bf16.mxu0 0
  %2179 = vmatmul.mubr.bf16.gmra.mrb[0].mxu0 %v1664
  %v2180 = vpop.f32.mrb[0].mxu0
  %v2181 = vadd.f32 %v1484, %v2180
  %v2182 = vpop.f32.mrb[0].mxu0
  %v2183 = vpop.f32.mrb[0].mxu0
  %v2184 = vadd.f32 %v1487, %v2183
  %v2185 = vpop.f32.mrb[0].mxu0
  %2186 = vmatprep.mubr.bf16.mxu0 0
  %2187 = vmatmul.mubr.bf16.gmra.mrb[0].mxu0 %v1666
  %v2188 = vpop.f32.mrb[0].mxu0
  %v2189 = vadd.f32 %v1492, %v2188
  %v2190 = vpop.f32.mrb[0].mxu0
  %v2191 = vpop.f32.mrb[0].mxu0
  %v2192 = vadd.f32 %v1495, %v2191
  %v2193 = vpop.f32.mrb[0].mxu0
  %2194 = vmatprep.mubr.bf16.mxu0 0
  %2195 = vmatmul.mubr.bf16.gmra.mrb[0].mxu0 %v1668
  %v2196 = vpop.f32.mrb[0].mxu0
  %v2197 = vadd.f32 %v1500, %v2196
  %v2198 = vpop.f32.mrb[0].mxu0
  %v2199 = vpop.f32.mrb[0].mxu0
  %v2200 = vadd.f32 %v1503, %v2199
  %v2201 = vpop.f32.mrb[0].mxu0
  %2202 = vmatprep.mubr.bf16.mxu0 0
  %2203 = vmatmul.mubr.bf16.gmra.mrb[0].mxu0 %v1670
  %v2204 = vpop.f32.mrb[0].mxu0
  %v2205 = vadd.f32 %v1508, %v2204
  %v2206 = vpop.f32.mrb[0].mxu0
  %v2207 = vpop.f32.mrb[0].mxu0
  %v2208 = vadd.f32 %v1511, %v2207
  %v2209 = vpop.f32.mrb[0].mxu0
  %2210 = vmatprep.mubr.bf16.mxu0 0
  %2211 = vmatmul.mubr.bf16.gmra.mrb[0].mxu0 %v1672
  %v2212 = vpop.f32.mrb[0].mxu0
  %v2213 = vadd.f32 %v1516, %v2212
  %v2214 = vpop.f32.mrb[0].mxu0
  %v2215 = vpop.f32.mrb[0].mxu0
  %v2216 = vadd.f32 %v1519, %v2215
  %v2217 = vpop.f32.mrb[0].mxu0
  %2218 = vdwg.mxu0
  %s2219 = scalar_lea.vmem %s1, 64
  %v2220 = vld [vmem:[%s2219] sm:$0xf]
  %v2221 = vld [vmem:[%s2219 + $0x4] sm:$0xf]
  %v2222 = vld [vmem:[%s2219 + $0x8] sm:$0xf]
  %v2223 = vld [vmem:[%s2219 + $0xc] sm:$0xf]
  %v2224 = vld [vmem:[%s2219 + $0x10] sm:$0xf]
  %v2225 = vld [vmem:[%s2219 + $0x14] sm:$0xf]
  %v2226 = vld [vmem:[%s2219 + $0x18] sm:$0xf]
  %v2227 = vld [vmem:[%s2219 + $0x1c] sm:$0xf]
  %vm2292 = vcmask 1046528
  %v2293 = vrot.slane %v167, 1
  %v2294 = vrot.slane %v168, 1
  %v2295 = vsel %vm2292, %v2293, %v2294
  %v2296 = vrot.slane %v169, 1
  %v2297 = vsel %vm2292, %v2294, %v2296
  %v2298 = vrot.slane %v170, 1
  %v2299 = vsel %vm2292, %v2296, %v2298
  %v2300 = vrot.slane %v171, 1
  %v2301 = vsel %vm2292, %v2298, %v2300
  %v2302 = vrot.slane %v172, 1
  %v2303 = vsel %vm2292, %v2300, %v2302
  %v2304 = vrot.slane %v173, 1
  %v2305 = vsel %vm2292, %v2302, %v2304
  %v2306 = vrot.slane %v174, 1
  %v2307 = vsel %vm2292, %v2304, %v2306
  %v2308 = vrot.slane %v175, 1
  %v2309 = vsel %vm2292, %v2306, %v2308
  %v2310 = vrot.slane %v176, 1
  %v2311 = vsel %vm2292, %v2308, %v2310
  %v2312 = vrot.slane %v177, 1
  %v2313 = vsel %vm2292, %v2310, %v2312
  %v2314 = vrot.slane %v178, 1
  %v2315 = vsel %vm2292, %v2312, %v2314
  %v2316 = vrot.slane %v179, 1
  %v2317 = vsel %vm2292, %v2314, %v2316
  %v2318 = vrot.slane %v180, 1
  %v2319 = vsel %vm2292, %v2316, %v2318
  %v2320 = vrot.slane %v181, 1
  %v2321 = vsel %vm2292, %v2318, %v2320
  %v2322 = vrot.slane %v182, 1
  %v2323 = vsel %vm2292, %v2320, %v2322
  %v2324 = vrot.slane %v183, 1
  %v2325 = vsel %vm2292, %v2322, %v2324
  %v2326 = vrot.slane %v184, 1
  %v2327 = vsel %vm2292, %v2324, %v2326
  %v2328 = vrot.slane %v185, 1
  %v2329 = vsel %vm2292, %v2326, %v2328
  %v2330 = vrot.slane %v186, 1
  %v2331 = vsel %vm2292, %v2328, %v2330
  %v2332 = vrot.slane %v187, 1
  %v2333 = vsel %vm2292, %v2330, %v2332
  %v2334 = vrot.slane %v188, 1
  %v2335 = vsel %vm2292, %v2332, %v2334
  %v2336 = vrot.slane %v189, 1
  %v2337 = vsel %vm2292, %v2334, %v2336
  %v2338 = vrot.slane %v190, 1
  %v2339 = vsel %vm2292, %v2336, %v2338
  %v2340 = vrot.slane %v191, 1
  %v2341 = vsel %vm2292, %v2338, %v2340
  %v2342 = vrot.slane %v192, 1
  %v2343 = vsel %vm2292, %v2340, %v2342
  %v2344 = vrot.slane %v193, 1
  %v2345 = vsel %vm2292, %v2342, %v2344
  %v2346 = vrot.slane %v194, 1
  %v2347 = vsel %vm2292, %v2344, %v2346
  %v2348 = vrot.slane %v195, 1
  %v2349 = vsel %vm2292, %v2346, %v2348
  %v2350 = vrot.slane %v196, 1
  %v2351 = vsel %vm2292, %v2348, %v2350
  %v2352 = vrot.slane %v197, 1
  %v2353 = vsel %vm2292, %v2350, %v2352
  %v2354 = vrot.slane %v198, 1
  %v2355 = vsel %vm2292, %v2352, %v2354
  %v2356 = vrot.slane %v199, 1
  %v2357 = vsel %vm2292, %v2354, %v2356
  %v2358 = vrot.slane %v200, 1
  %v2359 = vsel %vm2292, %v2356, %v2358
  %v2360 = vrot.slane %v201, 1
  %v2361 = vsel %vm2292, %v2358, %v2360
  %v2362 = vrot.slane %v202, 1
  %v2363 = vsel %vm2292, %v2360, %v2362
  %v2364 = vrot.slane %v203, 1
  %v2365 = vsel %vm2292, %v2362, %v2364
  %v2366 = vrot.slane %v204, 1
  %v2367 = vsel %vm2292, %v2364, %v2366
  %v2368 = vrot.slane %v205, 1
  %v2369 = vsel %vm2292, %v2366, %v2368
  %v2370 = vrot.slane %v206, 1
  %v2371 = vsel %vm2292, %v2368, %v2370
  %v2372 = vrot.slane %v207, 1
  %v2373 = vsel %vm2292, %v2370, %v2372
  %v2374 = vrot.slane %v208, 1
  %v2375 = vsel %vm2292, %v2372, %v2374
  %v2376 = vrot.slane %v209, 1
  %v2377 = vsel %vm2292, %v2374, %v2376
  %v2378 = vrot.slane %v210, 1
  %v2379 = vsel %vm2292, %v2376, %v2378
  %v2380 = vrot.slane %v211, 1
  %v2381 = vsel %vm2292, %v2378, %v2380
  %v2382 = vrot.slane %v212, 1
  %v2383 = vsel %vm2292, %v2380, %v2382
  %v2384 = vrot.slane %v213, 1
  %v2385 = vsel %vm2292, %v2382, %v2384
  %v2386 = vrot.slane %v214, 1
  %v2387 = vsel %vm2292, %v2384, %v2386
  %v2388 = vrot.slane %v215, 1
  %v2389 = vsel %vm2292, %v2386, %v2388
  %v2390 = vrot.slane %v216, 1
  %v2391 = vsel %vm2292, %v2388, %v2390
  %v2392 = vrot.slane %v217, 1
  %v2393 = vsel %vm2292, %v2390, %v2392
  %v2394 = vrot.slane %v218, 1
  %v2395 = vsel %vm2292, %v2392, %v2394
  %v2396 = vrot.slane %v219, 1
  %v2397 = vsel %vm2292, %v2394, %v2396
  %v2398 = vrot.slane %v220, 1
  %v2399 = vsel %vm2292, %v2396, %v2398
  %v2400 = vrot.slane %v221, 1
  %v2401 = vsel %vm2292, %v2398, %v2400
  %v2402 = vrot.slane %v222, 1
  %v2403 = vsel %vm2292, %v2400, %v2402
  %v2404 = vrot.slane %v223, 1
  %v2405 = vsel %vm2292, %v2402, %v2404
  %v2406 = vrot.slane %v224, 1
  %v2407 = vsel %vm2292, %v2404, %v2406
  %v2408 = vrot.slane %v225, 1
  %v2409 = vsel %vm2292, %v2406, %v2408
  %v2410 = vrot.slane %v226, 1
  %v2411 = vsel %vm2292, %v2408, %v2410
  %v2412 = vrot.slane %v227, 1
  %v2413 = vsel %vm2292, %v2410, %v2412
  %v2414 = vrot.slane %v228, 1
  %v2415 = vsel %vm2292, %v2412, %v2414
  %v2416 = vrot.slane %v229, 1
  %v2417 = vsel %vm2292, %v2414, %v2416
  %v2418 = vrot.slane %v230, 1
  %v2419 = vsel %vm2292, %v2416, %v2418
  %v2428 = vunpack.c.l.b16 %v2220
  %v2429 = vunpack.c.l.b16 %v2221
  %v2430 = vunpack.c.l.b16 %v2222
  %v2431 = vunpack.c.l.b16 %v2223
  %v2432 = vunpack.c.l.b16 %v2224
  %v2433 = vunpack.c.l.b16 %v2225
  %v2434 = vunpack.c.l.b16 %v2226
  %v2435 = vunpack.c.l.b16 %v2227
  %v2436 = vpack.c.b16 %v2429, %v2428
  %v2437 = vpack.c.b16 %v2431, %v2430
  %v2438 = vpack.c.b16 %v2433, %v2432
  %v2439 = vpack.c.b16 %v2435, %v2434
  %v2445 = vsel %vm784, %v2295, 0
  %v2448 = vsel %vm784, %v2297, 0
  %v2451 = vsel %vm784, %v2299, 0
  %v2454 = vsel %vm784, %v2301, 0
  %v2457 = vsel %vm784, %v2303, 0
  %v2460 = vsel %vm784, %v2305, 0
  %v2463 = vsel %vm784, %v2307, 0
  %v2466 = vsel %vm784, %v2309, 0
  %v2469 = vsel %vm784, %v2311, 0
  %v2472 = vsel %vm784, %v2313, 0
  %v2475 = vsel %vm784, %v2315, 0
  %v2478 = vsel %vm784, %v2317, 0
  %v2481 = vsel %vm784, %v2319, 0
  %v2484 = vsel %vm784, %v2321, 0
  %v2487 = vsel %vm784, %v2323, 0
  %v2490 = vsel %vm784, %v2325, 0
  %v2493 = vsel %vm784, %v2327, 0
  %v2496 = vsel %vm784, %v2329, 0
  %v2499 = vsel %vm784, %v2331, 0
  %v2502 = vsel %vm784, %v2333, 0
  %v2505 = vsel %vm784, %v2335, 0
  %v2508 = vsel %vm784, %v2337, 0
  %v2511 = vsel %vm784, %v2339, 0
  %v2514 = vsel %vm784, %v2341, 0
  %v2517 = vsel %vm784, %v2343, 0
  %v2520 = vsel %vm784, %v2345, 0
  %v2523 = vsel %vm784, %v2347, 0
  %v2526 = vsel %vm784, %v2349, 0
  %v2529 = vsel %vm784, %v2351, 0
  %v2532 = vsel %vm784, %v2353, 0
  %v2535 = vsel %vm784, %v2355, 0
  %v2538 = vsel %vm784, %v2357, 0
  %v2541 = vsel %vm784, %v2359, 0
  %v2544 = vsel %vm784, %v2361, 0
  %v2547 = vsel %vm784, %v2363, 0
  %v2550 = vsel %vm784, %v2365, 0
  %v2553 = vsel %vm784, %v2367, 0
  %v2556 = vsel %vm784, %v2369, 0
  %v2559 = vsel %vm784, %v2371, 0
  %v2562 = vsel %vm784, %v2373, 0
  %v2565 = vsel %vm784, %v2375, 0
  %v2568 = vsel %vm784, %v2377, 0
  %v2571 = vsel %vm784, %v2379, 0
  %v2574 = vsel %vm784, %v2381, 0
  %v2577 = vsel %vm784, %v2383, 0
  %v2580 = vsel %vm784, %v2385, 0
  %v2583 = vsel %vm784, %v2387, 0
  %v2586 = vsel %vm784, %v2389, 0
  %v2589 = vsel %vm784, %v2391, 0
  %v2592 = vsel %vm784, %v2393, 0
  %v2595 = vsel %vm784, %v2395, 0
  %v2598 = vsel %vm784, %v2397, 0
  %v2601 = vsel %vm784, %v2399, 0
  %v2604 = vsel %vm784, %v2401, 0
  %v2607 = vsel %vm784, %v2403, 0
  %v2610 = vsel %vm784, %v2405, 0
  %v2613 = vsel %vm784, %v2407, 0
  %v2616 = vsel %vm784, %v2409, 0
  %v2619 = vsel %vm784, %v2411, 0
  %v2622 = vsel %vm784, %v2413, 0
  %v2625 = vsel %vm784, %v2415, 0
  %v2628 = vsel %vm784, %v2417, 0
  %v2631 = vsel %vm784, %v2419, 0
  %v2634 = vsel %vm784, %v2418, 0
  %2636 = vmatprep.subr.bf16.mxu0 0
  %2637 = vmatpush1.bf16.msra.mxu0 %v2436
  %2638 = vmatprep.subr.bf16.mxu0 0
  %2639 = vmatpush1.bf16.msra.mxu0 %v2437
  %2640 = vmatprep.subr.bf16.mxu0 0
  %2641 = vmatpush1.bf16.msra.mxu0 %v2438
  %2642 = vmatprep.subr.bf16.mxu0 0
  %2643 = vmatpush1.bf16.msra.mxu0 %v2439
  %2644 = vmatprep.subr.bf16.mxu0 0
  %2645 = vmatpush1.bf16.msra.mxu0 0
  %2646 = vmatprep.subr.bf16.mxu0 0
  %2647 = vmatpush1.bf16.msra.mxu0 0
  %2648 = vmatprep.subr.bf16.mxu0 0
  %2649 = vmatpush1.bf16.msra.mxu0 0
  %2650 = vmatprep.subr.bf16.mxu0 0
  %2651 = vmatpush1.bf16.msra.mxu0 0
  %2652 = vmatprep.subr.bf16.mxu0 0
  %2653 = vmatpush1.bf16.msra.mxu0 0
  %2654 = vmatprep.subr.bf16.mxu0 0
  %2655 = vmatpush1.bf16.msra.mxu0 0
  %2656 = vmatprep.subr.bf16.mxu0 0
  %2657 = vmatpush1.bf16.msra.mxu0 0
  %2658 = vmatprep.subr.bf16.mxu0 0
  %2659 = vmatpush1.bf16.msra.mxu0 0
  %2660 = vmatprep.subr.bf16.mxu0 0
  %2661 = vmatpush1.bf16.msra.mxu0 0
  %2662 = vmatprep.subr.bf16.mxu0 0
  %2663 = vmatpush1.bf16.msra.mxu0 0
  %2664 = vmatprep.subr.bf16.mxu0 0
  %2665 = vmatpush1.bf16.msra.mxu0 0
  %2666 = vmatprep.subr.bf16.mxu0 0
  %2667 = vmatpush1.bf16.msra.mxu0 0
  %2668 = vmatprep.mubr.bf16.mxu0 0
  %2669 = vmatmul.mubr.bf16.gmra.mrb[0].mxu0 %v2445
  %v2670 = vpop.f32.mrb[0].mxu0
  %v2671 = vadd.f32 0.0, %v2670
  %v2672 = vpop.f32.mrb[0].mxu0
  %v2673 = vpop.f32.mrb[0].mxu0
  %v2674 = vadd.f32 0.0, %v2673
  %v2675 = vpop.f32.mrb[0].mxu0
  %2676 = vmatprep.mubr.bf16.mxu0 0
  %2677 = vmatmul.mubr.bf16.gmra.mrb[0].mxu0 %v2448
  %v2678 = vpop.f32.mrb[0].mxu0
  %v2679 = vadd.f32 0.0, %v2678
  %v2680 = vpop.f32.mrb[0].mxu0
  %v2681 = vpop.f32.mrb[0].mxu0
  %v2682 = vadd.f32 0.0, %v2681
  %v2683 = vpop.f32.mrb[0].mxu0
  %2684 = vmatprep.mubr.bf16.mxu0 0
  %2685 = vmatmul.mubr.bf16.gmra.mrb[0].mxu0 %v2451
  %v2686 = vpop.f32.mrb[0].mxu0
  %v2687 = vadd.f32 0.0, %v2686
  %v2688 = vpop.f32.mrb[0].mxu0
  %v2689 = vpop.f32.mrb[0].mxu0
  %v2690 = vadd.f32 0.0, %v2689
  %v2691 = vpop.f32.mrb[0].mxu0
  %2692 = vmatprep.mubr.bf16.mxu0 0
  %2693 = vmatmul.mubr.bf16.gmra.mrb[0].mxu0 %v2454
  %v2694 = vpop.f32.mrb[0].mxu0
  %v2695 = vadd.f32 0.0, %v2694
  %v2696 = vpop.f32.mrb[0].mxu0
  %v2697 = vpop.f32.mrb[0].mxu0
  %v2698 = vadd.f32 0.0, %v2697
  %v2699 = vpop.f32.mrb[0].mxu0
  %2700 = vmatprep.mubr.bf16.mxu0 0
  %2701 = vmatmul.mubr.bf16.gmra.mrb[0].mxu0 %v2457
  %v2702 = vpop.f32.mrb[0].mxu0
  %v2703 = vadd.f32 0.0, %v2702
  %v2704 = vpop.f32.mrb[0].mxu0
  %v2705 = vpop.f32.mrb[0].mxu0
  %v2706 = vadd.f32 0.0, %v2705
  %v2707 = vpop.f32.mrb[0].mxu0
  %2708 = vmatprep.mubr.bf16.mxu0 0
  %2709 = vmatmul.mubr.bf16.gmra.mrb[0].mxu0 %v2460
  %v2710 = vpop.f32.mrb[0].mxu0
  %v2711 = vadd.f32 0.0, %v2710
  %v2712 = vpop.f32.mrb[0].mxu0
  %v2713 = vpop.f32.mrb[0].mxu0
  %v2714 = vadd.f32 0.0, %v2713
  %v2715 = vpop.f32.mrb[0].mxu0
  %2716 = vmatprep.mubr.bf16.mxu0 0
  %2717 = vmatmul.mubr.bf16.gmra.mrb[0].mxu0 %v2463
  %v2718 = vpop.f32.mrb[0].mxu0
  %v2719 = vadd.f32 0.0, %v2718
  %v2720 = vpop.f32.mrb[0].mxu0
  %v2721 = vpop.f32.mrb[0].mxu0
  %v2722 = vadd.f32 0.0, %v2721
  %v2723 = vpop.f32.mrb[0].mxu0
  %2724 = vmatprep.mubr.bf16.mxu0 0
  %2725 = vmatmul.mubr.bf16.gmra.mrb[0].mxu0 %v2466
  %v2726 = vpop.f32.mrb[0].mxu0
  %v2727 = vadd.f32 0.0, %v2726
  %v2728 = vpop.f32.mrb[0].mxu0
  %v2729 = vpop.f32.mrb[0].mxu0
  %v2730 = vadd.f32 0.0, %v2729
  %v2731 = vpop.f32.mrb[0].mxu0
  %2732 = vmatprep.mubr.bf16.mxu0 0
  %2733 = vmatmul.mubr.bf16.gmra.mrb[0].mxu0 %v2469
  %v2734 = vpop.f32.mrb[0].mxu0
  %v2735 = vadd.f32 0.0, %v2734
  %v2736 = vpop.f32.mrb[0].mxu0
  %v2737 = vpop.f32.mrb[0].mxu0
  %v2738 = vadd.f32 0.0, %v2737
  %v2739 = vpop.f32.mrb[0].mxu0
  %2740 = vmatprep.mubr.bf16.mxu0 0
  %2741 = vmatmul.mubr.bf16.gmra.mrb[0].mxu0 %v2472
  %v2742 = vpop.f32.mrb[0].mxu0
  %v2743 = vadd.f32 0.0, %v2742
  %v2744 = vpop.f32.mrb[0].mxu0
  %v2745 = vpop.f32.mrb[0].mxu0
  %v2746 = vadd.f32 0.0, %v2745
  %v2747 = vpop.f32.mrb[0].mxu0
  %2748 = vmatprep.mubr.bf16.mxu0 0
  %2749 = vmatmul.mubr.bf16.gmra.mrb[0].mxu0 %v2475
  %v2750 = vpop.f32.mrb[0].mxu0
  %v2751 = vadd.f32 0.0, %v2750
  %v2752 = vpop.f32.mrb[0].mxu0
  %v2753 = vpop.f32.mrb[0].mxu0
  %v2754 = vadd.f32 0.0, %v2753
  %v2755 = vpop.f32.mrb[0].mxu0
  %2756 = vmatprep.mubr.bf16.mxu0 0
  %2757 = vmatmul.mubr.bf16.gmra.mrb[0].mxu0 %v2478
  %v2758 = vpop.f32.mrb[0].mxu0
  %v2759 = vadd.f32 0.0, %v2758
  %v2760 = vpop.f32.mrb[0].mxu0
  %v2761 = vpop.f32.mrb[0].mxu0
  %v2762 = vadd.f32 0.0, %v2761
  %v2763 = vpop.f32.mrb[0].mxu0
  %2764 = vmatprep.mubr.bf16.mxu0 0
  %2765 = vmatmul.mubr.bf16.gmra.mrb[0].mxu0 %v2481
  %v2766 = vpop.f32.mrb[0].mxu0
  %v2767 = vadd.f32 0.0, %v2766
  %v2768 = vpop.f32.mrb[0].mxu0
  %v2769 = vpop.f32.mrb[0].mxu0
  %v2770 = vadd.f32 0.0, %v2769
  %v2771 = vpop.f32.mrb[0].mxu0
  %2772 = vmatprep.mubr.bf16.mxu0 0
  %2773 = vmatmul.mubr.bf16.gmra.mrb[0].mxu0 %v2484
  %v2774 = vpop.f32.mrb[0].mxu0
  %v2775 = vadd.f32 0.0, %v2774
  %v2776 = vpop.f32.mrb[0].mxu0
  %v2777 = vpop.f32.mrb[0].mxu0
  %v2778 = vadd.f32 0.0, %v2777
  %v2779 = vpop.f32.mrb[0].mxu0
  %2780 = vmatprep.mubr.bf16.mxu0 0
  %2781 = vmatmul.mubr.bf16.gmra.mrb[0].mxu0 %v2487
  %v2782 = vpop.f32.mrb[0].mxu0
  %v2783 = vadd.f32 0.0, %v2782
  %v2784 = vpop.f32.mrb[0].mxu0
  %v2785 = vpop.f32.mrb[0].mxu0
  %v2786 = vadd.f32 0.0, %v2785
  %v2787 = vpop.f32.mrb[0].mxu0
  %2788 = vmatprep.mubr.bf16.mxu0 0
  %2789 = vmatmul.mubr.bf16.gmra.mrb[0].mxu0 %v2490
  %v2790 = vpop.f32.mrb[0].mxu0
  %v2791 = vadd.f32 0.0, %v2790
  %v2792 = vpop.f32.mrb[0].mxu0
  %v2793 = vpop.f32.mrb[0].mxu0
  %v2794 = vadd.f32 0.0, %v2793
  %v2795 = vpop.f32.mrb[0].mxu0
  %2796 = vmatprep.mubr.bf16.mxu0 0
  %2797 = vmatmul.mubr.bf16.gmra.mrb[0].mxu0 %v2493
  %v2798 = vpop.f32.mrb[0].mxu0
  %v2799 = vadd.f32 0.0, %v2798
  %v2800 = vpop.f32.mrb[0].mxu0
  %v2801 = vpop.f32.mrb[0].mxu0
  %v2802 = vadd.f32 0.0, %v2801
  %v2803 = vpop.f32.mrb[0].mxu0
  %2804 = vmatprep.mubr.bf16.mxu0 0
  %2805 = vmatmul.mubr.bf16.gmra.mrb[0].mxu0 %v2496
  %v2806 = vpop.f32.mrb[0].mxu0
  %v2807 = vadd.f32 0.0, %v2806
  %v2808 = vpop.f32.mrb[0].mxu0
  %v2809 = vpop.f32.mrb[0].mxu0
  %v2810 = vadd.f32 0.0, %v2809
  %v2811 = vpop.f32.mrb[0].mxu0
  %2812 = vmatprep.mubr.bf16.mxu0 0
  %2813 = vmatmul.mubr.bf16.gmra.mrb[0].mxu0 %v2499
  %v2814 = vpop.f32.mrb[0].mxu0
  %v2815 = vadd.f32 0.0, %v2814
  %v2816 = vpop.f32.mrb[0].mxu0
  %v2817 = vpop.f32.mrb[0].mxu0
  %v2818 = vadd.f32 0.0, %v2817
  %v2819 = vpop.f32.mrb[0].mxu0
  %2820 = vmatprep.mubr.bf16.mxu0 0
  %2821 = vmatmul.mubr.bf16.gmra.mrb[0].mxu0 %v2502
  %v2822 = vpop.f32.mrb[0].mxu0
  %v2823 = vadd.f32 0.0, %v2822
  %v2824 = vpop.f32.mrb[0].mxu0
  %v2825 = vpop.f32.mrb[0].mxu0
  %v2826 = vadd.f32 0.0, %v2825
  %v2827 = vpop.f32.mrb[0].mxu0
  %2828 = vmatprep.mubr.bf16.mxu0 0
  %2829 = vmatmul.mubr.bf16.gmra.mrb[0].mxu0 %v2505
  %v2830 = vpop.f32.mrb[0].mxu0
  %v2831 = vadd.f32 0.0, %v2830
  %v2832 = vpop.f32.mrb[0].mxu0
  %v2833 = vpop.f32.mrb[0].mxu0
  %v2834 = vadd.f32 0.0, %v2833
  %v2835 = vpop.f32.mrb[0].mxu0
  %2836 = vmatprep.mubr.bf16.mxu0 0
  %2837 = vmatmul.mubr.bf16.gmra.mrb[0].mxu0 %v2508
  %v2838 = vpop.f32.mrb[0].mxu0
  %v2839 = vadd.f32 0.0, %v2838
  %v2840 = vpop.f32.mrb[0].mxu0
  %v2841 = vpop.f32.mrb[0].mxu0
  %v2842 = vadd.f32 0.0, %v2841
  %v2843 = vpop.f32.mrb[0].mxu0
  %2844 = vmatprep.mubr.bf16.mxu0 0
  %2845 = vmatmul.mubr.bf16.gmra.mrb[0].mxu0 %v2511
  %v2846 = vpop.f32.mrb[0].mxu0
  %v2847 = vadd.f32 0.0, %v2846
  %v2848 = vpop.f32.mrb[0].mxu0
  %v2849 = vpop.f32.mrb[0].mxu0
  %v2850 = vadd.f32 0.0, %v2849
  %v2851 = vpop.f32.mrb[0].mxu0
  %2852 = vmatprep.mubr.bf16.mxu0 0
  %2853 = vmatmul.mubr.bf16.gmra.mrb[0].mxu0 %v2514
  %v2854 = vpop.f32.mrb[0].mxu0
  %v2855 = vadd.f32 0.0, %v2854
  %v2856 = vpop.f32.mrb[0].mxu0
  %v2857 = vpop.f32.mrb[0].mxu0
  %v2858 = vadd.f32 0.0, %v2857
  %v2859 = vpop.f32.mrb[0].mxu0
  %2860 = vmatprep.mubr.bf16.mxu0 0
  %2861 = vmatmul.mubr.bf16.gmra.mrb[0].mxu0 %v2517
  %v2862 = vpop.f32.mrb[0].mxu0
  %v2863 = vadd.f32 0.0, %v2862
  %v2864 = vpop.f32.mrb[0].mxu0
  %v2865 = vpop.f32.mrb[0].mxu0
  %v2866 = vadd.f32 0.0, %v2865
  %v2867 = vpop.f32.mrb[0].mxu0
  %2868 = vmatprep.mubr.bf16.mxu0 0
  %2869 = vmatmul.mubr.bf16.gmra.mrb[0].mxu0 %v2520
  %v2870 = vpop.f32.mrb[0].mxu0
  %v2871 = vadd.f32 0.0, %v2870
  %v2872 = vpop.f32.mrb[0].mxu0
  %v2873 = vpop.f32.mrb[0].mxu0
  %v2874 = vadd.f32 0.0, %v2873
  %v2875 = vpop.f32.mrb[0].mxu0
  %2876 = vmatprep.mubr.bf16.mxu0 0
  %2877 = vmatmul.mubr.bf16.gmra.mrb[0].mxu0 %v2523
  %v2878 = vpop.f32.mrb[0].mxu0
  %v2879 = vadd.f32 0.0, %v2878
  %v2880 = vpop.f32.mrb[0].mxu0
  %v2881 = vpop.f32.mrb[0].mxu0
  %v2882 = vadd.f32 0.0, %v2881
  %v2883 = vpop.f32.mrb[0].mxu0
  %2884 = vmatprep.mubr.bf16.mxu0 0
  %2885 = vmatmul.mubr.bf16.gmra.mrb[0].mxu0 %v2526
  %v2886 = vpop.f32.mrb[0].mxu0
  %v2887 = vadd.f32 0.0, %v2886
  %v2888 = vpop.f32.mrb[0].mxu0
  %v2889 = vpop.f32.mrb[0].mxu0
  %v2890 = vadd.f32 0.0, %v2889
  %v2891 = vpop.f32.mrb[0].mxu0
  %2892 = vmatprep.mubr.bf16.mxu0 0
  %2893 = vmatmul.mubr.bf16.gmra.mrb[0].mxu0 %v2529
  %v2894 = vpop.f32.mrb[0].mxu0
  %v2895 = vadd.f32 0.0, %v2894
  %v2896 = vpop.f32.mrb[0].mxu0
  %v2897 = vpop.f32.mrb[0].mxu0
  %v2898 = vadd.f32 0.0, %v2897
  %v2899 = vpop.f32.mrb[0].mxu0
  %2900 = vmatprep.mubr.bf16.mxu0 0
  %2901 = vmatmul.mubr.bf16.gmra.mrb[0].mxu0 %v2532
  %v2902 = vpop.f32.mrb[0].mxu0
  %v2903 = vadd.f32 0.0, %v2902
  %v2904 = vpop.f32.mrb[0].mxu0
  %v2905 = vpop.f32.mrb[0].mxu0
  %v2906 = vadd.f32 0.0, %v2905
  %v2907 = vpop.f32.mrb[0].mxu0
  %2908 = vmatprep.mubr.bf16.mxu0 0
  %2909 = vmatmul.mubr.bf16.gmra.mrb[0].mxu0 %v2535
  %v2910 = vpop.f32.mrb[0].mxu0
  %v2911 = vadd.f32 0.0, %v2910
  %v2912 = vpop.f32.mrb[0].mxu0
  %v2913 = vpop.f32.mrb[0].mxu0
  %v2914 = vadd.f32 0.0, %v2913
  %v2915 = vpop.f32.mrb[0].mxu0
  %2916 = vmatprep.mubr.bf16.mxu0 0
  %2917 = vmatmul.mubr.bf16.gmra.mrb[0].mxu0 %v2538
  %v2918 = vpop.f32.mrb[0].mxu0
  %v2919 = vadd.f32 0.0, %v2918
  %v2920 = vpop.f32.mrb[0].mxu0
  %v2921 = vpop.f32.mrb[0].mxu0
  %v2922 = vadd.f32 0.0, %v2921
  %v2923 = vpop.f32.mrb[0].mxu0
  %2924 = vmatprep.mubr.bf16.mxu0 0
  %2925 = vmatmul.mubr.bf16.gmra.mrb[0].mxu0 %v2541
  %v2926 = vpop.f32.mrb[0].mxu0
  %v2927 = vadd.f32 0.0, %v2926
  %v2928 = vpop.f32.mrb[0].mxu0
  %v2929 = vpop.f32.mrb[0].mxu0
  %v2930 = vadd.f32 0.0, %v2929
  %v2931 = vpop.f32.mrb[0].mxu0
  %2932 = vmatprep.mubr.bf16.mxu0 0
  %2933 = vmatmul.mubr.bf16.gmra.mrb[0].mxu0 %v2544
  %v2934 = vpop.f32.mrb[0].mxu0
  %v2935 = vadd.f32 0.0, %v2934
  %v2936 = vpop.f32.mrb[0].mxu0
  %v2937 = vpop.f32.mrb[0].mxu0
  %v2938 = vadd.f32 0.0, %v2937
  %v2939 = vpop.f32.mrb[0].mxu0
  %2940 = vmatprep.mubr.bf16.mxu0 0
  %2941 = vmatmul.mubr.bf16.gmra.mrb[0].mxu0 %v2547
  %v2942 = vpop.f32.mrb[0].mxu0
  %v2943 = vadd.f32 0.0, %v2942
  %v2944 = vpop.f32.mrb[0].mxu0
  %v2945 = vpop.f32.mrb[0].mxu0
  %v2946 = vadd.f32 0.0, %v2945
  %v2947 = vpop.f32.mrb[0].mxu0
  %2948 = vmatprep.mubr.bf16.mxu0 0
  %2949 = vmatmul.mubr.bf16.gmra.mrb[0].mxu0 %v2550
  %v2950 = vpop.f32.mrb[0].mxu0
  %v2951 = vadd.f32 0.0, %v2950
  %v2952 = vpop.f32.mrb[0].mxu0
  %v2953 = vpop.f32.mrb[0].mxu0
  %v2954 = vadd.f32 0.0, %v2953
  %v2955 = vpop.f32.mrb[0].mxu0
  %2956 = vmatprep.mubr.bf16.mxu0 0
  %2957 = vmatmul.mubr.bf16.gmra.mrb[0].mxu0 %v2553
  %v2958 = vpop.f32.mrb[0].mxu0
  %v2959 = vadd.f32 0.0, %v2958
  %v2960 = vpop.f32.mrb[0].mxu0
  %v2961 = vpop.f32.mrb[0].mxu0
  %v2962 = vadd.f32 0.0, %v2961
  %v2963 = vpop.f32.mrb[0].mxu0
  %2964 = vmatprep.mubr.bf16.mxu0 0
  %2965 = vmatmul.mubr.bf16.gmra.mrb[0].mxu0 %v2556
  %v2966 = vpop.f32.mrb[0].mxu0
  %v2967 = vadd.f32 0.0, %v2966
  %v2968 = vpop.f32.mrb[0].mxu0
  %v2969 = vpop.f32.mrb[0].mxu0
  %v2970 = vadd.f32 0.0, %v2969
  %v2971 = vpop.f32.mrb[0].mxu0
  %2972 = vmatprep.mubr.bf16.mxu0 0
  %2973 = vmatmul.mubr.bf16.gmra.mrb[0].mxu0 %v2559
  %v2974 = vpop.f32.mrb[0].mxu0
  %v2975 = vadd.f32 0.0, %v2974
  %v2976 = vpop.f32.mrb[0].mxu0
  %v2977 = vpop.f32.mrb[0].mxu0
  %v2978 = vadd.f32 0.0, %v2977
  %v2979 = vpop.f32.mrb[0].mxu0
  %2980 = vmatprep.mubr.bf16.mxu0 0
  %2981 = vmatmul.mubr.bf16.gmra.mrb[0].mxu0 %v2562
  %v2982 = vpop.f32.mrb[0].mxu0
  %v2983 = vadd.f32 0.0, %v2982
  %v2984 = vpop.f32.mrb[0].mxu0
  %v2985 = vpop.f32.mrb[0].mxu0
  %v2986 = vadd.f32 0.0, %v2985
  %v2987 = vpop.f32.mrb[0].mxu0
  %2988 = vmatprep.mubr.bf16.mxu0 0
  %2989 = vmatmul.mubr.bf16.gmra.mrb[0].mxu0 %v2565
  %v2990 = vpop.f32.mrb[0].mxu0
  %v2991 = vadd.f32 0.0, %v2990
  %v2992 = vpop.f32.mrb[0].mxu0
  %v2993 = vpop.f32.mrb[0].mxu0
  %v2994 = vadd.f32 0.0, %v2993
  %v2995 = vpop.f32.mrb[0].mxu0
  %2996 = vmatprep.mubr.bf16.mxu0 0
  %2997 = vmatmul.mubr.bf16.gmra.mrb[0].mxu0 %v2568
  %v2998 = vpop.f32.mrb[0].mxu0
  %v2999 = vadd.f32 0.0, %v2998
  %v3000 = vpop.f32.mrb[0].mxu0
  %v3001 = vpop.f32.mrb[0].mxu0
  %v3002 = vadd.f32 0.0, %v3001
  %v3003 = vpop.f32.mrb[0].mxu0
  %3004 = vmatprep.mubr.bf16.mxu0 0
  %3005 = vmatmul.mubr.bf16.gmra.mrb[0].mxu0 %v2571
  %v3006 = vpop.f32.mrb[0].mxu0
  %v3007 = vadd.f32 0.0, %v3006
  %v3008 = vpop.f32.mrb[0].mxu0
  %v3009 = vpop.f32.mrb[0].mxu0
  %v3010 = vadd.f32 0.0, %v3009
  %v3011 = vpop.f32.mrb[0].mxu0
  %3012 = vmatprep.mubr.bf16.mxu0 0
  %3013 = vmatmul.mubr.bf16.gmra.mrb[0].mxu0 %v2574
  %v3014 = vpop.f32.mrb[0].mxu0
  %v3015 = vadd.f32 0.0, %v3014
  %v3016 = vpop.f32.mrb[0].mxu0
  %v3017 = vpop.f32.mrb[0].mxu0
  %v3018 = vadd.f32 0.0, %v3017
  %v3019 = vpop.f32.mrb[0].mxu0
  %3020 = vmatprep.mubr.bf16.mxu0 0
  %3021 = vmatmul.mubr.bf16.gmra.mrb[0].mxu0 %v2577
  %v3022 = vpop.f32.mrb[0].mxu0
  %v3023 = vadd.f32 0.0, %v3022
  %v3024 = vpop.f32.mrb[0].mxu0
  %v3025 = vpop.f32.mrb[0].mxu0
  %v3026 = vadd.f32 0.0, %v3025
  %v3027 = vpop.f32.mrb[0].mxu0
  %3028 = vmatprep.mubr.bf16.mxu0 0
  %3029 = vmatmul.mubr.bf16.gmra.mrb[0].mxu0 %v2580
  %v3030 = vpop.f32.mrb[0].mxu0
  %v3031 = vadd.f32 0.0, %v3030
  %v3032 = vpop.f32.mrb[0].mxu0
  %v3033 = vpop.f32.mrb[0].mxu0
  %v3034 = vadd.f32 0.0, %v3033
  %v3035 = vpop.f32.mrb[0].mxu0
  %3036 = vmatprep.mubr.bf16.mxu0 0
  %3037 = vmatmul.mubr.bf16.gmra.mrb[0].mxu0 %v2583
  %v3038 = vpop.f32.mrb[0].mxu0
  %v3039 = vadd.f32 0.0, %v3038
  %v3040 = vpop.f32.mrb[0].mxu0
  %v3041 = vpop.f32.mrb[0].mxu0
  %v3042 = vadd.f32 0.0, %v3041
  %v3043 = vpop.f32.mrb[0].mxu0
  %3044 = vmatprep.mubr.bf16.mxu0 0
  %3045 = vmatmul.mubr.bf16.gmra.mrb[0].mxu0 %v2586
  %v3046 = vpop.f32.mrb[0].mxu0
  %v3047 = vadd.f32 0.0, %v3046
  %v3048 = vpop.f32.mrb[0].mxu0
  %v3049 = vpop.f32.mrb[0].mxu0
  %v3050 = vadd.f32 0.0, %v3049
  %v3051 = vpop.f32.mrb[0].mxu0
  %3052 = vmatprep.mubr.bf16.mxu0 0
  %3053 = vmatmul.mubr.bf16.gmra.mrb[0].mxu0 %v2589
  %v3054 = vpop.f32.mrb[0].mxu0
  %v3055 = vadd.f32 0.0, %v3054
  %v3056 = vpop.f32.mrb[0].mxu0
  %v3057 = vpop.f32.mrb[0].mxu0
  %v3058 = vadd.f32 0.0, %v3057
  %v3059 = vpop.f32.mrb[0].mxu0
  %3060 = vmatprep.mubr.bf16.mxu0 0
  %3061 = vmatmul.mubr.bf16.gmra.mrb[0].mxu0 %v2592
  %v3062 = vpop.f32.mrb[0].mxu0
  %v3063 = vadd.f32 0.0, %v3062
  %v3064 = vpop.f32.mrb[0].mxu0
  %v3065 = vpop.f32.mrb[0].mxu0
  %v3066 = vadd.f32 0.0, %v3065
  %v3067 = vpop.f32.mrb[0].mxu0
  %3068 = vmatprep.mubr.bf16.mxu0 0
  %3069 = vmatmul.mubr.bf16.gmra.mrb[0].mxu0 %v2595
  %v3070 = vpop.f32.mrb[0].mxu0
  %v3071 = vadd.f32 0.0, %v3070
  %v3072 = vpop.f32.mrb[0].mxu0
  %v3073 = vpop.f32.mrb[0].mxu0
  %v3074 = vadd.f32 0.0, %v3073
  %v3075 = vpop.f32.mrb[0].mxu0
  %3076 = vmatprep.mubr.bf16.mxu0 0
  %3077 = vmatmul.mubr.bf16.gmra.mrb[0].mxu0 %v2598
  %v3078 = vpop.f32.mrb[0].mxu0
  %v3079 = vadd.f32 0.0, %v3078
  %v3080 = vpop.f32.mrb[0].mxu0
  %v3081 = vpop.f32.mrb[0].mxu0
  %v3082 = vadd.f32 0.0, %v3081
  %v3083 = vpop.f32.mrb[0].mxu0
  %3084 = vmatprep.mubr.bf16.mxu0 0
  %3085 = vmatmul.mubr.bf16.gmra.mrb[0].mxu0 %v2601
  %v3086 = vpop.f32.mrb[0].mxu0
  %v3087 = vadd.f32 0.0, %v3086
  %v3088 = vpop.f32.mrb[0].mxu0
  %v3089 = vpop.f32.mrb[0].mxu0
  %v3090 = vadd.f32 0.0, %v3089
  %v3091 = vpop.f32.mrb[0].mxu0
  %3092 = vmatprep.mubr.bf16.mxu0 0
  %3093 = vmatmul.mubr.bf16.gmra.mrb[0].mxu0 %v2604
  %v3094 = vpop.f32.mrb[0].mxu0
  %v3095 = vadd.f32 0.0, %v3094
  %v3096 = vpop.f32.mrb[0].mxu0
  %v3097 = vpop.f32.mrb[0].mxu0
  %v3098 = vadd.f32 0.0, %v3097
  %v3099 = vpop.f32.mrb[0].mxu0
  %3100 = vmatprep.mubr.bf16.mxu0 0
  %3101 = vmatmul.mubr.bf16.gmra.mrb[0].mxu0 %v2607
  %v3102 = vpop.f32.mrb[0].mxu0
  %v3103 = vadd.f32 0.0, %v3102
  %v3104 = vpop.f32.mrb[0].mxu0
  %v3105 = vpop.f32.mrb[0].mxu0
  %v3106 = vadd.f32 0.0, %v3105
  %v3107 = vpop.f32.mrb[0].mxu0
  %3108 = vmatprep.mubr.bf16.mxu0 0
  %3109 = vmatmul.mubr.bf16.gmra.mrb[0].mxu0 %v2610
  %v3110 = vpop.f32.mrb[0].mxu0
  %v3111 = vadd.f32 0.0, %v3110
  %v3112 = vpop.f32.mrb[0].mxu0
  %v3113 = vpop.f32.mrb[0].mxu0
  %v3114 = vadd.f32 0.0, %v3113
  %v3115 = vpop.f32.mrb[0].mxu0
  %3116 = vmatprep.mubr.bf16.mxu0 0
  %3117 = vmatmul.mubr.bf16.gmra.mrb[0].mxu0 %v2613
  %v3118 = vpop.f32.mrb[0].mxu0
  %v3119 = vadd.f32 0.0, %v3118
  %v3120 = vpop.f32.mrb[0].mxu0
  %v3121 = vpop.f32.mrb[0].mxu0
  %v3122 = vadd.f32 0.0, %v3121
  %v3123 = vpop.f32.mrb[0].mxu0
  %3124 = vmatprep.mubr.bf16.mxu0 0
  %3125 = vmatmul.mubr.bf16.gmra.mrb[0].mxu0 %v2616
  %v3126 = vpop.f32.mrb[0].mxu0
  %v3127 = vadd.f32 0.0, %v3126
  %v3128 = vpop.f32.mrb[0].mxu0
  %v3129 = vpop.f32.mrb[0].mxu0
  %v3130 = vadd.f32 0.0, %v3129
  %v3131 = vpop.f32.mrb[0].mxu0
  %3132 = vmatprep.mubr.bf16.mxu0 0
  %3133 = vmatmul.mubr.bf16.gmra.mrb[0].mxu0 %v2619
  %v3134 = vpop.f32.mrb[0].mxu0
  %v3135 = vadd.f32 0.0, %v3134
  %v3136 = vpop.f32.mrb[0].mxu0
  %v3137 = vpop.f32.mrb[0].mxu0
  %v3138 = vadd.f32 0.0, %v3137
  %v3139 = vpop.f32.mrb[0].mxu0
  %3140 = vmatprep.mubr.bf16.mxu0 0
  %3141 = vmatmul.mubr.bf16.gmra.mrb[0].mxu0 %v2622
  %v3142 = vpop.f32.mrb[0].mxu0
  %v3143 = vadd.f32 0.0, %v3142
  %v3144 = vpop.f32.mrb[0].mxu0
  %v3145 = vpop.f32.mrb[0].mxu0
  %v3146 = vadd.f32 0.0, %v3145
  %v3147 = vpop.f32.mrb[0].mxu0
  %3148 = vmatprep.mubr.bf16.mxu0 0
  %3149 = vmatmul.mubr.bf16.gmra.mrb[0].mxu0 %v2625
  %v3150 = vpop.f32.mrb[0].mxu0
  %v3151 = vadd.f32 0.0, %v3150
  %v3152 = vpop.f32.mrb[0].mxu0
  %v3153 = vpop.f32.mrb[0].mxu0
  %v3154 = vadd.f32 0.0, %v3153
  %v3155 = vpop.f32.mrb[0].mxu0
  %3156 = vmatprep.mubr.bf16.mxu0 0
  %3157 = vmatmul.mubr.bf16.gmra.mrb[0].mxu0 %v2628
  %v3158 = vpop.f32.mrb[0].mxu0
  %v3159 = vadd.f32 0.0, %v3158
  %v3160 = vpop.f32.mrb[0].mxu0
  %v3161 = vpop.f32.mrb[0].mxu0
  %v3162 = vadd.f32 0.0, %v3161
  %v3163 = vpop.f32.mrb[0].mxu0
  %3164 = vmatprep.mubr.bf16.mxu0 0
  %3165 = vmatmul.mubr.bf16.gmra.mrb[0].mxu0 %v2631
  %v3166 = vpop.f32.mrb[0].mxu0
  %v3167 = vadd.f32 0.0, %v3166
  %v3168 = vpop.f32.mrb[0].mxu0
  %v3169 = vpop.f32.mrb[0].mxu0
  %v3170 = vadd.f32 0.0, %v3169
  %v3171 = vpop.f32.mrb[0].mxu0
  %3172 = vmatprep.mubr.bf16.mxu0 0
  %3173 = vmatmul.mubr.bf16.gmra.mrb[0].mxu0 %v2634
  %v3174 = vpop.f32.mrb[0].mxu0
  %v3175 = vadd.f32 0.0, %v3174
  %v3176 = vpop.f32.mrb[0].mxu0
  %v3177 = vpop.f32.mrb[0].mxu0
  %v3178 = vadd.f32 0.0, %v3177
  %v3179 = vpop.f32.mrb[0].mxu0
  %3180 = vdwg.mxu0
  %v3181 = vadd.f32 %v1709, %v2671
  %v3182 = vadd.f32 %v1712, %v2674
  %v3183 = vadd.f32 %v1717, %v2679
  %v3184 = vadd.f32 %v1720, %v2682
  %v3185 = vadd.f32 %v1725, %v2687
  %v3186 = vadd.f32 %v1728, %v2690
  %v3187 = vadd.f32 %v1733, %v2695
  %v3188 = vadd.f32 %v1736, %v2698
  %v3189 = vadd.f32 %v1741, %v2703
  %v3190 = vadd.f32 %v1744, %v2706
  %v3191 = vadd.f32 %v1749, %v2711
  %v3192 = vadd.f32 %v1752, %v2714
  %v3193 = vadd.f32 %v1757, %v2719
  %v3194 = vadd.f32 %v1760, %v2722
  %v3195 = vadd.f32 %v1765, %v2727
  %v3196 = vadd.f32 %v1768, %v2730
  %v3197 = vadd.f32 %v1773, %v2735
  %v3198 = vadd.f32 %v1776, %v2738
  %v3199 = vadd.f32 %v1781, %v2743
  %v3200 = vadd.f32 %v1784, %v2746
  %v3201 = vadd.f32 %v1789, %v2751
  %v3202 = vadd.f32 %v1792, %v2754
  %v3203 = vadd.f32 %v1797, %v2759
  %v3204 = vadd.f32 %v1800, %v2762
  %v3205 = vadd.f32 %v1805, %v2767
  %v3206 = vadd.f32 %v1808, %v2770
  %v3207 = vadd.f32 %v1813, %v2775
  %v3208 = vadd.f32 %v1816, %v2778
  %v3209 = vadd.f32 %v1821, %v2783
  %v3210 = vadd.f32 %v1824, %v2786
  %v3211 = vadd.f32 %v1829, %v2791
  %v3212 = vadd.f32 %v1832, %v2794
  %v3213 = vadd.f32 %v1837, %v2799
  %v3214 = vadd.f32 %v1840, %v2802
  %v3215 = vadd.f32 %v1845, %v2807
  %v3216 = vadd.f32 %v1848, %v2810
  %v3217 = vadd.f32 %v1853, %v2815
  %v3218 = vadd.f32 %v1856, %v2818
  %v3219 = vadd.f32 %v1861, %v2823
  %v3220 = vadd.f32 %v1864, %v2826
  %v3221 = vadd.f32 %v1869, %v2831
  %v3222 = vadd.f32 %v1872, %v2834
  %v3223 = vadd.f32 %v1877, %v2839
  %v3224 = vadd.f32 %v1880, %v2842
  %v3225 = vadd.f32 %v1885, %v2847
  %v3226 = vadd.f32 %v1888, %v2850
  %v3227 = vadd.f32 %v1893, %v2855
  %v3228 = vadd.f32 %v1896, %v2858
  %v3229 = vadd.f32 %v1901, %v2863
  %v3230 = vadd.f32 %v1904, %v2866
  %v3231 = vadd.f32 %v1909, %v2871
  %v3232 = vadd.f32 %v1912, %v2874
  %v3233 = vadd.f32 %v1917, %v2879
  %v3234 = vadd.f32 %v1920, %v2882
  %v3235 = vadd.f32 %v1925, %v2887
  %v3236 = vadd.f32 %v1928, %v2890
  %v3237 = vadd.f32 %v1933, %v2895
  %v3238 = vadd.f32 %v1936, %v2898
  %v3239 = vadd.f32 %v1941, %v2903
  %v3240 = vadd.f32 %v1944, %v2906
  %v3241 = vadd.f32 %v1949, %v2911
  %v3242 = vadd.f32 %v1952, %v2914
  %v3243 = vadd.f32 %v1957, %v2919
  %v3244 = vadd.f32 %v1960, %v2922
  %v3245 = vadd.f32 %v1965, %v2927
  %v3246 = vadd.f32 %v1968, %v2930
  %v3247 = vadd.f32 %v1973, %v2935
  %v3248 = vadd.f32 %v1976, %v2938
  %v3249 = vadd.f32 %v1981, %v2943
  %v3250 = vadd.f32 %v1984, %v2946
  %v3251 = vadd.f32 %v1989, %v2951
  %v3252 = vadd.f32 %v1992, %v2954
  %v3253 = vadd.f32 %v1997, %v2959
  %v3254 = vadd.f32 %v2000, %v2962
  %v3255 = vadd.f32 %v2005, %v2967
  %v3256 = vadd.f32 %v2008, %v2970
  %v3257 = vadd.f32 %v2013, %v2975
  %v3258 = vadd.f32 %v2016, %v2978
  %v3259 = vadd.f32 %v2021, %v2983
  %v3260 = vadd.f32 %v2024, %v2986
  %v3261 = vadd.f32 %v2029, %v2991
  %v3262 = vadd.f32 %v2032, %v2994
  %v3263 = vadd.f32 %v2037, %v2999
  %v3264 = vadd.f32 %v2040, %v3002
  %v3265 = vadd.f32 %v2045, %v3007
  %v3266 = vadd.f32 %v2048, %v3010
  %v3267 = vadd.f32 %v2053, %v3015
  %v3268 = vadd.f32 %v2056, %v3018
  %v3269 = vadd.f32 %v2061, %v3023
  %v3270 = vadd.f32 %v2064, %v3026
  %v3271 = vadd.f32 %v2069, %v3031
  %v3272 = vadd.f32 %v2072, %v3034
  %v3273 = vadd.f32 %v2077, %v3039
  %v3274 = vadd.f32 %v2080, %v3042
  %v3275 = vadd.f32 %v2085, %v3047
  %v3276 = vadd.f32 %v2088, %v3050
  %v3277 = vadd.f32 %v2093, %v3055
  %v3278 = vadd.f32 %v2096, %v3058
  %v3279 = vadd.f32 %v2101, %v3063
  %v3280 = vadd.f32 %v2104, %v3066
  %v3281 = vadd.f32 %v2109, %v3071
  %v3282 = vadd.f32 %v2112, %v3074
  %v3283 = vadd.f32 %v2117, %v3079
  %v3284 = vadd.f32 %v2120, %v3082
  %v3285 = vadd.f32 %v2125, %v3087
  %v3286 = vadd.f32 %v2128, %v3090
  %v3287 = vadd.f32 %v2133, %v3095
  %v3288 = vadd.f32 %v2136, %v3098
  %v3289 = vadd.f32 %v2141, %v3103
  %v3290 = vadd.f32 %v2144, %v3106
  %v3291 = vadd.f32 %v2149, %v3111
  %v3292 = vadd.f32 %v2152, %v3114
  %v3293 = vadd.f32 %v2157, %v3119
  %v3294 = vadd.f32 %v2160, %v3122
  %v3295 = vadd.f32 %v2165, %v3127
  %v3296 = vadd.f32 %v2168, %v3130
  %v3297 = vadd.f32 %v2173, %v3135
  %v3298 = vadd.f32 %v2176, %v3138
  %v3299 = vadd.f32 %v2181, %v3143
  %v3300 = vadd.f32 %v2184, %v3146
  %v3301 = vadd.f32 %v2189, %v3151
  %v3302 = vadd.f32 %v2192, %v3154
  %v3303 = vadd.f32 %v2197, %v3159
  %v3304 = vadd.f32 %v2200, %v3162
  %v3305 = vadd.f32 %v2205, %v3167
  %v3306 = vadd.f32 %v2208, %v3170
  %v3307 = vadd.f32 %v2213, %v3175
  %v3308 = vadd.f32 %v2216, %v3178
  %v3309 = vld [vmem:[%s2] sm:$0x1]
  %v3311 = vlaneseq
  %v3312 = vshrl.u32 %v3311, 7
  %v3313 = vsub.s32 0, %v3312
  %v3314 = vrot.slane %v3309, %v3313
  %v3316 = vadd.f32 %v3181, %v3314
  %v3317 = vadd.f32 %v3182, %v3314
  %v3318 = vadd.f32 %v3183, %v3314
  %v3319 = vadd.f32 %v3184, %v3314
  %v3320 = vadd.f32 %v3185, %v3314
  %v3321 = vadd.f32 %v3186, %v3314
  %v3322 = vadd.f32 %v3187, %v3314
  %v3323 = vadd.f32 %v3188, %v3314
  %v3324 = vadd.f32 %v3189, %v3314
  %v3325 = vadd.f32 %v3190, %v3314
  %v3326 = vadd.f32 %v3191, %v3314
  %v3327 = vadd.f32 %v3192, %v3314
  %v3328 = vadd.f32 %v3193, %v3314
  %v3329 = vadd.f32 %v3194, %v3314
  %v3330 = vadd.f32 %v3195, %v3314
  %v3331 = vadd.f32 %v3196, %v3314
  %v3332 = vadd.f32 %v3197, %v3314
  %v3333 = vadd.f32 %v3198, %v3314
  %v3334 = vadd.f32 %v3199, %v3314
  %v3335 = vadd.f32 %v3200, %v3314
  %v3336 = vadd.f32 %v3201, %v3314
  %v3337 = vadd.f32 %v3202, %v3314
  %v3338 = vadd.f32 %v3203, %v3314
  %v3339 = vadd.f32 %v3204, %v3314
  %v3340 = vadd.f32 %v3205, %v3314
  %v3341 = vadd.f32 %v3206, %v3314
  %v3342 = vadd.f32 %v3207, %v3314
  %v3343 = vadd.f32 %v3208, %v3314
  %v3344 = vadd.f32 %v3209, %v3314
  %v3345 = vadd.f32 %v3210, %v3314
  %v3346 = vadd.f32 %v3211, %v3314
  %v3347 = vadd.f32 %v3212, %v3314
  %v3348 = vadd.f32 %v3213, %v3314
  %v3349 = vadd.f32 %v3214, %v3314
  %v3350 = vadd.f32 %v3215, %v3314
  %v3351 = vadd.f32 %v3216, %v3314
  %v3352 = vadd.f32 %v3217, %v3314
  %v3353 = vadd.f32 %v3218, %v3314
  %v3354 = vadd.f32 %v3219, %v3314
  %v3355 = vadd.f32 %v3220, %v3314
  %v3356 = vadd.f32 %v3221, %v3314
  %v3357 = vadd.f32 %v3222, %v3314
  %v3358 = vadd.f32 %v3223, %v3314
  %v3359 = vadd.f32 %v3224, %v3314
  %v3360 = vadd.f32 %v3225, %v3314
  %v3361 = vadd.f32 %v3226, %v3314
  %v3362 = vadd.f32 %v3227, %v3314
  %v3363 = vadd.f32 %v3228, %v3314
  %v3364 = vadd.f32 %v3229, %v3314
  %v3365 = vadd.f32 %v3230, %v3314
  %v3366 = vadd.f32 %v3231, %v3314
  %v3367 = vadd.f32 %v3232, %v3314
  %v3368 = vadd.f32 %v3233, %v3314
  %v3369 = vadd.f32 %v3234, %v3314
  %v3370 = vadd.f32 %v3235, %v3314
  %v3371 = vadd.f32 %v3236, %v3314
  %v3372 = vadd.f32 %v3237, %v3314
  %v3373 = vadd.f32 %v3238, %v3314
  %v3374 = vadd.f32 %v3239, %v3314
  %v3375 = vadd.f32 %v3240, %v3314
  %v3376 = vadd.f32 %v3241, %v3314
  %v3377 = vadd.f32 %v3242, %v3314
  %v3378 = vadd.f32 %v3243, %v3314
  %v3379 = vadd.f32 %v3244, %v3314
  %v3380 = vadd.f32 %v3245, %v3314
  %v3381 = vadd.f32 %v3246, %v3314
  %v3382 = vadd.f32 %v3247, %v3314
  %v3383 = vadd.f32 %v3248, %v3314
  %v3384 = vadd.f32 %v3249, %v3314
  %v3385 = vadd.f32 %v3250, %v3314
  %v3386 = vadd.f32 %v3251, %v3314
  %v3387 = vadd.f32 %v3252, %v3314
  %v3388 = vadd.f32 %v3253, %v3314
  %v3389 = vadd.f32 %v3254, %v3314
  %v3390 = vadd.f32 %v3255, %v3314
  %v3391 = vadd.f32 %v3256, %v3314
  %v3392 = vadd.f32 %v3257, %v3314
  %v3393 = vadd.f32 %v3258, %v3314
  %v3394 = vadd.f32 %v3259, %v3314
  %v3395 = vadd.f32 %v3260, %v3314
  %v3396 = vadd.f32 %v3261, %v3314
  %v3397 = vadd.f32 %v3262, %v3314
  %v3398 = vadd.f32 %v3263, %v3314
  %v3399 = vadd.f32 %v3264, %v3314
  %v3400 = vadd.f32 %v3265, %v3314
  %v3401 = vadd.f32 %v3266, %v3314
  %v3402 = vadd.f32 %v3267, %v3314
  %v3403 = vadd.f32 %v3268, %v3314
  %v3404 = vadd.f32 %v3269, %v3314
  %v3405 = vadd.f32 %v3270, %v3314
  %v3406 = vadd.f32 %v3271, %v3314
  %v3407 = vadd.f32 %v3272, %v3314
  %v3408 = vadd.f32 %v3273, %v3314
  %v3409 = vadd.f32 %v3274, %v3314
  %v3410 = vadd.f32 %v3275, %v3314
  %v3411 = vadd.f32 %v3276, %v3314
  %v3412 = vadd.f32 %v3277, %v3314
  %v3413 = vadd.f32 %v3278, %v3314
  %v3414 = vadd.f32 %v3279, %v3314
  %v3415 = vadd.f32 %v3280, %v3314
  %v3416 = vadd.f32 %v3281, %v3314
  %v3417 = vadd.f32 %v3282, %v3314
  %v3418 = vadd.f32 %v3283, %v3314
  %v3419 = vadd.f32 %v3284, %v3314
  %v3420 = vadd.f32 %v3285, %v3314
  %v3421 = vadd.f32 %v3286, %v3314
  %v3422 = vadd.f32 %v3287, %v3314
  %v3423 = vadd.f32 %v3288, %v3314
  %v3424 = vadd.f32 %v3289, %v3314
  %v3425 = vadd.f32 %v3290, %v3314
  %v3426 = vadd.f32 %v3291, %v3314
  %v3427 = vadd.f32 %v3292, %v3314
  %v3428 = vadd.f32 %v3293, %v3314
  %v3429 = vadd.f32 %v3294, %v3314
  %v3430 = vadd.f32 %v3295, %v3314
  %v3431 = vadd.f32 %v3296, %v3314
  %v3432 = vadd.f32 %v3297, %v3314
  %v3433 = vadd.f32 %v3298, %v3314
  %v3434 = vadd.f32 %v3299, %v3314
  %v3435 = vadd.f32 %v3300, %v3314
  %v3436 = vadd.f32 %v3301, %v3314
  %v3437 = vadd.f32 %v3302, %v3314
  %v3438 = vadd.f32 %v3303, %v3314
  %v3439 = vadd.f32 %v3304, %v3314
  %v3440 = vadd.f32 %v3305, %v3314
  %v3441 = vadd.f32 %v3306, %v3314
  %v3442 = vadd.f32 %v3307, %v3314
  %v3443 = vadd.f32 %v3308, %v3314
  %v3444 = vmax.f32 %v3316, 0.0
  %v3445 = vmax.f32 %v3317, 0.0
  %v3446 = vmax.f32 %v3318, 0.0
  %v3447 = vmax.f32 %v3319, 0.0
  %v3448 = vmax.f32 %v3320, 0.0
  %v3449 = vmax.f32 %v3321, 0.0
  %v3450 = vmax.f32 %v3322, 0.0
  %v3451 = vmax.f32 %v3323, 0.0
  %v3452 = vmax.f32 %v3324, 0.0
  %v3453 = vmax.f32 %v3325, 0.0
  %v3454 = vmax.f32 %v3326, 0.0
  %v3455 = vmax.f32 %v3327, 0.0
  %v3456 = vmax.f32 %v3328, 0.0
  %v3457 = vmax.f32 %v3329, 0.0
  %v3458 = vmax.f32 %v3330, 0.0
  %v3459 = vmax.f32 %v3331, 0.0
  %v3460 = vmax.f32 %v3332, 0.0
  %v3461 = vmax.f32 %v3333, 0.0
  %v3462 = vmax.f32 %v3334, 0.0
  %v3463 = vmax.f32 %v3335, 0.0
  %v3464 = vmax.f32 %v3336, 0.0
  %v3465 = vmax.f32 %v3337, 0.0
  %v3466 = vmax.f32 %v3338, 0.0
  %v3467 = vmax.f32 %v3339, 0.0
  %v3468 = vmax.f32 %v3340, 0.0
  %v3469 = vmax.f32 %v3341, 0.0
  %v3470 = vmax.f32 %v3342, 0.0
  %v3471 = vmax.f32 %v3343, 0.0
  %v3472 = vmax.f32 %v3344, 0.0
  %v3473 = vmax.f32 %v3345, 0.0
  %v3474 = vmax.f32 %v3346, 0.0
  %v3475 = vmax.f32 %v3347, 0.0
  %v3476 = vmax.f32 %v3348, 0.0
  %v3477 = vmax.f32 %v3349, 0.0
  %v3478 = vmax.f32 %v3350, 0.0
  %v3479 = vmax.f32 %v3351, 0.0
  %v3480 = vmax.f32 %v3352, 0.0
  %v3481 = vmax.f32 %v3353, 0.0
  %v3482 = vmax.f32 %v3354, 0.0
  %v3483 = vmax.f32 %v3355, 0.0
  %v3484 = vmax.f32 %v3356, 0.0
  %v3485 = vmax.f32 %v3357, 0.0
  %v3486 = vmax.f32 %v3358, 0.0
  %v3487 = vmax.f32 %v3359, 0.0
  %v3488 = vmax.f32 %v3360, 0.0
  %v3489 = vmax.f32 %v3361, 0.0
  %v3490 = vmax.f32 %v3362, 0.0
  %v3491 = vmax.f32 %v3363, 0.0
  %v3492 = vmax.f32 %v3364, 0.0
  %v3493 = vmax.f32 %v3365, 0.0
  %v3494 = vmax.f32 %v3366, 0.0
  %v3495 = vmax.f32 %v3367, 0.0
  %v3496 = vmax.f32 %v3368, 0.0
  %v3497 = vmax.f32 %v3369, 0.0
  %v3498 = vmax.f32 %v3370, 0.0
  %v3499 = vmax.f32 %v3371, 0.0
  %v3500 = vmax.f32 %v3372, 0.0
  %v3501 = vmax.f32 %v3373, 0.0
  %v3502 = vmax.f32 %v3374, 0.0
  %v3503 = vmax.f32 %v3375, 0.0
  %v3504 = vmax.f32 %v3376, 0.0
  %v3505 = vmax.f32 %v3377, 0.0
  %v3506 = vmax.f32 %v3378, 0.0
  %v3507 = vmax.f32 %v3379, 0.0
  %v3508 = vmax.f32 %v3380, 0.0
  %v3509 = vmax.f32 %v3381, 0.0
  %v3510 = vmax.f32 %v3382, 0.0
  %v3511 = vmax.f32 %v3383, 0.0
  %v3512 = vmax.f32 %v3384, 0.0
  %v3513 = vmax.f32 %v3385, 0.0
  %v3514 = vmax.f32 %v3386, 0.0
  %v3515 = vmax.f32 %v3387, 0.0
  %v3516 = vmax.f32 %v3388, 0.0
  %v3517 = vmax.f32 %v3389, 0.0
  %v3518 = vmax.f32 %v3390, 0.0
  %v3519 = vmax.f32 %v3391, 0.0
  %v3520 = vmax.f32 %v3392, 0.0
  %v3521 = vmax.f32 %v3393, 0.0
  %v3522 = vmax.f32 %v3394, 0.0
  %v3523 = vmax.f32 %v3395, 0.0
  %v3524 = vmax.f32 %v3396, 0.0
  %v3525 = vmax.f32 %v3397, 0.0
  %v3526 = vmax.f32 %v3398, 0.0
  %v3527 = vmax.f32 %v3399, 0.0
  %v3528 = vmax.f32 %v3400, 0.0
  %v3529 = vmax.f32 %v3401, 0.0
  %v3530 = vmax.f32 %v3402, 0.0
  %v3531 = vmax.f32 %v3403, 0.0
  %v3532 = vmax.f32 %v3404, 0.0
  %v3533 = vmax.f32 %v3405, 0.0
  %v3534 = vmax.f32 %v3406, 0.0
  %v3535 = vmax.f32 %v3407, 0.0
  %v3536 = vmax.f32 %v3408, 0.0
  %v3537 = vmax.f32 %v3409, 0.0
  %v3538 = vmax.f32 %v3410, 0.0
  %v3539 = vmax.f32 %v3411, 0.0
  %v3540 = vmax.f32 %v3412, 0.0
  %v3541 = vmax.f32 %v3413, 0.0
  %v3542 = vmax.f32 %v3414, 0.0
  %v3543 = vmax.f32 %v3415, 0.0
  %v3544 = vmax.f32 %v3416, 0.0
  %v3545 = vmax.f32 %v3417, 0.0
  %v3546 = vmax.f32 %v3418, 0.0
  %v3547 = vmax.f32 %v3419, 0.0
  %v3548 = vmax.f32 %v3420, 0.0
  %v3549 = vmax.f32 %v3421, 0.0
  %v3550 = vmax.f32 %v3422, 0.0
  %v3551 = vmax.f32 %v3423, 0.0
  %v3552 = vmax.f32 %v3424, 0.0
  %v3553 = vmax.f32 %v3425, 0.0
  %v3554 = vmax.f32 %v3426, 0.0
  %v3555 = vmax.f32 %v3427, 0.0
  %v3556 = vmax.f32 %v3428, 0.0
  %v3557 = vmax.f32 %v3429, 0.0
  %v3558 = vmax.f32 %v3430, 0.0
  %v3559 = vmax.f32 %v3431, 0.0
  %v3560 = vmax.f32 %v3432, 0.0
  %v3561 = vmax.f32 %v3433, 0.0
  %v3562 = vmax.f32 %v3434, 0.0
  %v3563 = vmax.f32 %v3435, 0.0
  %v3564 = vmax.f32 %v3436, 0.0
  %v3565 = vmax.f32 %v3437, 0.0
  %v3566 = vmax.f32 %v3438, 0.0
  %v3567 = vmax.f32 %v3439, 0.0
  %v3568 = vmax.f32 %v3440, 0.0
  %v3569 = vmax.f32 %v3441, 0.0
  %v3570 = vmax.f32 %v3442, 0.0
  %v3571 = vmax.f32 %v3443, 0.0
  %v3572 = vpack.c.bf16 %v3445, %v3444
  %v3573 = vpack.c.bf16 %v3447, %v3446
  %v3574 = vpack.c.bf16 %v3449, %v3448
  %v3575 = vpack.c.bf16 %v3451, %v3450
  %v3576 = vpack.c.bf16 %v3453, %v3452
  %v3577 = vpack.c.bf16 %v3455, %v3454
  %v3578 = vpack.c.bf16 %v3457, %v3456
  %v3579 = vpack.c.bf16 %v3459, %v3458
  %v3580 = vpack.c.bf16 %v3461, %v3460
  %v3581 = vpack.c.bf16 %v3463, %v3462
  %v3582 = vpack.c.bf16 %v3465, %v3464
  %v3583 = vpack.c.bf16 %v3467, %v3466
  %v3584 = vpack.c.bf16 %v3469, %v3468
  %v3585 = vpack.c.bf16 %v3471, %v3470
  %v3586 = vpack.c.bf16 %v3473, %v3472
  %v3587 = vpack.c.bf16 %v3475, %v3474
  %v3588 = vpack.c.bf16 %v3477, %v3476
  %v3589 = vpack.c.bf16 %v3479, %v3478
  %v3590 = vpack.c.bf16 %v3481, %v3480
  %v3591 = vpack.c.bf16 %v3483, %v3482
  %v3592 = vpack.c.bf16 %v3485, %v3484
  %v3593 = vpack.c.bf16 %v3487, %v3486
  %v3594 = vpack.c.bf16 %v3489, %v3488
  %v3595 = vpack.c.bf16 %v3491, %v3490
  %v3596 = vpack.c.bf16 %v3493, %v3492
  %v3597 = vpack.c.bf16 %v3495, %v3494
  %v3598 = vpack.c.bf16 %v3497, %v3496
  %v3599 = vpack.c.bf16 %v3499, %v3498
  %v3600 = vpack.c.bf16 %v3501, %v3500
  %v3601 = vpack.c.bf16 %v3503, %v3502
  %v3602 = vpack.c.bf16 %v3505, %v3504
  %v3603 = vpack.c.bf16 %v3507, %v3506
  %v3604 = vpack.c.bf16 %v3509, %v3508
  %v3605 = vpack.c.bf16 %v3511, %v3510
  %v3606 = vpack.c.bf16 %v3513, %v3512
  %v3607 = vpack.c.bf16 %v3515, %v3514
  %v3608 = vpack.c.bf16 %v3517, %v3516
  %v3609 = vpack.c.bf16 %v3519, %v3518
  %v3610 = vpack.c.bf16 %v3521, %v3520
  %v3611 = vpack.c.bf16 %v3523, %v3522
  %v3612 = vpack.c.bf16 %v3525, %v3524
  %v3613 = vpack.c.bf16 %v3527, %v3526
  %v3614 = vpack.c.bf16 %v3529, %v3528
  %v3615 = vpack.c.bf16 %v3531, %v3530
  %v3616 = vpack.c.bf16 %v3533, %v3532
  %v3617 = vpack.c.bf16 %v3535, %v3534
  %v3618 = vpack.c.bf16 %v3537, %v3536
  %v3619 = vpack.c.bf16 %v3539, %v3538
  %v3620 = vpack.c.bf16 %v3541, %v3540
  %v3621 = vpack.c.bf16 %v3543, %v3542
  %v3622 = vpack.c.bf16 %v3545, %v3544
  %v3623 = vpack.c.bf16 %v3547, %v3546
  %v3624 = vpack.c.bf16 %v3549, %v3548
  %v3625 = vpack.c.bf16 %v3551, %v3550
  %v3626 = vpack.c.bf16 %v3553, %v3552
  %v3627 = vpack.c.bf16 %v3555, %v3554
  %v3628 = vpack.c.bf16 %v3557, %v3556
  %v3629 = vpack.c.bf16 %v3559, %v3558
  %v3630 = vpack.c.bf16 %v3561, %v3560
  %v3631 = vpack.c.bf16 %v3563, %v3562
  %v3632 = vpack.c.bf16 %v3565, %v3564
  %v3633 = vpack.c.bf16 %v3567, %v3566
  %v3634 = vpack.c.bf16 %v3569, %v3568
  %v3635 = vpack.c.bf16 %v3571, %v3570
  %v3636 = vld [vmem:[%s3] sm:$0xf]
  %v3637 = vld [vmem:[%s3 + $0x4] sm:$0xf]
  %v3638 = vld [vmem:[%s3 + $0x8] sm:$0xf]
  %v3639 = vld [vmem:[%s3 + $0xc] sm:$0xf]
  %v3640 = vld [vmem:[%s3 + $0x10] sm:$0xf]
  %v3641 = vld [vmem:[%s3 + $0x14] sm:$0xf]
  %v3642 = vld [vmem:[%s3 + $0x18] sm:$0xf]
  %v3643 = vld [vmem:[%s3 + $0x1c] sm:$0xf]
  %v3644 = vld [vmem:[%s3 + $0x20] sm:$0xf]
  %v3645 = vld [vmem:[%s3 + $0x24] sm:$0xf]
  %v3646 = vld [vmem:[%s3 + $0x28] sm:$0xf]
  %v3647 = vld [vmem:[%s3 + $0x2c] sm:$0xf]
  %v3648 = vld [vmem:[%s3 + $0x30] sm:$0xf]
  %v3649 = vld [vmem:[%s3 + $0x34] sm:$0xf]
  %v3664 = vunpack.c.l.b16 %v3636
  %v3665 = vunpack.c.l.b16 %v3637
  %v3666 = vunpack.c.l.b16 %v3638
  %v3667 = vunpack.c.l.b16 %v3639
  %v3668 = vunpack.c.l.b16 %v3640
  %v3669 = vunpack.c.l.b16 %v3641
  %v3670 = vunpack.c.l.b16 %v3642
  %v3671 = vunpack.c.l.b16 %v3643
  %v3672 = vunpack.c.l.b16 %v3644
  %v3673 = vunpack.c.l.b16 %v3645
  %v3674 = vunpack.c.l.b16 %v3646
  %v3675 = vunpack.c.l.b16 %v3647
  %v3676 = vunpack.c.l.b16 %v3648
  %v3677 = vunpack.c.l.b16 %v3649
  %v3678 = vpack.c.b16 %v3665, %v3664
  %v3679 = vpack.c.b16 %v3667, %v3666
  %v3680 = vpack.c.b16 %v3669, %v3668
  %v3681 = vpack.c.b16 %v3671, %v3670
  %v3682 = vpack.c.b16 %v3673, %v3672
  %v3683 = vpack.c.b16 %v3675, %v3674
  %v3684 = vpack.c.b16 %v3677, %v3676
  %vm3692 = vcmask 916480
  %v3694 = vsel %vm3692, %v3572, 0
  %v3697 = vsel %vm3692, %v3573, 0
  %v3700 = vsel %vm3692, %v3574, 0
  %v3703 = vsel %vm3692, %v3575, 0
  %v3706 = vsel %vm3692, %v3576, 0
  %v3709 = vsel %vm3692, %v3577, 0
  %v3712 = vsel %vm3692, %v3578, 0
  %v3715 = vsel %vm3692, %v3579, 0
  %v3718 = vsel %vm3692, %v3580, 0
  %v3721 = vsel %vm3692, %v3581, 0
  %v3724 = vsel %vm3692, %v3582, 0
  %v3727 = vsel %vm3692, %v3583, 0
  %v3730 = vsel %vm3692, %v3584, 0
  %v3733 = vsel %vm3692, %v3585, 0
  %v3736 = vsel %vm3692, %v3586, 0
  %v3739 = vsel %vm3692, %v3587, 0
  %v3742 = vsel %vm3692, %v3588, 0
  %v3745 = vsel %vm3692, %v3589, 0
  %v3748 = vsel %vm3692, %v3590, 0
  %v3751 = vsel %vm3692, %v3591, 0
  %v3754 = vsel %vm3692, %v3592, 0
  %v3757 = vsel %vm3692, %v3593, 0
  %v3760 = vsel %vm3692, %v3594, 0
  %v3763 = vsel %vm3692, %v3595, 0
  %v3766 = vsel %vm3692, %v3596, 0
  %v3769 = vsel %vm3692, %v3597, 0
  %v3772 = vsel %vm3692, %v3598, 0
  %v3775 = vsel %vm3692, %v3599, 0
  %v3778 = vsel %vm3692, %v3600, 0
  %v3781 = vsel %vm3692, %v3601, 0
  %v3784 = vsel %vm3692, %v3602, 0
  %v3787 = vsel %vm3692, %v3603, 0
  %v3790 = vsel %vm3692, %v3604, 0
  %v3793 = vsel %vm3692, %v3605, 0
  %v3796 = vsel %vm3692, %v3606, 0
  %v3799 = vsel %vm3692, %v3607, 0
  %v3802 = vsel %vm3692, %v3608, 0
  %v3805 = vsel %vm3692, %v3609, 0
  %v3808 = vsel %vm3692, %v3610, 0
  %v3811 = vsel %vm3692, %v3611, 0
  %v3814 = vsel %vm3692, %v3612, 0
  %v3817 = vsel %vm3692, %v3613, 0
  %v3820 = vsel %vm3692, %v3614, 0
  %v3823 = vsel %vm3692, %v3615, 0
  %v3826 = vsel %vm3692, %v3616, 0
  %v3829 = vsel %vm3692, %v3617, 0
  %v3832 = vsel %vm3692, %v3618, 0
  %v3835 = vsel %vm3692, %v3619, 0
  %v3838 = vsel %vm3692, %v3620, 0
  %v3841 = vsel %vm3692, %v3621, 0
  %v3844 = vsel %vm3692, %v3622, 0
  %v3847 = vsel %vm3692, %v3623, 0
  %v3850 = vsel %vm3692, %v3624, 0
  %v3853 = vsel %vm3692, %v3625, 0
  %v3856 = vsel %vm3692, %v3626, 0
  %v3859 = vsel %vm3692, %v3627, 0
  %v3862 = vsel %vm3692, %v3628, 0
  %v3865 = vsel %vm3692, %v3629, 0
  %v3868 = vsel %vm3692, %v3630, 0
  %v3871 = vsel %vm3692, %v3631, 0
  %v3874 = vsel %vm3692, %v3632, 0
  %v3877 = vsel %vm3692, %v3633, 0
  %v3880 = vsel %vm3692, %v3634, 0
  %v3883 = vsel %vm3692, %v3635, 0
  %3885 = vmatprep.subr.bf16.mxu0 0
  %3886 = vmatpush1.bf16.msra.mxu0 %v3678
  %3887 = vmatprep.subr.bf16.mxu0 0
  %3888 = vmatpush1.bf16.msra.mxu0 %v3679
  %3889 = vmatprep.subr.bf16.mxu0 0
  %3890 = vmatpush1.bf16.msra.mxu0 %v3680
  %3891 = vmatprep.subr.bf16.mxu0 0
  %3892 = vmatpush1.bf16.msra.mxu0 %v3681
  %3893 = vmatprep.subr.bf16.mxu0 0
  %3894 = vmatpush1.bf16.msra.mxu0 %v3682
  %3895 = vmatprep.subr.bf16.mxu0 0
  %3896 = vmatpush1.bf16.msra.mxu0 %v3683
  %3897 = vmatprep.subr.bf16.mxu0 0
  %3898 = vmatpush1.bf16.msra.mxu0 %v3684
  %3899 = vmatprep.subr.bf16.mxu0 0
  %3900 = vmatpush1.bf16.msra.mxu0 0
  %3901 = vmatprep.subr.bf16.mxu0 0
  %3902 = vmatpush1.bf16.msra.mxu0 0
  %3903 = vmatprep.subr.bf16.mxu0 0
  %3904 = vmatpush1.bf16.msra.mxu0 0
  %3905 = vmatprep.subr.bf16.mxu0 0
  %3906 = vmatpush1.bf16.msra.mxu0 0
  %3907 = vmatprep.subr.bf16.mxu0 0
  %3908 = vmatpush1.bf16.msra.mxu0 0
  %3909 = vmatprep.subr.bf16.mxu0 0
  %3910 = vmatpush1.bf16.msra.mxu0 0
  %3911 = vmatprep.subr.bf16.mxu0 0
  %3912 = vmatpush1.bf16.msra.mxu0 0
  %3913 = vmatprep.subr.bf16.mxu0 0
  %3914 = vmatpush1.bf16.msra.mxu0 0
  %3915 = vmatprep.subr.bf16.mxu0 0
  %3916 = vmatpush1.bf16.msra.mxu0 0
  %3917 = vmatprep.mubr.bf16.mxu0 0
  %3918 = vmatmul.mubr.bf16.gmra.mrb[0].mxu0 %v3694
  %v3919 = vpop.f32.mrb[0].mxu0
  %v3920 = vadd.f32 0.0, %v3919
  %v3921 = vpop.f32.mrb[0].mxu0
  %v3922 = vpop.f32.mrb[0].mxu0
  %v3923 = vadd.f32 0.0, %v3922
  %v3924 = vpop.f32.mrb[0].mxu0
  %3925 = vmatprep.mubr.bf16.mxu0 0
  %3926 = vmatmul.mubr.bf16.gmra.mrb[0].mxu0 %v3697
  %v3927 = vpop.f32.mrb[0].mxu0
  %v3928 = vadd.f32 0.0, %v3927
  %v3929 = vpop.f32.mrb[0].mxu0
  %v3930 = vpop.f32.mrb[0].mxu0
  %v3931 = vadd.f32 0.0, %v3930
  %v3932 = vpop.f32.mrb[0].mxu0
  %3933 = vmatprep.mubr.bf16.mxu0 0
  %3934 = vmatmul.mubr.bf16.gmra.mrb[0].mxu0 %v3700
  %v3935 = vpop.f32.mrb[0].mxu0
  %v3936 = vadd.f32 0.0, %v3935
  %v3937 = vpop.f32.mrb[0].mxu0
  %v3938 = vpop.f32.mrb[0].mxu0
  %v3939 = vadd.f32 0.0, %v3938
  %v3940 = vpop.f32.mrb[0].mxu0
  %3941 = vmatprep.mubr.bf16.mxu0 0
  %3942 = vmatmul.mubr.bf16.gmra.mrb[0].mxu0 %v3703
  %v3943 = vpop.f32.mrb[0].mxu0
  %v3944 = vadd.f32 0.0, %v3943
  %v3945 = vpop.f32.mrb[0].mxu0
  %v3946 = vpop.f32.mrb[0].mxu0
  %v3947 = vadd.f32 0.0, %v3946
  %v3948 = vpop.f32.mrb[0].mxu0
  %3949 = vmatprep.mubr.bf16.mxu0 0
  %3950 = vmatmul.mubr.bf16.gmra.mrb[0].mxu0 %v3706
  %v3951 = vpop.f32.mrb[0].mxu0
  %v3952 = vadd.f32 0.0, %v3951
  %v3953 = vpop.f32.mrb[0].mxu0
  %v3954 = vpop.f32.mrb[0].mxu0
  %v3955 = vadd.f32 0.0, %v3954
  %v3956 = vpop.f32.mrb[0].mxu0
  %3957 = vmatprep.mubr.bf16.mxu0 0
  %3958 = vmatmul.mubr.bf16.gmra.mrb[0].mxu0 %v3709
  %v3959 = vpop.f32.mrb[0].mxu0
  %v3960 = vadd.f32 0.0, %v3959
  %v3961 = vpop.f32.mrb[0].mxu0
  %v3962 = vpop.f32.mrb[0].mxu0
  %v3963 = vadd.f32 0.0, %v3962
  %v3964 = vpop.f32.mrb[0].mxu0
  %3965 = vmatprep.mubr.bf16.mxu0 0
  %3966 = vmatmul.mubr.bf16.gmra.mrb[0].mxu0 %v3712
  %v3967 = vpop.f32.mrb[0].mxu0
  %v3968 = vadd.f32 0.0, %v3967
  %v3969 = vpop.f32.mrb[0].mxu0
  %v3970 = vpop.f32.mrb[0].mxu0
  %v3971 = vadd.f32 0.0, %v3970
  %v3972 = vpop.f32.mrb[0].mxu0
  %3973 = vmatprep.mubr.bf16.mxu0 0
  %3974 = vmatmul.mubr.bf16.gmra.mrb[0].mxu0 %v3715
  %v3975 = vpop.f32.mrb[0].mxu0
  %v3976 = vadd.f32 0.0, %v3975
  %v3977 = vpop.f32.mrb[0].mxu0
  %v3978 = vpop.f32.mrb[0].mxu0
  %v3979 = vadd.f32 0.0, %v3978
  %v3980 = vpop.f32.mrb[0].mxu0
  %3981 = vmatprep.mubr.bf16.mxu0 0
  %3982 = vmatmul.mubr.bf16.gmra.mrb[0].mxu0 %v3718
  %v3983 = vpop.f32.mrb[0].mxu0
  %v3984 = vadd.f32 0.0, %v3983
  %v3985 = vpop.f32.mrb[0].mxu0
  %v3986 = vpop.f32.mrb[0].mxu0
  %v3987 = vadd.f32 0.0, %v3986
  %v3988 = vpop.f32.mrb[0].mxu0
  %3989 = vmatprep.mubr.bf16.mxu0 0
  %3990 = vmatmul.mubr.bf16.gmra.mrb[0].mxu0 %v3721
  %v3991 = vpop.f32.mrb[0].mxu0
  %v3992 = vadd.f32 0.0, %v3991
  %v3993 = vpop.f32.mrb[0].mxu0
  %v3994 = vpop.f32.mrb[0].mxu0
  %v3995 = vadd.f32 0.0, %v3994
  %v3996 = vpop.f32.mrb[0].mxu0
  %3997 = vmatprep.mubr.bf16.mxu0 0
  %3998 = vmatmul.mubr.bf16.gmra.mrb[0].mxu0 %v3724
  %v3999 = vpop.f32.mrb[0].mxu0
  %v4000 = vadd.f32 0.0, %v3999
  %v4001 = vpop.f32.mrb[0].mxu0
  %v4002 = vpop.f32.mrb[0].mxu0
  %v4003 = vadd.f32 0.0, %v4002
  %v4004 = vpop.f32.mrb[0].mxu0
  %4005 = vmatprep.mubr.bf16.mxu0 0
  %4006 = vmatmul.mubr.bf16.gmra.mrb[0].mxu0 %v3727
  %v4007 = vpop.f32.mrb[0].mxu0
  %v4008 = vadd.f32 0.0, %v4007
  %v4009 = vpop.f32.mrb[0].mxu0
  %v4010 = vpop.f32.mrb[0].mxu0
  %v4011 = vadd.f32 0.0, %v4010
  %v4012 = vpop.f32.mrb[0].mxu0
  %4013 = vmatprep.mubr.bf16.mxu0 0
  %4014 = vmatmul.mubr.bf16.gmra.mrb[0].mxu0 %v3730
  %v4015 = vpop.f32.mrb[0].mxu0
  %v4016 = vadd.f32 0.0, %v4015
  %v4017 = vpop.f32.mrb[0].mxu0
  %v4018 = vpop.f32.mrb[0].mxu0
  %v4019 = vadd.f32 0.0, %v4018
  %v4020 = vpop.f32.mrb[0].mxu0
  %4021 = vmatprep.mubr.bf16.mxu0 0
  %4022 = vmatmul.mubr.bf16.gmra.mrb[0].mxu0 %v3733
  %v4023 = vpop.f32.mrb[0].mxu0
  %v4024 = vadd.f32 0.0, %v4023
  %v4025 = vpop.f32.mrb[0].mxu0
  %v4026 = vpop.f32.mrb[0].mxu0
  %v4027 = vadd.f32 0.0, %v4026
  %v4028 = vpop.f32.mrb[0].mxu0
  %4029 = vmatprep.mubr.bf16.mxu0 0
  %4030 = vmatmul.mubr.bf16.gmra.mrb[0].mxu0 %v3736
  %v4031 = vpop.f32.mrb[0].mxu0
  %v4032 = vadd.f32 0.0, %v4031
  %v4033 = vpop.f32.mrb[0].mxu0
  %v4034 = vpop.f32.mrb[0].mxu0
  %v4035 = vadd.f32 0.0, %v4034
  %v4036 = vpop.f32.mrb[0].mxu0
  %4037 = vmatprep.mubr.bf16.mxu0 0
  %4038 = vmatmul.mubr.bf16.gmra.mrb[0].mxu0 %v3739
  %v4039 = vpop.f32.mrb[0].mxu0
  %v4040 = vadd.f32 0.0, %v4039
  %v4041 = vpop.f32.mrb[0].mxu0
  %v4042 = vpop.f32.mrb[0].mxu0
  %v4043 = vadd.f32 0.0, %v4042
  %v4044 = vpop.f32.mrb[0].mxu0
  %4045 = vmatprep.mubr.bf16.mxu0 0
  %4046 = vmatmul.mubr.bf16.gmra.mrb[0].mxu0 %v3742
  %v4047 = vpop.f32.mrb[0].mxu0
  %v4048 = vadd.f32 0.0, %v4047
  %v4049 = vpop.f32.mrb[0].mxu0
  %v4050 = vpop.f32.mrb[0].mxu0
  %v4051 = vadd.f32 0.0, %v4050
  %v4052 = vpop.f32.mrb[0].mxu0
  %4053 = vmatprep.mubr.bf16.mxu0 0
  %4054 = vmatmul.mubr.bf16.gmra.mrb[0].mxu0 %v3745
  %v4055 = vpop.f32.mrb[0].mxu0
  %v4056 = vadd.f32 0.0, %v4055
  %v4057 = vpop.f32.mrb[0].mxu0
  %v4058 = vpop.f32.mrb[0].mxu0
  %v4059 = vadd.f32 0.0, %v4058
  %v4060 = vpop.f32.mrb[0].mxu0
  %4061 = vmatprep.mubr.bf16.mxu0 0
  %4062 = vmatmul.mubr.bf16.gmra.mrb[0].mxu0 %v3748
  %v4063 = vpop.f32.mrb[0].mxu0
  %v4064 = vadd.f32 0.0, %v4063
  %v4065 = vpop.f32.mrb[0].mxu0
  %v4066 = vpop.f32.mrb[0].mxu0
  %v4067 = vadd.f32 0.0, %v4066
  %v4068 = vpop.f32.mrb[0].mxu0
  %4069 = vmatprep.mubr.bf16.mxu0 0
  %4070 = vmatmul.mubr.bf16.gmra.mrb[0].mxu0 %v3751
  %v4071 = vpop.f32.mrb[0].mxu0
  %v4072 = vadd.f32 0.0, %v4071
  %v4073 = vpop.f32.mrb[0].mxu0
  %v4074 = vpop.f32.mrb[0].mxu0
  %v4075 = vadd.f32 0.0, %v4074
  %v4076 = vpop.f32.mrb[0].mxu0
  %4077 = vmatprep.mubr.bf16.mxu0 0
  %4078 = vmatmul.mubr.bf16.gmra.mrb[0].mxu0 %v3754
  %v4079 = vpop.f32.mrb[0].mxu0
  %v4080 = vadd.f32 0.0, %v4079
  %v4081 = vpop.f32.mrb[0].mxu0
  %v4082 = vpop.f32.mrb[0].mxu0
  %v4083 = vadd.f32 0.0, %v4082
  %v4084 = vpop.f32.mrb[0].mxu0
  %4085 = vmatprep.mubr.bf16.mxu0 0
  %4086 = vmatmul.mubr.bf16.gmra.mrb[0].mxu0 %v3757
  %v4087 = vpop.f32.mrb[0].mxu0
  %v4088 = vadd.f32 0.0, %v4087
  %v4089 = vpop.f32.mrb[0].mxu0
  %v4090 = vpop.f32.mrb[0].mxu0
  %v4091 = vadd.f32 0.0, %v4090
  %v4092 = vpop.f32.mrb[0].mxu0
  %4093 = vmatprep.mubr.bf16.mxu0 0
  %4094 = vmatmul.mubr.bf16.gmra.mrb[0].mxu0 %v3760
  %v4095 = vpop.f32.mrb[0].mxu0
  %v4096 = vadd.f32 0.0, %v4095
  %v4097 = vpop.f32.mrb[0].mxu0
  %v4098 = vpop.f32.mrb[0].mxu0
  %v4099 = vadd.f32 0.0, %v4098
  %v4100 = vpop.f32.mrb[0].mxu0
  %4101 = vmatprep.mubr.bf16.mxu0 0
  %4102 = vmatmul.mubr.bf16.gmra.mrb[0].mxu0 %v3763
  %v4103 = vpop.f32.mrb[0].mxu0
  %v4104 = vadd.f32 0.0, %v4103
  %v4105 = vpop.f32.mrb[0].mxu0
  %v4106 = vpop.f32.mrb[0].mxu0
  %v4107 = vadd.f32 0.0, %v4106
  %v4108 = vpop.f32.mrb[0].mxu0
  %4109 = vmatprep.mubr.bf16.mxu0 0
  %4110 = vmatmul.mubr.bf16.gmra.mrb[0].mxu0 %v3766
  %v4111 = vpop.f32.mrb[0].mxu0
  %v4112 = vadd.f32 0.0, %v4111
  %v4113 = vpop.f32.mrb[0].mxu0
  %v4114 = vpop.f32.mrb[0].mxu0
  %v4115 = vadd.f32 0.0, %v4114
  %v4116 = vpop.f32.mrb[0].mxu0
  %4117 = vmatprep.mubr.bf16.mxu0 0
  %4118 = vmatmul.mubr.bf16.gmra.mrb[0].mxu0 %v3769
  %v4119 = vpop.f32.mrb[0].mxu0
  %v4120 = vadd.f32 0.0, %v4119
  %v4121 = vpop.f32.mrb[0].mxu0
  %v4122 = vpop.f32.mrb[0].mxu0
  %v4123 = vadd.f32 0.0, %v4122
  %v4124 = vpop.f32.mrb[0].mxu0
  %4125 = vmatprep.mubr.bf16.mxu0 0
  %4126 = vmatmul.mubr.bf16.gmra.mrb[0].mxu0 %v3772
  %v4127 = vpop.f32.mrb[0].mxu0
  %v4128 = vadd.f32 0.0, %v4127
  %v4129 = vpop.f32.mrb[0].mxu0
  %v4130 = vpop.f32.mrb[0].mxu0
  %v4131 = vadd.f32 0.0, %v4130
  %v4132 = vpop.f32.mrb[0].mxu0
  %4133 = vmatprep.mubr.bf16.mxu0 0
  %4134 = vmatmul.mubr.bf16.gmra.mrb[0].mxu0 %v3775
  %v4135 = vpop.f32.mrb[0].mxu0
  %v4136 = vadd.f32 0.0, %v4135
  %v4137 = vpop.f32.mrb[0].mxu0
  %v4138 = vpop.f32.mrb[0].mxu0
  %v4139 = vadd.f32 0.0, %v4138
  %v4140 = vpop.f32.mrb[0].mxu0
  %4141 = vmatprep.mubr.bf16.mxu0 0
  %4142 = vmatmul.mubr.bf16.gmra.mrb[0].mxu0 %v3778
  %v4143 = vpop.f32.mrb[0].mxu0
  %v4144 = vadd.f32 0.0, %v4143
  %v4145 = vpop.f32.mrb[0].mxu0
  %v4146 = vpop.f32.mrb[0].mxu0
  %v4147 = vadd.f32 0.0, %v4146
  %v4148 = vpop.f32.mrb[0].mxu0
  %4149 = vmatprep.mubr.bf16.mxu0 0
  %4150 = vmatmul.mubr.bf16.gmra.mrb[0].mxu0 %v3781
  %v4151 = vpop.f32.mrb[0].mxu0
  %v4152 = vadd.f32 0.0, %v4151
  %v4153 = vpop.f32.mrb[0].mxu0
  %v4154 = vpop.f32.mrb[0].mxu0
  %v4155 = vadd.f32 0.0, %v4154
  %v4156 = vpop.f32.mrb[0].mxu0
  %4157 = vmatprep.mubr.bf16.mxu0 0
  %4158 = vmatmul.mubr.bf16.gmra.mrb[0].mxu0 %v3784
  %v4159 = vpop.f32.mrb[0].mxu0
  %v4160 = vadd.f32 0.0, %v4159
  %v4161 = vpop.f32.mrb[0].mxu0
  %v4162 = vpop.f32.mrb[0].mxu0
  %v4163 = vadd.f32 0.0, %v4162
  %v4164 = vpop.f32.mrb[0].mxu0
  %4165 = vmatprep.mubr.bf16.mxu0 0
  %4166 = vmatmul.mubr.bf16.gmra.mrb[0].mxu0 %v3787
  %v4167 = vpop.f32.mrb[0].mxu0
  %v4168 = vadd.f32 0.0, %v4167
  %v4169 = vpop.f32.mrb[0].mxu0
  %v4170 = vpop.f32.mrb[0].mxu0
  %v4171 = vadd.f32 0.0, %v4170
  %v4172 = vpop.f32.mrb[0].mxu0
  %4173 = vmatprep.mubr.bf16.mxu0 0
  %4174 = vmatmul.mubr.bf16.gmra.mrb[0].mxu0 %v3790
  %v4175 = vpop.f32.mrb[0].mxu0
  %v4176 = vadd.f32 0.0, %v4175
  %v4177 = vpop.f32.mrb[0].mxu0
  %v4178 = vpop.f32.mrb[0].mxu0
  %v4179 = vadd.f32 0.0, %v4178
  %v4180 = vpop.f32.mrb[0].mxu0
  %4181 = vmatprep.mubr.bf16.mxu0 0
  %4182 = vmatmul.mubr.bf16.gmra.mrb[0].mxu0 %v3793
  %v4183 = vpop.f32.mrb[0].mxu0
  %v4184 = vadd.f32 0.0, %v4183
  %v4185 = vpop.f32.mrb[0].mxu0
  %v4186 = vpop.f32.mrb[0].mxu0
  %v4187 = vadd.f32 0.0, %v4186
  %v4188 = vpop.f32.mrb[0].mxu0
  %4189 = vmatprep.mubr.bf16.mxu0 0
  %4190 = vmatmul.mubr.bf16.gmra.mrb[0].mxu0 %v3796
  %v4191 = vpop.f32.mrb[0].mxu0
  %v4192 = vadd.f32 0.0, %v4191
  %v4193 = vpop.f32.mrb[0].mxu0
  %v4194 = vpop.f32.mrb[0].mxu0
  %v4195 = vadd.f32 0.0, %v4194
  %v4196 = vpop.f32.mrb[0].mxu0
  %4197 = vmatprep.mubr.bf16.mxu0 0
  %4198 = vmatmul.mubr.bf16.gmra.mrb[0].mxu0 %v3799
  %v4199 = vpop.f32.mrb[0].mxu0
  %v4200 = vadd.f32 0.0, %v4199
  %v4201 = vpop.f32.mrb[0].mxu0
  %v4202 = vpop.f32.mrb[0].mxu0
  %v4203 = vadd.f32 0.0, %v4202
  %v4204 = vpop.f32.mrb[0].mxu0
  %4205 = vmatprep.mubr.bf16.mxu0 0
  %4206 = vmatmul.mubr.bf16.gmra.mrb[0].mxu0 %v3802
  %v4207 = vpop.f32.mrb[0].mxu0
  %v4208 = vadd.f32 0.0, %v4207
  %v4209 = vpop.f32.mrb[0].mxu0
  %v4210 = vpop.f32.mrb[0].mxu0
  %v4211 = vadd.f32 0.0, %v4210
  %v4212 = vpop.f32.mrb[0].mxu0
  %4213 = vmatprep.mubr.bf16.mxu0 0
  %4214 = vmatmul.mubr.bf16.gmra.mrb[0].mxu0 %v3805
  %v4215 = vpop.f32.mrb[0].mxu0
  %v4216 = vadd.f32 0.0, %v4215
  %v4217 = vpop.f32.mrb[0].mxu0
  %v4218 = vpop.f32.mrb[0].mxu0
  %v4219 = vadd.f32 0.0, %v4218
  %v4220 = vpop.f32.mrb[0].mxu0
  %4221 = vmatprep.mubr.bf16.mxu0 0
  %4222 = vmatmul.mubr.bf16.gmra.mrb[0].mxu0 %v3808
  %v4223 = vpop.f32.mrb[0].mxu0
  %v4224 = vadd.f32 0.0, %v4223
  %v4225 = vpop.f32.mrb[0].mxu0
  %v4226 = vpop.f32.mrb[0].mxu0
  %v4227 = vadd.f32 0.0, %v4226
  %v4228 = vpop.f32.mrb[0].mxu0
  %4229 = vmatprep.mubr.bf16.mxu0 0
  %4230 = vmatmul.mubr.bf16.gmra.mrb[0].mxu0 %v3811
  %v4231 = vpop.f32.mrb[0].mxu0
  %v4232 = vadd.f32 0.0, %v4231
  %v4233 = vpop.f32.mrb[0].mxu0
  %v4234 = vpop.f32.mrb[0].mxu0
  %v4235 = vadd.f32 0.0, %v4234
  %v4236 = vpop.f32.mrb[0].mxu0
  %4237 = vmatprep.mubr.bf16.mxu0 0
  %4238 = vmatmul.mubr.bf16.gmra.mrb[0].mxu0 %v3814
  %v4239 = vpop.f32.mrb[0].mxu0
  %v4240 = vadd.f32 0.0, %v4239
  %v4241 = vpop.f32.mrb[0].mxu0
  %v4242 = vpop.f32.mrb[0].mxu0
  %v4243 = vadd.f32 0.0, %v4242
  %v4244 = vpop.f32.mrb[0].mxu0
  %4245 = vmatprep.mubr.bf16.mxu0 0
  %4246 = vmatmul.mubr.bf16.gmra.mrb[0].mxu0 %v3817
  %v4247 = vpop.f32.mrb[0].mxu0
  %v4248 = vadd.f32 0.0, %v4247
  %v4249 = vpop.f32.mrb[0].mxu0
  %v4250 = vpop.f32.mrb[0].mxu0
  %v4251 = vadd.f32 0.0, %v4250
  %v4252 = vpop.f32.mrb[0].mxu0
  %4253 = vmatprep.mubr.bf16.mxu0 0
  %4254 = vmatmul.mubr.bf16.gmra.mrb[0].mxu0 %v3820
  %v4255 = vpop.f32.mrb[0].mxu0
  %v4256 = vadd.f32 0.0, %v4255
  %v4257 = vpop.f32.mrb[0].mxu0
  %v4258 = vpop.f32.mrb[0].mxu0
  %v4259 = vadd.f32 0.0, %v4258
  %v4260 = vpop.f32.mrb[0].mxu0
  %4261 = vmatprep.mubr.bf16.mxu0 0
  %4262 = vmatmul.mubr.bf16.gmra.mrb[0].mxu0 %v3823
  %v4263 = vpop.f32.mrb[0].mxu0
  %v4264 = vadd.f32 0.0, %v4263
  %v4265 = vpop.f32.mrb[0].mxu0
  %v4266 = vpop.f32.mrb[0].mxu0
  %v4267 = vadd.f32 0.0, %v4266
  %v4268 = vpop.f32.mrb[0].mxu0
  %4269 = vmatprep.mubr.bf16.mxu0 0
  %4270 = vmatmul.mubr.bf16.gmra.mrb[0].mxu0 %v3826
  %v4271 = vpop.f32.mrb[0].mxu0
  %v4272 = vadd.f32 0.0, %v4271
  %v4273 = vpop.f32.mrb[0].mxu0
  %v4274 = vpop.f32.mrb[0].mxu0
  %v4275 = vadd.f32 0.0, %v4274
  %v4276 = vpop.f32.mrb[0].mxu0
  %4277 = vmatprep.mubr.bf16.mxu0 0
  %4278 = vmatmul.mubr.bf16.gmra.mrb[0].mxu0 %v3829
  %v4279 = vpop.f32.mrb[0].mxu0
  %v4280 = vadd.f32 0.0, %v4279
  %v4281 = vpop.f32.mrb[0].mxu0
  %v4282 = vpop.f32.mrb[0].mxu0
  %v4283 = vadd.f32 0.0, %v4282
  %v4284 = vpop.f32.mrb[0].mxu0
  %4285 = vmatprep.mubr.bf16.mxu0 0
  %4286 = vmatmul.mubr.bf16.gmra.mrb[0].mxu0 %v3832
  %v4287 = vpop.f32.mrb[0].mxu0
  %v4288 = vadd.f32 0.0, %v4287
  %v4289 = vpop.f32.mrb[0].mxu0
  %v4290 = vpop.f32.mrb[0].mxu0
  %v4291 = vadd.f32 0.0, %v4290
  %v4292 = vpop.f32.mrb[0].mxu0
  %4293 = vmatprep.mubr.bf16.mxu0 0
  %4294 = vmatmul.mubr.bf16.gmra.mrb[0].mxu0 %v3835
  %v4295 = vpop.f32.mrb[0].mxu0
  %v4296 = vadd.f32 0.0, %v4295
  %v4297 = vpop.f32.mrb[0].mxu0
  %v4298 = vpop.f32.mrb[0].mxu0
  %v4299 = vadd.f32 0.0, %v4298
  %v4300 = vpop.f32.mrb[0].mxu0
  %4301 = vmatprep.mubr.bf16.mxu0 0
  %4302 = vmatmul.mubr.bf16.gmra.mrb[0].mxu0 %v3838
  %v4303 = vpop.f32.mrb[0].mxu0
  %v4304 = vadd.f32 0.0, %v4303
  %v4305 = vpop.f32.mrb[0].mxu0
  %v4306 = vpop.f32.mrb[0].mxu0
  %v4307 = vadd.f32 0.0, %v4306
  %v4308 = vpop.f32.mrb[0].mxu0
  %4309 = vmatprep.mubr.bf16.mxu0 0
  %4310 = vmatmul.mubr.bf16.gmra.mrb[0].mxu0 %v3841
  %v4311 = vpop.f32.mrb[0].mxu0
  %v4312 = vadd.f32 0.0, %v4311
  %v4313 = vpop.f32.mrb[0].mxu0
  %v4314 = vpop.f32.mrb[0].mxu0
  %v4315 = vadd.f32 0.0, %v4314
  %v4316 = vpop.f32.mrb[0].mxu0
  %4317 = vmatprep.mubr.bf16.mxu0 0
  %4318 = vmatmul.mubr.bf16.gmra.mrb[0].mxu0 %v3844
  %v4319 = vpop.f32.mrb[0].mxu0
  %v4320 = vadd.f32 0.0, %v4319
  %v4321 = vpop.f32.mrb[0].mxu0
  %v4322 = vpop.f32.mrb[0].mxu0
  %v4323 = vadd.f32 0.0, %v4322
  %v4324 = vpop.f32.mrb[0].mxu0
  %4325 = vmatprep.mubr.bf16.mxu0 0
  %4326 = vmatmul.mubr.bf16.gmra.mrb[0].mxu0 %v3847
  %v4327 = vpop.f32.mrb[0].mxu0
  %v4328 = vadd.f32 0.0, %v4327
  %v4329 = vpop.f32.mrb[0].mxu0
  %v4330 = vpop.f32.mrb[0].mxu0
  %v4331 = vadd.f32 0.0, %v4330
  %v4332 = vpop.f32.mrb[0].mxu0
  %4333 = vmatprep.mubr.bf16.mxu0 0
  %4334 = vmatmul.mubr.bf16.gmra.mrb[0].mxu0 %v3850
  %v4335 = vpop.f32.mrb[0].mxu0
  %v4336 = vadd.f32 0.0, %v4335
  %v4337 = vpop.f32.mrb[0].mxu0
  %v4338 = vpop.f32.mrb[0].mxu0
  %v4339 = vadd.f32 0.0, %v4338
  %v4340 = vpop.f32.mrb[0].mxu0
  %4341 = vmatprep.mubr.bf16.mxu0 0
  %4342 = vmatmul.mubr.bf16.gmra.mrb[0].mxu0 %v3853
  %v4343 = vpop.f32.mrb[0].mxu0
  %v4344 = vadd.f32 0.0, %v4343
  %v4345 = vpop.f32.mrb[0].mxu0
  %v4346 = vpop.f32.mrb[0].mxu0
  %v4347 = vadd.f32 0.0, %v4346
  %v4348 = vpop.f32.mrb[0].mxu0
  %4349 = vmatprep.mubr.bf16.mxu0 0
  %4350 = vmatmul.mubr.bf16.gmra.mrb[0].mxu0 %v3856
  %v4351 = vpop.f32.mrb[0].mxu0
  %v4352 = vadd.f32 0.0, %v4351
  %v4353 = vpop.f32.mrb[0].mxu0
  %v4354 = vpop.f32.mrb[0].mxu0
  %v4355 = vadd.f32 0.0, %v4354
  %v4356 = vpop.f32.mrb[0].mxu0
  %4357 = vmatprep.mubr.bf16.mxu0 0
  %4358 = vmatmul.mubr.bf16.gmra.mrb[0].mxu0 %v3859
  %v4359 = vpop.f32.mrb[0].mxu0
  %v4360 = vadd.f32 0.0, %v4359
  %v4361 = vpop.f32.mrb[0].mxu0
  %v4362 = vpop.f32.mrb[0].mxu0
  %v4363 = vadd.f32 0.0, %v4362
  %v4364 = vpop.f32.mrb[0].mxu0
  %4365 = vmatprep.mubr.bf16.mxu0 0
  %4366 = vmatmul.mubr.bf16.gmra.mrb[0].mxu0 %v3862
  %v4367 = vpop.f32.mrb[0].mxu0
  %v4368 = vadd.f32 0.0, %v4367
  %v4369 = vpop.f32.mrb[0].mxu0
  %v4370 = vpop.f32.mrb[0].mxu0
  %v4371 = vadd.f32 0.0, %v4370
  %v4372 = vpop.f32.mrb[0].mxu0
  %4373 = vmatprep.mubr.bf16.mxu0 0
  %4374 = vmatmul.mubr.bf16.gmra.mrb[0].mxu0 %v3865
  %v4375 = vpop.f32.mrb[0].mxu0
  %v4376 = vadd.f32 0.0, %v4375
  %v4377 = vpop.f32.mrb[0].mxu0
  %v4378 = vpop.f32.mrb[0].mxu0
  %v4379 = vadd.f32 0.0, %v4378
  %v4380 = vpop.f32.mrb[0].mxu0
  %4381 = vmatprep.mubr.bf16.mxu0 0
  %4382 = vmatmul.mubr.bf16.gmra.mrb[0].mxu0 %v3868
  %v4383 = vpop.f32.mrb[0].mxu0
  %v4384 = vadd.f32 0.0, %v4383
  %v4385 = vpop.f32.mrb[0].mxu0
  %v4386 = vpop.f32.mrb[0].mxu0
  %v4387 = vadd.f32 0.0, %v4386
  %v4388 = vpop.f32.mrb[0].mxu0
  %4389 = vmatprep.mubr.bf16.mxu0 0
  %4390 = vmatmul.mubr.bf16.gmra.mrb[0].mxu0 %v3871
  %v4391 = vpop.f32.mrb[0].mxu0
  %v4392 = vadd.f32 0.0, %v4391
  %v4393 = vpop.f32.mrb[0].mxu0
  %v4394 = vpop.f32.mrb[0].mxu0
  %v4395 = vadd.f32 0.0, %v4394
  %v4396 = vpop.f32.mrb[0].mxu0
  %4397 = vmatprep.mubr.bf16.mxu0 0
  %4398 = vmatmul.mubr.bf16.gmra.mrb[0].mxu0 %v3874
  %v4399 = vpop.f32.mrb[0].mxu0
  %v4400 = vadd.f32 0.0, %v4399
  %v4401 = vpop.f32.mrb[0].mxu0
  %v4402 = vpop.f32.mrb[0].mxu0
  %v4403 = vadd.f32 0.0, %v4402
  %v4404 = vpop.f32.mrb[0].mxu0
  %4405 = vmatprep.mubr.bf16.mxu0 0
  %4406 = vmatmul.mubr.bf16.gmra.mrb[0].mxu0 %v3877
  %v4407 = vpop.f32.mrb[0].mxu0
  %v4408 = vadd.f32 0.0, %v4407
  %v4409 = vpop.f32.mrb[0].mxu0
  %v4410 = vpop.f32.mrb[0].mxu0
  %v4411 = vadd.f32 0.0, %v4410
  %v4412 = vpop.f32.mrb[0].mxu0
  %4413 = vmatprep.mubr.bf16.mxu0 0
  %4414 = vmatmul.mubr.bf16.gmra.mrb[0].mxu0 %v3880
  %v4415 = vpop.f32.mrb[0].mxu0
  %v4416 = vadd.f32 0.0, %v4415
  %v4417 = vpop.f32.mrb[0].mxu0
  %v4418 = vpop.f32.mrb[0].mxu0
  %v4419 = vadd.f32 0.0, %v4418
  %v4420 = vpop.f32.mrb[0].mxu0
  %4421 = vmatprep.mubr.bf16.mxu0 0
  %4422 = vmatmul.mubr.bf16.gmra.mrb[0].mxu0 %v3883
  %v4423 = vpop.f32.mrb[0].mxu0
  %v4424 = vadd.f32 0.0, %v4423
  %v4425 = vpop.f32.mrb[0].mxu0
  %v4426 = vpop.f32.mrb[0].mxu0
  %v4427 = vadd.f32 0.0, %v4426
  %v4428 = vpop.f32.mrb[0].mxu0
  %4429 = vdwg.mxu0
  %s4430 = scalar_lea.vmem %s3, 56
  %v4431 = vld [vmem:[%s4430] sm:$0xf]
  %v4432 = vld [vmem:[%s4430 + $0x4] sm:$0xf]
  %v4433 = vld [vmem:[%s4430 + $0x8] sm:$0xf]
  %v4434 = vld [vmem:[%s4430 + $0xc] sm:$0xf]
  %v4435 = vld [vmem:[%s4430 + $0x10] sm:$0xf]
  %v4436 = vld [vmem:[%s4430 + $0x14] sm:$0xf]
  %v4437 = vld [vmem:[%s4430 + $0x18] sm:$0xf]
  %v4438 = vld [vmem:[%s4430 + $0x1c] sm:$0xf]
  %v4439 = vld [vmem:[%s4430 + $0x20] sm:$0xf]
  %v4440 = vld [vmem:[%s4430 + $0x24] sm:$0xf]
  %v4441 = vld [vmem:[%s4430 + $0x28] sm:$0xf]
  %v4442 = vld [vmem:[%s4430 + $0x2c] sm:$0xf]
  %v4443 = vld [vmem:[%s4430 + $0x30] sm:$0xf]
  %v4444 = vld [vmem:[%s4430 + $0x34] sm:$0xf]
  %v4459 = vunpack.c.l.b16 %v4431
  %v4460 = vunpack.c.l.b16 %v4432
  %v4461 = vunpack.c.l.b16 %v4433
  %v4462 = vunpack.c.l.b16 %v4434
  %v4463 = vunpack.c.l.b16 %v4435
  %v4464 = vunpack.c.l.b16 %v4436
  %v4465 = vunpack.c.l.b16 %v4437
  %v4466 = vunpack.c.l.b16 %v4438
  %v4467 = vunpack.c.l.b16 %v4439
  %v4468 = vunpack.c.l.b16 %v4440
  %v4469 = vunpack.c.l.b16 %v4441
  %v4470 = vunpack.c.l.b16 %v4442
  %v4471 = vunpack.c.l.b16 %v4443
  %v4472 = vunpack.c.l.b16 %v4444
  %v4473 = vpack.c.b16 %v4460, %v4459
  %v4474 = vpack.c.b16 %v4462, %v4461
  %v4475 = vpack.c.b16 %v4464, %v4463
  %v4476 = vpack.c.b16 %v4466, %v4465
  %v4477 = vpack.c.b16 %v4468, %v4467
  %v4478 = vpack.c.b16 %v4470, %v4469
  %v4479 = vpack.c.b16 %v4472, %v4471
  %4487 = vmatprep.subr.bf16.mxu0 0
  %4488 = vmatpush1.bf16.msra.mxu0 %v4473
  %4489 = vmatprep.subr.bf16.mxu0 0
  %4490 = vmatpush1.bf16.msra.mxu0 %v4474
  %4491 = vmatprep.subr.bf16.mxu0 0
  %4492 = vmatpush1.bf16.msra.mxu0 %v4475
  %4493 = vmatprep.subr.bf16.mxu0 0
  %4494 = vmatpush1.bf16.msra.mxu0 %v4476
  %4495 = vmatprep.subr.bf16.mxu0 0
  %4496 = vmatpush1.bf16.msra.mxu0 %v4477
  %4497 = vmatprep.subr.bf16.mxu0 0
  %4498 = vmatpush1.bf16.msra.mxu0 %v4478
  %4499 = vmatprep.subr.bf16.mxu0 0
  %4500 = vmatpush1.bf16.msra.mxu0 %v4479
  %4501 = vmatprep.subr.bf16.mxu0 0
  %4502 = vmatpush1.bf16.msra.mxu0 0
  %4503 = vmatprep.subr.bf16.mxu0 0
  %4504 = vmatpush1.bf16.msra.mxu0 0
  %4505 = vmatprep.subr.bf16.mxu0 0
  %4506 = vmatpush1.bf16.msra.mxu0 0
  %4507 = vmatprep.subr.bf16.mxu0 0
  %4508 = vmatpush1.bf16.msra.mxu0 0
  %4509 = vmatprep.subr.bf16.mxu0 0
  %4510 = vmatpush1.bf16.msra.mxu0 0
  %4511 = vmatprep.subr.bf16.mxu0 0
  %4512 = vmatpush1.bf16.msra.mxu0 0
  %4513 = vmatprep.subr.bf16.mxu0 0
  %4514 = vmatpush1.bf16.msra.mxu0 0
  %4515 = vmatprep.subr.bf16.mxu0 0
  %4516 = vmatpush1.bf16.msra.mxu0 0
  %4517 = vmatprep.subr.bf16.mxu0 0
  %4518 = vmatpush1.bf16.msra.mxu0 0
  %4519 = vmatprep.mubr.bf16.mxu0 0
  %4520 = vmatmul.mubr.bf16.gmra.mrb[0].mxu0 %v3694
  %v4521 = vpop.f32.mrb[0].mxu0
  %v4522 = vadd.f32 0.0, %v4521
  %v4523 = vpop.f32.mrb[0].mxu0
  %v4524 = vpop.f32.mrb[0].mxu0
  %v4525 = vadd.f32 0.0, %v4524
  %v4526 = vpop.f32.mrb[0].mxu0
  %4527 = vmatprep.mubr.bf16.mxu0 0
  %4528 = vmatmul.mubr.bf16.gmra.mrb[0].mxu0 %v3697
  %v4529 = vpop.f32.mrb[0].mxu0
  %v4530 = vadd.f32 0.0, %v4529
  %v4531 = vpop.f32.mrb[0].mxu0
  %v4532 = vpop.f32.mrb[0].mxu0
  %v4533 = vadd.f32 0.0, %v4532
  %v4534 = vpop.f32.mrb[0].mxu0
  %4535 = vmatprep.mubr.bf16.mxu0 0
  %4536 = vmatmul.mubr.bf16.gmra.mrb[0].mxu0 %v3700
  %v4537 = vpop.f32.mrb[0].mxu0
  %v4538 = vadd.f32 0.0, %v4537
  %v4539 = vpop.f32.mrb[0].mxu0
  %v4540 = vpop.f32.mrb[0].mxu0
  %v4541 = vadd.f32 0.0, %v4540
  %v4542 = vpop.f32.mrb[0].mxu0
  %4543 = vmatprep.mubr.bf16.mxu0 0
  %4544 = vmatmul.mubr.bf16.gmra.mrb[0].mxu0 %v3703
  %v4545 = vpop.f32.mrb[0].mxu0
  %v4546 = vadd.f32 0.0, %v4545
  %v4547 = vpop.f32.mrb[0].mxu0
  %v4548 = vpop.f32.mrb[0].mxu0
  %v4549 = vadd.f32 0.0, %v4548
  %v4550 = vpop.f32.mrb[0].mxu0
  %4551 = vmatprep.mubr.bf16.mxu0 0
  %4552 = vmatmul.mubr.bf16.gmra.mrb[0].mxu0 %v3706
  %v4553 = vpop.f32.mrb[0].mxu0
  %v4554 = vadd.f32 0.0, %v4553
  %v4555 = vpop.f32.mrb[0].mxu0
  %v4556 = vpop.f32.mrb[0].mxu0
  %v4557 = vadd.f32 0.0, %v4556
  %v4558 = vpop.f32.mrb[0].mxu0
  %4559 = vmatprep.mubr.bf16.mxu0 0
  %4560 = vmatmul.mubr.bf16.gmra.mrb[0].mxu0 %v3709
  %v4561 = vpop.f32.mrb[0].mxu0
  %v4562 = vadd.f32 0.0, %v4561
  %v4563 = vpop.f32.mrb[0].mxu0
  %v4564 = vpop.f32.mrb[0].mxu0
  %v4565 = vadd.f32 0.0, %v4564
  %v4566 = vpop.f32.mrb[0].mxu0
  %4567 = vmatprep.mubr.bf16.mxu0 0
  %4568 = vmatmul.mubr.bf16.gmra.mrb[0].mxu0 %v3712
  %v4569 = vpop.f32.mrb[0].mxu0
  %v4570 = vadd.f32 0.0, %v4569
  %v4571 = vpop.f32.mrb[0].mxu0
  %v4572 = vpop.f32.mrb[0].mxu0
  %v4573 = vadd.f32 0.0, %v4572
  %v4574 = vpop.f32.mrb[0].mxu0
  %4575 = vmatprep.mubr.bf16.mxu0 0
  %4576 = vmatmul.mubr.bf16.gmra.mrb[0].mxu0 %v3715
  %v4577 = vpop.f32.mrb[0].mxu0
  %v4578 = vadd.f32 0.0, %v4577
  %v4579 = vpop.f32.mrb[0].mxu0
  %v4580 = vpop.f32.mrb[0].mxu0
  %v4581 = vadd.f32 0.0, %v4580
  %v4582 = vpop.f32.mrb[0].mxu0
  %4583 = vmatprep.mubr.bf16.mxu0 0
  %4584 = vmatmul.mubr.bf16.gmra.mrb[0].mxu0 %v3718
  %v4585 = vpop.f32.mrb[0].mxu0
  %v4586 = vadd.f32 0.0, %v4585
  %v4587 = vpop.f32.mrb[0].mxu0
  %v4588 = vpop.f32.mrb[0].mxu0
  %v4589 = vadd.f32 0.0, %v4588
  %v4590 = vpop.f32.mrb[0].mxu0
  %4591 = vmatprep.mubr.bf16.mxu0 0
  %4592 = vmatmul.mubr.bf16.gmra.mrb[0].mxu0 %v3721
  %v4593 = vpop.f32.mrb[0].mxu0
  %v4594 = vadd.f32 0.0, %v4593
  %v4595 = vpop.f32.mrb[0].mxu0
  %v4596 = vpop.f32.mrb[0].mxu0
  %v4597 = vadd.f32 0.0, %v4596
  %v4598 = vpop.f32.mrb[0].mxu0
  %4599 = vmatprep.mubr.bf16.mxu0 0
  %4600 = vmatmul.mubr.bf16.gmra.mrb[0].mxu0 %v3724
  %v4601 = vpop.f32.mrb[0].mxu0
  %v4602 = vadd.f32 0.0, %v4601
  %v4603 = vpop.f32.mrb[0].mxu0
  %v4604 = vpop.f32.mrb[0].mxu0
  %v4605 = vadd.f32 0.0, %v4604
  %v4606 = vpop.f32.mrb[0].mxu0
  %4607 = vmatprep.mubr.bf16.mxu0 0
  %4608 = vmatmul.mubr.bf16.gmra.mrb[0].mxu0 %v3727
  %v4609 = vpop.f32.mrb[0].mxu0
  %v4610 = vadd.f32 0.0, %v4609
  %v4611 = vpop.f32.mrb[0].mxu0
  %v4612 = vpop.f32.mrb[0].mxu0
  %v4613 = vadd.f32 0.0, %v4612
  %v4614 = vpop.f32.mrb[0].mxu0
  %4615 = vmatprep.mubr.bf16.mxu0 0
  %4616 = vmatmul.mubr.bf16.gmra.mrb[0].mxu0 %v3730
  %v4617 = vpop.f32.mrb[0].mxu0
  %v4618 = vadd.f32 0.0, %v4617
  %v4619 = vpop.f32.mrb[0].mxu0
  %v4620 = vpop.f32.mrb[0].mxu0
  %v4621 = vadd.f32 0.0, %v4620
  %v4622 = vpop.f32.mrb[0].mxu0
  %4623 = vmatprep.mubr.bf16.mxu0 0
  %4624 = vmatmul.mubr.bf16.gmra.mrb[0].mxu0 %v3733
  %v4625 = vpop.f32.mrb[0].mxu0
  %v4626 = vadd.f32 0.0, %v4625
  %v4627 = vpop.f32.mrb[0].mxu0
  %v4628 = vpop.f32.mrb[0].mxu0
  %v4629 = vadd.f32 0.0, %v4628
  %v4630 = vpop.f32.mrb[0].mxu0
  %4631 = vmatprep.mubr.bf16.mxu0 0
  %4632 = vmatmul.mubr.bf16.gmra.mrb[0].mxu0 %v3736
  %v4633 = vpop.f32.mrb[0].mxu0
  %v4634 = vadd.f32 0.0, %v4633
  %v4635 = vpop.f32.mrb[0].mxu0
  %v4636 = vpop.f32.mrb[0].mxu0
  %v4637 = vadd.f32 0.0, %v4636
  %v4638 = vpop.f32.mrb[0].mxu0
  %4639 = vmatprep.mubr.bf16.mxu0 0
  %4640 = vmatmul.mubr.bf16.gmra.mrb[0].mxu0 %v3739
  %v4641 = vpop.f32.mrb[0].mxu0
  %v4642 = vadd.f32 0.0, %v4641
  %v4643 = vpop.f32.mrb[0].mxu0
  %v4644 = vpop.f32.mrb[0].mxu0
  %v4645 = vadd.f32 0.0, %v4644
  %v4646 = vpop.f32.mrb[0].mxu0
  %4647 = vmatprep.mubr.bf16.mxu0 0
  %4648 = vmatmul.mubr.bf16.gmra.mrb[0].mxu0 %v3742
  %v4649 = vpop.f32.mrb[0].mxu0
  %v4650 = vadd.f32 0.0, %v4649
  %v4651 = vpop.f32.mrb[0].mxu0
  %v4652 = vpop.f32.mrb[0].mxu0
  %v4653 = vadd.f32 0.0, %v4652
  %v4654 = vpop.f32.mrb[0].mxu0
  %4655 = vmatprep.mubr.bf16.mxu0 0
  %4656 = vmatmul.mubr.bf16.gmra.mrb[0].mxu0 %v3745
  %v4657 = vpop.f32.mrb[0].mxu0
  %v4658 = vadd.f32 0.0, %v4657
  %v4659 = vpop.f32.mrb[0].mxu0
  %v4660 = vpop.f32.mrb[0].mxu0
  %v4661 = vadd.f32 0.0, %v4660
  %v4662 = vpop.f32.mrb[0].mxu0
  %4663 = vmatprep.mubr.bf16.mxu0 0
  %4664 = vmatmul.mubr.bf16.gmra.mrb[0].mxu0 %v3748
  %v4665 = vpop.f32.mrb[0].mxu0
  %v4666 = vadd.f32 0.0, %v4665
  %v4667 = vpop.f32.mrb[0].mxu0
  %v4668 = vpop.f32.mrb[0].mxu0
  %v4669 = vadd.f32 0.0, %v4668
  %v4670 = vpop.f32.mrb[0].mxu0
  %4671 = vmatprep.mubr.bf16.mxu0 0
  %4672 = vmatmul.mubr.bf16.gmra.mrb[0].mxu0 %v3751
  %v4673 = vpop.f32.mrb[0].mxu0
  %v4674 = vadd.f32 0.0, %v4673
  %v4675 = vpop.f32.mrb[0].mxu0
  %v4676 = vpop.f32.mrb[0].mxu0
  %v4677 = vadd.f32 0.0, %v4676
  %v4678 = vpop.f32.mrb[0].mxu0
  %4679 = vmatprep.mubr.bf16.mxu0 0
  %4680 = vmatmul.mubr.bf16.gmra.mrb[0].mxu0 %v3754
  %v4681 = vpop.f32.mrb[0].mxu0
  %v4682 = vadd.f32 0.0, %v4681
  %v4683 = vpop.f32.mrb[0].mxu0
  %v4684 = vpop.f32.mrb[0].mxu0
  %v4685 = vadd.f32 0.0, %v4684
  %v4686 = vpop.f32.mrb[0].mxu0
  %4687 = vmatprep.mubr.bf16.mxu0 0
  %4688 = vmatmul.mubr.bf16.gmra.mrb[0].mxu0 %v3757
  %v4689 = vpop.f32.mrb[0].mxu0
  %v4690 = vadd.f32 0.0, %v4689
  %v4691 = vpop.f32.mrb[0].mxu0
  %v4692 = vpop.f32.mrb[0].mxu0
  %v4693 = vadd.f32 0.0, %v4692
  %v4694 = vpop.f32.mrb[0].mxu0
  %4695 = vmatprep.mubr.bf16.mxu0 0
  %4696 = vmatmul.mubr.bf16.gmra.mrb[0].mxu0 %v3760
  %v4697 = vpop.f32.mrb[0].mxu0
  %v4698 = vadd.f32 0.0, %v4697
  %v4699 = vpop.f32.mrb[0].mxu0
  %v4700 = vpop.f32.mrb[0].mxu0
  %v4701 = vadd.f32 0.0, %v4700
  %v4702 = vpop.f32.mrb[0].mxu0
  %4703 = vmatprep.mubr.bf16.mxu0 0
  %4704 = vmatmul.mubr.bf16.gmra.mrb[0].mxu0 %v3763
  %v4705 = vpop.f32.mrb[0].mxu0
  %v4706 = vadd.f32 0.0, %v4705
  %v4707 = vpop.f32.mrb[0].mxu0
  %v4708 = vpop.f32.mrb[0].mxu0
  %v4709 = vadd.f32 0.0, %v4708
  %v4710 = vpop.f32.mrb[0].mxu0
  %4711 = vmatprep.mubr.bf16.mxu0 0
  %4712 = vmatmul.mubr.bf16.gmra.mrb[0].mxu0 %v3766
  %v4713 = vpop.f32.mrb[0].mxu0
  %v4714 = vadd.f32 0.0, %v4713
  %v4715 = vpop.f32.mrb[0].mxu0
  %v4716 = vpop.f32.mrb[0].mxu0
  %v4717 = vadd.f32 0.0, %v4716
  %v4718 = vpop.f32.mrb[0].mxu0
  %4719 = vmatprep.mubr.bf16.mxu0 0
  %4720 = vmatmul.mubr.bf16.gmra.mrb[0].mxu0 %v3769
  %v4721 = vpop.f32.mrb[0].mxu0
  %v4722 = vadd.f32 0.0, %v4721
  %v4723 = vpop.f32.mrb[0].mxu0
  %v4724 = vpop.f32.mrb[0].mxu0
  %v4725 = vadd.f32 0.0, %v4724
  %v4726 = vpop.f32.mrb[0].mxu0
  %4727 = vmatprep.mubr.bf16.mxu0 0
  %4728 = vmatmul.mubr.bf16.gmra.mrb[0].mxu0 %v3772
  %v4729 = vpop.f32.mrb[0].mxu0
  %v4730 = vadd.f32 0.0, %v4729
  %v4731 = vpop.f32.mrb[0].mxu0
  %v4732 = vpop.f32.mrb[0].mxu0
  %v4733 = vadd.f32 0.0, %v4732
  %v4734 = vpop.f32.mrb[0].mxu0
  %4735 = vmatprep.mubr.bf16.mxu0 0
  %4736 = vmatmul.mubr.bf16.gmra.mrb[0].mxu0 %v3775
  %v4737 = vpop.f32.mrb[0].mxu0
  %v4738 = vadd.f32 0.0, %v4737
  %v4739 = vpop.f32.mrb[0].mxu0
  %v4740 = vpop.f32.mrb[0].mxu0
  %v4741 = vadd.f32 0.0, %v4740
  %v4742 = vpop.f32.mrb[0].mxu0
  %4743 = vmatprep.mubr.bf16.mxu0 0
  %4744 = vmatmul.mubr.bf16.gmra.mrb[0].mxu0 %v3778
  %v4745 = vpop.f32.mrb[0].mxu0
  %v4746 = vadd.f32 0.0, %v4745
  %v4747 = vpop.f32.mrb[0].mxu0
  %v4748 = vpop.f32.mrb[0].mxu0
  %v4749 = vadd.f32 0.0, %v4748
  %v4750 = vpop.f32.mrb[0].mxu0
  %4751 = vmatprep.mubr.bf16.mxu0 0
  %4752 = vmatmul.mubr.bf16.gmra.mrb[0].mxu0 %v3781
  %v4753 = vpop.f32.mrb[0].mxu0
  %v4754 = vadd.f32 0.0, %v4753
  %v4755 = vpop.f32.mrb[0].mxu0
  %v4756 = vpop.f32.mrb[0].mxu0
  %v4757 = vadd.f32 0.0, %v4756
  %v4758 = vpop.f32.mrb[0].mxu0
  %4759 = vmatprep.mubr.bf16.mxu0 0
  %4760 = vmatmul.mubr.bf16.gmra.mrb[0].mxu0 %v3784
  %v4761 = vpop.f32.mrb[0].mxu0
  %v4762 = vadd.f32 0.0, %v4761
  %v4763 = vpop.f32.mrb[0].mxu0
  %v4764 = vpop.f32.mrb[0].mxu0
  %v4765 = vadd.f32 0.0, %v4764
  %v4766 = vpop.f32.mrb[0].mxu0
  %4767 = vmatprep.mubr.bf16.mxu0 0
  %4768 = vmatmul.mubr.bf16.gmra.mrb[0].mxu0 %v3787
  %v4769 = vpop.f32.mrb[0].mxu0
  %v4770 = vadd.f32 0.0, %v4769
  %v4771 = vpop.f32.mrb[0].mxu0
  %v4772 = vpop.f32.mrb[0].mxu0
  %v4773 = vadd.f32 0.0, %v4772
  %v4774 = vpop.f32.mrb[0].mxu0
  %4775 = vmatprep.mubr.bf16.mxu0 0
  %4776 = vmatmul.mubr.bf16.gmra.mrb[0].mxu0 %v3790
  %v4777 = vpop.f32.mrb[0].mxu0
  %v4778 = vadd.f32 0.0, %v4777
  %v4779 = vpop.f32.mrb[0].mxu0
  %v4780 = vpop.f32.mrb[0].mxu0
  %v4781 = vadd.f32 0.0, %v4780
  %v4782 = vpop.f32.mrb[0].mxu0
  %4783 = vmatprep.mubr.bf16.mxu0 0
  %4784 = vmatmul.mubr.bf16.gmra.mrb[0].mxu0 %v3793
  %v4785 = vpop.f32.mrb[0].mxu0
  %v4786 = vadd.f32 0.0, %v4785
  %v4787 = vpop.f32.mrb[0].mxu0
  %v4788 = vpop.f32.mrb[0].mxu0
  %v4789 = vadd.f32 0.0, %v4788
  %v4790 = vpop.f32.mrb[0].mxu0
  %4791 = vmatprep.mubr.bf16.mxu0 0
  %4792 = vmatmul.mubr.bf16.gmra.mrb[0].mxu0 %v3796
  %v4793 = vpop.f32.mrb[0].mxu0
  %v4794 = vadd.f32 0.0, %v4793
  %v4795 = vpop.f32.mrb[0].mxu0
  %v4796 = vpop.f32.mrb[0].mxu0
  %v4797 = vadd.f32 0.0, %v4796
  %v4798 = vpop.f32.mrb[0].mxu0
  %4799 = vmatprep.mubr.bf16.mxu0 0
  %4800 = vmatmul.mubr.bf16.gmra.mrb[0].mxu0 %v3799
  %v4801 = vpop.f32.mrb[0].mxu0
  %v4802 = vadd.f32 0.0, %v4801
  %v4803 = vpop.f32.mrb[0].mxu0
  %v4804 = vpop.f32.mrb[0].mxu0
  %v4805 = vadd.f32 0.0, %v4804
  %v4806 = vpop.f32.mrb[0].mxu0
  %4807 = vmatprep.mubr.bf16.mxu0 0
  %4808 = vmatmul.mubr.bf16.gmra.mrb[0].mxu0 %v3802
  %v4809 = vpop.f32.mrb[0].mxu0
  %v4810 = vadd.f32 0.0, %v4809
  %v4811 = vpop.f32.mrb[0].mxu0
  %v4812 = vpop.f32.mrb[0].mxu0
  %v4813 = vadd.f32 0.0, %v4812
  %v4814 = vpop.f32.mrb[0].mxu0
  %4815 = vmatprep.mubr.bf16.mxu0 0
  %4816 = vmatmul.mubr.bf16.gmra.mrb[0].mxu0 %v3805
  %v4817 = vpop.f32.mrb[0].mxu0
  %v4818 = vadd.f32 0.0, %v4817
  %v4819 = vpop.f32.mrb[0].mxu0
  %v4820 = vpop.f32.mrb[0].mxu0
  %v4821 = vadd.f32 0.0, %v4820
  %v4822 = vpop.f32.mrb[0].mxu0
  %4823 = vmatprep.mubr.bf16.mxu0 0
  %4824 = vmatmul.mubr.bf16.gmra.mrb[0].mxu0 %v3808
  %v4825 = vpop.f32.mrb[0].mxu0
  %v4826 = vadd.f32 0.0, %v4825
  %v4827 = vpop.f32.mrb[0].mxu0
  %v4828 = vpop.f32.mrb[0].mxu0
  %v4829 = vadd.f32 0.0, %v4828
  %v4830 = vpop.f32.mrb[0].mxu0
  %4831 = vmatprep.mubr.bf16.mxu0 0
  %4832 = vmatmul.mubr.bf16.gmra.mrb[0].mxu0 %v3811
  %v4833 = vpop.f32.mrb[0].mxu0
  %v4834 = vadd.f32 0.0, %v4833
  %v4835 = vpop.f32.mrb[0].mxu0
  %v4836 = vpop.f32.mrb[0].mxu0
  %v4837 = vadd.f32 0.0, %v4836
  %v4838 = vpop.f32.mrb[0].mxu0
  %4839 = vmatprep.mubr.bf16.mxu0 0
  %4840 = vmatmul.mubr.bf16.gmra.mrb[0].mxu0 %v3814
  %v4841 = vpop.f32.mrb[0].mxu0
  %v4842 = vadd.f32 0.0, %v4841
  %v4843 = vpop.f32.mrb[0].mxu0
  %v4844 = vpop.f32.mrb[0].mxu0
  %v4845 = vadd.f32 0.0, %v4844
  %v4846 = vpop.f32.mrb[0].mxu0
  %4847 = vmatprep.mubr.bf16.mxu0 0
  %4848 = vmatmul.mubr.bf16.gmra.mrb[0].mxu0 %v3817
  %v4849 = vpop.f32.mrb[0].mxu0
  %v4850 = vadd.f32 0.0, %v4849
  %v4851 = vpop.f32.mrb[0].mxu0
  %v4852 = vpop.f32.mrb[0].mxu0
  %v4853 = vadd.f32 0.0, %v4852
  %v4854 = vpop.f32.mrb[0].mxu0
  %4855 = vmatprep.mubr.bf16.mxu0 0
  %4856 = vmatmul.mubr.bf16.gmra.mrb[0].mxu0 %v3820
  %v4857 = vpop.f32.mrb[0].mxu0
  %v4858 = vadd.f32 0.0, %v4857
  %v4859 = vpop.f32.mrb[0].mxu0
  %v4860 = vpop.f32.mrb[0].mxu0
  %v4861 = vadd.f32 0.0, %v4860
  %v4862 = vpop.f32.mrb[0].mxu0
  %4863 = vmatprep.mubr.bf16.mxu0 0
  %4864 = vmatmul.mubr.bf16.gmra.mrb[0].mxu0 %v3823
  %v4865 = vpop.f32.mrb[0].mxu0
  %v4866 = vadd.f32 0.0, %v4865
  %v4867 = vpop.f32.mrb[0].mxu0
  %v4868 = vpop.f32.mrb[0].mxu0
  %v4869 = vadd.f32 0.0, %v4868
  %v4870 = vpop.f32.mrb[0].mxu0
  %4871 = vmatprep.mubr.bf16.mxu0 0
  %4872 = vmatmul.mubr.bf16.gmra.mrb[0].mxu0 %v3826
  %v4873 = vpop.f32.mrb[0].mxu0
  %v4874 = vadd.f32 0.0, %v4873
  %v4875 = vpop.f32.mrb[0].mxu0
  %v4876 = vpop.f32.mrb[0].mxu0
  %v4877 = vadd.f32 0.0, %v4876
  %v4878 = vpop.f32.mrb[0].mxu0
  %4879 = vmatprep.mubr.bf16.mxu0 0
  %4880 = vmatmul.mubr.bf16.gmra.mrb[0].mxu0 %v3829
  %v4881 = vpop.f32.mrb[0].mxu0
  %v4882 = vadd.f32 0.0, %v4881
  %v4883 = vpop.f32.mrb[0].mxu0
  %v4884 = vpop.f32.mrb[0].mxu0
  %v4885 = vadd.f32 0.0, %v4884
  %v4886 = vpop.f32.mrb[0].mxu0
  %4887 = vmatprep.mubr.bf16.mxu0 0
  %4888 = vmatmul.mubr.bf16.gmra.mrb[0].mxu0 %v3832
  %v4889 = vpop.f32.mrb[0].mxu0
  %v4890 = vadd.f32 0.0, %v4889
  %v4891 = vpop.f32.mrb[0].mxu0
  %v4892 = vpop.f32.mrb[0].mxu0
  %v4893 = vadd.f32 0.0, %v4892
  %v4894 = vpop.f32.mrb[0].mxu0
  %4895 = vmatprep.mubr.bf16.mxu0 0
  %4896 = vmatmul.mubr.bf16.gmra.mrb[0].mxu0 %v3835
  %v4897 = vpop.f32.mrb[0].mxu0
  %v4898 = vadd.f32 0.0, %v4897
  %v4899 = vpop.f32.mrb[0].mxu0
  %v4900 = vpop.f32.mrb[0].mxu0
  %v4901 = vadd.f32 0.0, %v4900
  %v4902 = vpop.f32.mrb[0].mxu0
  %4903 = vmatprep.mubr.bf16.mxu0 0
  %4904 = vmatmul.mubr.bf16.gmra.mrb[0].mxu0 %v3838
  %v4905 = vpop.f32.mrb[0].mxu0
  %v4906 = vadd.f32 0.0, %v4905
  %v4907 = vpop.f32.mrb[0].mxu0
  %v4908 = vpop.f32.mrb[0].mxu0
  %v4909 = vadd.f32 0.0, %v4908
  %v4910 = vpop.f32.mrb[0].mxu0
  %4911 = vmatprep.mubr.bf16.mxu0 0
  %4912 = vmatmul.mubr.bf16.gmra.mrb[0].mxu0 %v3841
  %v4913 = vpop.f32.mrb[0].mxu0
  %v4914 = vadd.f32 0.0, %v4913
  %v4915 = vpop.f32.mrb[0].mxu0
  %v4916 = vpop.f32.mrb[0].mxu0
  %v4917 = vadd.f32 0.0, %v4916
  %v4918 = vpop.f32.mrb[0].mxu0
  %4919 = vmatprep.mubr.bf16.mxu0 0
  %4920 = vmatmul.mubr.bf16.gmra.mrb[0].mxu0 %v3844
  %v4921 = vpop.f32.mrb[0].mxu0
  %v4922 = vadd.f32 0.0, %v4921
  %v4923 = vpop.f32.mrb[0].mxu0
  %v4924 = vpop.f32.mrb[0].mxu0
  %v4925 = vadd.f32 0.0, %v4924
  %v4926 = vpop.f32.mrb[0].mxu0
  %4927 = vmatprep.mubr.bf16.mxu0 0
  %4928 = vmatmul.mubr.bf16.gmra.mrb[0].mxu0 %v3847
  %v4929 = vpop.f32.mrb[0].mxu0
  %v4930 = vadd.f32 0.0, %v4929
  %v4931 = vpop.f32.mrb[0].mxu0
  %v4932 = vpop.f32.mrb[0].mxu0
  %v4933 = vadd.f32 0.0, %v4932
  %v4934 = vpop.f32.mrb[0].mxu0
  %4935 = vmatprep.mubr.bf16.mxu0 0
  %4936 = vmatmul.mubr.bf16.gmra.mrb[0].mxu0 %v3850
  %v4937 = vpop.f32.mrb[0].mxu0
  %v4938 = vadd.f32 0.0, %v4937
  %v4939 = vpop.f32.mrb[0].mxu0
  %v4940 = vpop.f32.mrb[0].mxu0
  %v4941 = vadd.f32 0.0, %v4940
  %v4942 = vpop.f32.mrb[0].mxu0
  %4943 = vmatprep.mubr.bf16.mxu0 0
  %4944 = vmatmul.mubr.bf16.gmra.mrb[0].mxu0 %v3853
  %v4945 = vpop.f32.mrb[0].mxu0
  %v4946 = vadd.f32 0.0, %v4945
  %v4947 = vpop.f32.mrb[0].mxu0
  %v4948 = vpop.f32.mrb[0].mxu0
  %v4949 = vadd.f32 0.0, %v4948
  %v4950 = vpop.f32.mrb[0].mxu0
  %4951 = vmatprep.mubr.bf16.mxu0 0
  %4952 = vmatmul.mubr.bf16.gmra.mrb[0].mxu0 %v3856
  %v4953 = vpop.f32.mrb[0].mxu0
  %v4954 = vadd.f32 0.0, %v4953
  %v4955 = vpop.f32.mrb[0].mxu0
  %v4956 = vpop.f32.mrb[0].mxu0
  %v4957 = vadd.f32 0.0, %v4956
  %v4958 = vpop.f32.mrb[0].mxu0
  %4959 = vmatprep.mubr.bf16.mxu0 0
  %4960 = vmatmul.mubr.bf16.gmra.mrb[0].mxu0 %v3859
  %v4961 = vpop.f32.mrb[0].mxu0
  %v4962 = vadd.f32 0.0, %v4961
  %v4963 = vpop.f32.mrb[0].mxu0
  %v4964 = vpop.f32.mrb[0].mxu0
  %v4965 = vadd.f32 0.0, %v4964
  %v4966 = vpop.f32.mrb[0].mxu0
  %4967 = vmatprep.mubr.bf16.mxu0 0
  %4968 = vmatmul.mubr.bf16.gmra.mrb[0].mxu0 %v3862
  %v4969 = vpop.f32.mrb[0].mxu0
  %v4970 = vadd.f32 0.0, %v4969
  %v4971 = vpop.f32.mrb[0].mxu0
  %v4972 = vpop.f32.mrb[0].mxu0
  %v4973 = vadd.f32 0.0, %v4972
  %v4974 = vpop.f32.mrb[0].mxu0
  %4975 = vmatprep.mubr.bf16.mxu0 0
  %4976 = vmatmul.mubr.bf16.gmra.mrb[0].mxu0 %v3865
  %v4977 = vpop.f32.mrb[0].mxu0
  %v4978 = vadd.f32 0.0, %v4977
  %v4979 = vpop.f32.mrb[0].mxu0
  %v4980 = vpop.f32.mrb[0].mxu0
  %v4981 = vadd.f32 0.0, %v4980
  %v4982 = vpop.f32.mrb[0].mxu0
  %4983 = vmatprep.mubr.bf16.mxu0 0
  %4984 = vmatmul.mubr.bf16.gmra.mrb[0].mxu0 %v3868
  %v4985 = vpop.f32.mrb[0].mxu0
  %v4986 = vadd.f32 0.0, %v4985
  %v4987 = vpop.f32.mrb[0].mxu0
  %v4988 = vpop.f32.mrb[0].mxu0
  %v4989 = vadd.f32 0.0, %v4988
  %v4990 = vpop.f32.mrb[0].mxu0
  %4991 = vmatprep.mubr.bf16.mxu0 0
  %4992 = vmatmul.mubr.bf16.gmra.mrb[0].mxu0 %v3871
  %v4993 = vpop.f32.mrb[0].mxu0
  %v4994 = vadd.f32 0.0, %v4993
  %v4995 = vpop.f32.mrb[0].mxu0
  %v4996 = vpop.f32.mrb[0].mxu0
  %v4997 = vadd.f32 0.0, %v4996
  %v4998 = vpop.f32.mrb[0].mxu0
  %4999 = vmatprep.mubr.bf16.mxu0 0
  %5000 = vmatmul.mubr.bf16.gmra.mrb[0].mxu0 %v3874
  %v5001 = vpop.f32.mrb[0].mxu0
  %v5002 = vadd.f32 0.0, %v5001
  %v5003 = vpop.f32.mrb[0].mxu0
  %v5004 = vpop.f32.mrb[0].mxu0
  %v5005 = vadd.f32 0.0, %v5004
  %v5006 = vpop.f32.mrb[0].mxu0
  %5007 = vmatprep.mubr.bf16.mxu0 0
  %5008 = vmatmul.mubr.bf16.gmra.mrb[0].mxu0 %v3877
  %v5009 = vpop.f32.mrb[0].mxu0
  %v5010 = vadd.f32 0.0, %v5009
  %v5011 = vpop.f32.mrb[0].mxu0
  %v5012 = vpop.f32.mrb[0].mxu0
  %v5013 = vadd.f32 0.0, %v5012
  %v5014 = vpop.f32.mrb[0].mxu0
  %5015 = vmatprep.mubr.bf16.mxu0 0
  %5016 = vmatmul.mubr.bf16.gmra.mrb[0].mxu0 %v3880
  %v5017 = vpop.f32.mrb[0].mxu0
  %v5018 = vadd.f32 0.0, %v5017
  %v5019 = vpop.f32.mrb[0].mxu0
  %v5020 = vpop.f32.mrb[0].mxu0
  %v5021 = vadd.f32 0.0, %v5020
  %v5022 = vpop.f32.mrb[0].mxu0
  %5023 = vmatprep.mubr.bf16.mxu0 0
  %5024 = vmatmul.mubr.bf16.gmra.mrb[0].mxu0 %v3883
  %v5025 = vpop.f32.mrb[0].mxu0
  %v5026 = vadd.f32 0.0, %v5025
  %v5027 = vpop.f32.mrb[0].mxu0
  %v5028 = vpop.f32.mrb[0].mxu0
  %v5029 = vadd.f32 0.0, %v5028
  %v5030 = vpop.f32.mrb[0].mxu0
  %5031 = vdwg.mxu0
  %v5032 = vmax.f32 %v3920, %v4522
  %v5033 = vmax.f32 %v3923, %v4525
  %v5034 = vmax.f32 %v3928, %v4530
  %v5035 = vmax.f32 %v3931, %v4533
  %v5036 = vmax.f32 %v3936, %v4538
  %v5037 = vmax.f32 %v3939, %v4541
  %v5038 = vmax.f32 %v3944, %v4546
  %v5039 = vmax.f32 %v3947, %v4549
  %v5040 = vmax.f32 %v3952, %v4554
  %v5041 = vmax.f32 %v3955, %v4557
  %v5042 = vmax.f32 %v3960, %v4562
  %v5043 = vmax.f32 %v3963, %v4565
  %v5044 = vmax.f32 %v3968, %v4570
  %v5045 = vmax.f32 %v3971, %v4573
  %v5046 = vmax.f32 %v3976, %v4578
  %v5047 = vmax.f32 %v3979, %v4581
  %v5048 = vmax.f32 %v3984, %v4586
  %v5049 = vmax.f32 %v3987, %v4589
  %v5050 = vmax.f32 %v3992, %v4594
  %v5051 = vmax.f32 %v3995, %v4597
  %v5052 = vmax.f32 %v4000, %v4602
  %v5053 = vmax.f32 %v4003, %v4605
  %v5054 = vmax.f32 %v4008, %v4610
  %v5055 = vmax.f32 %v4011, %v4613
  %v5056 = vmax.f32 %v4016, %v4618
  %v5057 = vmax.f32 %v4019, %v4621
  %v5058 = vmax.f32 %v4024, %v4626
  %v5059 = vmax.f32 %v4027, %v4629
  %v5060 = vmax.f32 %v4032, %v4634
  %v5061 = vmax.f32 %v4035, %v4637
  %v5062 = vmax.f32 %v4040, %v4642
  %v5063 = vmax.f32 %v4043, %v4645
  %v5064 = vmax.f32 %v4048, %v4650
  %v5065 = vmax.f32 %v4051, %v4653
  %v5066 = vmax.f32 %v4056, %v4658
  %v5067 = vmax.f32 %v4059, %v4661
  %v5068 = vmax.f32 %v4064, %v4666
  %v5069 = vmax.f32 %v4067, %v4669
  %v5070 = vmax.f32 %v4072, %v4674
  %v5071 = vmax.f32 %v4075, %v4677
  %v5072 = vmax.f32 %v4080, %v4682
  %v5073 = vmax.f32 %v4083, %v4685
  %v5074 = vmax.f32 %v4088, %v4690
  %v5075 = vmax.f32 %v4091, %v4693
  %v5076 = vmax.f32 %v4096, %v4698
  %v5077 = vmax.f32 %v4099, %v4701
  %v5078 = vmax.f32 %v4104, %v4706
  %v5079 = vmax.f32 %v4107, %v4709
  %v5080 = vmax.f32 %v4112, %v4714
  %v5081 = vmax.f32 %v4115, %v4717
  %v5082 = vmax.f32 %v4120, %v4722
  %v5083 = vmax.f32 %v4123, %v4725
  %v5084 = vmax.f32 %v4128, %v4730
  %v5085 = vmax.f32 %v4131, %v4733
  %v5086 = vmax.f32 %v4136, %v4738
  %v5087 = vmax.f32 %v4139, %v4741
  %v5088 = vmax.f32 %v4144, %v4746
  %v5089 = vmax.f32 %v4147, %v4749
  %v5090 = vmax.f32 %v4152, %v4754
  %v5091 = vmax.f32 %v4155, %v4757
  %v5092 = vmax.f32 %v4160, %v4762
  %v5093 = vmax.f32 %v4163, %v4765
  %v5094 = vmax.f32 %v4168, %v4770
  %v5095 = vmax.f32 %v4171, %v4773
  %v5096 = vmax.f32 %v4176, %v4778
  %v5097 = vmax.f32 %v4179, %v4781
  %v5098 = vmax.f32 %v4184, %v4786
  %v5099 = vmax.f32 %v4187, %v4789
  %v5100 = vmax.f32 %v4192, %v4794
  %v5101 = vmax.f32 %v4195, %v4797
  %v5102 = vmax.f32 %v4200, %v4802
  %v5103 = vmax.f32 %v4203, %v4805
  %v5104 = vmax.f32 %v4208, %v4810
  %v5105 = vmax.f32 %v4211, %v4813
  %v5106 = vmax.f32 %v4216, %v4818
  %v5107 = vmax.f32 %v4219, %v4821
  %v5108 = vmax.f32 %v4224, %v4826
  %v5109 = vmax.f32 %v4227, %v4829
  %v5110 = vmax.f32 %v4232, %v4834
  %v5111 = vmax.f32 %v4235, %v4837
  %v5112 = vmax.f32 %v4240, %v4842
  %v5113 = vmax.f32 %v4243, %v4845
  %v5114 = vmax.f32 %v4248, %v4850
  %v5115 = vmax.f32 %v4251, %v4853
  %v5116 = vmax.f32 %v4256, %v4858
  %v5117 = vmax.f32 %v4259, %v4861
  %v5118 = vmax.f32 %v4264, %v4866
  %v5119 = vmax.f32 %v4267, %v4869
  %v5120 = vmax.f32 %v4272, %v4874
  %v5121 = vmax.f32 %v4275, %v4877
  %v5122 = vmax.f32 %v4280, %v4882
  %v5123 = vmax.f32 %v4283, %v4885
  %v5124 = vmax.f32 %v4288, %v4890
  %v5125 = vmax.f32 %v4291, %v4893
  %v5126 = vmax.f32 %v4296, %v4898
  %v5127 = vmax.f32 %v4299, %v4901
  %v5128 = vmax.f32 %v4304, %v4906
  %v5129 = vmax.f32 %v4307, %v4909
  %v5130 = vmax.f32 %v4312, %v4914
  %v5131 = vmax.f32 %v4315, %v4917
  %v5132 = vmax.f32 %v4320, %v4922
  %v5133 = vmax.f32 %v4323, %v4925
  %v5134 = vmax.f32 %v4328, %v4930
  %v5135 = vmax.f32 %v4331, %v4933
  %v5136 = vmax.f32 %v4336, %v4938
  %v5137 = vmax.f32 %v4339, %v4941
  %v5138 = vmax.f32 %v4344, %v4946
  %v5139 = vmax.f32 %v4347, %v4949
  %v5140 = vmax.f32 %v4352, %v4954
  %v5141 = vmax.f32 %v4355, %v4957
  %v5142 = vmax.f32 %v4360, %v4962
  %v5143 = vmax.f32 %v4363, %v4965
  %v5144 = vmax.f32 %v4368, %v4970
  %v5145 = vmax.f32 %v4371, %v4973
  %v5146 = vmax.f32 %v4376, %v4978
  %v5147 = vmax.f32 %v4379, %v4981
  %v5148 = vmax.f32 %v4384, %v4986
  %v5149 = vmax.f32 %v4387, %v4989
  %v5150 = vmax.f32 %v4392, %v4994
  %v5151 = vmax.f32 %v4395, %v4997
  %v5152 = vmax.f32 %v4400, %v5002
  %v5153 = vmax.f32 %v4403, %v5005
  %v5154 = vmax.f32 %v4408, %v5010
  %v5155 = vmax.f32 %v4411, %v5013
  %v5156 = vmax.f32 %v4416, %v5018
  %v5157 = vmax.f32 %v4419, %v5021
  %v5158 = vmax.f32 %v4424, %v5026
  %v5159 = vmax.f32 %v4427, %v5029
  %vm5160 = vcmask 457728
  %5161 = vst.msk [vmem:[#allocation2] sm:$0xff] %vm5160, %v5032
  %5162 = vst.msk [vmem:[#allocation2 + $0x8] sm:$0xff] %vm5160, %v5033
  %5163 = vst.msk [vmem:[#allocation2 + $0x10] sm:$0xff] %vm5160, %v5034
  %5164 = vst.msk [vmem:[#allocation2 + $0x18] sm:$0xff] %vm5160, %v5035
  %5165 = vst.msk [vmem:[#allocation2 + $0x20] sm:$0xff] %vm5160, %v5036
  %5166 = vst.msk [vmem:[#allocation2 + $0x28] sm:$0xff] %vm5160, %v5037
  %5167 = vst.msk [vmem:[#allocation2 + $0x30] sm:$0xff] %vm5160, %v5038
  %5168 = vst.msk [vmem:[#allocation2 + $0x38] sm:$0xff] %vm5160, %v5039
  %5169 = vst.msk [vmem:[#allocation2 + $0x40] sm:$0xff] %vm5160, %v5040
  %5170 = vst.msk [vmem:[#allocation2 + $0x48] sm:$0xff] %vm5160, %v5041
  %5171 = vst.msk [vmem:[#allocation2 + $0x50] sm:$0xff] %vm5160, %v5042
  %5172 = vst.msk [vmem:[#allocation2 + $0x58] sm:$0xff] %vm5160, %v5043
  %5173 = vst.msk [vmem:[#allocation2 + $0x60] sm:$0xff] %vm5160, %v5044
  %5174 = vst.msk [vmem:[#allocation2 + $0x68] sm:$0xff] %vm5160, %v5045
  %5175 = vst.msk [vmem:[#allocation2 + $0x70] sm:$0xff] %vm5160, %v5046
  %5176 = vst.msk [vmem:[#allocation2 + $0x78] sm:$0xff] %vm5160, %v5047
  %5177 = vst.msk [vmem:[#allocation2 + $0x80] sm:$0xff] %vm5160, %v5048
  %5178 = vst.msk [vmem:[#allocation2 + $0x88] sm:$0xff] %vm5160, %v5049
  %5179 = vst.msk [vmem:[#allocation2 + $0x90] sm:$0xff] %vm5160, %v5050
  %5180 = vst.msk [vmem:[#allocation2 + $0x98] sm:$0xff] %vm5160, %v5051
  %5181 = vst.msk [vmem:[#allocation2 + $0xa0] sm:$0xff] %vm5160, %v5052
  %5182 = vst.msk [vmem:[#allocation2 + $0xa8] sm:$0xff] %vm5160, %v5053
  %5183 = vst.msk [vmem:[#allocation2 + $0xb0] sm:$0xff] %vm5160, %v5054
  %5184 = vst.msk [vmem:[#allocation2 + $0xb8] sm:$0xff] %vm5160, %v5055
  %5185 = vst.msk [vmem:[#allocation2 + $0xc0] sm:$0xff] %vm5160, %v5056
  %5186 = vst.msk [vmem:[#allocation2 + $0xc8] sm:$0xff] %vm5160, %v5057
  %5187 = vst.msk [vmem:[#allocation2 + $0xd0] sm:$0xff] %vm5160, %v5058
  %5188 = vst.msk [vmem:[#allocation2 + $0xd8] sm:$0xff] %vm5160, %v5059
  %5189 = vst.msk [vmem:[#allocation2 + $0xe0] sm:$0xff] %vm5160, %v5060
  %5190 = vst.msk [vmem:[#allocation2 + $0xe8] sm:$0xff] %vm5160, %v5061
  %5191 = vst.msk [vmem:[#allocation2 + $0xf0] sm:$0xff] %vm5160, %v5062
  %5192 = vst.msk [vmem:[#allocation2 + $0xf8] sm:$0xff] %vm5160, %v5063
  %5193 = vst.msk [vmem:[#allocation2 + $0x100] sm:$0xff] %vm5160, %v5064
  %5194 = vst.msk [vmem:[#allocation2 + $0x108] sm:$0xff] %vm5160, %v5065
  %5195 = vst.msk [vmem:[#allocation2 + $0x110] sm:$0xff] %vm5160, %v5066
  %5196 = vst.msk [vmem:[#allocation2 + $0x118] sm:$0xff] %vm5160, %v5067
  %5197 = vst.msk [vmem:[#allocation2 + $0x120] sm:$0xff] %vm5160, %v5068
  %5198 = vst.msk [vmem:[#allocation2 + $0x128] sm:$0xff] %vm5160, %v5069
  %5199 = vst.msk [vmem:[#allocation2 + $0x130] sm:$0xff] %vm5160, %v5070
  %5200 = vst.msk [vmem:[#allocation2 + $0x138] sm:$0xff] %vm5160, %v5071
  %5201 = vst.msk [vmem:[#allocation2 + $0x140] sm:$0xff] %vm5160, %v5072
  %5202 = vst.msk [vmem:[#allocation2 + $0x148] sm:$0xff] %vm5160, %v5073
  %5203 = vst.msk [vmem:[#allocation2 + $0x150] sm:$0xff] %vm5160, %v5074
  %5204 = vst.msk [vmem:[#allocation2 + $0x158] sm:$0xff] %vm5160, %v5075
  %5205 = vst.msk [vmem:[#allocation2 + $0x160] sm:$0xff] %vm5160, %v5076
  %5206 = vst.msk [vmem:[#allocation2 + $0x168] sm:$0xff] %vm5160, %v5077
  %5207 = vst.msk [vmem:[#allocation2 + $0x170] sm:$0xff] %vm5160, %v5078
  %5208 = vst.msk [vmem:[#allocation2 + $0x178] sm:$0xff] %vm5160, %v5079
  %5209 = vst.msk [vmem:[#allocation2 + $0x180] sm:$0xff] %vm5160, %v5080
  %5210 = vst.msk [vmem:[#allocation2 + $0x188] sm:$0xff] %vm5160, %v5081
  %5211 = vst.msk [vmem:[#allocation2 + $0x190] sm:$0xff] %vm5160, %v5082
  %5212 = vst.msk [vmem:[#allocation2 + $0x198] sm:$0xff] %vm5160, %v5083
  %5213 = vst.msk [vmem:[#allocation2 + $0x1a0] sm:$0xff] %vm5160, %v5084
  %5214 = vst.msk [vmem:[#allocation2 + $0x1a8] sm:$0xff] %vm5160, %v5085
  %5215 = vst.msk [vmem:[#allocation2 + $0x1b0] sm:$0xff] %vm5160, %v5086
  %5216 = vst.msk [vmem:[#allocation2 + $0x1b8] sm:$0xff] %vm5160, %v5087
  %5217 = vst.msk [vmem:[#allocation2 + $0x1c0] sm:$0xff] %vm5160, %v5088
  %5218 = vst.msk [vmem:[#allocation2 + $0x1c8] sm:$0xff] %vm5160, %v5089
  %5219 = vst.msk [vmem:[#allocation2 + $0x1d0] sm:$0xff] %vm5160, %v5090
  %5220 = vst.msk [vmem:[#allocation2 + $0x1d8] sm:$0xff] %vm5160, %v5091
  %5221 = vst.msk [vmem:[#allocation2 + $0x1e0] sm:$0xff] %vm5160, %v5092
  %5222 = vst.msk [vmem:[#allocation2 + $0x1e8] sm:$0xff] %vm5160, %v5093
  %5223 = vst.msk [vmem:[#allocation2 + $0x1f0] sm:$0xff] %vm5160, %v5094
  %5224 = vst.msk [vmem:[#allocation2 + $0x1f8] sm:$0xff] %vm5160, %v5095
  %5225 = vst.msk [vmem:[#allocation2 + $0x200] sm:$0xff] %vm5160, %v5096
  %5226 = vst.msk [vmem:[#allocation2 + $0x208] sm:$0xff] %vm5160, %v5097
  %5227 = vst.msk [vmem:[#allocation2 + $0x210] sm:$0xff] %vm5160, %v5098
  %5228 = vst.msk [vmem:[#allocation2 + $0x218] sm:$0xff] %vm5160, %v5099
  %5229 = vst.msk [vmem:[#allocation2 + $0x220] sm:$0xff] %vm5160, %v5100
  %5230 = vst.msk [vmem:[#allocation2 + $0x228] sm:$0xff] %vm5160, %v5101
  %5231 = vst.msk [vmem:[#allocation2 + $0x230] sm:$0xff] %vm5160, %v5102
  %5232 = vst.msk [vmem:[#allocation2 + $0x238] sm:$0xff] %vm5160, %v5103
  %5233 = vst.msk [vmem:[#allocation2 + $0x240] sm:$0xff] %vm5160, %v5104
  %5234 = vst.msk [vmem:[#allocation2 + $0x248] sm:$0xff] %vm5160, %v5105
  %5235 = vst.msk [vmem:[#allocation2 + $0x250] sm:$0xff] %vm5160, %v5106
  %5236 = vst.msk [vmem:[#allocation2 + $0x258] sm:$0xff] %vm5160, %v5107
  %5237 = vst.msk [vmem:[#allocation2 + $0x260] sm:$0xff] %vm5160, %v5108
  %5238 = vst.msk [vmem:[#allocation2 + $0x268] sm:$0xff] %vm5160, %v5109
  %5239 = vst.msk [vmem:[#allocation2 + $0x270] sm:$0xff] %vm5160, %v5110
  %5240 = vst.msk [vmem:[#allocation2 + $0x278] sm:$0xff] %vm5160, %v5111
  %5241 = vst.msk [vmem:[#allocation2 + $0x280] sm:$0xff] %vm5160, %v5112
  %5242 = vst.msk [vmem:[#allocation2 + $0x288] sm:$0xff] %vm5160, %v5113
  %5243 = vst.msk [vmem:[#allocation2 + $0x290] sm:$0xff] %vm5160, %v5114
  %5244 = vst.msk [vmem:[#allocation2 + $0x298] sm:$0xff] %vm5160, %v5115
  %5245 = vst.msk [vmem:[#allocation2 + $0x2a0] sm:$0xff] %vm5160, %v5116
  %5246 = vst.msk [vmem:[#allocation2 + $0x2a8] sm:$0xff] %vm5160, %v5117
  %5247 = vst.msk [vmem:[#allocation2 + $0x2b0] sm:$0xff] %vm5160, %v5118
  %5248 = vst.msk [vmem:[#allocation2 + $0x2b8] sm:$0xff] %vm5160, %v5119
  %5249 = vst.msk [vmem:[#allocation2 + $0x2c0] sm:$0xff] %vm5160, %v5120
  %5250 = vst.msk [vmem:[#allocation2 + $0x2c8] sm:$0xff] %vm5160, %v5121
  %5251 = vst.msk [vmem:[#allocation2 + $0x2d0] sm:$0xff] %vm5160, %v5122
  %5252 = vst.msk [vmem:[#allocation2 + $0x2d8] sm:$0xff] %vm5160, %v5123
  %5253 = vst.msk [vmem:[#allocation2 + $0x2e0] sm:$0xff] %vm5160, %v5124
  %5254 = vst.msk [vmem:[#allocation2 + $0x2e8] sm:$0xff] %vm5160, %v5125
  %5255 = vst.msk [vmem:[#allocation2 + $0x2f0] sm:$0xff] %vm5160, %v5126
  %5256 = vst.msk [vmem:[#allocation2 + $0x2f8] sm:$0xff] %vm5160, %v5127
  %5257 = vst.msk [vmem:[#allocation2 + $0x300] sm:$0xff] %vm5160, %v5128
  %5258 = vst.msk [vmem:[#allocation2 + $0x308] sm:$0xff] %vm5160, %v5129
  %5259 = vst.msk [vmem:[#allocation2 + $0x310] sm:$0xff] %vm5160, %v5130
  %5260 = vst.msk [vmem:[#allocation2 + $0x318] sm:$0xff] %vm5160, %v5131
  %5261 = vst.msk [vmem:[#allocation2 + $0x320] sm:$0xff] %vm5160, %v5132
  %5262 = vst.msk [vmem:[#allocation2 + $0x328] sm:$0xff] %vm5160, %v5133
  %5263 = vst.msk [vmem:[#allocation2 + $0x330] sm:$0xff] %vm5160, %v5134
  %5264 = vst.msk [vmem:[#allocation2 + $0x338] sm:$0xff] %vm5160, %v5135
  %5265 = vst.msk [vmem:[#allocation2 + $0x340] sm:$0xff] %vm5160, %v5136
  %5266 = vst.msk [vmem:[#allocation2 + $0x348] sm:$0xff] %vm5160, %v5137
  %5267 = vst.msk [vmem:[#allocation2 + $0x350] sm:$0xff] %vm5160, %v5138
  %5268 = vst.msk [vmem:[#allocation2 + $0x358] sm:$0xff] %vm5160, %v5139
  %5269 = vst.msk [vmem:[#allocation2 + $0x360] sm:$0xff] %vm5160, %v5140
  %5270 = vst.msk [vmem:[#allocation2 + $0x368] sm:$0xff] %vm5160, %v5141
  %5271 = vst.msk [vmem:[#allocation2 + $0x370] sm:$0xff] %vm5160, %v5142
  %5272 = vst.msk [vmem:[#allocation2 + $0x378] sm:$0xff] %vm5160, %v5143
  %5273 = vst.msk [vmem:[#allocation2 + $0x380] sm:$0xff] %vm5160, %v5144
  %5274 = vst.msk [vmem:[#allocation2 + $0x388] sm:$0xff] %vm5160, %v5145
  %5275 = vst.msk [vmem:[#allocation2 + $0x390] sm:$0xff] %vm5160, %v5146
  %5276 = vst.msk [vmem:[#allocation2 + $0x398] sm:$0xff] %vm5160, %v5147
  %5277 = vst.msk [vmem:[#allocation2 + $0x3a0] sm:$0xff] %vm5160, %v5148
  %5278 = vst.msk [vmem:[#allocation2 + $0x3a8] sm:$0xff] %vm5160, %v5149
  %5279 = vst.msk [vmem:[#allocation2 + $0x3b0] sm:$0xff] %vm5160, %v5150
  %5280 = vst.msk [vmem:[#allocation2 + $0x3b8] sm:$0xff] %vm5160, %v5151
  %5281 = vst.msk [vmem:[#allocation2 + $0x3c0] sm:$0xff] %vm5160, %v5152
  %5282 = vst.msk [vmem:[#allocation2 + $0x3c8] sm:$0xff] %vm5160, %v5153
  %5283 = vst.msk [vmem:[#allocation2 + $0x3d0] sm:$0xff] %vm5160, %v5154
  %5284 = vst.msk [vmem:[#allocation2 + $0x3d8] sm:$0xff] %vm5160, %v5155
  %5285 = vst.msk [vmem:[#allocation2 + $0x3e0] sm:$0xff] %vm5160, %v5156
  %5286 = vst.msk [vmem:[#allocation2 + $0x3e8] sm:$0xff] %vm5160, %v5157
  %5287 = vst.msk [vmem:[#allocation2 + $0x3f0] sm:$0xff] %vm5160, %v5158
  %vm5288 = vcmask 455680
  %5289 = vst.msk [vmem:[#allocation2 + $0x3f8] sm:$0x3f] %vm5288, %v5159
  %v5290 = vld [vmem:[#allocation2] ss:$2 sm:$0xff]
  %s5291 = scalar_lea.vmem [#allocation2], 16
  %v5292 = vld [vmem:[%s5291] ss:$2 sm:$0xff]
  %s5293 = scalar_lea.vmem [#allocation2], 32
  %v5294 = vld [vmem:[%s5293] ss:$2 sm:$0xff]
  %s5295 = scalar_lea.vmem [#allocation2], 48
  %v5296 = vld [vmem:[%s5295] ss:$2 sm:$0xff]
  %s5297 = scalar_lea.vmem [#allocation2], 64
  %v5298 = vld [vmem:[%s5297] ss:$2 sm:$0xff]
  %s5299 = scalar_lea.vmem [#allocation2], 80
  %v5300 = vld [vmem:[%s5299] ss:$2 sm:$0xff]
  %s5301 = scalar_lea.vmem [#allocation2], 96
  %v5302 = vld [vmem:[%s5301] ss:$2 sm:$0xff]
  %s5303 = scalar_lea.vmem [#allocation2], 112
  %v5304 = vld [vmem:[%s5303] ss:$2 sm:$0xff]
  %s5305 = scalar_lea.vmem [#allocation2], 128
  %v5306 = vld [vmem:[%s5305] ss:$2 sm:$0xff]
  %s5307 = scalar_lea.vmem [#allocation2], 144
  %v5308 = vld [vmem:[%s5307] ss:$2 sm:$0xff]
  %s5309 = scalar_lea.vmem [#allocation2], 160
  %v5310 = vld [vmem:[%s5309] ss:$2 sm:$0xff]
  %s5311 = scalar_lea.vmem [#allocation2], 176
  %v5312 = vld [vmem:[%s5311] ss:$2 sm:$0xff]
  %s5313 = scalar_lea.vmem [#allocation2], 192
  %v5314 = vld [vmem:[%s5313] ss:$2 sm:$0xff]
  %s5315 = scalar_lea.vmem [#allocation2], 208
  %v5316 = vld [vmem:[%s5315] ss:$2 sm:$0xff]
  %s5317 = scalar_lea.vmem [#allocation2], 224
  %v5318 = vld [vmem:[%s5317] ss:$2 sm:$0xff]
  %s5319 = scalar_lea.vmem [#allocation2], 240
  %v5320 = vld [vmem:[%s5319] ss:$2 sm:$0xff]
  %s5321 = scalar_lea.vmem [#allocation2], 256
  %v5322 = vld [vmem:[%s5321] ss:$2 sm:$0xff]
  %s5323 = scalar_lea.vmem [#allocation2], 272
  %v5324 = vld [vmem:[%s5323] ss:$2 sm:$0xff]
  %s5325 = scalar_lea.vmem [#allocation2], 288
  %v5326 = vld [vmem:[%s5325] ss:$2 sm:$0xff]
  %s5327 = scalar_lea.vmem [#allocation2], 304
  %v5328 = vld [vmem:[%s5327] ss:$2 sm:$0xff]
  %s5329 = scalar_lea.vmem [#allocation2], 320
  %v5330 = vld [vmem:[%s5329] ss:$2 sm:$0xff]
  %s5331 = scalar_lea.vmem [#allocation2], 336
  %v5332 = vld [vmem:[%s5331] ss:$2 sm:$0xff]
  %s5333 = scalar_lea.vmem [#allocation2], 352
  %v5334 = vld [vmem:[%s5333] ss:$2 sm:$0xff]
  %s5335 = scalar_lea.vmem [#allocation2], 368
  %v5336 = vld [vmem:[%s5335] ss:$2 sm:$0xff]
  %s5337 = scalar_lea.vmem [#allocation2], 384
  %v5338 = vld [vmem:[%s5337] ss:$2 sm:$0xff]
  %s5339 = scalar_lea.vmem [#allocation2], 400
  %v5340 = vld [vmem:[%s5339] ss:$2 sm:$0xff]
  %s5341 = scalar_lea.vmem [#allocation2], 416
  %v5342 = vld [vmem:[%s5341] ss:$2 sm:$0xff]
  %s5343 = scalar_lea.vmem [#allocation2], 432
  %v5344 = vld [vmem:[%s5343] ss:$2 sm:$0xff]
  %s5345 = scalar_lea.vmem [#allocation2], 448
  %v5346 = vld [vmem:[%s5345] ss:$2 sm:$0xff]
  %s5347 = scalar_lea.vmem [#allocation2], 464
  %v5348 = vld [vmem:[%s5347] ss:$2 sm:$0xff]
  %s5349 = scalar_lea.vmem [#allocation2], 480
  %v5350 = vld [vmem:[%s5349] ss:$2 sm:$0xff]
  %s5351 = scalar_lea.vmem [#allocation2], 496
  %v5352 = vld [vmem:[%s5351] ss:$2 sm:$0xff]
  %s5353 = scalar_lea.vmem [#allocation2], 512
  %v5354 = vld [vmem:[%s5353] ss:$2 sm:$0xff]
  %s5355 = scalar_lea.vmem [#allocation2], 528
  %v5356 = vld [vmem:[%s5355] ss:$2 sm:$0xff]
  %s5357 = scalar_lea.vmem [#allocation2], 544
  %v5358 = vld [vmem:[%s5357] ss:$2 sm:$0xff]
  %s5359 = scalar_lea.vmem [#allocation2], 560
  %v5360 = vld [vmem:[%s5359] ss:$2 sm:$0xff]
  %s5361 = scalar_lea.vmem [#allocation2], 576
  %v5362 = vld [vmem:[%s5361] ss:$2 sm:$0xff]
  %s5363 = scalar_lea.vmem [#allocation2], 592
  %v5364 = vld [vmem:[%s5363] ss:$2 sm:$0xff]
  %s5365 = scalar_lea.vmem [#allocation2], 608
  %v5366 = vld [vmem:[%s5365] ss:$2 sm:$0xff]
  %s5367 = scalar_lea.vmem [#allocation2], 624
  %v5368 = vld [vmem:[%s5367] ss:$2 sm:$0xff]
  %s5369 = scalar_lea.vmem [#allocation2], 640
  %v5370 = vld [vmem:[%s5369] ss:$2 sm:$0xff]
  %s5371 = scalar_lea.vmem [#allocation2], 656
  %v5372 = vld [vmem:[%s5371] ss:$2 sm:$0xff]
  %s5373 = scalar_lea.vmem [#allocation2], 672
  %v5374 = vld [vmem:[%s5373] ss:$2 sm:$0xff]
  %s5375 = scalar_lea.vmem [#allocation2], 688
  %v5376 = vld [vmem:[%s5375] ss:$2 sm:$0xff]
  %s5377 = scalar_lea.vmem [#allocation2], 704
  %v5378 = vld [vmem:[%s5377] ss:$2 sm:$0xff]
  %s5379 = scalar_lea.vmem [#allocation2], 720
  %v5380 = vld [vmem:[%s5379] ss:$2 sm:$0xff]
  %s5381 = scalar_lea.vmem [#allocation2], 736
  %v5382 = vld [vmem:[%s5381] ss:$2 sm:$0xff]
  %s5383 = scalar_lea.vmem [#allocation2], 752
  %v5384 = vld [vmem:[%s5383] ss:$2 sm:$0xff]
  %s5385 = scalar_lea.vmem [#allocation2], 768
  %v5386 = vld [vmem:[%s5385] ss:$2 sm:$0xff]
  %s5387 = scalar_lea.vmem [#allocation2], 784
  %v5388 = vld [vmem:[%s5387] ss:$2 sm:$0xff]
  %s5389 = scalar_lea.vmem [#allocation2], 800
  %v5390 = vld [vmem:[%s5389] ss:$2 sm:$0xff]
  %s5391 = scalar_lea.vmem [#allocation2], 816
  %v5392 = vld [vmem:[%s5391] ss:$2 sm:$0xff]
  %s5393 = scalar_lea.vmem [#allocation2], 832
  %v5394 = vld [vmem:[%s5393] ss:$2 sm:$0xff]
  %s5395 = scalar_lea.vmem [#allocation2], 848
  %v5396 = vld [vmem:[%s5395] ss:$2 sm:$0xff]
  %s5397 = scalar_lea.vmem [#allocation2], 864
  %v5398 = vld [vmem:[%s5397] ss:$2 sm:$0xff]
  %s5399 = scalar_lea.vmem [#allocation2], 880
  %v5400 = vld [vmem:[%s5399] ss:$2 sm:$0xff]
  %s5401 = scalar_lea.vmem [#allocation2], 896
  %v5402 = vld [vmem:[%s5401] ss:$2 sm:$0xff]
  %s5403 = scalar_lea.vmem [#allocation2], 912
  %v5404 = vld [vmem:[%s5403] ss:$2 sm:$0xff]
  %s5405 = scalar_lea.vmem [#allocation2], 928
  %v5406 = vld [vmem:[%s5405] ss:$2 sm:$0xff]
  %s5407 = scalar_lea.vmem [#allocation2], 944
  %v5408 = vld [vmem:[%s5407] ss:$2 sm:$0xff]
  %s5409 = scalar_lea.vmem [#allocation2], 960
  %v5410 = vld [vmem:[%s5409] ss:$2 sm:$0xff]
  %s5411 = scalar_lea.vmem [#allocation2], 976
  %v5412 = vld [vmem:[%s5411] ss:$2 sm:$0xff]
  %s5413 = scalar_lea.vmem [#allocation2], 992
  %v5414 = vld [vmem:[%s5413] ss:$2 sm:$0xff]
  %s5415 = scalar_lea.vmem [#allocation2], 1008
  %v5416 = vld [vmem:[%s5415] ss:$2 sm:$0xff]
  %s5417 = scalar_lea.vmem [#allocation2], 1
  %v5418 = vld [vmem:[%s5417] ss:$2 sm:$0xff]
  %s5419 = scalar_lea.vmem [#allocation2], 17
  %v5420 = vld [vmem:[%s5419] ss:$2 sm:$0xff]
  %s5421 = scalar_lea.vmem [#allocation2], 33
  %v5422 = vld [vmem:[%s5421] ss:$2 sm:$0xff]
  %s5423 = scalar_lea.vmem [#allocation2], 49
  %v5424 = vld [vmem:[%s5423] ss:$2 sm:$0xff]
  %s5425 = scalar_lea.vmem [#allocation2], 65
  %v5426 = vld [vmem:[%s5425] ss:$2 sm:$0xff]
  %s5427 = scalar_lea.vmem [#allocation2], 81
  %v5428 = vld [vmem:[%s5427] ss:$2 sm:$0xff]
  %s5429 = scalar_lea.vmem [#allocation2], 97
  %v5430 = vld [vmem:[%s5429] ss:$2 sm:$0xff]
  %s5431 = scalar_lea.vmem [#allocation2], 113
  %v5432 = vld [vmem:[%s5431] ss:$2 sm:$0xff]
  %s5433 = scalar_lea.vmem [#allocation2], 129
  %v5434 = vld [vmem:[%s5433] ss:$2 sm:$0xff]
  %s5435 = scalar_lea.vmem [#allocation2], 145
  %v5436 = vld [vmem:[%s5435] ss:$2 sm:$0xff]
  %s5437 = scalar_lea.vmem [#allocation2], 161
  %v5438 = vld [vmem:[%s5437] ss:$2 sm:$0xff]
  %s5439 = scalar_lea.vmem [#allocation2], 177
  %v5440 = vld [vmem:[%s5439] ss:$2 sm:$0xff]
  %s5441 = scalar_lea.vmem [#allocation2], 193
  %v5442 = vld [vmem:[%s5441] ss:$2 sm:$0xff]
  %s5443 = scalar_lea.vmem [#allocation2], 209
  %v5444 = vld [vmem:[%s5443] ss:$2 sm:$0xff]
  %s5445 = scalar_lea.vmem [#allocation2], 225
  %v5446 = vld [vmem:[%s5445] ss:$2 sm:$0xff]
  %s5447 = scalar_lea.vmem [#allocation2], 241
  %v5448 = vld [vmem:[%s5447] ss:$2 sm:$0xff]
  %s5449 = scalar_lea.vmem [#allocation2], 257
  %v5450 = vld [vmem:[%s5449] ss:$2 sm:$0xff]
  %s5451 = scalar_lea.vmem [#allocation2], 273
  %v5452 = vld [vmem:[%s5451] ss:$2 sm:$0xff]
  %s5453 = scalar_lea.vmem [#allocation2], 289
  %v5454 = vld [vmem:[%s5453] ss:$2 sm:$0xff]
  %s5455 = scalar_lea.vmem [#allocation2], 305
  %v5456 = vld [vmem:[%s5455] ss:$2 sm:$0xff]
  %s5457 = scalar_lea.vmem [#allocation2], 321
  %v5458 = vld [vmem:[%s5457] ss:$2 sm:$0xff]
  %s5459 = scalar_lea.vmem [#allocation2], 337
  %v5460 = vld [vmem:[%s5459] ss:$2 sm:$0xff]
  %s5461 = scalar_lea.vmem [#allocation2], 353
  %v5462 = vld [vmem:[%s5461] ss:$2 sm:$0xff]
  %s5463 = scalar_lea.vmem [#allocation2], 369
  %v5464 = vld [vmem:[%s5463] ss:$2 sm:$0xff]
  %s5465 = scalar_lea.vmem [#allocation2], 385
  %v5466 = vld [vmem:[%s5465] ss:$2 sm:$0xff]
  %s5467 = scalar_lea.vmem [#allocation2], 401
  %v5468 = vld [vmem:[%s5467] ss:$2 sm:$0xff]
  %s5469 = scalar_lea.vmem [#allocation2], 417
  %v5470 = vld [vmem:[%s5469] ss:$2 sm:$0xff]
  %s5471 = scalar_lea.vmem [#allocation2], 433
  %v5472 = vld [vmem:[%s5471] ss:$2 sm:$0xff]
  %s5473 = scalar_lea.vmem [#allocation2], 449
  %v5474 = vld [vmem:[%s5473] ss:$2 sm:$0xff]
  %s5475 = scalar_lea.vmem [#allocation2], 465
  %v5476 = vld [vmem:[%s5475] ss:$2 sm:$0xff]
  %s5477 = scalar_lea.vmem [#allocation2], 481
  %v5478 = vld [vmem:[%s5477] ss:$2 sm:$0xff]
  %s5479 = scalar_lea.vmem [#allocation2], 497
  %v5480 = vld [vmem:[%s5479] ss:$2 sm:$0xff]
  %s5481 = scalar_lea.vmem [#allocation2], 513
  %v5482 = vld [vmem:[%s5481] ss:$2 sm:$0xff]
  %s5483 = scalar_lea.vmem [#allocation2], 529
  %v5484 = vld [vmem:[%s5483] ss:$2 sm:$0xff]
  %s5485 = scalar_lea.vmem [#allocation2], 545
  %v5486 = vld [vmem:[%s5485] ss:$2 sm:$0xff]
  %s5487 = scalar_lea.vmem [#allocation2], 561
  %v5488 = vld [vmem:[%s5487] ss:$2 sm:$0xff]
  %s5489 = scalar_lea.vmem [#allocation2], 577
  %v5490 = vld [vmem:[%s5489] ss:$2 sm:$0xff]
  %s5491 = scalar_lea.vmem [#allocation2], 593
  %v5492 = vld [vmem:[%s5491] ss:$2 sm:$0xff]
  %s5493 = scalar_lea.vmem [#allocation2], 609
  %v5494 = vld [vmem:[%s5493] ss:$2 sm:$0xff]
  %s5495 = scalar_lea.vmem [#allocation2], 625
  %v5496 = vld [vmem:[%s5495] ss:$2 sm:$0xff]
  %s5497 = scalar_lea.vmem [#allocation2], 641
  %v5498 = vld [vmem:[%s5497] ss:$2 sm:$0xff]
  %s5499 = scalar_lea.vmem [#allocation2], 657
  %v5500 = vld [vmem:[%s5499] ss:$2 sm:$0xff]
  %s5501 = scalar_lea.vmem [#allocation2], 673
  %v5502 = vld [vmem:[%s5501] ss:$2 sm:$0xff]
  %s5503 = scalar_lea.vmem [#allocation2], 689
  %v5504 = vld [vmem:[%s5503] ss:$2 sm:$0xff]
  %s5505 = scalar_lea.vmem [#allocation2], 705
  %v5506 = vld [vmem:[%s5505] ss:$2 sm:$0xff]
  %s5507 = scalar_lea.vmem [#allocation2], 721
  %v5508 = vld [vmem:[%s5507] ss:$2 sm:$0xff]
  %s5509 = scalar_lea.vmem [#allocation2], 737
  %v5510 = vld [vmem:[%s5509] ss:$2 sm:$0xff]
  %s5511 = scalar_lea.vmem [#allocation2], 753
  %v5512 = vld [vmem:[%s5511] ss:$2 sm:$0xff]
  %s5513 = scalar_lea.vmem [#allocation2], 769
  %v5514 = vld [vmem:[%s5513] ss:$2 sm:$0xff]
  %s5515 = scalar_lea.vmem [#allocation2], 785
  %v5516 = vld [vmem:[%s5515] ss:$2 sm:$0xff]
  %s5517 = scalar_lea.vmem [#allocation2], 801
  %v5518 = vld [vmem:[%s5517] ss:$2 sm:$0xff]
  %s5519 = scalar_lea.vmem [#allocation2], 817
  %v5520 = vld [vmem:[%s5519] ss:$2 sm:$0xff]
  %s5521 = scalar_lea.vmem [#allocation2], 833
  %v5522 = vld [vmem:[%s5521] ss:$2 sm:$0xff]
  %s5523 = scalar_lea.vmem [#allocation2], 849
  %v5524 = vld [vmem:[%s5523] ss:$2 sm:$0xff]
  %s5525 = scalar_lea.vmem [#allocation2], 865
  %v5526 = vld [vmem:[%s5525] ss:$2 sm:$0xff]
  %s5527 = scalar_lea.vmem [#allocation2], 881
  %v5528 = vld [vmem:[%s5527] ss:$2 sm:$0xff]
  %s5529 = scalar_lea.vmem [#allocation2], 897
  %v5530 = vld [vmem:[%s5529] ss:$2 sm:$0xff]
  %s5531 = scalar_lea.vmem [#allocation2], 913
  %v5532 = vld [vmem:[%s5531] ss:$2 sm:$0xff]
  %s5533 = scalar_lea.vmem [#allocation2], 929
  %v5534 = vld [vmem:[%s5533] ss:$2 sm:$0xff]
  %s5535 = scalar_lea.vmem [#allocation2], 945
  %v5536 = vld [vmem:[%s5535] ss:$2 sm:$0xff]
  %s5537 = scalar_lea.vmem [#allocation2], 961
  %v5538 = vld [vmem:[%s5537] ss:$2 sm:$0xff]
  %s5539 = scalar_lea.vmem [#allocation2], 977
  %v5540 = vld [vmem:[%s5539] ss:$2 sm:$0xff]
  %s5541 = scalar_lea.vmem [#allocation2], 993
  %v5542 = vld [vmem:[%s5541] ss:$2 sm:$0xff]
  %s5543 = scalar_lea.vmem [#allocation2], 1009
  %v5544 = vld [vmem:[%s5543] ss:$2 sm:$0xff]
  %v5545 = vmax.f32 %v5290, %v5418
  %v5546 = vmax.f32 %v5292, %v5420
  %v5547 = vmax.f32 %v5294, %v5422
  %v5548 = vmax.f32 %v5296, %v5424
  %v5549 = vmax.f32 %v5298, %v5426
  %v5550 = vmax.f32 %v5300, %v5428
  %v5551 = vmax.f32 %v5302, %v5430
  %v5552 = vmax.f32 %v5304, %v5432
  %v5553 = vmax.f32 %v5306, %v5434
  %v5554 = vmax.f32 %v5308, %v5436
  %v5555 = vmax.f32 %v5310, %v5438
  %v5556 = vmax.f32 %v5312, %v5440
  %v5557 = vmax.f32 %v5314, %v5442
  %v5558 = vmax.f32 %v5316, %v5444
  %v5559 = vmax.f32 %v5318, %v5446
  %v5560 = vmax.f32 %v5320, %v5448
  %v5561 = vmax.f32 %v5322, %v5450
  %v5562 = vmax.f32 %v5324, %v5452
  %v5563 = vmax.f32 %v5326, %v5454
  %v5564 = vmax.f32 %v5328, %v5456
  %v5565 = vmax.f32 %v5330, %v5458
  %v5566 = vmax.f32 %v5332, %v5460
  %v5567 = vmax.f32 %v5334, %v5462
  %v5568 = vmax.f32 %v5336, %v5464
  %v5569 = vmax.f32 %v5338, %v5466
  %v5570 = vmax.f32 %v5340, %v5468
  %v5571 = vmax.f32 %v5342, %v5470
  %v5572 = vmax.f32 %v5344, %v5472
  %v5573 = vmax.f32 %v5346, %v5474
  %v5574 = vmax.f32 %v5348, %v5476
  %v5575 = vmax.f32 %v5350, %v5478
  %v5576 = vmax.f32 %v5352, %v5480
  %v5577 = vmax.f32 %v5354, %v5482
  %v5578 = vmax.f32 %v5356, %v5484
  %v5579 = vmax.f32 %v5358, %v5486
  %v5580 = vmax.f32 %v5360, %v5488
  %v5581 = vmax.f32 %v5362, %v5490
  %v5582 = vmax.f32 %v5364, %v5492
  %v5583 = vmax.f32 %v5366, %v5494
  %v5584 = vmax.f32 %v5368, %v5496
  %v5585 = vmax.f32 %v5370, %v5498
  %v5586 = vmax.f32 %v5372, %v5500
  %v5587 = vmax.f32 %v5374, %v5502
  %v5588 = vmax.f32 %v5376, %v5504
  %v5589 = vmax.f32 %v5378, %v5506
  %v5590 = vmax.f32 %v5380, %v5508
  %v5591 = vmax.f32 %v5382, %v5510
  %v5592 = vmax.f32 %v5384, %v5512
  %v5593 = vmax.f32 %v5386, %v5514
  %v5594 = vmax.f32 %v5388, %v5516
  %v5595 = vmax.f32 %v5390, %v5518
  %v5596 = vmax.f32 %v5392, %v5520
  %v5597 = vmax.f32 %v5394, %v5522
  %v5598 = vmax.f32 %v5396, %v5524
  %v5599 = vmax.f32 %v5398, %v5526
  %v5600 = vmax.f32 %v5400, %v5528
  %v5601 = vmax.f32 %v5402, %v5530
  %v5602 = vmax.f32 %v5404, %v5532
  %v5603 = vmax.f32 %v5406, %v5534
  %v5604 = vmax.f32 %v5408, %v5536
  %v5605 = vmax.f32 %v5410, %v5538
  %v5606 = vmax.f32 %v5412, %v5540
  %v5607 = vmax.f32 %v5414, %v5542
  %v5608 = vmax.f32 %v5416, %v5544
  %v5609 = vpack.c.bf16 %v5546, %v5545
  %v5610 = vpack.c.bf16 %v5548, %v5547
  %v5611 = vpack.c.bf16 %v5550, %v5549
  %v5612 = vpack.c.bf16 %v5552, %v5551
  %v5613 = vpack.c.bf16 %v5554, %v5553
  %v5614 = vpack.c.bf16 %v5556, %v5555
  %v5615 = vpack.c.bf16 %v5558, %v5557
  %v5616 = vpack.c.bf16 %v5560, %v5559
  %v5617 = vpack.c.bf16 %v5562, %v5561
  %v5618 = vpack.c.bf16 %v5564, %v5563
  %v5619 = vpack.c.bf16 %v5566, %v5565
  %v5620 = vpack.c.bf16 %v5568, %v5567
  %v5621 = vpack.c.bf16 %v5570, %v5569
  %v5622 = vpack.c.bf16 %v5572, %v5571
  %v5623 = vpack.c.bf16 %v5574, %v5573
  %v5624 = vpack.c.bf16 %v5576, %v5575
  %v5625 = vpack.c.bf16 %v5578, %v5577
  %v5626 = vpack.c.bf16 %v5580, %v5579
  %v5627 = vpack.c.bf16 %v5582, %v5581
  %v5628 = vpack.c.bf16 %v5584, %v5583
  %v5629 = vpack.c.bf16 %v5586, %v5585
  %v5630 = vpack.c.bf16 %v5588, %v5587
  %v5631 = vpack.c.bf16 %v5590, %v5589
  %v5632 = vpack.c.bf16 %v5592, %v5591
  %v5633 = vpack.c.bf16 %v5594, %v5593
  %v5634 = vpack.c.bf16 %v5596, %v5595
  %v5635 = vpack.c.bf16 %v5598, %v5597
  %v5636 = vpack.c.bf16 %v5600, %v5599
  %v5637 = vpack.c.bf16 %v5602, %v5601
  %v5638 = vpack.c.bf16 %v5604, %v5603
  %v5639 = vpack.c.bf16 %v5606, %v5605
  %v5640 = vpack.c.bf16 %v5608, %v5607
  %v5641 = vld [vmem:[%s4] sm:$0xf]
  %v5642 = vld [vmem:[%s4 + $0x4] sm:$0xf]
  %v5643 = vld [vmem:[%s4 + $0x8] sm:$0xf]
  %v5644 = vld [vmem:[%s4 + $0xc] sm:$0xf]
  %v5645 = vld [vmem:[%s4 + $0x10] sm:$0xf]
  %v5646 = vld [vmem:[%s4 + $0x14] sm:$0xf]
  %v5647 = vld [vmem:[%s4 + $0x18] sm:$0xf]
  %s5648 = scalar_lea.vmem %s4, 28
  %v5649 = vld [vmem:[%s5648] sm:$0xf]
  %v5650 = vld [vmem:[%s5648 + $0x4] sm:$0xf]
  %v5651 = vld [vmem:[%s5648 + $0x8] sm:$0xf]
  %v5652 = vld [vmem:[%s5648 + $0xc] sm:$0xf]
  %v5653 = vld [vmem:[%s5648 + $0x10] sm:$0xf]
  %v5654 = vld [vmem:[%s5648 + $0x14] sm:$0xf]
  %v5655 = vld [vmem:[%s5648 + $0x18] sm:$0xf]
  %v5657 = vshrl.u32 %v5609, 16
  %v5659 = vshll.u32 %v5609, 16
  %v5661 = vrot.slane %v5659, 1
  %v5662 = vor.u32 %v5657, %v5661
  %v5664 = vshll.u32 %v5610, 16
  %v5666 = vrot.slane %v5664, 1
  %v5667 = vsel %vm248, %v5662, %v5666
  %v5668 = vshrl.u32 %v5610, 16
  %v5670 = vor.u32 %v5668, %v5666
  %v5672 = vshll.u32 %v5611, 16
  %v5674 = vrot.slane %v5672, 1
  %v5675 = vsel %vm248, %v5670, %v5674
  %v5676 = vshrl.u32 %v5611, 16
  %v5678 = vor.u32 %v5676, %v5674
  %v5680 = vshll.u32 %v5612, 16
  %v5682 = vrot.slane %v5680, 1
  %v5683 = vsel %vm248, %v5678, %v5682
  %v5684 = vshrl.u32 %v5612, 16
  %v5686 = vor.u32 %v5684, %v5682
  %v5688 = vshll.u32 %v5613, 16
  %v5690 = vrot.slane %v5688, 1
  %v5691 = vsel %vm248, %v5686, %v5690
  %v5692 = vshrl.u32 %v5613, 16
  %v5694 = vor.u32 %v5692, %v5690
  %v5696 = vshll.u32 %v5614, 16
  %v5698 = vrot.slane %v5696, 1
  %v5699 = vsel %vm248, %v5694, %v5698
  %v5700 = vshrl.u32 %v5614, 16
  %v5702 = vor.u32 %v5700, %v5698
  %v5704 = vshll.u32 %v5615, 16
  %v5706 = vrot.slane %v5704, 1
  %v5707 = vsel %vm248, %v5702, %v5706
  %v5708 = vshrl.u32 %v5615, 16
  %v5710 = vor.u32 %v5708, %v5706
  %v5712 = vshll.u32 %v5616, 16
  %v5714 = vrot.slane %v5712, 1
  %v5715 = vsel %vm248, %v5710, %v5714
  %v5716 = vshrl.u32 %v5616, 16
  %v5718 = vor.u32 %v5716, %v5714
  %v5720 = vshll.u32 %v5617, 16
  %v5722 = vrot.slane %v5720, 1
  %v5723 = vsel %vm248, %v5718, %v5722
  %v5724 = vshrl.u32 %v5617, 16
  %v5726 = vor.u32 %v5724, %v5722
  %v5728 = vshll.u32 %v5618, 16
  %v5730 = vrot.slane %v5728, 1
  %v5731 = vsel %vm248, %v5726, %v5730
  %v5732 = vshrl.u32 %v5618, 16
  %v5734 = vor.u32 %v5732, %v5730
  %v5736 = vshll.u32 %v5619, 16
  %v5738 = vrot.slane %v5736, 1
  %v5739 = vsel %vm248, %v5734, %v5738
  %v5740 = vshrl.u32 %v5619, 16
  %v5742 = vor.u32 %v5740, %v5738
  %v5744 = vshll.u32 %v5620, 16
  %v5746 = vrot.slane %v5744, 1
  %v5747 = vsel %vm248, %v5742, %v5746
  %v5748 = vshrl.u32 %v5620, 16
  %v5750 = vor.u32 %v5748, %v5746
  %v5752 = vshll.u32 %v5621, 16
  %v5754 = vrot.slane %v5752, 1
  %v5755 = vsel %vm248, %v5750, %v5754
  %v5756 = vshrl.u32 %v5621, 16
  %v5758 = vor.u32 %v5756, %v5754
  %v5760 = vshll.u32 %v5622, 16
  %v5762 = vrot.slane %v5760, 1
  %v5763 = vsel %vm248, %v5758, %v5762
  %v5764 = vshrl.u32 %v5622, 16
  %v5766 = vor.u32 %v5764, %v5762
  %v5768 = vshll.u32 %v5623, 16
  %v5770 = vrot.slane %v5768, 1
  %v5771 = vsel %vm248, %v5766, %v5770
  %v5772 = vshrl.u32 %v5623, 16
  %v5774 = vor.u32 %v5772, %v5770
  %v5776 = vshll.u32 %v5624, 16
  %v5778 = vrot.slane %v5776, 1
  %v5779 = vsel %vm248, %v5774, %v5778
  %v5780 = vshrl.u32 %v5624, 16
  %v5782 = vor.u32 %v5780, %v5778
  %v5784 = vshll.u32 %v5625, 16
  %v5786 = vrot.slane %v5784, 1
  %v5787 = vsel %vm248, %v5782, %v5786
  %v5788 = vshrl.u32 %v5625, 16
  %v5790 = vor.u32 %v5788, %v5786
  %v5792 = vshll.u32 %v5626, 16
  %v5794 = vrot.slane %v5792, 1
  %v5795 = vsel %vm248, %v5790, %v5794
  %v5796 = vshrl.u32 %v5626, 16
  %v5798 = vor.u32 %v5796, %v5794
  %v5800 = vshll.u32 %v5627, 16
  %v5802 = vrot.slane %v5800, 1
  %v5803 = vsel %vm248, %v5798, %v5802
  %v5804 = vshrl.u32 %v5627, 16
  %v5806 = vor.u32 %v5804, %v5802
  %v5808 = vshll.u32 %v5628, 16
  %v5810 = vrot.slane %v5808, 1
  %v5811 = vsel %vm248, %v5806, %v5810
  %v5812 = vshrl.u32 %v5628, 16
  %v5814 = vor.u32 %v5812, %v5810
  %v5816 = vshll.u32 %v5629, 16
  %v5818 = vrot.slane %v5816, 1
  %v5819 = vsel %vm248, %v5814, %v5818
  %v5820 = vshrl.u32 %v5629, 16
  %v5822 = vor.u32 %v5820, %v5818
  %v5824 = vshll.u32 %v5630, 16
  %v5826 = vrot.slane %v5824, 1
  %v5827 = vsel %vm248, %v5822, %v5826
  %v5828 = vshrl.u32 %v5630, 16
  %v5830 = vor.u32 %v5828, %v5826
  %v5832 = vshll.u32 %v5631, 16
  %v5834 = vrot.slane %v5832, 1
  %v5835 = vsel %vm248, %v5830, %v5834
  %v5836 = vshrl.u32 %v5631, 16
  %v5838 = vor.u32 %v5836, %v5834
  %v5840 = vshll.u32 %v5632, 16
  %v5842 = vrot.slane %v5840, 1
  %v5843 = vsel %vm248, %v5838, %v5842
  %v5844 = vshrl.u32 %v5632, 16
  %v5846 = vor.u32 %v5844, %v5842
  %v5848 = vshll.u32 %v5633, 16
  %v5850 = vrot.slane %v5848, 1
  %v5851 = vsel %vm248, %v5846, %v5850
  %v5852 = vshrl.u32 %v5633, 16
  %v5854 = vor.u32 %v5852, %v5850
  %v5856 = vshll.u32 %v5634, 16
  %v5858 = vrot.slane %v5856, 1
  %v5859 = vsel %vm248, %v5854, %v5858
  %v5860 = vshrl.u32 %v5634, 16
  %v5862 = vor.u32 %v5860, %v5858
  %v5864 = vshll.u32 %v5635, 16
  %v5866 = vrot.slane %v5864, 1
  %v5867 = vsel %vm248, %v5862, %v5866
  %v5868 = vshrl.u32 %v5635, 16
  %v5870 = vor.u32 %v5868, %v5866
  %v5872 = vshll.u32 %v5636, 16
  %v5874 = vrot.slane %v5872, 1
  %v5875 = vsel %vm248, %v5870, %v5874
  %v5876 = vshrl.u32 %v5636, 16
  %v5878 = vor.u32 %v5876, %v5874
  %v5880 = vshll.u32 %v5637, 16
  %v5882 = vrot.slane %v5880, 1
  %v5883 = vsel %vm248, %v5878, %v5882
  %v5884 = vshrl.u32 %v5637, 16
  %v5886 = vor.u32 %v5884, %v5882
  %v5888 = vshll.u32 %v5638, 16
  %v5890 = vrot.slane %v5888, 1
  %v5891 = vsel %vm248, %v5886, %v5890
  %v5892 = vshrl.u32 %v5638, 16
  %v5894 = vor.u32 %v5892, %v5890
  %v5896 = vshll.u32 %v5639, 16
  %v5898 = vrot.slane %v5896, 1
  %v5899 = vsel %vm248, %v5894, %v5898
  %v5900 = vshrl.u32 %v5639, 16
  %v5902 = vor.u32 %v5900, %v5898
  %v5904 = vshll.u32 %v5640, 16
  %v5906 = vrot.slane %v5904, 1
  %v5907 = vsel %vm248, %v5902, %v5906
  %v5908 = vshrl.u32 %v5640, 16
  %v5910 = vor.u32 %v5908, %v5906
  %v5918 = vunpack.c.l.b16 %v5649
  %v5919 = vunpack.c.l.b16 %v5650
  %v5920 = vunpack.c.l.b16 %v5651
  %v5921 = vunpack.c.l.b16 %v5652
  %v5922 = vunpack.c.l.b16 %v5653
  %v5923 = vunpack.c.l.b16 %v5654
  %v5924 = vunpack.c.l.b16 %v5655
  %v5925 = vpack.c.b16 %v5919, %v5918
  %v5926 = vpack.c.b16 %v5921, %v5920
  %v5927 = vpack.c.b16 %v5923, %v5922
  %v5928 = vpack.c.b16 %v5924, %v5924
  %v5933 = vsel %vm5160, %v5667, 0
  %v5936 = vsel %vm5160, %v5675, 0
  %v5939 = vsel %vm5160, %v5683, 0
  %v5942 = vsel %vm5160, %v5691, 0
  %v5945 = vsel %vm5160, %v5699, 0
  %v5948 = vsel %vm5160, %v5707, 0
  %v5951 = vsel %vm5160, %v5715, 0
  %v5954 = vsel %vm5160, %v5723, 0
  %v5957 = vsel %vm5160, %v5731, 0
  %v5960 = vsel %vm5160, %v5739, 0
  %v5963 = vsel %vm5160, %v5747, 0
  %v5966 = vsel %vm5160, %v5755, 0
  %v5969 = vsel %vm5160, %v5763, 0
  %v5972 = vsel %vm5160, %v5771, 0
  %v5975 = vsel %vm5160, %v5779, 0
  %v5978 = vsel %vm5160, %v5787, 0
  %v5981 = vsel %vm5160, %v5795, 0
  %v5984 = vsel %vm5160, %v5803, 0
  %v5987 = vsel %vm5160, %v5811, 0
  %v5990 = vsel %vm5160, %v5819, 0
  %v5993 = vsel %vm5160, %v5827, 0
  %v5996 = vsel %vm5160, %v5835, 0
  %v5999 = vsel %vm5160, %v5843, 0
  %v6002 = vsel %vm5160, %v5851, 0
  %v6005 = vsel %vm5160, %v5859, 0
  %v6008 = vsel %vm5160, %v5867, 0
  %v6011 = vsel %vm5160, %v5875, 0
  %v6014 = vsel %vm5160, %v5883, 0
  %v6017 = vsel %vm5160, %v5891, 0
  %v6020 = vsel %vm5160, %v5899, 0
  %v6023 = vsel %vm5160, %v5907, 0
  %v6026 = vsel %vm5160, %v5910, 0
  %vm6028 = vcmask 1043456
  %v6030 = vsel %vm6028, %v5928, 0
  %6032 = vmatprep.subr.bf16.mxu0 0
  %6033 = vmatpush1.bf16.msra.mxu0 %v5925
  %6034 = vmatprep.subr.bf16.mxu0 0
  %6035 = vmatpush1.bf16.msra.mxu0 %v5926
  %6036 = vmatprep.subr.bf16.mxu0 0
  %6037 = vmatpush1.bf16.msra.mxu0 %v5927
  %6038 = vmatprep.subr.bf16.mxu0 0
  %6039 = vmatpush1.bf16.msra.mxu0 %v6030
  %6040 = vmatprep.subr.bf16.mxu0 0
  %6041 = vmatpush1.bf16.msra.mxu0 0
  %6042 = vmatprep.subr.bf16.mxu0 0
  %6043 = vmatpush1.bf16.msra.mxu0 0
  %6044 = vmatprep.subr.bf16.mxu0 0
  %6045 = vmatpush1.bf16.msra.mxu0 0
  %6046 = vmatprep.subr.bf16.mxu0 0
  %6047 = vmatpush1.bf16.msra.mxu0 0
  %6048 = vmatprep.subr.bf16.mxu0 0
  %6049 = vmatpush1.bf16.msra.mxu0 0
  %6050 = vmatprep.subr.bf16.mxu0 0
  %6051 = vmatpush1.bf16.msra.mxu0 0
  %6052 = vmatprep.subr.bf16.mxu0 0
  %6053 = vmatpush1.bf16.msra.mxu0 0
  %6054 = vmatprep.subr.bf16.mxu0 0
  %6055 = vmatpush1.bf16.msra.mxu0 0
  %6056 = vmatprep.subr.bf16.mxu0 0
  %6057 = vmatpush1.bf16.msra.mxu0 0
  %6058 = vmatprep.subr.bf16.mxu0 0
  %6059 = vmatpush1.bf16.msra.mxu0 0
  %6060 = vmatprep.subr.bf16.mxu0 0
  %6061 = vmatpush1.bf16.msra.mxu0 0
  %6062 = vmatprep.subr.bf16.mxu0 0
  %6063 = vmatpush1.bf16.msra.mxu0 0
  %6064 = vmatprep.mubr.bf16.mxu0 0
  %6065 = vmatmul.mubr.bf16.gmra.mrb[0].mxu0 %v5933
  %v6066 = vpop.f32.mrb[0].mxu0
  %v6067 = vadd.f32 0.0, %v6066
  %v6068 = vpop.f32.mrb[0].mxu0
  %v6069 = vpop.f32.mrb[0].mxu0
  %v6070 = vadd.f32 0.0, %v6069
  %v6071 = vpop.f32.mrb[0].mxu0
  %6072 = vmatprep.mubr.bf16.mxu0 0
  %6073 = vmatmul.mubr.bf16.gmra.mrb[0].mxu0 %v5936
  %v6074 = vpop.f32.mrb[0].mxu0
  %v6075 = vadd.f32 0.0, %v6074
  %v6076 = vpop.f32.mrb[0].mxu0
  %v6077 = vpop.f32.mrb[0].mxu0
  %v6078 = vadd.f32 0.0, %v6077
  %v6079 = vpop.f32.mrb[0].mxu0
  %6080 = vmatprep.mubr.bf16.mxu0 0
  %6081 = vmatmul.mubr.bf16.gmra.mrb[0].mxu0 %v5939
  %v6082 = vpop.f32.mrb[0].mxu0
  %v6083 = vadd.f32 0.0, %v6082
  %v6084 = vpop.f32.mrb[0].mxu0
  %v6085 = vpop.f32.mrb[0].mxu0
  %v6086 = vadd.f32 0.0, %v6085
  %v6087 = vpop.f32.mrb[0].mxu0
  %6088 = vmatprep.mubr.bf16.mxu0 0
  %6089 = vmatmul.mubr.bf16.gmra.mrb[0].mxu0 %v5942
  %v6090 = vpop.f32.mrb[0].mxu0
  %v6091 = vadd.f32 0.0, %v6090
  %v6092 = vpop.f32.mrb[0].mxu0
  %v6093 = vpop.f32.mrb[0].mxu0
  %v6094 = vadd.f32 0.0, %v6093
  %v6095 = vpop.f32.mrb[0].mxu0
  %6096 = vmatprep.mubr.bf16.mxu0 0
  %6097 = vmatmul.mubr.bf16.gmra.mrb[0].mxu0 %v5945
  %v6098 = vpop.f32.mrb[0].mxu0
  %v6099 = vadd.f32 0.0, %v6098
  %v6100 = vpop.f32.mrb[0].mxu0
  %v6101 = vpop.f32.mrb[0].mxu0
  %v6102 = vadd.f32 0.0, %v6101
  %v6103 = vpop.f32.mrb[0].mxu0
  %6104 = vmatprep.mubr.bf16.mxu0 0
  %6105 = vmatmul.mubr.bf16.gmra.mrb[0].mxu0 %v5948
  %v6106 = vpop.f32.mrb[0].mxu0
  %v6107 = vadd.f32 0.0, %v6106
  %v6108 = vpop.f32.mrb[0].mxu0
  %v6109 = vpop.f32.mrb[0].mxu0
  %v6110 = vadd.f32 0.0, %v6109
  %v6111 = vpop.f32.mrb[0].mxu0
  %6112 = vmatprep.mubr.bf16.mxu0 0
  %6113 = vmatmul.mubr.bf16.gmra.mrb[0].mxu0 %v5951
  %v6114 = vpop.f32.mrb[0].mxu0
  %v6115 = vadd.f32 0.0, %v6114
  %v6116 = vpop.f32.mrb[0].mxu0
  %v6117 = vpop.f32.mrb[0].mxu0
  %v6118 = vadd.f32 0.0, %v6117
  %v6119 = vpop.f32.mrb[0].mxu0
  %6120 = vmatprep.mubr.bf16.mxu0 0
  %6121 = vmatmul.mubr.bf16.gmra.mrb[0].mxu0 %v5954
  %v6122 = vpop.f32.mrb[0].mxu0
  %v6123 = vadd.f32 0.0, %v6122
  %v6124 = vpop.f32.mrb[0].mxu0
  %v6125 = vpop.f32.mrb[0].mxu0
  %v6126 = vadd.f32 0.0, %v6125
  %v6127 = vpop.f32.mrb[0].mxu0
  %6128 = vmatprep.mubr.bf16.mxu0 0
  %6129 = vmatmul.mubr.bf16.gmra.mrb[0].mxu0 %v5957
  %v6130 = vpop.f32.mrb[0].mxu0
  %v6131 = vadd.f32 0.0, %v6130
  %v6132 = vpop.f32.mrb[0].mxu0
  %v6133 = vpop.f32.mrb[0].mxu0
  %v6134 = vadd.f32 0.0, %v6133
  %v6135 = vpop.f32.mrb[0].mxu0
  %6136 = vmatprep.mubr.bf16.mxu0 0
  %6137 = vmatmul.mubr.bf16.gmra.mrb[0].mxu0 %v5960
  %v6138 = vpop.f32.mrb[0].mxu0
  %v6139 = vadd.f32 0.0, %v6138
  %v6140 = vpop.f32.mrb[0].mxu0
  %v6141 = vpop.f32.mrb[0].mxu0
  %v6142 = vadd.f32 0.0, %v6141
  %v6143 = vpop.f32.mrb[0].mxu0
  %6144 = vmatprep.mubr.bf16.mxu0 0
  %6145 = vmatmul.mubr.bf16.gmra.mrb[0].mxu0 %v5963
  %v6146 = vpop.f32.mrb[0].mxu0
  %v6147 = vadd.f32 0.0, %v6146
  %v6148 = vpop.f32.mrb[0].mxu0
  %v6149 = vpop.f32.mrb[0].mxu0
  %v6150 = vadd.f32 0.0, %v6149
  %v6151 = vpop.f32.mrb[0].mxu0
  %6152 = vmatprep.mubr.bf16.mxu0 0
  %6153 = vmatmul.mubr.bf16.gmra.mrb[0].mxu0 %v5966
  %v6154 = vpop.f32.mrb[0].mxu0
  %v6155 = vadd.f32 0.0, %v6154
  %v6156 = vpop.f32.mrb[0].mxu0
  %v6157 = vpop.f32.mrb[0].mxu0
  %v6158 = vadd.f32 0.0, %v6157
  %v6159 = vpop.f32.mrb[0].mxu0
  %6160 = vmatprep.mubr.bf16.mxu0 0
  %6161 = vmatmul.mubr.bf16.gmra.mrb[0].mxu0 %v5969
  %v6162 = vpop.f32.mrb[0].mxu0
  %v6163 = vadd.f32 0.0, %v6162
  %v6164 = vpop.f32.mrb[0].mxu0
  %v6165 = vpop.f32.mrb[0].mxu0
  %v6166 = vadd.f32 0.0, %v6165
  %v6167 = vpop.f32.mrb[0].mxu0
  %6168 = vmatprep.mubr.bf16.mxu0 0
  %6169 = vmatmul.mubr.bf16.gmra.mrb[0].mxu0 %v5972
  %v6170 = vpop.f32.mrb[0].mxu0
  %v6171 = vadd.f32 0.0, %v6170
  %v6172 = vpop.f32.mrb[0].mxu0
  %v6173 = vpop.f32.mrb[0].mxu0
  %v6174 = vadd.f32 0.0, %v6173
  %v6175 = vpop.f32.mrb[0].mxu0
  %6176 = vmatprep.mubr.bf16.mxu0 0
  %6177 = vmatmul.mubr.bf16.gmra.mrb[0].mxu0 %v5975
  %v6178 = vpop.f32.mrb[0].mxu0
  %v6179 = vadd.f32 0.0, %v6178
  %v6180 = vpop.f32.mrb[0].mxu0
  %v6181 = vpop.f32.mrb[0].mxu0
  %v6182 = vadd.f32 0.0, %v6181
  %v6183 = vpop.f32.mrb[0].mxu0
  %6184 = vmatprep.mubr.bf16.mxu0 0
  %6185 = vmatmul.mubr.bf16.gmra.mrb[0].mxu0 %v5978
  %v6186 = vpop.f32.mrb[0].mxu0
  %v6187 = vadd.f32 0.0, %v6186
  %v6188 = vpop.f32.mrb[0].mxu0
  %v6189 = vpop.f32.mrb[0].mxu0
  %v6190 = vadd.f32 0.0, %v6189
  %v6191 = vpop.f32.mrb[0].mxu0
  %6192 = vmatprep.mubr.bf16.mxu0 0
  %6193 = vmatmul.mubr.bf16.gmra.mrb[0].mxu0 %v5981
  %v6194 = vpop.f32.mrb[0].mxu0
  %v6195 = vadd.f32 0.0, %v6194
  %v6196 = vpop.f32.mrb[0].mxu0
  %v6197 = vpop.f32.mrb[0].mxu0
  %v6198 = vadd.f32 0.0, %v6197
  %v6199 = vpop.f32.mrb[0].mxu0
  %6200 = vmatprep.mubr.bf16.mxu0 0
  %6201 = vmatmul.mubr.bf16.gmra.mrb[0].mxu0 %v5984
  %v6202 = vpop.f32.mrb[0].mxu0
  %v6203 = vadd.f32 0.0, %v6202
  %v6204 = vpop.f32.mrb[0].mxu0
  %v6205 = vpop.f32.mrb[0].mxu0
  %v6206 = vadd.f32 0.0, %v6205
  %v6207 = vpop.f32.mrb[0].mxu0
  %6208 = vmatprep.mubr.bf16.mxu0 0
  %6209 = vmatmul.mubr.bf16.gmra.mrb[0].mxu0 %v5987
  %v6210 = vpop.f32.mrb[0].mxu0
  %v6211 = vadd.f32 0.0, %v6210
  %v6212 = vpop.f32.mrb[0].mxu0
  %v6213 = vpop.f32.mrb[0].mxu0
  %v6214 = vadd.f32 0.0, %v6213
  %v6215 = vpop.f32.mrb[0].mxu0
  %6216 = vmatprep.mubr.bf16.mxu0 0
  %6217 = vmatmul.mubr.bf16.gmra.mrb[0].mxu0 %v5990
  %v6218 = vpop.f32.mrb[0].mxu0
  %v6219 = vadd.f32 0.0, %v6218
  %v6220 = vpop.f32.mrb[0].mxu0
  %v6221 = vpop.f32.mrb[0].mxu0
  %v6222 = vadd.f32 0.0, %v6221
  %v6223 = vpop.f32.mrb[0].mxu0
  %6224 = vmatprep.mubr.bf16.mxu0 0
  %6225 = vmatmul.mubr.bf16.gmra.mrb[0].mxu0 %v5993
  %v6226 = vpop.f32.mrb[0].mxu0
  %v6227 = vadd.f32 0.0, %v6226
  %v6228 = vpop.f32.mrb[0].mxu0
  %v6229 = vpop.f32.mrb[0].mxu0
  %v6230 = vadd.f32 0.0, %v6229
  %v6231 = vpop.f32.mrb[0].mxu0
  %6232 = vmatprep.mubr.bf16.mxu0 0
  %6233 = vmatmul.mubr.bf16.gmra.mrb[0].mxu0 %v5996
  %v6234 = vpop.f32.mrb[0].mxu0
  %v6235 = vadd.f32 0.0, %v6234
  %v6236 = vpop.f32.mrb[0].mxu0
  %v6237 = vpop.f32.mrb[0].mxu0
  %v6238 = vadd.f32 0.0, %v6237
  %v6239 = vpop.f32.mrb[0].mxu0
  %6240 = vmatprep.mubr.bf16.mxu0 0
  %6241 = vmatmul.mubr.bf16.gmra.mrb[0].mxu0 %v5999
  %v6242 = vpop.f32.mrb[0].mxu0
  %v6243 = vadd.f32 0.0, %v6242
  %v6244 = vpop.f32.mrb[0].mxu0
  %v6245 = vpop.f32.mrb[0].mxu0
  %v6246 = vadd.f32 0.0, %v6245
  %v6247 = vpop.f32.mrb[0].mxu0
  %6248 = vmatprep.mubr.bf16.mxu0 0
  %6249 = vmatmul.mubr.bf16.gmra.mrb[0].mxu0 %v6002
  %v6250 = vpop.f32.mrb[0].mxu0
  %v6251 = vadd.f32 0.0, %v6250
  %v6252 = vpop.f32.mrb[0].mxu0
  %v6253 = vpop.f32.mrb[0].mxu0
  %v6254 = vadd.f32 0.0, %v6253
  %v6255 = vpop.f32.mrb[0].mxu0
  %6256 = vmatprep.mubr.bf16.mxu0 0
  %6257 = vmatmul.mubr.bf16.gmra.mrb[0].mxu0 %v6005
  %v6258 = vpop.f32.mrb[0].mxu0
  %v6259 = vadd.f32 0.0, %v6258
  %v6260 = vpop.f32.mrb[0].mxu0
  %v6261 = vpop.f32.mrb[0].mxu0
  %v6262 = vadd.f32 0.0, %v6261
  %v6263 = vpop.f32.mrb[0].mxu0
  %6264 = vmatprep.mubr.bf16.mxu0 0
  %6265 = vmatmul.mubr.bf16.gmra.mrb[0].mxu0 %v6008
  %v6266 = vpop.f32.mrb[0].mxu0
  %v6267 = vadd.f32 0.0, %v6266
  %v6268 = vpop.f32.mrb[0].mxu0
  %v6269 = vpop.f32.mrb[0].mxu0
  %v6270 = vadd.f32 0.0, %v6269
  %v6271 = vpop.f32.mrb[0].mxu0
  %6272 = vmatprep.mubr.bf16.mxu0 0
  %6273 = vmatmul.mubr.bf16.gmra.mrb[0].mxu0 %v6011
  %v6274 = vpop.f32.mrb[0].mxu0
  %v6275 = vadd.f32 0.0, %v6274
  %v6276 = vpop.f32.mrb[0].mxu0
  %v6277 = vpop.f32.mrb[0].mxu0
  %v6278 = vadd.f32 0.0, %v6277
  %v6279 = vpop.f32.mrb[0].mxu0
  %6280 = vmatprep.mubr.bf16.mxu0 0
  %6281 = vmatmul.mubr.bf16.gmra.mrb[0].mxu0 %v6014
  %v6282 = vpop.f32.mrb[0].mxu0
  %v6283 = vadd.f32 0.0, %v6282
  %v6284 = vpop.f32.mrb[0].mxu0
  %v6285 = vpop.f32.mrb[0].mxu0
  %v6286 = vadd.f32 0.0, %v6285
  %v6287 = vpop.f32.mrb[0].mxu0
  %6288 = vmatprep.mubr.bf16.mxu0 0
  %6289 = vmatmul.mubr.bf16.gmra.mrb[0].mxu0 %v6017
  %v6290 = vpop.f32.mrb[0].mxu0
  %v6291 = vadd.f32 0.0, %v6290
  %v6292 = vpop.f32.mrb[0].mxu0
  %v6293 = vpop.f32.mrb[0].mxu0
  %v6294 = vadd.f32 0.0, %v6293
  %v6295 = vpop.f32.mrb[0].mxu0
  %6296 = vmatprep.mubr.bf16.mxu0 0
  %6297 = vmatmul.mubr.bf16.gmra.mrb[0].mxu0 %v6020
  %v6298 = vpop.f32.mrb[0].mxu0
  %v6299 = vadd.f32 0.0, %v6298
  %v6300 = vpop.f32.mrb[0].mxu0
  %v6301 = vpop.f32.mrb[0].mxu0
  %v6302 = vadd.f32 0.0, %v6301
  %v6303 = vpop.f32.mrb[0].mxu0
  %6304 = vmatprep.mubr.bf16.mxu0 0
  %6305 = vmatmul.mubr.bf16.gmra.mrb[0].mxu0 %v6023
  %v6306 = vpop.f32.mrb[0].mxu0
  %v6307 = vadd.f32 0.0, %v6306
  %v6308 = vpop.f32.mrb[0].mxu0
  %v6309 = vpop.f32.mrb[0].mxu0
  %v6310 = vadd.f32 0.0, %v6309
  %v6311 = vpop.f32.mrb[0].mxu0
  %6312 = vmatprep.mubr.bf16.mxu0 0
  %6313 = vmatmul.mubr.bf16.gmra.mrb[0].mxu0 %v6026
  %v6314 = vpop.f32.mrb[0].mxu0
  %v6315 = vadd.f32 0.0, %v6314
  %v6316 = vpop.f32.mrb[0].mxu0
  %v6317 = vpop.f32.mrb[0].mxu0
  %v6318 = vadd.f32 0.0, %v6317
  %v6319 = vpop.f32.mrb[0].mxu0
  %6320 = vdwg.mxu0
  %v6328 = vunpack.c.l.b16 %v5641
  %v6329 = vunpack.c.l.b16 %v5642
  %v6330 = vunpack.c.l.b16 %v5643
  %v6331 = vunpack.c.l.b16 %v5644
  %v6332 = vunpack.c.l.b16 %v5645
  %v6333 = vunpack.c.l.b16 %v5646
  %v6334 = vunpack.c.l.b16 %v5647
  %v6335 = vpack.c.b16 %v6329, %v6328
  %v6336 = vpack.c.b16 %v6331, %v6330
  %v6337 = vpack.c.b16 %v6333, %v6332
  %v6338 = vpack.c.b16 %v6334, %v6334
  %v6342 = vsel %vm5160, %v5609, 0
  %v6344 = vsel %vm5160, %v5610, 0
  %v6346 = vsel %vm5160, %v5611, 0
  %v6348 = vsel %vm5160, %v5612, 0
  %v6350 = vsel %vm5160, %v5613, 0
  %v6352 = vsel %vm5160, %v5614, 0
  %v6354 = vsel %vm5160, %v5615, 0
  %v6356 = vsel %vm5160, %v5616, 0
  %v6358 = vsel %vm5160, %v5617, 0
  %v6360 = vsel %vm5160, %v5618, 0
  %v6362 = vsel %vm5160, %v5619, 0
  %v6364 = vsel %vm5160, %v5620, 0
  %v6366 = vsel %vm5160, %v5621, 0
  %v6368 = vsel %vm5160, %v5622, 0
  %v6370 = vsel %vm5160, %v5623, 0
  %v6372 = vsel %vm5160, %v5624, 0
  %v6374 = vsel %vm5160, %v5625, 0
  %v6376 = vsel %vm5160, %v5626, 0
  %v6378 = vsel %vm5160, %v5627, 0
  %v6380 = vsel %vm5160, %v5628, 0
  %v6382 = vsel %vm5160, %v5629, 0
  %v6384 = vsel %vm5160, %v5630, 0
  %v6386 = vsel %vm5160, %v5631, 0
  %v6388 = vsel %vm5160, %v5632, 0
  %v6390 = vsel %vm5160, %v5633, 0
  %v6392 = vsel %vm5160, %v5634, 0
  %v6394 = vsel %vm5160, %v5635, 0
  %v6396 = vsel %vm5160, %v5636, 0
  %v6398 = vsel %vm5160, %v5637, 0
  %v6400 = vsel %vm5160, %v5638, 0
  %v6402 = vsel %vm5160, %v5639, 0
  %v6404 = vsel %vm5160, %v5640, 0
  %v6407 = vsel %vm6028, %v6338, 0
  %6409 = vmatprep.subr.bf16.mxu0 0
  %6410 = vmatpush1.bf16.msra.mxu0 %v6335
  %6411 = vmatprep.subr.bf16.mxu0 0
  %6412 = vmatpush1.bf16.msra.mxu0 %v6336
  %6413 = vmatprep.subr.bf16.mxu0 0
  %6414 = vmatpush1.bf16.msra.mxu0 %v6337
  %6415 = vmatprep.subr.bf16.mxu0 0
  %6416 = vmatpush1.bf16.msra.mxu0 %v6407
  %6417 = vmatprep.subr.bf16.mxu0 0
  %6418 = vmatpush1.bf16.msra.mxu0 0
  %6419 = vmatprep.subr.bf16.mxu0 0
  %6420 = vmatpush1.bf16.msra.mxu0 0
  %6421 = vmatprep.subr.bf16.mxu0 0
  %6422 = vmatpush1.bf16.msra.mxu0 0
  %6423 = vmatprep.subr.bf16.mxu0 0
  %6424 = vmatpush1.bf16.msra.mxu0 0
  %6425 = vmatprep.subr.bf16.mxu0 0
  %6426 = vmatpush1.bf16.msra.mxu0 0
  %6427 = vmatprep.subr.bf16.mxu0 0
  %6428 = vmatpush1.bf16.msra.mxu0 0
  %6429 = vmatprep.subr.bf16.mxu0 0
  %6430 = vmatpush1.bf16.msra.mxu0 0
  %6431 = vmatprep.subr.bf16.mxu0 0
  %6432 = vmatpush1.bf16.msra.mxu0 0
  %6433 = vmatprep.subr.bf16.mxu0 0
  %6434 = vmatpush1.bf16.msra.mxu0 0
  %6435 = vmatprep.subr.bf16.mxu0 0
  %6436 = vmatpush1.bf16.msra.mxu0 0
  %6437 = vmatprep.subr.bf16.mxu0 0
  %6438 = vmatpush1.bf16.msra.mxu0 0
  %6439 = vmatprep.subr.bf16.mxu0 0
  %6440 = vmatpush1.bf16.msra.mxu0 0
  %6441 = vmatprep.mubr.bf16.mxu0 0
  %6442 = vmatmul.mubr.bf16.gmra.mrb[0].mxu0 %v6342
  %v6443 = vpop.f32.mrb[0].mxu0
  %v6444 = vadd.f32 %v6067, %v6443
  %v6445 = vpop.f32.mrb[0].mxu0
  %v6446 = vpop.f32.mrb[0].mxu0
  %v6447 = vadd.f32 %v6070, %v6446
  %v6448 = vpop.f32.mrb[0].mxu0
  %6449 = vmatprep.mubr.bf16.mxu0 0
  %6450 = vmatmul.mubr.bf16.gmra.mrb[0].mxu0 %v6344
  %v6451 = vpop.f32.mrb[0].mxu0
  %v6452 = vadd.f32 %v6075, %v6451
  %v6453 = vpop.f32.mrb[0].mxu0
  %v6454 = vpop.f32.mrb[0].mxu0
  %v6455 = vadd.f32 %v6078, %v6454
  %v6456 = vpop.f32.mrb[0].mxu0
  %6457 = vmatprep.mubr.bf16.mxu0 0
  %6458 = vmatmul.mubr.bf16.gmra.mrb[0].mxu0 %v6346
  %v6459 = vpop.f32.mrb[0].mxu0
  %v6460 = vadd.f32 %v6083, %v6459
  %v6461 = vpop.f32.mrb[0].mxu0
  %v6462 = vpop.f32.mrb[0].mxu0
  %v6463 = vadd.f32 %v6086, %v6462
  %v6464 = vpop.f32.mrb[0].mxu0
  %6465 = vmatprep.mubr.bf16.mxu0 0
  %6466 = vmatmul.mubr.bf16.gmra.mrb[0].mxu0 %v6348
  %v6467 = vpop.f32.mrb[0].mxu0
  %v6468 = vadd.f32 %v6091, %v6467
  %v6469 = vpop.f32.mrb[0].mxu0
  %v6470 = vpop.f32.mrb[0].mxu0
  %v6471 = vadd.f32 %v6094, %v6470
  %v6472 = vpop.f32.mrb[0].mxu0
  %6473 = vmatprep.mubr.bf16.mxu0 0
  %6474 = vmatmul.mubr.bf16.gmra.mrb[0].mxu0 %v6350
  %v6475 = vpop.f32.mrb[0].mxu0
  %v6476 = vadd.f32 %v6099, %v6475
  %v6477 = vpop.f32.mrb[0].mxu0
  %v6478 = vpop.f32.mrb[0].mxu0
  %v6479 = vadd.f32 %v6102, %v6478
  %v6480 = vpop.f32.mrb[0].mxu0
  %6481 = vmatprep.mubr.bf16.mxu0 0
  %6482 = vmatmul.mubr.bf16.gmra.mrb[0].mxu0 %v6352
  %v6483 = vpop.f32.mrb[0].mxu0
  %v6484 = vadd.f32 %v6107, %v6483
  %v6485 = vpop.f32.mrb[0].mxu0
  %v6486 = vpop.f32.mrb[0].mxu0
  %v6487 = vadd.f32 %v6110, %v6486
  %v6488 = vpop.f32.mrb[0].mxu0
  %6489 = vmatprep.mubr.bf16.mxu0 0
  %6490 = vmatmul.mubr.bf16.gmra.mrb[0].mxu0 %v6354
  %v6491 = vpop.f32.mrb[0].mxu0
  %v6492 = vadd.f32 %v6115, %v6491
  %v6493 = vpop.f32.mrb[0].mxu0
  %v6494 = vpop.f32.mrb[0].mxu0
  %v6495 = vadd.f32 %v6118, %v6494
  %v6496 = vpop.f32.mrb[0].mxu0
  %6497 = vmatprep.mubr.bf16.mxu0 0
  %6498 = vmatmul.mubr.bf16.gmra.mrb[0].mxu0 %v6356
  %v6499 = vpop.f32.mrb[0].mxu0
  %v6500 = vadd.f32 %v6123, %v6499
  %v6501 = vpop.f32.mrb[0].mxu0
  %v6502 = vpop.f32.mrb[0].mxu0
  %v6503 = vadd.f32 %v6126, %v6502
  %v6504 = vpop.f32.mrb[0].mxu0
  %6505 = vmatprep.mubr.bf16.mxu0 0
  %6506 = vmatmul.mubr.bf16.gmra.mrb[0].mxu0 %v6358
  %v6507 = vpop.f32.mrb[0].mxu0
  %v6508 = vadd.f32 %v6131, %v6507
  %v6509 = vpop.f32.mrb[0].mxu0
  %v6510 = vpop.f32.mrb[0].mxu0
  %v6511 = vadd.f32 %v6134, %v6510
  %v6512 = vpop.f32.mrb[0].mxu0
  %6513 = vmatprep.mubr.bf16.mxu0 0
  %6514 = vmatmul.mubr.bf16.gmra.mrb[0].mxu0 %v6360
  %v6515 = vpop.f32.mrb[0].mxu0
  %v6516 = vadd.f32 %v6139, %v6515
  %v6517 = vpop.f32.mrb[0].mxu0
  %v6518 = vpop.f32.mrb[0].mxu0
  %v6519 = vadd.f32 %v6142, %v6518
  %v6520 = vpop.f32.mrb[0].mxu0
  %6521 = vmatprep.mubr.bf16.mxu0 0
  %6522 = vmatmul.mubr.bf16.gmra.mrb[0].mxu0 %v6362
  %v6523 = vpop.f32.mrb[0].mxu0
  %v6524 = vadd.f32 %v6147, %v6523
  %v6525 = vpop.f32.mrb[0].mxu0
  %v6526 = vpop.f32.mrb[0].mxu0
  %v6527 = vadd.f32 %v6150, %v6526
  %v6528 = vpop.f32.mrb[0].mxu0
  %6529 = vmatprep.mubr.bf16.mxu0 0
  %6530 = vmatmul.mubr.bf16.gmra.mrb[0].mxu0 %v6364
  %v6531 = vpop.f32.mrb[0].mxu0
  %v6532 = vadd.f32 %v6155, %v6531
  %v6533 = vpop.f32.mrb[0].mxu0
  %v6534 = vpop.f32.mrb[0].mxu0
  %v6535 = vadd.f32 %v6158, %v6534
  %v6536 = vpop.f32.mrb[0].mxu0
  %6537 = vmatprep.mubr.bf16.mxu0 0
  %6538 = vmatmul.mubr.bf16.gmra.mrb[0].mxu0 %v6366
  %v6539 = vpop.f32.mrb[0].mxu0
  %v6540 = vadd.f32 %v6163, %v6539
  %v6541 = vpop.f32.mrb[0].mxu0
  %v6542 = vpop.f32.mrb[0].mxu0
  %v6543 = vadd.f32 %v6166, %v6542
  %v6544 = vpop.f32.mrb[0].mxu0
  %6545 = vmatprep.mubr.bf16.mxu0 0
  %6546 = vmatmul.mubr.bf16.gmra.mrb[0].mxu0 %v6368
  %v6547 = vpop.f32.mrb[0].mxu0
  %v6548 = vadd.f32 %v6171, %v6547
  %v6549 = vpop.f32.mrb[0].mxu0
  %v6550 = vpop.f32.mrb[0].mxu0
  %v6551 = vadd.f32 %v6174, %v6550
  %v6552 = vpop.f32.mrb[0].mxu0
  %6553 = vmatprep.mubr.bf16.mxu0 0
  %6554 = vmatmul.mubr.bf16.gmra.mrb[0].mxu0 %v6370
  %v6555 = vpop.f32.mrb[0].mxu0
  %v6556 = vadd.f32 %v6179, %v6555
  %v6557 = vpop.f32.mrb[0].mxu0
  %v6558 = vpop.f32.mrb[0].mxu0
  %v6559 = vadd.f32 %v6182, %v6558
  %v6560 = vpop.f32.mrb[0].mxu0
  %6561 = vmatprep.mubr.bf16.mxu0 0
  %6562 = vmatmul.mubr.bf16.gmra.mrb[0].mxu0 %v6372
  %v6563 = vpop.f32.mrb[0].mxu0
  %v6564 = vadd.f32 %v6187, %v6563
  %v6565 = vpop.f32.mrb[0].mxu0
  %v6566 = vpop.f32.mrb[0].mxu0
  %v6567 = vadd.f32 %v6190, %v6566
  %v6568 = vpop.f32.mrb[0].mxu0
  %6569 = vmatprep.mubr.bf16.mxu0 0
  %6570 = vmatmul.mubr.bf16.gmra.mrb[0].mxu0 %v6374
  %v6571 = vpop.f32.mrb[0].mxu0
  %v6572 = vadd.f32 %v6195, %v6571
  %v6573 = vpop.f32.mrb[0].mxu0
  %v6574 = vpop.f32.mrb[0].mxu0
  %v6575 = vadd.f32 %v6198, %v6574
  %v6576 = vpop.f32.mrb[0].mxu0
  %6577 = vmatprep.mubr.bf16.mxu0 0
  %6578 = vmatmul.mubr.bf16.gmra.mrb[0].mxu0 %v6376
  %v6579 = vpop.f32.mrb[0].mxu0
  %v6580 = vadd.f32 %v6203, %v6579
  %v6581 = vpop.f32.mrb[0].mxu0
  %v6582 = vpop.f32.mrb[0].mxu0
  %v6583 = vadd.f32 %v6206, %v6582
  %v6584 = vpop.f32.mrb[0].mxu0
  %6585 = vmatprep.mubr.bf16.mxu0 0
  %6586 = vmatmul.mubr.bf16.gmra.mrb[0].mxu0 %v6378
  %v6587 = vpop.f32.mrb[0].mxu0
  %v6588 = vadd.f32 %v6211, %v6587
  %v6589 = vpop.f32.mrb[0].mxu0
  %v6590 = vpop.f32.mrb[0].mxu0
  %v6591 = vadd.f32 %v6214, %v6590
  %v6592 = vpop.f32.mrb[0].mxu0
  %6593 = vmatprep.mubr.bf16.mxu0 0
  %6594 = vmatmul.mubr.bf16.gmra.mrb[0].mxu0 %v6380
  %v6595 = vpop.f32.mrb[0].mxu0
  %v6596 = vadd.f32 %v6219, %v6595
  %v6597 = vpop.f32.mrb[0].mxu0
  %v6598 = vpop.f32.mrb[0].mxu0
  %v6599 = vadd.f32 %v6222, %v6598
  %v6600 = vpop.f32.mrb[0].mxu0
  %6601 = vmatprep.mubr.bf16.mxu0 0
  %6602 = vmatmul.mubr.bf16.gmra.mrb[0].mxu0 %v6382
  %v6603 = vpop.f32.mrb[0].mxu0
  %v6604 = vadd.f32 %v6227, %v6603
  %v6605 = vpop.f32.mrb[0].mxu0
  %v6606 = vpop.f32.mrb[0].mxu0
  %v6607 = vadd.f32 %v6230, %v6606
  %v6608 = vpop.f32.mrb[0].mxu0
  %6609 = vmatprep.mubr.bf16.mxu0 0
  %6610 = vmatmul.mubr.bf16.gmra.mrb[0].mxu0 %v6384
  %v6611 = vpop.f32.mrb[0].mxu0
  %v6612 = vadd.f32 %v6235, %v6611
  %v6613 = vpop.f32.mrb[0].mxu0
  %v6614 = vpop.f32.mrb[0].mxu0
  %v6615 = vadd.f32 %v6238, %v6614
  %v6616 = vpop.f32.mrb[0].mxu0
  %6617 = vmatprep.mubr.bf16.mxu0 0
  %6618 = vmatmul.mubr.bf16.gmra.mrb[0].mxu0 %v6386
  %v6619 = vpop.f32.mrb[0].mxu0
  %v6620 = vadd.f32 %v6243, %v6619
  %v6621 = vpop.f32.mrb[0].mxu0
  %v6622 = vpop.f32.mrb[0].mxu0
  %v6623 = vadd.f32 %v6246, %v6622
  %v6624 = vpop.f32.mrb[0].mxu0
  %6625 = vmatprep.mubr.bf16.mxu0 0
  %6626 = vmatmul.mubr.bf16.gmra.mrb[0].mxu0 %v6388
  %v6627 = vpop.f32.mrb[0].mxu0
  %v6628 = vadd.f32 %v6251, %v6627
  %v6629 = vpop.f32.mrb[0].mxu0
  %v6630 = vpop.f32.mrb[0].mxu0
  %v6631 = vadd.f32 %v6254, %v6630
  %v6632 = vpop.f32.mrb[0].mxu0
  %6633 = vmatprep.mubr.bf16.mxu0 0
  %6634 = vmatmul.mubr.bf16.gmra.mrb[0].mxu0 %v6390
  %v6635 = vpop.f32.mrb[0].mxu0
  %v6636 = vadd.f32 %v6259, %v6635
  %v6637 = vpop.f32.mrb[0].mxu0
  %v6638 = vpop.f32.mrb[0].mxu0
  %v6639 = vadd.f32 %v6262, %v6638
  %v6640 = vpop.f32.mrb[0].mxu0
  %6641 = vmatprep.mubr.bf16.mxu0 0
  %6642 = vmatmul.mubr.bf16.gmra.mrb[0].mxu0 %v6392
  %v6643 = vpop.f32.mrb[0].mxu0
  %v6644 = vadd.f32 %v6267, %v6643
  %v6645 = vpop.f32.mrb[0].mxu0
  %v6646 = vpop.f32.mrb[0].mxu0
  %v6647 = vadd.f32 %v6270, %v6646
  %v6648 = vpop.f32.mrb[0].mxu0
  %6649 = vmatprep.mubr.bf16.mxu0 0
  %6650 = vmatmul.mubr.bf16.gmra.mrb[0].mxu0 %v6394
  %v6651 = vpop.f32.mrb[0].mxu0
  %v6652 = vadd.f32 %v6275, %v6651
  %v6653 = vpop.f32.mrb[0].mxu0
  %v6654 = vpop.f32.mrb[0].mxu0
  %v6655 = vadd.f32 %v6278, %v6654
  %v6656 = vpop.f32.mrb[0].mxu0
  %6657 = vmatprep.mubr.bf16.mxu0 0
  %6658 = vmatmul.mubr.bf16.gmra.mrb[0].mxu0 %v6396
  %v6659 = vpop.f32.mrb[0].mxu0
  %v6660 = vadd.f32 %v6283, %v6659
  %v6661 = vpop.f32.mrb[0].mxu0
  %v6662 = vpop.f32.mrb[0].mxu0
  %v6663 = vadd.f32 %v6286, %v6662
  %v6664 = vpop.f32.mrb[0].mxu0
  %6665 = vmatprep.mubr.bf16.mxu0 0
  %6666 = vmatmul.mubr.bf16.gmra.mrb[0].mxu0 %v6398
  %v6667 = vpop.f32.mrb[0].mxu0
  %v6668 = vadd.f32 %v6291, %v6667
  %v6669 = vpop.f32.mrb[0].mxu0
  %v6670 = vpop.f32.mrb[0].mxu0
  %v6671 = vadd.f32 %v6294, %v6670
  %v6672 = vpop.f32.mrb[0].mxu0
  %6673 = vmatprep.mubr.bf16.mxu0 0
  %6674 = vmatmul.mubr.bf16.gmra.mrb[0].mxu0 %v6400
  %v6675 = vpop.f32.mrb[0].mxu0
  %v6676 = vadd.f32 %v6299, %v6675
  %v6677 = vpop.f32.mrb[0].mxu0
  %v6678 = vpop.f32.mrb[0].mxu0
  %v6679 = vadd.f32 %v6302, %v6678
  %v6680 = vpop.f32.mrb[0].mxu0
  %6681 = vmatprep.mubr.bf16.mxu0 0
  %6682 = vmatmul.mubr.bf16.gmra.mrb[0].mxu0 %v6402
  %v6683 = vpop.f32.mrb[0].mxu0
  %v6684 = vadd.f32 %v6307, %v6683
  %v6685 = vpop.f32.mrb[0].mxu0
  %v6686 = vpop.f32.mrb[0].mxu0
  %v6687 = vadd.f32 %v6310, %v6686
  %v6688 = vpop.f32.mrb[0].mxu0
  %6689 = vmatprep.mubr.bf16.mxu0 0
  %6690 = vmatmul.mubr.bf16.gmra.mrb[0].mxu0 %v6404
  %v6691 = vpop.f32.mrb[0].mxu0
  %v6692 = vadd.f32 %v6315, %v6691
  %v6693 = vpop.f32.mrb[0].mxu0
  %v6694 = vpop.f32.mrb[0].mxu0
  %v6695 = vadd.f32 %v6318, %v6694
  %v6696 = vpop.f32.mrb[0].mxu0
  %6697 = vdwg.mxu0
  %s6698 = scalar_lea.vmem %s4, 56
  %v6699 = vld [vmem:[%s6698] sm:$0xf]
  %v6700 = vld [vmem:[%s6698 + $0x4] sm:$0xf]
  %v6701 = vld [vmem:[%s6698 + $0x8] sm:$0xf]
  %v6702 = vld [vmem:[%s6698 + $0xc] sm:$0xf]
  %v6703 = vld [vmem:[%s6698 + $0x10] sm:$0xf]
  %v6704 = vld [vmem:[%s6698 + $0x14] sm:$0xf]
  %v6705 = vld [vmem:[%s6698 + $0x18] sm:$0xf]
  %v6738 = vrot.slane %v5609, 1
  %v6739 = vrot.slane %v5610, 1
  %v6740 = vsel %vm2292, %v6738, %v6739
  %v6741 = vrot.slane %v5611, 1
  %v6742 = vsel %vm2292, %v6739, %v6741
  %v6743 = vrot.slane %v5612, 1
  %v6744 = vsel %vm2292, %v6741, %v6743
  %v6745 = vrot.slane %v5613, 1
  %v6746 = vsel %vm2292, %v6743, %v6745
  %v6747 = vrot.slane %v5614, 1
  %v6748 = vsel %vm2292, %v6745, %v6747
  %v6749 = vrot.slane %v5615, 1
  %v6750 = vsel %vm2292, %v6747, %v6749
  %v6751 = vrot.slane %v5616, 1
  %v6752 = vsel %vm2292, %v6749, %v6751
  %v6753 = vrot.slane %v5617, 1
  %v6754 = vsel %vm2292, %v6751, %v6753
  %v6755 = vrot.slane %v5618, 1
  %v6756 = vsel %vm2292, %v6753, %v6755
  %v6757 = vrot.slane %v5619, 1
  %v6758 = vsel %vm2292, %v6755, %v6757
  %v6759 = vrot.slane %v5620, 1
  %v6760 = vsel %vm2292, %v6757, %v6759
  %v6761 = vrot.slane %v5621, 1
  %v6762 = vsel %vm2292, %v6759, %v6761
  %v6763 = vrot.slane %v5622, 1
  %v6764 = vsel %vm2292, %v6761, %v6763
  %v6765 = vrot.slane %v5623, 1
  %v6766 = vsel %vm2292, %v6763, %v6765
  %v6767 = vrot.slane %v5624, 1
  %v6768 = vsel %vm2292, %v6765, %v6767
  %v6769 = vrot.slane %v5625, 1
  %v6770 = vsel %vm2292, %v6767, %v6769
  %v6771 = vrot.slane %v5626, 1
  %v6772 = vsel %vm2292, %v6769, %v6771
  %v6773 = vrot.slane %v5627, 1
  %v6774 = vsel %vm2292, %v6771, %v6773
  %v6775 = vrot.slane %v5628, 1
  %v6776 = vsel %vm2292, %v6773, %v6775
  %v6777 = vrot.slane %v5629, 1
  %v6778 = vsel %vm2292, %v6775, %v6777
  %v6779 = vrot.slane %v5630, 1
  %v6780 = vsel %vm2292, %v6777, %v6779
  %v6781 = vrot.slane %v5631, 1
  %v6782 = vsel %vm2292, %v6779, %v6781
  %v6783 = vrot.slane %v5632, 1
  %v6784 = vsel %vm2292, %v6781, %v6783
  %v6785 = vrot.slane %v5633, 1
  %v6786 = vsel %vm2292, %v6783, %v6785
  %v6787 = vrot.slane %v5634, 1
  %v6788 = vsel %vm2292, %v6785, %v6787
  %v6789 = vrot.slane %v5635, 1
  %v6790 = vsel %vm2292, %v6787, %v6789
  %v6791 = vrot.slane %v5636, 1
  %v6792 = vsel %vm2292, %v6789, %v6791
  %v6793 = vrot.slane %v5637, 1
  %v6794 = vsel %vm2292, %v6791, %v6793
  %v6795 = vrot.slane %v5638, 1
  %v6796 = vsel %vm2292, %v6793, %v6795
  %v6797 = vrot.slane %v5639, 1
  %v6798 = vsel %vm2292, %v6795, %v6797
  %v6799 = vrot.slane %v5640, 1
  %v6800 = vsel %vm2292, %v6797, %v6799
  %v6808 = vunpack.c.l.b16 %v6699
  %v6809 = vunpack.c.l.b16 %v6700
  %v6810 = vunpack.c.l.b16 %v6701
  %v6811 = vunpack.c.l.b16 %v6702
  %v6812 = vunpack.c.l.b16 %v6703
  %v6813 = vunpack.c.l.b16 %v6704
  %v6814 = vunpack.c.l.b16 %v6705
  %v6815 = vpack.c.b16 %v6809, %v6808
  %v6816 = vpack.c.b16 %v6811, %v6810
  %v6817 = vpack.c.b16 %v6813, %v6812
  %v6818 = vpack.c.b16 %v6814, %v6814
  %v6823 = vsel %vm5160, %v6740, 0
  %v6826 = vsel %vm5160, %v6742, 0
  %v6829 = vsel %vm5160, %v6744, 0
  %v6832 = vsel %vm5160, %v6746, 0
  %v6835 = vsel %vm5160, %v6748, 0
  %v6838 = vsel %vm5160, %v6750, 0
  %v6841 = vsel %vm5160, %v6752, 0
  %v6844 = vsel %vm5160, %v6754, 0
  %v6847 = vsel %vm5160, %v6756, 0
  %v6850 = vsel %vm5160, %v6758, 0
  %v6853 = vsel %vm5160, %v6760, 0
  %v6856 = vsel %vm5160, %v6762, 0
  %v6859 = vsel %vm5160, %v6764, 0
  %v6862 = vsel %vm5160, %v6766, 0
  %v6865 = vsel %vm5160, %v6768, 0
  %v6868 = vsel %vm5160, %v6770, 0
  %v6871 = vsel %vm5160, %v6772, 0
  %v6874 = vsel %vm5160, %v6774, 0
  %v6877 = vsel %vm5160, %v6776, 0
  %v6880 = vsel %vm5160, %v6778, 0
  %v6883 = vsel %vm5160, %v6780, 0
  %v6886 = vsel %vm5160, %v6782, 0
  %v6889 = vsel %vm5160, %v6784, 0
  %v6892 = vsel %vm5160, %v6786, 0
  %v6895 = vsel %vm5160, %v6788, 0
  %v6898 = vsel %vm5160, %v6790, 0
  %v6901 = vsel %vm5160, %v6792, 0
  %v6904 = vsel %vm5160, %v6794, 0
  %v6907 = vsel %vm5160, %v6796, 0
  %v6910 = vsel %vm5160, %v6798, 0
  %v6913 = vsel %vm5160, %v6800, 0
  %v6916 = vsel %vm5160, %v6799, 0
  %v6919 = vsel %vm6028, %v6818, 0
  %6921 = vmatprep.subr.bf16.mxu0 0
  %6922 = vmatpush1.bf16.msra.mxu0 %v6815
  %6923 = vmatprep.subr.bf16.mxu0 0
  %6924 = vmatpush1.bf16.msra.mxu0 %v6816
  %6925 = vmatprep.subr.bf16.mxu0 0
  %6926 = vmatpush1.bf16.msra.mxu0 %v6817
  %6927 = vmatprep.subr.bf16.mxu0 0
  %6928 = vmatpush1.bf16.msra.mxu0 %v6919
  %6929 = vmatprep.subr.bf16.mxu0 0
  %6930 = vmatpush1.bf16.msra.mxu0 0
  %6931 = vmatprep.subr.bf16.mxu0 0
  %6932 = vmatpush1.bf16.msra.mxu0 0
  %6933 = vmatprep.subr.bf16.mxu0 0
  %6934 = vmatpush1.bf16.msra.mxu0 0
  %6935 = vmatprep.subr.bf16.mxu0 0
  %6936 = vmatpush1.bf16.msra.mxu0 0
  %6937 = vmatprep.subr.bf16.mxu0 0
  %6938 = vmatpush1.bf16.msra.mxu0 0
  %6939 = vmatprep.subr.bf16.mxu0 0
  %6940 = vmatpush1.bf16.msra.mxu0 0
  %6941 = vmatprep.subr.bf16.mxu0 0
  %6942 = vmatpush1.bf16.msra.mxu0 0
  %6943 = vmatprep.subr.bf16.mxu0 0
  %6944 = vmatpush1.bf16.msra.mxu0 0
  %6945 = vmatprep.subr.bf16.mxu0 0
  %6946 = vmatpush1.bf16.msra.mxu0 0
  %6947 = vmatprep.subr.bf16.mxu0 0
  %6948 = vmatpush1.bf16.msra.mxu0 0
  %6949 = vmatprep.subr.bf16.mxu0 0
  %6950 = vmatpush1.bf16.msra.mxu0 0
  %6951 = vmatprep.subr.bf16.mxu0 0
  %6952 = vmatpush1.bf16.msra.mxu0 0
  %6953 = vmatprep.mubr.bf16.mxu0 0
  %6954 = vmatmul.mubr.bf16.gmra.mrb[0].mxu0 %v6823
  %v6955 = vpop.f32.mrb[0].mxu0
  %v6956 = vadd.f32 0.0, %v6955
  %v6957 = vpop.f32.mrb[0].mxu0
  %v6958 = vpop.f32.mrb[0].mxu0
  %v6959 = vadd.f32 0.0, %v6958
  %v6960 = vpop.f32.mrb[0].mxu0
  %6961 = vmatprep.mubr.bf16.mxu0 0
  %6962 = vmatmul.mubr.bf16.gmra.mrb[0].mxu0 %v6826
  %v6963 = vpop.f32.mrb[0].mxu0
  %v6964 = vadd.f32 0.0, %v6963
  %v6965 = vpop.f32.mrb[0].mxu0
  %v6966 = vpop.f32.mrb[0].mxu0
  %v6967 = vadd.f32 0.0, %v6966
  %v6968 = vpop.f32.mrb[0].mxu0
  %6969 = vmatprep.mubr.bf16.mxu0 0
  %6970 = vmatmul.mubr.bf16.gmra.mrb[0].mxu0 %v6829
  %v6971 = vpop.f32.mrb[0].mxu0
  %v6972 = vadd.f32 0.0, %v6971
  %v6973 = vpop.f32.mrb[0].mxu0
  %v6974 = vpop.f32.mrb[0].mxu0
  %v6975 = vadd.f32 0.0, %v6974
  %v6976 = vpop.f32.mrb[0].mxu0
  %6977 = vmatprep.mubr.bf16.mxu0 0
  %6978 = vmatmul.mubr.bf16.gmra.mrb[0].mxu0 %v6832
  %v6979 = vpop.f32.mrb[0].mxu0
  %v6980 = vadd.f32 0.0, %v6979
  %v6981 = vpop.f32.mrb[0].mxu0
  %v6982 = vpop.f32.mrb[0].mxu0
  %v6983 = vadd.f32 0.0, %v6982
  %v6984 = vpop.f32.mrb[0].mxu0
  %6985 = vmatprep.mubr.bf16.mxu0 0
  %6986 = vmatmul.mubr.bf16.gmra.mrb[0].mxu0 %v6835
  %v6987 = vpop.f32.mrb[0].mxu0
  %v6988 = vadd.f32 0.0, %v6987
  %v6989 = vpop.f32.mrb[0].mxu0
  %v6990 = vpop.f32.mrb[0].mxu0
  %v6991 = vadd.f32 0.0, %v6990
  %v6992 = vpop.f32.mrb[0].mxu0
  %6993 = vmatprep.mubr.bf16.mxu0 0
  %6994 = vmatmul.mubr.bf16.gmra.mrb[0].mxu0 %v6838
  %v6995 = vpop.f32.mrb[0].mxu0
  %v6996 = vadd.f32 0.0, %v6995
  %v6997 = vpop.f32.mrb[0].mxu0
  %v6998 = vpop.f32.mrb[0].mxu0
  %v6999 = vadd.f32 0.0, %v6998
  %v7000 = vpop.f32.mrb[0].mxu0
  %7001 = vmatprep.mubr.bf16.mxu0 0
  %7002 = vmatmul.mubr.bf16.gmra.mrb[0].mxu0 %v6841
  %v7003 = vpop.f32.mrb[0].mxu0
  %v7004 = vadd.f32 0.0, %v7003
  %v7005 = vpop.f32.mrb[0].mxu0
  %v7006 = vpop.f32.mrb[0].mxu0
  %v7007 = vadd.f32 0.0, %v7006
  %v7008 = vpop.f32.mrb[0].mxu0
  %7009 = vmatprep.mubr.bf16.mxu0 0
  %7010 = vmatmul.mubr.bf16.gmra.mrb[0].mxu0 %v6844
  %v7011 = vpop.f32.mrb[0].mxu0
  %v7012 = vadd.f32 0.0, %v7011
  %v7013 = vpop.f32.mrb[0].mxu0
  %v7014 = vpop.f32.mrb[0].mxu0
  %v7015 = vadd.f32 0.0, %v7014
  %v7016 = vpop.f32.mrb[0].mxu0
  %7017 = vmatprep.mubr.bf16.mxu0 0
  %7018 = vmatmul.mubr.bf16.gmra.mrb[0].mxu0 %v6847
  %v7019 = vpop.f32.mrb[0].mxu0
  %v7020 = vadd.f32 0.0, %v7019
  %v7021 = vpop.f32.mrb[0].mxu0
  %v7022 = vpop.f32.mrb[0].mxu0
  %v7023 = vadd.f32 0.0, %v7022
  %v7024 = vpop.f32.mrb[0].mxu0
  %7025 = vmatprep.mubr.bf16.mxu0 0
  %7026 = vmatmul.mubr.bf16.gmra.mrb[0].mxu0 %v6850
  %v7027 = vpop.f32.mrb[0].mxu0
  %v7028 = vadd.f32 0.0, %v7027
  %v7029 = vpop.f32.mrb[0].mxu0
  %v7030 = vpop.f32.mrb[0].mxu0
  %v7031 = vadd.f32 0.0, %v7030
  %v7032 = vpop.f32.mrb[0].mxu0
  %7033 = vmatprep.mubr.bf16.mxu0 0
  %7034 = vmatmul.mubr.bf16.gmra.mrb[0].mxu0 %v6853
  %v7035 = vpop.f32.mrb[0].mxu0
  %v7036 = vadd.f32 0.0, %v7035
  %v7037 = vpop.f32.mrb[0].mxu0
  %v7038 = vpop.f32.mrb[0].mxu0
  %v7039 = vadd.f32 0.0, %v7038
  %v7040 = vpop.f32.mrb[0].mxu0
  %7041 = vmatprep.mubr.bf16.mxu0 0
  %7042 = vmatmul.mubr.bf16.gmra.mrb[0].mxu0 %v6856
  %v7043 = vpop.f32.mrb[0].mxu0
  %v7044 = vadd.f32 0.0, %v7043
  %v7045 = vpop.f32.mrb[0].mxu0
  %v7046 = vpop.f32.mrb[0].mxu0
  %v7047 = vadd.f32 0.0, %v7046
  %v7048 = vpop.f32.mrb[0].mxu0
  %7049 = vmatprep.mubr.bf16.mxu0 0
  %7050 = vmatmul.mubr.bf16.gmra.mrb[0].mxu0 %v6859
  %v7051 = vpop.f32.mrb[0].mxu0
  %v7052 = vadd.f32 0.0, %v7051
  %v7053 = vpop.f32.mrb[0].mxu0
  %v7054 = vpop.f32.mrb[0].mxu0
  %v7055 = vadd.f32 0.0, %v7054
  %v7056 = vpop.f32.mrb[0].mxu0
  %7057 = vmatprep.mubr.bf16.mxu0 0
  %7058 = vmatmul.mubr.bf16.gmra.mrb[0].mxu0 %v6862
  %v7059 = vpop.f32.mrb[0].mxu0
  %v7060 = vadd.f32 0.0, %v7059
  %v7061 = vpop.f32.mrb[0].mxu0
  %v7062 = vpop.f32.mrb[0].mxu0
  %v7063 = vadd.f32 0.0, %v7062
  %v7064 = vpop.f32.mrb[0].mxu0
  %7065 = vmatprep.mubr.bf16.mxu0 0
  %7066 = vmatmul.mubr.bf16.gmra.mrb[0].mxu0 %v6865
  %v7067 = vpop.f32.mrb[0].mxu0
  %v7068 = vadd.f32 0.0, %v7067
  %v7069 = vpop.f32.mrb[0].mxu0
  %v7070 = vpop.f32.mrb[0].mxu0
  %v7071 = vadd.f32 0.0, %v7070
  %v7072 = vpop.f32.mrb[0].mxu0
  %7073 = vmatprep.mubr.bf16.mxu0 0
  %7074 = vmatmul.mubr.bf16.gmra.mrb[0].mxu0 %v6868
  %v7075 = vpop.f32.mrb[0].mxu0
  %v7076 = vadd.f32 0.0, %v7075
  %v7077 = vpop.f32.mrb[0].mxu0
  %v7078 = vpop.f32.mrb[0].mxu0
  %v7079 = vadd.f32 0.0, %v7078
  %v7080 = vpop.f32.mrb[0].mxu0
  %7081 = vmatprep.mubr.bf16.mxu0 0
  %7082 = vmatmul.mubr.bf16.gmra.mrb[0].mxu0 %v6871
  %v7083 = vpop.f32.mrb[0].mxu0
  %v7084 = vadd.f32 0.0, %v7083
  %v7085 = vpop.f32.mrb[0].mxu0
  %v7086 = vpop.f32.mrb[0].mxu0
  %v7087 = vadd.f32 0.0, %v7086
  %v7088 = vpop.f32.mrb[0].mxu0
  %7089 = vmatprep.mubr.bf16.mxu0 0
  %7090 = vmatmul.mubr.bf16.gmra.mrb[0].mxu0 %v6874
  %v7091 = vpop.f32.mrb[0].mxu0
  %v7092 = vadd.f32 0.0, %v7091
  %v7093 = vpop.f32.mrb[0].mxu0
  %v7094 = vpop.f32.mrb[0].mxu0
  %v7095 = vadd.f32 0.0, %v7094
  %v7096 = vpop.f32.mrb[0].mxu0
  %7097 = vmatprep.mubr.bf16.mxu0 0
  %7098 = vmatmul.mubr.bf16.gmra.mrb[0].mxu0 %v6877
  %v7099 = vpop.f32.mrb[0].mxu0
  %v7100 = vadd.f32 0.0, %v7099
  %v7101 = vpop.f32.mrb[0].mxu0
  %v7102 = vpop.f32.mrb[0].mxu0
  %v7103 = vadd.f32 0.0, %v7102
  %v7104 = vpop.f32.mrb[0].mxu0
  %7105 = vmatprep.mubr.bf16.mxu0 0
  %7106 = vmatmul.mubr.bf16.gmra.mrb[0].mxu0 %v6880
  %v7107 = vpop.f32.mrb[0].mxu0
  %v7108 = vadd.f32 0.0, %v7107
  %v7109 = vpop.f32.mrb[0].mxu0
  %v7110 = vpop.f32.mrb[0].mxu0
  %v7111 = vadd.f32 0.0, %v7110
  %v7112 = vpop.f32.mrb[0].mxu0
  %7113 = vmatprep.mubr.bf16.mxu0 0
  %7114 = vmatmul.mubr.bf16.gmra.mrb[0].mxu0 %v6883
  %v7115 = vpop.f32.mrb[0].mxu0
  %v7116 = vadd.f32 0.0, %v7115
  %v7117 = vpop.f32.mrb[0].mxu0
  %v7118 = vpop.f32.mrb[0].mxu0
  %v7119 = vadd.f32 0.0, %v7118
  %v7120 = vpop.f32.mrb[0].mxu0
  %7121 = vmatprep.mubr.bf16.mxu0 0
  %7122 = vmatmul.mubr.bf16.gmra.mrb[0].mxu0 %v6886
  %v7123 = vpop.f32.mrb[0].mxu0
  %v7124 = vadd.f32 0.0, %v7123
  %v7125 = vpop.f32.mrb[0].mxu0
  %v7126 = vpop.f32.mrb[0].mxu0
  %v7127 = vadd.f32 0.0, %v7126
  %v7128 = vpop.f32.mrb[0].mxu0
  %7129 = vmatprep.mubr.bf16.mxu0 0
  %7130 = vmatmul.mubr.bf16.gmra.mrb[0].mxu0 %v6889
  %v7131 = vpop.f32.mrb[0].mxu0
  %v7132 = vadd.f32 0.0, %v7131
  %v7133 = vpop.f32.mrb[0].mxu0
  %v7134 = vpop.f32.mrb[0].mxu0
  %v7135 = vadd.f32 0.0, %v7134
  %v7136 = vpop.f32.mrb[0].mxu0
  %7137 = vmatprep.mubr.bf16.mxu0 0
  %7138 = vmatmul.mubr.bf16.gmra.mrb[0].mxu0 %v6892
  %v7139 = vpop.f32.mrb[0].mxu0
  %v7140 = vadd.f32 0.0, %v7139
  %v7141 = vpop.f32.mrb[0].mxu0
  %v7142 = vpop.f32.mrb[0].mxu0
  %v7143 = vadd.f32 0.0, %v7142
  %v7144 = vpop.f32.mrb[0].mxu0
  %7145 = vmatprep.mubr.bf16.mxu0 0
  %7146 = vmatmul.mubr.bf16.gmra.mrb[0].mxu0 %v6895
  %v7147 = vpop.f32.mrb[0].mxu0
  %v7148 = vadd.f32 0.0, %v7147
  %v7149 = vpop.f32.mrb[0].mxu0
  %v7150 = vpop.f32.mrb[0].mxu0
  %v7151 = vadd.f32 0.0, %v7150
  %v7152 = vpop.f32.mrb[0].mxu0
  %7153 = vmatprep.mubr.bf16.mxu0 0
  %7154 = vmatmul.mubr.bf16.gmra.mrb[0].mxu0 %v6898
  %v7155 = vpop.f32.mrb[0].mxu0
  %v7156 = vadd.f32 0.0, %v7155
  %v7157 = vpop.f32.mrb[0].mxu0
  %v7158 = vpop.f32.mrb[0].mxu0
  %v7159 = vadd.f32 0.0, %v7158
  %v7160 = vpop.f32.mrb[0].mxu0
  %7161 = vmatprep.mubr.bf16.mxu0 0
  %7162 = vmatmul.mubr.bf16.gmra.mrb[0].mxu0 %v6901
  %v7163 = vpop.f32.mrb[0].mxu0
  %v7164 = vadd.f32 0.0, %v7163
  %v7165 = vpop.f32.mrb[0].mxu0
  %v7166 = vpop.f32.mrb[0].mxu0
  %v7167 = vadd.f32 0.0, %v7166
  %v7168 = vpop.f32.mrb[0].mxu0
  %7169 = vmatprep.mubr.bf16.mxu0 0
  %7170 = vmatmul.mubr.bf16.gmra.mrb[0].mxu0 %v6904
  %v7171 = vpop.f32.mrb[0].mxu0
  %v7172 = vadd.f32 0.0, %v7171
  %v7173 = vpop.f32.mrb[0].mxu0
  %v7174 = vpop.f32.mrb[0].mxu0
  %v7175 = vadd.f32 0.0, %v7174
  %v7176 = vpop.f32.mrb[0].mxu0
  %7177 = vmatprep.mubr.bf16.mxu0 0
  %7178 = vmatmul.mubr.bf16.gmra.mrb[0].mxu0 %v6907
  %v7179 = vpop.f32.mrb[0].mxu0
  %v7180 = vadd.f32 0.0, %v7179
  %v7181 = vpop.f32.mrb[0].mxu0
  %v7182 = vpop.f32.mrb[0].mxu0
  %v7183 = vadd.f32 0.0, %v7182
  %v7184 = vpop.f32.mrb[0].mxu0
  %7185 = vmatprep.mubr.bf16.mxu0 0
  %7186 = vmatmul.mubr.bf16.gmra.mrb[0].mxu0 %v6910
  %v7187 = vpop.f32.mrb[0].mxu0
  %v7188 = vadd.f32 0.0, %v7187
  %v7189 = vpop.f32.mrb[0].mxu0
  %v7190 = vpop.f32.mrb[0].mxu0
  %v7191 = vadd.f32 0.0, %v7190
  %v7192 = vpop.f32.mrb[0].mxu0
  %7193 = vmatprep.mubr.bf16.mxu0 0
  %7194 = vmatmul.mubr.bf16.gmra.mrb[0].mxu0 %v6913
  %v7195 = vpop.f32.mrb[0].mxu0
  %v7196 = vadd.f32 0.0, %v7195
  %v7197 = vpop.f32.mrb[0].mxu0
  %v7198 = vpop.f32.mrb[0].mxu0
  %v7199 = vadd.f32 0.0, %v7198
  %v7200 = vpop.f32.mrb[0].mxu0
  %7201 = vmatprep.mubr.bf16.mxu0 0
  %7202 = vmatmul.mubr.bf16.gmra.mrb[0].mxu0 %v6916
  %v7203 = vpop.f32.mrb[0].mxu0
  %v7204 = vadd.f32 0.0, %v7203
  %v7205 = vpop.f32.mrb[0].mxu0
  %v7206 = vpop.f32.mrb[0].mxu0
  %v7207 = vadd.f32 0.0, %v7206
  %v7208 = vpop.f32.mrb[0].mxu0
  %7209 = vdwg.mxu0
  %v7210 = vadd.f32 %v6444, %v6956
  %v7211 = vadd.f32 %v6447, %v6959
  %v7212 = vadd.f32 %v6452, %v6964
  %v7213 = vadd.f32 %v6455, %v6967
  %v7214 = vadd.f32 %v6460, %v6972
  %v7215 = vadd.f32 %v6463, %v6975
  %v7216 = vadd.f32 %v6468, %v6980
  %v7217 = vadd.f32 %v6471, %v6983
  %v7218 = vadd.f32 %v6476, %v6988
  %v7219 = vadd.f32 %v6479, %v6991
  %v7220 = vadd.f32 %v6484, %v6996
  %v7221 = vadd.f32 %v6487, %v6999
  %v7222 = vadd.f32 %v6492, %v7004
  %v7223 = vadd.f32 %v6495, %v7007
  %v7224 = vadd.f32 %v6500, %v7012
  %v7225 = vadd.f32 %v6503, %v7015
  %v7226 = vadd.f32 %v6508, %v7020
  %v7227 = vadd.f32 %v6511, %v7023
  %v7228 = vadd.f32 %v6516, %v7028
  %v7229 = vadd.f32 %v6519, %v7031
  %v7230 = vadd.f32 %v6524, %v7036
  %v7231 = vadd.f32 %v6527, %v7039
  %v7232 = vadd.f32 %v6532, %v7044
  %v7233 = vadd.f32 %v6535, %v7047
  %v7234 = vadd.f32 %v6540, %v7052
  %v7235 = vadd.f32 %v6543, %v7055
  %v7236 = vadd.f32 %v6548, %v7060
  %v7237 = vadd.f32 %v6551, %v7063
  %v7238 = vadd.f32 %v6556, %v7068
  %v7239 = vadd.f32 %v6559, %v7071
  %v7240 = vadd.f32 %v6564, %v7076
  %v7241 = vadd.f32 %v6567, %v7079
  %v7242 = vadd.f32 %v6572, %v7084
  %v7243 = vadd.f32 %v6575, %v7087
  %v7244 = vadd.f32 %v6580, %v7092
  %v7245 = vadd.f32 %v6583, %v7095
  %v7246 = vadd.f32 %v6588, %v7100
  %v7247 = vadd.f32 %v6591, %v7103
  %v7248 = vadd.f32 %v6596, %v7108
  %v7249 = vadd.f32 %v6599, %v7111
  %v7250 = vadd.f32 %v6604, %v7116
  %v7251 = vadd.f32 %v6607, %v7119
  %v7252 = vadd.f32 %v6612, %v7124
  %v7253 = vadd.f32 %v6615, %v7127
  %v7254 = vadd.f32 %v6620, %v7132
  %v7255 = vadd.f32 %v6623, %v7135
  %v7256 = vadd.f32 %v6628, %v7140
  %v7257 = vadd.f32 %v6631, %v7143
  %v7258 = vadd.f32 %v6636, %v7148
  %v7259 = vadd.f32 %v6639, %v7151
  %v7260 = vadd.f32 %v6644, %v7156
  %v7261 = vadd.f32 %v6647, %v7159
  %v7262 = vadd.f32 %v6652, %v7164
  %v7263 = vadd.f32 %v6655, %v7167
  %v7264 = vadd.f32 %v6660, %v7172
  %v7265 = vadd.f32 %v6663, %v7175
  %v7266 = vadd.f32 %v6668, %v7180
  %v7267 = vadd.f32 %v6671, %v7183
  %v7268 = vadd.f32 %v6676, %v7188
  %v7269 = vadd.f32 %v6679, %v7191
  %v7270 = vadd.f32 %v6684, %v7196
  %v7271 = vadd.f32 %v6687, %v7199
  %v7272 = vadd.f32 %v6692, %v7204
  %v7273 = vadd.f32 %v6695, %v7207
  %v7274 = vld [vmem:[%s5] sm:$0x1]
  %v7276 = vlaneseq
  %v7277 = vshrl.u32 %v7276, 7
  %v7278 = vsub.s32 0, %v7277
  %v7279 = vrot.slane %v7274, %v7278
  %v7281 = vadd.f32 %v7210, %v7279
  %v7282 = vadd.f32 %v7211, %v7279
  %v7283 = vadd.f32 %v7212, %v7279
  %v7284 = vadd.f32 %v7213, %v7279
  %v7285 = vadd.f32 %v7214, %v7279
  %v7286 = vadd.f32 %v7215, %v7279
  %v7287 = vadd.f32 %v7216, %v7279
  %v7288 = vadd.f32 %v7217, %v7279
  %v7289 = vadd.f32 %v7218, %v7279
  %v7290 = vadd.f32 %v7219, %v7279
  %v7291 = vadd.f32 %v7220, %v7279
  %v7292 = vadd.f32 %v7221, %v7279
  %v7293 = vadd.f32 %v7222, %v7279
  %v7294 = vadd.f32 %v7223, %v7279
  %v7295 = vadd.f32 %v7224, %v7279
  %v7296 = vadd.f32 %v7225, %v7279
  %v7297 = vadd.f32 %v7226, %v7279
  %v7298 = vadd.f32 %v7227, %v7279
  %v7299 = vadd.f32 %v7228, %v7279
  %v7300 = vadd.f32 %v7229, %v7279
  %v7301 = vadd.f32 %v7230, %v7279
  %v7302 = vadd.f32 %v7231, %v7279
  %v7303 = vadd.f32 %v7232, %v7279
  %v7304 = vadd.f32 %v7233, %v7279
  %v7305 = vadd.f32 %v7234, %v7279
  %v7306 = vadd.f32 %v7235, %v7279
  %v7307 = vadd.f32 %v7236, %v7279
  %v7308 = vadd.f32 %v7237, %v7279
  %v7309 = vadd.f32 %v7238, %v7279
  %v7310 = vadd.f32 %v7239, %v7279
  %v7311 = vadd.f32 %v7240, %v7279
  %v7312 = vadd.f32 %v7241, %v7279
  %v7313 = vadd.f32 %v7242, %v7279
  %v7314 = vadd.f32 %v7243, %v7279
  %v7315 = vadd.f32 %v7244, %v7279
  %v7316 = vadd.f32 %v7245, %v7279
  %v7317 = vadd.f32 %v7246, %v7279
  %v7318 = vadd.f32 %v7247, %v7279
  %v7319 = vadd.f32 %v7248, %v7279
  %v7320 = vadd.f32 %v7249, %v7279
  %v7321 = vadd.f32 %v7250, %v7279
  %v7322 = vadd.f32 %v7251, %v7279
  %v7323 = vadd.f32 %v7252, %v7279
  %v7324 = vadd.f32 %v7253, %v7279
  %v7325 = vadd.f32 %v7254, %v7279
  %v7326 = vadd.f32 %v7255, %v7279
  %v7327 = vadd.f32 %v7256, %v7279
  %v7328 = vadd.f32 %v7257, %v7279
  %v7329 = vadd.f32 %v7258, %v7279
  %v7330 = vadd.f32 %v7259, %v7279
  %v7331 = vadd.f32 %v7260, %v7279
  %v7332 = vadd.f32 %v7261, %v7279
  %v7333 = vadd.f32 %v7262, %v7279
  %v7334 = vadd.f32 %v7263, %v7279
  %v7335 = vadd.f32 %v7264, %v7279
  %v7336 = vadd.f32 %v7265, %v7279
  %v7337 = vadd.f32 %v7266, %v7279
  %v7338 = vadd.f32 %v7267, %v7279
  %v7339 = vadd.f32 %v7268, %v7279
  %v7340 = vadd.f32 %v7269, %v7279
  %v7341 = vadd.f32 %v7270, %v7279
  %v7342 = vadd.f32 %v7271, %v7279
  %v7343 = vadd.f32 %v7272, %v7279
  %v7344 = vadd.f32 %v7273, %v7279
  %v7345 = vmax.f32 %v7281, 0.0
  %v7346 = vmax.f32 %v7282, 0.0
  %v7347 = vmax.f32 %v7283, 0.0
  %v7348 = vmax.f32 %v7284, 0.0
  %v7349 = vmax.f32 %v7285, 0.0
  %v7350 = vmax.f32 %v7286, 0.0
  %v7351 = vmax.f32 %v7287, 0.0
  %v7352 = vmax.f32 %v7288, 0.0
  %v7353 = vmax.f32 %v7289, 0.0
  %v7354 = vmax.f32 %v7290, 0.0
  %v7355 = vmax.f32 %v7291, 0.0
  %v7356 = vmax.f32 %v7292, 0.0
  %v7357 = vmax.f32 %v7293, 0.0
  %v7358 = vmax.f32 %v7294, 0.0
  %v7359 = vmax.f32 %v7295, 0.0
  %v7360 = vmax.f32 %v7296, 0.0
  %v7361 = vmax.f32 %v7297, 0.0
  %v7362 = vmax.f32 %v7298, 0.0
  %v7363 = vmax.f32 %v7299, 0.0
  %v7364 = vmax.f32 %v7300, 0.0
  %v7365 = vmax.f32 %v7301, 0.0
  %v7366 = vmax.f32 %v7302, 0.0
  %v7367 = vmax.f32 %v7303, 0.0
  %v7368 = vmax.f32 %v7304, 0.0
  %v7369 = vmax.f32 %v7305, 0.0
  %v7370 = vmax.f32 %v7306, 0.0
  %v7371 = vmax.f32 %v7307, 0.0
  %v7372 = vmax.f32 %v7308, 0.0
  %v7373 = vmax.f32 %v7309, 0.0
  %v7374 = vmax.f32 %v7310, 0.0
  %v7375 = vmax.f32 %v7311, 0.0
  %v7376 = vmax.f32 %v7312, 0.0
  %v7377 = vmax.f32 %v7313, 0.0
  %v7378 = vmax.f32 %v7314, 0.0
  %v7379 = vmax.f32 %v7315, 0.0
  %v7380 = vmax.f32 %v7316, 0.0
  %v7381 = vmax.f32 %v7317, 0.0
  %v7382 = vmax.f32 %v7318, 0.0
  %v7383 = vmax.f32 %v7319, 0.0
  %v7384 = vmax.f32 %v7320, 0.0
  %v7385 = vmax.f32 %v7321, 0.0
  %v7386 = vmax.f32 %v7322, 0.0
  %v7387 = vmax.f32 %v7323, 0.0
  %v7388 = vmax.f32 %v7324, 0.0
  %v7389 = vmax.f32 %v7325, 0.0
  %v7390 = vmax.f32 %v7326, 0.0
  %v7391 = vmax.f32 %v7327, 0.0
  %v7392 = vmax.f32 %v7328, 0.0
  %v7393 = vmax.f32 %v7329, 0.0
  %v7394 = vmax.f32 %v7330, 0.0
  %v7395 = vmax.f32 %v7331, 0.0
  %v7396 = vmax.f32 %v7332, 0.0
  %v7397 = vmax.f32 %v7333, 0.0
  %v7398 = vmax.f32 %v7334, 0.0
  %v7399 = vmax.f32 %v7335, 0.0
  %v7400 = vmax.f32 %v7336, 0.0
  %v7401 = vmax.f32 %v7337, 0.0
  %v7402 = vmax.f32 %v7338, 0.0
  %v7403 = vmax.f32 %v7339, 0.0
  %v7404 = vmax.f32 %v7340, 0.0
  %v7405 = vmax.f32 %v7341, 0.0
  %v7406 = vmax.f32 %v7342, 0.0
  %v7407 = vmax.f32 %v7343, 0.0
  %v7408 = vmax.f32 %v7344, 0.0
  %v7409 = vpack.c.bf16 %v7346, %v7345
  %v7410 = vpack.c.bf16 %v7348, %v7347
  %v7411 = vpack.c.bf16 %v7350, %v7349
  %v7412 = vpack.c.bf16 %v7352, %v7351
  %v7413 = vpack.c.bf16 %v7354, %v7353
  %v7414 = vpack.c.bf16 %v7356, %v7355
  %v7415 = vpack.c.bf16 %v7358, %v7357
  %v7416 = vpack.c.bf16 %v7360, %v7359
  %v7417 = vpack.c.bf16 %v7362, %v7361
  %v7418 = vpack.c.bf16 %v7364, %v7363
  %v7419 = vpack.c.bf16 %v7366, %v7365
  %v7420 = vpack.c.bf16 %v7368, %v7367
  %v7421 = vpack.c.bf16 %v7370, %v7369
  %v7422 = vpack.c.bf16 %v7372, %v7371
  %v7423 = vpack.c.bf16 %v7374, %v7373
  %v7424 = vpack.c.bf16 %v7376, %v7375
  %v7425 = vpack.c.bf16 %v7378, %v7377
  %v7426 = vpack.c.bf16 %v7380, %v7379
  %v7427 = vpack.c.bf16 %v7382, %v7381
  %v7428 = vpack.c.bf16 %v7384, %v7383
  %v7429 = vpack.c.bf16 %v7386, %v7385
  %v7430 = vpack.c.bf16 %v7388, %v7387
  %v7431 = vpack.c.bf16 %v7390, %v7389
  %v7432 = vpack.c.bf16 %v7392, %v7391
  %v7433 = vpack.c.bf16 %v7394, %v7393
  %v7434 = vpack.c.bf16 %v7396, %v7395
  %v7435 = vpack.c.bf16 %v7398, %v7397
  %v7436 = vpack.c.bf16 %v7400, %v7399
  %v7437 = vpack.c.bf16 %v7402, %v7401
  %v7438 = vpack.c.bf16 %v7404, %v7403
  %v7439 = vpack.c.bf16 %v7406, %v7405
  %v7440 = vpack.c.bf16 %v7408, %v7407
  %v7441 = vld [vmem:[%s6] sm:$0xf]
  %v7442 = vld [vmem:[%s6 + $0x4] sm:$0xf]
  %v7443 = vld [vmem:[%s6 + $0x8] sm:$0xf]
  %v7444 = vld [vmem:[%s6 + $0xc] sm:$0xf]
  %v7445 = vld [vmem:[%s6 + $0x10] sm:$0xf]
  %v7446 = vld [vmem:[%s6 + $0x14] sm:$0xf]
  %v7447 = vld [vmem:[%s6 + $0x18] sm:$0xf]
  %v7448 = vld [vmem:[%s6 + $0x1c] sm:$0xf]
  %v7449 = vld [vmem:[%s6 + $0x20] sm:$0xf]
  %v7450 = vld [vmem:[%s6 + $0x24] sm:$0xf]
  %v7461 = vunpack.c.l.b16 %v7441
  %v7462 = vunpack.c.l.b16 %v7442
  %v7463 = vunpack.c.l.b16 %v7443
  %v7464 = vunpack.c.l.b16 %v7444
  %v7465 = vunpack.c.l.b16 %v7445
  %v7466 = vunpack.c.l.b16 %v7446
  %v7467 = vunpack.c.l.b16 %v7447
  %v7468 = vunpack.c.l.b16 %v7448
  %v7469 = vunpack.c.l.b16 %v7449
  %v7470 = vunpack.c.l.b16 %v7450
  %v7471 = vpack.c.b16 %v7462, %v7461
  %v7472 = vpack.c.b16 %v7464, %v7463
  %v7473 = vpack.c.b16 %v7466, %v7465
  %v7474 = vpack.c.b16 %v7468, %v7467
  %v7475 = vpack.c.b16 %v7470, %v7469
  %vm7481 = vcmask 654336
  %v7483 = vsel %vm7481, %v7409, 0
  %v7486 = vsel %vm7481, %v7410, 0
  %v7489 = vsel %vm7481, %v7411, 0
  %v7492 = vsel %vm7481, %v7412, 0
  %v7495 = vsel %vm7481, %v7413, 0
  %v7498 = vsel %vm7481, %v7414, 0
  %v7501 = vsel %vm7481, %v7415, 0
  %v7504 = vsel %vm7481, %v7416, 0
  %v7507 = vsel %vm7481, %v7417, 0
  %v7510 = vsel %vm7481, %v7418, 0
  %v7513 = vsel %vm7481, %v7419, 0
  %v7516 = vsel %vm7481, %v7420, 0
  %v7519 = vsel %vm7481, %v7421, 0
  %v7522 = vsel %vm7481, %v7422, 0
  %v7525 = vsel %vm7481, %v7423, 0
  %v7528 = vsel %vm7481, %v7424, 0
  %v7531 = vsel %vm7481, %v7425, 0
  %v7534 = vsel %vm7481, %v7426, 0
  %v7537 = vsel %vm7481, %v7427, 0
  %v7540 = vsel %vm7481, %v7428, 0
  %v7543 = vsel %vm7481, %v7429, 0
  %v7546 = vsel %vm7481, %v7430, 0
  %v7549 = vsel %vm7481, %v7431, 0
  %v7552 = vsel %vm7481, %v7432, 0
  %v7555 = vsel %vm7481, %v7433, 0
  %v7558 = vsel %vm7481, %v7434, 0
  %v7561 = vsel %vm7481, %v7435, 0
  %v7564 = vsel %vm7481, %v7436, 0
  %v7567 = vsel %vm7481, %v7437, 0
  %v7570 = vsel %vm7481, %v7438, 0
  %v7573 = vsel %vm7481, %v7439, 0
  %v7576 = vsel %vm7481, %v7440, 0
  %7578 = vmatprep.subr.bf16.mxu0 0
  %7579 = vmatpush1.bf16.msra.mxu0 %v7471
  %7580 = vmatprep.subr.bf16.mxu0 0
  %7581 = vmatpush1.bf16.msra.mxu0 %v7472
  %7582 = vmatprep.subr.bf16.mxu0 0
  %7583 = vmatpush1.bf16.msra.mxu0 %v7473
  %7584 = vmatprep.subr.bf16.mxu0 0
  %7585 = vmatpush1.bf16.msra.mxu0 %v7474
  %7586 = vmatprep.subr.bf16.mxu0 0
  %7587 = vmatpush1.bf16.msra.mxu0 %v7475
  %7588 = vmatprep.subr.bf16.mxu0 0
  %7589 = vmatpush1.bf16.msra.mxu0 0
  %7590 = vmatprep.subr.bf16.mxu0 0
  %7591 = vmatpush1.bf16.msra.mxu0 0
  %7592 = vmatprep.subr.bf16.mxu0 0
  %7593 = vmatpush1.bf16.msra.mxu0 0
  %7594 = vmatprep.subr.bf16.mxu0 0
  %7595 = vmatpush1.bf16.msra.mxu0 0
  %7596 = vmatprep.subr.bf16.mxu0 0
  %7597 = vmatpush1.bf16.msra.mxu0 0
  %7598 = vmatprep.subr.bf16.mxu0 0
  %7599 = vmatpush1.bf16.msra.mxu0 0
  %7600 = vmatprep.subr.bf16.mxu0 0
  %7601 = vmatpush1.bf16.msra.mxu0 0
  %7602 = vmatprep.subr.bf16.mxu0 0
  %7603 = vmatpush1.bf16.msra.mxu0 0
  %7604 = vmatprep.subr.bf16.mxu0 0
  %7605 = vmatpush1.bf16.msra.mxu0 0
  %7606 = vmatprep.subr.bf16.mxu0 0
  %7607 = vmatpush1.bf16.msra.mxu0 0
  %7608 = vmatprep.subr.bf16.mxu0 0
  %7609 = vmatpush1.bf16.msra.mxu0 0
  %7610 = vmatprep.mubr.bf16.mxu0 0
  %7611 = vmatmul.mubr.bf16.gmra.mrb[0].mxu0 %v7483
  %v7612 = vpop.f32.mrb[0].mxu0
  %v7613 = vadd.f32 0.0, %v7612
  %v7614 = vpop.f32.mrb[0].mxu0
  %v7615 = vpop.f32.mrb[0].mxu0
  %v7616 = vadd.f32 0.0, %v7615
  %v7617 = vpop.f32.mrb[0].mxu0
  %7618 = vmatprep.mubr.bf16.mxu0 0
  %7619 = vmatmul.mubr.bf16.gmra.mrb[0].mxu0 %v7486
  %v7620 = vpop.f32.mrb[0].mxu0
  %v7621 = vadd.f32 0.0, %v7620
  %v7622 = vpop.f32.mrb[0].mxu0
  %v7623 = vpop.f32.mrb[0].mxu0
  %v7624 = vadd.f32 0.0, %v7623
  %v7625 = vpop.f32.mrb[0].mxu0
  %7626 = vmatprep.mubr.bf16.mxu0 0
  %7627 = vmatmul.mubr.bf16.gmra.mrb[0].mxu0 %v7489
  %v7628 = vpop.f32.mrb[0].mxu0
  %v7629 = vadd.f32 0.0, %v7628
  %v7630 = vpop.f32.mrb[0].mxu0
  %v7631 = vpop.f32.mrb[0].mxu0
  %v7632 = vadd.f32 0.0, %v7631
  %v7633 = vpop.f32.mrb[0].mxu0
  %7634 = vmatprep.mubr.bf16.mxu0 0
  %7635 = vmatmul.mubr.bf16.gmra.mrb[0].mxu0 %v7492
  %v7636 = vpop.f32.mrb[0].mxu0
  %v7637 = vadd.f32 0.0, %v7636
  %v7638 = vpop.f32.mrb[0].mxu0
  %v7639 = vpop.f32.mrb[0].mxu0
  %v7640 = vadd.f32 0.0, %v7639
  %v7641 = vpop.f32.mrb[0].mxu0
  %7642 = vmatprep.mubr.bf16.mxu0 0
  %7643 = vmatmul.mubr.bf16.gmra.mrb[0].mxu0 %v7495
  %v7644 = vpop.f32.mrb[0].mxu0
  %v7645 = vadd.f32 0.0, %v7644
  %v7646 = vpop.f32.mrb[0].mxu0
  %v7647 = vpop.f32.mrb[0].mxu0
  %v7648 = vadd.f32 0.0, %v7647
  %v7649 = vpop.f32.mrb[0].mxu0
  %7650 = vmatprep.mubr.bf16.mxu0 0
  %7651 = vmatmul.mubr.bf16.gmra.mrb[0].mxu0 %v7498
  %v7652 = vpop.f32.mrb[0].mxu0
  %v7653 = vadd.f32 0.0, %v7652
  %v7654 = vpop.f32.mrb[0].mxu0
  %v7655 = vpop.f32.mrb[0].mxu0
  %v7656 = vadd.f32 0.0, %v7655
  %v7657 = vpop.f32.mrb[0].mxu0
  %7658 = vmatprep.mubr.bf16.mxu0 0
  %7659 = vmatmul.mubr.bf16.gmra.mrb[0].mxu0 %v7501
  %v7660 = vpop.f32.mrb[0].mxu0
  %v7661 = vadd.f32 0.0, %v7660
  %v7662 = vpop.f32.mrb[0].mxu0
  %v7663 = vpop.f32.mrb[0].mxu0
  %v7664 = vadd.f32 0.0, %v7663
  %v7665 = vpop.f32.mrb[0].mxu0
  %7666 = vmatprep.mubr.bf16.mxu0 0
  %7667 = vmatmul.mubr.bf16.gmra.mrb[0].mxu0 %v7504
  %v7668 = vpop.f32.mrb[0].mxu0
  %v7669 = vadd.f32 0.0, %v7668
  %v7670 = vpop.f32.mrb[0].mxu0
  %v7671 = vpop.f32.mrb[0].mxu0
  %v7672 = vadd.f32 0.0, %v7671
  %v7673 = vpop.f32.mrb[0].mxu0
  %7674 = vmatprep.mubr.bf16.mxu0 0
  %7675 = vmatmul.mubr.bf16.gmra.mrb[0].mxu0 %v7507
  %v7676 = vpop.f32.mrb[0].mxu0
  %v7677 = vadd.f32 0.0, %v7676
  %v7678 = vpop.f32.mrb[0].mxu0
  %v7679 = vpop.f32.mrb[0].mxu0
  %v7680 = vadd.f32 0.0, %v7679
  %v7681 = vpop.f32.mrb[0].mxu0
  %7682 = vmatprep.mubr.bf16.mxu0 0
  %7683 = vmatmul.mubr.bf16.gmra.mrb[0].mxu0 %v7510
  %v7684 = vpop.f32.mrb[0].mxu0
  %v7685 = vadd.f32 0.0, %v7684
  %v7686 = vpop.f32.mrb[0].mxu0
  %v7687 = vpop.f32.mrb[0].mxu0
  %v7688 = vadd.f32 0.0, %v7687
  %v7689 = vpop.f32.mrb[0].mxu0
  %7690 = vmatprep.mubr.bf16.mxu0 0
  %7691 = vmatmul.mubr.bf16.gmra.mrb[0].mxu0 %v7513
  %v7692 = vpop.f32.mrb[0].mxu0
  %v7693 = vadd.f32 0.0, %v7692
  %v7694 = vpop.f32.mrb[0].mxu0
  %v7695 = vpop.f32.mrb[0].mxu0
  %v7696 = vadd.f32 0.0, %v7695
  %v7697 = vpop.f32.mrb[0].mxu0
  %7698 = vmatprep.mubr.bf16.mxu0 0
  %7699 = vmatmul.mubr.bf16.gmra.mrb[0].mxu0 %v7516
  %v7700 = vpop.f32.mrb[0].mxu0
  %v7701 = vadd.f32 0.0, %v7700
  %v7702 = vpop.f32.mrb[0].mxu0
  %v7703 = vpop.f32.mrb[0].mxu0
  %v7704 = vadd.f32 0.0, %v7703
  %v7705 = vpop.f32.mrb[0].mxu0
  %7706 = vmatprep.mubr.bf16.mxu0 0
  %7707 = vmatmul.mubr.bf16.gmra.mrb[0].mxu0 %v7519
  %v7708 = vpop.f32.mrb[0].mxu0
  %v7709 = vadd.f32 0.0, %v7708
  %v7710 = vpop.f32.mrb[0].mxu0
  %v7711 = vpop.f32.mrb[0].mxu0
  %v7712 = vadd.f32 0.0, %v7711
  %v7713 = vpop.f32.mrb[0].mxu0
  %7714 = vmatprep.mubr.bf16.mxu0 0
  %7715 = vmatmul.mubr.bf16.gmra.mrb[0].mxu0 %v7522
  %v7716 = vpop.f32.mrb[0].mxu0
  %v7717 = vadd.f32 0.0, %v7716
  %v7718 = vpop.f32.mrb[0].mxu0
  %v7719 = vpop.f32.mrb[0].mxu0
  %v7720 = vadd.f32 0.0, %v7719
  %v7721 = vpop.f32.mrb[0].mxu0
  %7722 = vmatprep.mubr.bf16.mxu0 0
  %7723 = vmatmul.mubr.bf16.gmra.mrb[0].mxu0 %v7525
  %v7724 = vpop.f32.mrb[0].mxu0
  %v7725 = vadd.f32 0.0, %v7724
  %v7726 = vpop.f32.mrb[0].mxu0
  %v7727 = vpop.f32.mrb[0].mxu0
  %v7728 = vadd.f32 0.0, %v7727
  %v7729 = vpop.f32.mrb[0].mxu0
  %7730 = vmatprep.mubr.bf16.mxu0 0
  %7731 = vmatmul.mubr.bf16.gmra.mrb[0].mxu0 %v7528
  %v7732 = vpop.f32.mrb[0].mxu0
  %v7733 = vadd.f32 0.0, %v7732
  %v7734 = vpop.f32.mrb[0].mxu0
  %v7735 = vpop.f32.mrb[0].mxu0
  %v7736 = vadd.f32 0.0, %v7735
  %v7737 = vpop.f32.mrb[0].mxu0
  %7738 = vmatprep.mubr.bf16.mxu0 0
  %7739 = vmatmul.mubr.bf16.gmra.mrb[0].mxu0 %v7531
  %v7740 = vpop.f32.mrb[0].mxu0
  %v7741 = vadd.f32 0.0, %v7740
  %v7742 = vpop.f32.mrb[0].mxu0
  %v7743 = vpop.f32.mrb[0].mxu0
  %v7744 = vadd.f32 0.0, %v7743
  %v7745 = vpop.f32.mrb[0].mxu0
  %7746 = vmatprep.mubr.bf16.mxu0 0
  %7747 = vmatmul.mubr.bf16.gmra.mrb[0].mxu0 %v7534
  %v7748 = vpop.f32.mrb[0].mxu0
  %v7749 = vadd.f32 0.0, %v7748
  %v7750 = vpop.f32.mrb[0].mxu0
  %v7751 = vpop.f32.mrb[0].mxu0
  %v7752 = vadd.f32 0.0, %v7751
  %v7753 = vpop.f32.mrb[0].mxu0
  %7754 = vmatprep.mubr.bf16.mxu0 0
  %7755 = vmatmul.mubr.bf16.gmra.mrb[0].mxu0 %v7537
  %v7756 = vpop.f32.mrb[0].mxu0
  %v7757 = vadd.f32 0.0, %v7756
  %v7758 = vpop.f32.mrb[0].mxu0
  %v7759 = vpop.f32.mrb[0].mxu0
  %v7760 = vadd.f32 0.0, %v7759
  %v7761 = vpop.f32.mrb[0].mxu0
  %7762 = vmatprep.mubr.bf16.mxu0 0
  %7763 = vmatmul.mubr.bf16.gmra.mrb[0].mxu0 %v7540
  %v7764 = vpop.f32.mrb[0].mxu0
  %v7765 = vadd.f32 0.0, %v7764
  %v7766 = vpop.f32.mrb[0].mxu0
  %v7767 = vpop.f32.mrb[0].mxu0
  %v7768 = vadd.f32 0.0, %v7767
  %v7769 = vpop.f32.mrb[0].mxu0
  %7770 = vmatprep.mubr.bf16.mxu0 0
  %7771 = vmatmul.mubr.bf16.gmra.mrb[0].mxu0 %v7543
  %v7772 = vpop.f32.mrb[0].mxu0
  %v7773 = vadd.f32 0.0, %v7772
  %v7774 = vpop.f32.mrb[0].mxu0
  %v7775 = vpop.f32.mrb[0].mxu0
  %v7776 = vadd.f32 0.0, %v7775
  %v7777 = vpop.f32.mrb[0].mxu0
  %7778 = vmatprep.mubr.bf16.mxu0 0
  %7779 = vmatmul.mubr.bf16.gmra.mrb[0].mxu0 %v7546
  %v7780 = vpop.f32.mrb[0].mxu0
  %v7781 = vadd.f32 0.0, %v7780
  %v7782 = vpop.f32.mrb[0].mxu0
  %v7783 = vpop.f32.mrb[0].mxu0
  %v7784 = vadd.f32 0.0, %v7783
  %v7785 = vpop.f32.mrb[0].mxu0
  %7786 = vmatprep.mubr.bf16.mxu0 0
  %7787 = vmatmul.mubr.bf16.gmra.mrb[0].mxu0 %v7549
  %v7788 = vpop.f32.mrb[0].mxu0
  %v7789 = vadd.f32 0.0, %v7788
  %v7790 = vpop.f32.mrb[0].mxu0
  %v7791 = vpop.f32.mrb[0].mxu0
  %v7792 = vadd.f32 0.0, %v7791
  %v7793 = vpop.f32.mrb[0].mxu0
  %7794 = vmatprep.mubr.bf16.mxu0 0
  %7795 = vmatmul.mubr.bf16.gmra.mrb[0].mxu0 %v7552
  %v7796 = vpop.f32.mrb[0].mxu0
  %v7797 = vadd.f32 0.0, %v7796
  %v7798 = vpop.f32.mrb[0].mxu0
  %v7799 = vpop.f32.mrb[0].mxu0
  %v7800 = vadd.f32 0.0, %v7799
  %v7801 = vpop.f32.mrb[0].mxu0
  %7802 = vmatprep.mubr.bf16.mxu0 0
  %7803 = vmatmul.mubr.bf16.gmra.mrb[0].mxu0 %v7555
  %v7804 = vpop.f32.mrb[0].mxu0
  %v7805 = vadd.f32 0.0, %v7804
  %v7806 = vpop.f32.mrb[0].mxu0
  %v7807 = vpop.f32.mrb[0].mxu0
  %v7808 = vadd.f32 0.0, %v7807
  %v7809 = vpop.f32.mrb[0].mxu0
  %7810 = vmatprep.mubr.bf16.mxu0 0
  %7811 = vmatmul.mubr.bf16.gmra.mrb[0].mxu0 %v7558
  %v7812 = vpop.f32.mrb[0].mxu0
  %v7813 = vadd.f32 0.0, %v7812
  %v7814 = vpop.f32.mrb[0].mxu0
  %v7815 = vpop.f32.mrb[0].mxu0
  %v7816 = vadd.f32 0.0, %v7815
  %v7817 = vpop.f32.mrb[0].mxu0
  %7818 = vmatprep.mubr.bf16.mxu0 0
  %7819 = vmatmul.mubr.bf16.gmra.mrb[0].mxu0 %v7561
  %v7820 = vpop.f32.mrb[0].mxu0
  %v7821 = vadd.f32 0.0, %v7820
  %v7822 = vpop.f32.mrb[0].mxu0
  %v7823 = vpop.f32.mrb[0].mxu0
  %v7824 = vadd.f32 0.0, %v7823
  %v7825 = vpop.f32.mrb[0].mxu0
  %7826 = vmatprep.mubr.bf16.mxu0 0
  %7827 = vmatmul.mubr.bf16.gmra.mrb[0].mxu0 %v7564
  %v7828 = vpop.f32.mrb[0].mxu0
  %v7829 = vadd.f32 0.0, %v7828
  %v7830 = vpop.f32.mrb[0].mxu0
  %v7831 = vpop.f32.mrb[0].mxu0
  %v7832 = vadd.f32 0.0, %v7831
  %v7833 = vpop.f32.mrb[0].mxu0
  %7834 = vmatprep.mubr.bf16.mxu0 0
  %7835 = vmatmul.mubr.bf16.gmra.mrb[0].mxu0 %v7567
  %v7836 = vpop.f32.mrb[0].mxu0
  %v7837 = vadd.f32 0.0, %v7836
  %v7838 = vpop.f32.mrb[0].mxu0
  %v7839 = vpop.f32.mrb[0].mxu0
  %v7840 = vadd.f32 0.0, %v7839
  %v7841 = vpop.f32.mrb[0].mxu0
  %7842 = vmatprep.mubr.bf16.mxu0 0
  %7843 = vmatmul.mubr.bf16.gmra.mrb[0].mxu0 %v7570
  %v7844 = vpop.f32.mrb[0].mxu0
  %v7845 = vadd.f32 0.0, %v7844
  %v7846 = vpop.f32.mrb[0].mxu0
  %v7847 = vpop.f32.mrb[0].mxu0
  %v7848 = vadd.f32 0.0, %v7847
  %v7849 = vpop.f32.mrb[0].mxu0
  %7850 = vmatprep.mubr.bf16.mxu0 0
  %7851 = vmatmul.mubr.bf16.gmra.mrb[0].mxu0 %v7573
  %v7852 = vpop.f32.mrb[0].mxu0
  %v7853 = vadd.f32 0.0, %v7852
  %v7854 = vpop.f32.mrb[0].mxu0
  %v7855 = vpop.f32.mrb[0].mxu0
  %v7856 = vadd.f32 0.0, %v7855
  %v7857 = vpop.f32.mrb[0].mxu0
  %7858 = vmatprep.mubr.bf16.mxu0 0
  %7859 = vmatmul.mubr.bf16.gmra.mrb[0].mxu0 %v7576
  %v7860 = vpop.f32.mrb[0].mxu0
  %v7861 = vadd.f32 0.0, %v7860
  %v7862 = vpop.f32.mrb[0].mxu0
  %v7863 = vpop.f32.mrb[0].mxu0
  %v7864 = vadd.f32 0.0, %v7863
  %v7865 = vpop.f32.mrb[0].mxu0
  %7866 = vdwg.mxu0
  %s7867 = scalar_lea.vmem %s6, 40
  %v7868 = vld [vmem:[%s7867] sm:$0xf]
  %v7869 = vld [vmem:[%s7867 + $0x4] sm:$0xf]
  %v7870 = vld [vmem:[%s7867 + $0x8] sm:$0xf]
  %v7871 = vld [vmem:[%s7867 + $0xc] sm:$0xf]
  %v7872 = vld [vmem:[%s7867 + $0x10] sm:$0xf]
  %v7873 = vld [vmem:[%s7867 + $0x14] sm:$0xf]
  %v7874 = vld [vmem:[%s7867 + $0x18] sm:$0xf]
  %v7875 = vld [vmem:[%s7867 + $0x1c] sm:$0xf]
  %v7876 = vld [vmem:[%s7867 + $0x20] sm:$0xf]
  %v7877 = vld [vmem:[%s7867 + $0x24] sm:$0xf]
  %v7888 = vunpack.c.l.b16 %v7868
  %v7889 = vunpack.c.l.b16 %v7869
  %v7890 = vunpack.c.l.b16 %v7870
  %v7891 = vunpack.c.l.b16 %v7871
  %v7892 = vunpack.c.l.b16 %v7872
  %v7893 = vunpack.c.l.b16 %v7873
  %v7894 = vunpack.c.l.b16 %v7874
  %v7895 = vunpack.c.l.b16 %v7875
  %v7896 = vunpack.c.l.b16 %v7876
  %v7897 = vunpack.c.l.b16 %v7877
  %v7898 = vpack.c.b16 %v7889, %v7888
  %v7899 = vpack.c.b16 %v7891, %v7890
  %v7900 = vpack.c.b16 %v7893, %v7892
  %v7901 = vpack.c.b16 %v7895, %v7894
  %v7902 = vpack.c.b16 %v7897, %v7896
  %7908 = vmatprep.subr.bf16.mxu0 0
  %7909 = vmatpush1.bf16.msra.mxu0 %v7898
  %7910 = vmatprep.subr.bf16.mxu0 0
  %7911 = vmatpush1.bf16.msra.mxu0 %v7899
  %7912 = vmatprep.subr.bf16.mxu0 0
  %7913 = vmatpush1.bf16.msra.mxu0 %v7900
  %7914 = vmatprep.subr.bf16.mxu0 0
  %7915 = vmatpush1.bf16.msra.mxu0 %v7901
  %7916 = vmatprep.subr.bf16.mxu0 0
  %7917 = vmatpush1.bf16.msra.mxu0 %v7902
  %7918 = vmatprep.subr.bf16.mxu0 0
  %7919 = vmatpush1.bf16.msra.mxu0 0
  %7920 = vmatprep.subr.bf16.mxu0 0
  %7921 = vmatpush1.bf16.msra.mxu0 0
  %7922 = vmatprep.subr.bf16.mxu0 0
  %7923 = vmatpush1.bf16.msra.mxu0 0
  %7924 = vmatprep.subr.bf16.mxu0 0
  %7925 = vmatpush1.bf16.msra.mxu0 0
  %7926 = vmatprep.subr.bf16.mxu0 0
  %7927 = vmatpush1.bf16.msra.mxu0 0
  %7928 = vmatprep.subr.bf16.mxu0 0
  %7929 = vmatpush1.bf16.msra.mxu0 0
  %7930 = vmatprep.subr.bf16.mxu0 0
  %7931 = vmatpush1.bf16.msra.mxu0 0
  %7932 = vmatprep.subr.bf16.mxu0 0
  %7933 = vmatpush1.bf16.msra.mxu0 0
  %7934 = vmatprep.subr.bf16.mxu0 0
  %7935 = vmatpush1.bf16.msra.mxu0 0
  %7936 = vmatprep.subr.bf16.mxu0 0
  %7937 = vmatpush1.bf16.msra.mxu0 0
  %7938 = vmatprep.subr.bf16.mxu0 0
  %7939 = vmatpush1.bf16.msra.mxu0 0
  %7940 = vmatprep.mubr.bf16.mxu0 0
  %7941 = vmatmul.mubr.bf16.gmra.mrb[0].mxu0 %v7483
  %v7942 = vpop.f32.mrb[0].mxu0
  %v7943 = vadd.f32 0.0, %v7942
  %v7944 = vpop.f32.mrb[0].mxu0
  %v7945 = vpop.f32.mrb[0].mxu0
  %v7946 = vadd.f32 0.0, %v7945
  %v7947 = vpop.f32.mrb[0].mxu0
  %7948 = vmatprep.mubr.bf16.mxu0 0
  %7949 = vmatmul.mubr.bf16.gmra.mrb[0].mxu0 %v7486
  %v7950 = vpop.f32.mrb[0].mxu0
  %v7951 = vadd.f32 0.0, %v7950
  %v7952 = vpop.f32.mrb[0].mxu0
  %v7953 = vpop.f32.mrb[0].mxu0
  %v7954 = vadd.f32 0.0, %v7953
  %v7955 = vpop.f32.mrb[0].mxu0
  %7956 = vmatprep.mubr.bf16.mxu0 0
  %7957 = vmatmul.mubr.bf16.gmra.mrb[0].mxu0 %v7489
  %v7958 = vpop.f32.mrb[0].mxu0
  %v7959 = vadd.f32 0.0, %v7958
  %v7960 = vpop.f32.mrb[0].mxu0
  %v7961 = vpop.f32.mrb[0].mxu0
  %v7962 = vadd.f32 0.0, %v7961
  %v7963 = vpop.f32.mrb[0].mxu0
  %7964 = vmatprep.mubr.bf16.mxu0 0
  %7965 = vmatmul.mubr.bf16.gmra.mrb[0].mxu0 %v7492
  %v7966 = vpop.f32.mrb[0].mxu0
  %v7967 = vadd.f32 0.0, %v7966
  %v7968 = vpop.f32.mrb[0].mxu0
  %v7969 = vpop.f32.mrb[0].mxu0
  %v7970 = vadd.f32 0.0, %v7969
  %v7971 = vpop.f32.mrb[0].mxu0
  %7972 = vmatprep.mubr.bf16.mxu0 0
  %7973 = vmatmul.mubr.bf16.gmra.mrb[0].mxu0 %v7495
  %v7974 = vpop.f32.mrb[0].mxu0
  %v7975 = vadd.f32 0.0, %v7974
  %v7976 = vpop.f32.mrb[0].mxu0
  %v7977 = vpop.f32.mrb[0].mxu0
  %v7978 = vadd.f32 0.0, %v7977
  %v7979 = vpop.f32.mrb[0].mxu0
  %7980 = vmatprep.mubr.bf16.mxu0 0
  %7981 = vmatmul.mubr.bf16.gmra.mrb[0].mxu0 %v7498
  %v7982 = vpop.f32.mrb[0].mxu0
  %v7983 = vadd.f32 0.0, %v7982
  %v7984 = vpop.f32.mrb[0].mxu0
  %v7985 = vpop.f32.mrb[0].mxu0
  %v7986 = vadd.f32 0.0, %v7985
  %v7987 = vpop.f32.mrb[0].mxu0
  %7988 = vmatprep.mubr.bf16.mxu0 0
  %7989 = vmatmul.mubr.bf16.gmra.mrb[0].mxu0 %v7501
  %v7990 = vpop.f32.mrb[0].mxu0
  %v7991 = vadd.f32 0.0, %v7990
  %v7992 = vpop.f32.mrb[0].mxu0
  %v7993 = vpop.f32.mrb[0].mxu0
  %v7994 = vadd.f32 0.0, %v7993
  %v7995 = vpop.f32.mrb[0].mxu0
  %7996 = vmatprep.mubr.bf16.mxu0 0
  %7997 = vmatmul.mubr.bf16.gmra.mrb[0].mxu0 %v7504
  %v7998 = vpop.f32.mrb[0].mxu0
  %v7999 = vadd.f32 0.0, %v7998
  %v8000 = vpop.f32.mrb[0].mxu0
  %v8001 = vpop.f32.mrb[0].mxu0
  %v8002 = vadd.f32 0.0, %v8001
  %v8003 = vpop.f32.mrb[0].mxu0
  %8004 = vmatprep.mubr.bf16.mxu0 0
  %8005 = vmatmul.mubr.bf16.gmra.mrb[0].mxu0 %v7507
  %v8006 = vpop.f32.mrb[0].mxu0
  %v8007 = vadd.f32 0.0, %v8006
  %v8008 = vpop.f32.mrb[0].mxu0
  %v8009 = vpop.f32.mrb[0].mxu0
  %v8010 = vadd.f32 0.0, %v8009
  %v8011 = vpop.f32.mrb[0].mxu0
  %8012 = vmatprep.mubr.bf16.mxu0 0
  %8013 = vmatmul.mubr.bf16.gmra.mrb[0].mxu0 %v7510
  %v8014 = vpop.f32.mrb[0].mxu0
  %v8015 = vadd.f32 0.0, %v8014
  %v8016 = vpop.f32.mrb[0].mxu0
  %v8017 = vpop.f32.mrb[0].mxu0
  %v8018 = vadd.f32 0.0, %v8017
  %v8019 = vpop.f32.mrb[0].mxu0
  %8020 = vmatprep.mubr.bf16.mxu0 0
  %8021 = vmatmul.mubr.bf16.gmra.mrb[0].mxu0 %v7513
  %v8022 = vpop.f32.mrb[0].mxu0
  %v8023 = vadd.f32 0.0, %v8022
  %v8024 = vpop.f32.mrb[0].mxu0
  %v8025 = vpop.f32.mrb[0].mxu0
  %v8026 = vadd.f32 0.0, %v8025
  %v8027 = vpop.f32.mrb[0].mxu0
  %8028 = vmatprep.mubr.bf16.mxu0 0
  %8029 = vmatmul.mubr.bf16.gmra.mrb[0].mxu0 %v7516
  %v8030 = vpop.f32.mrb[0].mxu0
  %v8031 = vadd.f32 0.0, %v8030
  %v8032 = vpop.f32.mrb[0].mxu0
  %v8033 = vpop.f32.mrb[0].mxu0
  %v8034 = vadd.f32 0.0, %v8033
  %v8035 = vpop.f32.mrb[0].mxu0
  %8036 = vmatprep.mubr.bf16.mxu0 0
  %8037 = vmatmul.mubr.bf16.gmra.mrb[0].mxu0 %v7519
  %v8038 = vpop.f32.mrb[0].mxu0
  %v8039 = vadd.f32 0.0, %v8038
  %v8040 = vpop.f32.mrb[0].mxu0
  %v8041 = vpop.f32.mrb[0].mxu0
  %v8042 = vadd.f32 0.0, %v8041
  %v8043 = vpop.f32.mrb[0].mxu0
  %8044 = vmatprep.mubr.bf16.mxu0 0
  %8045 = vmatmul.mubr.bf16.gmra.mrb[0].mxu0 %v7522
  %v8046 = vpop.f32.mrb[0].mxu0
  %v8047 = vadd.f32 0.0, %v8046
  %v8048 = vpop.f32.mrb[0].mxu0
  %v8049 = vpop.f32.mrb[0].mxu0
  %v8050 = vadd.f32 0.0, %v8049
  %v8051 = vpop.f32.mrb[0].mxu0
  %8052 = vmatprep.mubr.bf16.mxu0 0
  %8053 = vmatmul.mubr.bf16.gmra.mrb[0].mxu0 %v7525
  %v8054 = vpop.f32.mrb[0].mxu0
  %v8055 = vadd.f32 0.0, %v8054
  %v8056 = vpop.f32.mrb[0].mxu0
  %v8057 = vpop.f32.mrb[0].mxu0
  %v8058 = vadd.f32 0.0, %v8057
  %v8059 = vpop.f32.mrb[0].mxu0
  %8060 = vmatprep.mubr.bf16.mxu0 0
  %8061 = vmatmul.mubr.bf16.gmra.mrb[0].mxu0 %v7528
  %v8062 = vpop.f32.mrb[0].mxu0
  %v8063 = vadd.f32 0.0, %v8062
  %v8064 = vpop.f32.mrb[0].mxu0
  %v8065 = vpop.f32.mrb[0].mxu0
  %v8066 = vadd.f32 0.0, %v8065
  %v8067 = vpop.f32.mrb[0].mxu0
  %8068 = vmatprep.mubr.bf16.mxu0 0
  %8069 = vmatmul.mubr.bf16.gmra.mrb[0].mxu0 %v7531
  %v8070 = vpop.f32.mrb[0].mxu0
  %v8071 = vadd.f32 0.0, %v8070
  %v8072 = vpop.f32.mrb[0].mxu0
  %v8073 = vpop.f32.mrb[0].mxu0
  %v8074 = vadd.f32 0.0, %v8073
  %v8075 = vpop.f32.mrb[0].mxu0
  %8076 = vmatprep.mubr.bf16.mxu0 0
  %8077 = vmatmul.mubr.bf16.gmra.mrb[0].mxu0 %v7534
  %v8078 = vpop.f32.mrb[0].mxu0
  %v8079 = vadd.f32 0.0, %v8078
  %v8080 = vpop.f32.mrb[0].mxu0
  %v8081 = vpop.f32.mrb[0].mxu0
  %v8082 = vadd.f32 0.0, %v8081
  %v8083 = vpop.f32.mrb[0].mxu0
  %8084 = vmatprep.mubr.bf16.mxu0 0
  %8085 = vmatmul.mubr.bf16.gmra.mrb[0].mxu0 %v7537
  %v8086 = vpop.f32.mrb[0].mxu0
  %v8087 = vadd.f32 0.0, %v8086
  %v8088 = vpop.f32.mrb[0].mxu0
  %v8089 = vpop.f32.mrb[0].mxu0
  %v8090 = vadd.f32 0.0, %v8089
  %v8091 = vpop.f32.mrb[0].mxu0
  %8092 = vmatprep.mubr.bf16.mxu0 0
  %8093 = vmatmul.mubr.bf16.gmra.mrb[0].mxu0 %v7540
  %v8094 = vpop.f32.mrb[0].mxu0
  %v8095 = vadd.f32 0.0, %v8094
  %v8096 = vpop.f32.mrb[0].mxu0
  %v8097 = vpop.f32.mrb[0].mxu0
  %v8098 = vadd.f32 0.0, %v8097
  %v8099 = vpop.f32.mrb[0].mxu0
  %8100 = vmatprep.mubr.bf16.mxu0 0
  %8101 = vmatmul.mubr.bf16.gmra.mrb[0].mxu0 %v7543
  %v8102 = vpop.f32.mrb[0].mxu0
  %v8103 = vadd.f32 0.0, %v8102
  %v8104 = vpop.f32.mrb[0].mxu0
  %v8105 = vpop.f32.mrb[0].mxu0
  %v8106 = vadd.f32 0.0, %v8105
  %v8107 = vpop.f32.mrb[0].mxu0
  %8108 = vmatprep.mubr.bf16.mxu0 0
  %8109 = vmatmul.mubr.bf16.gmra.mrb[0].mxu0 %v7546
  %v8110 = vpop.f32.mrb[0].mxu0
  %v8111 = vadd.f32 0.0, %v8110
  %v8112 = vpop.f32.mrb[0].mxu0
  %v8113 = vpop.f32.mrb[0].mxu0
  %v8114 = vadd.f32 0.0, %v8113
  %v8115 = vpop.f32.mrb[0].mxu0
  %8116 = vmatprep.mubr.bf16.mxu0 0
  %8117 = vmatmul.mubr.bf16.gmra.mrb[0].mxu0 %v7549
  %v8118 = vpop.f32.mrb[0].mxu0
  %v8119 = vadd.f32 0.0, %v8118
  %v8120 = vpop.f32.mrb[0].mxu0
  %v8121 = vpop.f32.mrb[0].mxu0
  %v8122 = vadd.f32 0.0, %v8121
  %v8123 = vpop.f32.mrb[0].mxu0
  %8124 = vmatprep.mubr.bf16.mxu0 0
  %8125 = vmatmul.mubr.bf16.gmra.mrb[0].mxu0 %v7552
  %v8126 = vpop.f32.mrb[0].mxu0
  %v8127 = vadd.f32 0.0, %v8126
  %v8128 = vpop.f32.mrb[0].mxu0
  %v8129 = vpop.f32.mrb[0].mxu0
  %v8130 = vadd.f32 0.0, %v8129
  %v8131 = vpop.f32.mrb[0].mxu0
  %8132 = vmatprep.mubr.bf16.mxu0 0
  %8133 = vmatmul.mubr.bf16.gmra.mrb[0].mxu0 %v7555
  %v8134 = vpop.f32.mrb[0].mxu0
  %v8135 = vadd.f32 0.0, %v8134
  %v8136 = vpop.f32.mrb[0].mxu0
  %v8137 = vpop.f32.mrb[0].mxu0
  %v8138 = vadd.f32 0.0, %v8137
  %v8139 = vpop.f32.mrb[0].mxu0
  %8140 = vmatprep.mubr.bf16.mxu0 0
  %8141 = vmatmul.mubr.bf16.gmra.mrb[0].mxu0 %v7558
  %v8142 = vpop.f32.mrb[0].mxu0
  %v8143 = vadd.f32 0.0, %v8142
  %v8144 = vpop.f32.mrb[0].mxu0
  %v8145 = vpop.f32.mrb[0].mxu0
  %v8146 = vadd.f32 0.0, %v8145
  %v8147 = vpop.f32.mrb[0].mxu0
  %8148 = vmatprep.mubr.bf16.mxu0 0
  %8149 = vmatmul.mubr.bf16.gmra.mrb[0].mxu0 %v7561
  %v8150 = vpop.f32.mrb[0].mxu0
  %v8151 = vadd.f32 0.0, %v8150
  %v8152 = vpop.f32.mrb[0].mxu0
  %v8153 = vpop.f32.mrb[0].mxu0
  %v8154 = vadd.f32 0.0, %v8153
  %v8155 = vpop.f32.mrb[0].mxu0
  %8156 = vmatprep.mubr.bf16.mxu0 0
  %8157 = vmatmul.mubr.bf16.gmra.mrb[0].mxu0 %v7564
  %v8158 = vpop.f32.mrb[0].mxu0
  %v8159 = vadd.f32 0.0, %v8158
  %v8160 = vpop.f32.mrb[0].mxu0
  %v8161 = vpop.f32.mrb[0].mxu0
  %v8162 = vadd.f32 0.0, %v8161
  %v8163 = vpop.f32.mrb[0].mxu0
  %8164 = vmatprep.mubr.bf16.mxu0 0
  %8165 = vmatmul.mubr.bf16.gmra.mrb[0].mxu0 %v7567
  %v8166 = vpop.f32.mrb[0].mxu0
  %v8167 = vadd.f32 0.0, %v8166
  %v8168 = vpop.f32.mrb[0].mxu0
  %v8169 = vpop.f32.mrb[0].mxu0
  %v8170 = vadd.f32 0.0, %v8169
  %v8171 = vpop.f32.mrb[0].mxu0
  %8172 = vmatprep.mubr.bf16.mxu0 0
  %8173 = vmatmul.mubr.bf16.gmra.mrb[0].mxu0 %v7570
  %v8174 = vpop.f32.mrb[0].mxu0
  %v8175 = vadd.f32 0.0, %v8174
  %v8176 = vpop.f32.mrb[0].mxu0
  %v8177 = vpop.f32.mrb[0].mxu0
  %v8178 = vadd.f32 0.0, %v8177
  %v8179 = vpop.f32.mrb[0].mxu0
  %8180 = vmatprep.mubr.bf16.mxu0 0
  %8181 = vmatmul.mubr.bf16.gmra.mrb[0].mxu0 %v7573
  %v8182 = vpop.f32.mrb[0].mxu0
  %v8183 = vadd.f32 0.0, %v8182
  %v8184 = vpop.f32.mrb[0].mxu0
  %v8185 = vpop.f32.mrb[0].mxu0
  %v8186 = vadd.f32 0.0, %v8185
  %v8187 = vpop.f32.mrb[0].mxu0
  %8188 = vmatprep.mubr.bf16.mxu0 0
  %8189 = vmatmul.mubr.bf16.gmra.mrb[0].mxu0 %v7576
  %v8190 = vpop.f32.mrb[0].mxu0
  %v8191 = vadd.f32 0.0, %v8190
  %v8192 = vpop.f32.mrb[0].mxu0
  %v8193 = vpop.f32.mrb[0].mxu0
  %v8194 = vadd.f32 0.0, %v8193
  %v8195 = vpop.f32.mrb[0].mxu0
  %8196 = vdwg.mxu0
  %v8197 = vmax.f32 %v7613, %v7943
  %v8198 = vmax.f32 %v7616, %v7946
  %v8199 = vmax.f32 %v7621, %v7951
  %v8200 = vmax.f32 %v7624, %v7954
  %v8201 = vmax.f32 %v7629, %v7959
  %v8202 = vmax.f32 %v7632, %v7962
  %v8203 = vmax.f32 %v7637, %v7967
  %v8204 = vmax.f32 %v7640, %v7970
  %v8205 = vmax.f32 %v7645, %v7975
  %v8206 = vmax.f32 %v7648, %v7978
  %v8207 = vmax.f32 %v7653, %v7983
  %v8208 = vmax.f32 %v7656, %v7986
  %v8209 = vmax.f32 %v7661, %v7991
  %v8210 = vmax.f32 %v7664, %v7994
  %v8211 = vmax.f32 %v7669, %v7999
  %v8212 = vmax.f32 %v7672, %v8002
  %v8213 = vmax.f32 %v7677, %v8007
  %v8214 = vmax.f32 %v7680, %v8010
  %v8215 = vmax.f32 %v7685, %v8015
  %v8216 = vmax.f32 %v7688, %v8018
  %v8217 = vmax.f32 %v7693, %v8023
  %v8218 = vmax.f32 %v7696, %v8026
  %v8219 = vmax.f32 %v7701, %v8031
  %v8220 = vmax.f32 %v7704, %v8034
  %v8221 = vmax.f32 %v7709, %v8039
  %v8222 = vmax.f32 %v7712, %v8042
  %v8223 = vmax.f32 %v7717, %v8047
  %v8224 = vmax.f32 %v7720, %v8050
  %v8225 = vmax.f32 %v7725, %v8055
  %v8226 = vmax.f32 %v7728, %v8058
  %v8227 = vmax.f32 %v7733, %v8063
  %v8228 = vmax.f32 %v7736, %v8066
  %v8229 = vmax.f32 %v7741, %v8071
  %v8230 = vmax.f32 %v7744, %v8074
  %v8231 = vmax.f32 %v7749, %v8079
  %v8232 = vmax.f32 %v7752, %v8082
  %v8233 = vmax.f32 %v7757, %v8087
  %v8234 = vmax.f32 %v7760, %v8090
  %v8235 = vmax.f32 %v7765, %v8095
  %v8236 = vmax.f32 %v7768, %v8098
  %v8237 = vmax.f32 %v7773, %v8103
  %v8238 = vmax.f32 %v7776, %v8106
  %v8239 = vmax.f32 %v7781, %v8111
  %v8240 = vmax.f32 %v7784, %v8114
  %v8241 = vmax.f32 %v7789, %v8119
  %v8242 = vmax.f32 %v7792, %v8122
  %v8243 = vmax.f32 %v7797, %v8127
  %v8244 = vmax.f32 %v7800, %v8130
  %v8245 = vmax.f32 %v7805, %v8135
  %v8246 = vmax.f32 %v7808, %v8138
  %v8247 = vmax.f32 %v7813, %v8143
  %v8248 = vmax.f32 %v7816, %v8146
  %v8249 = vmax.f32 %v7821, %v8151
  %v8250 = vmax.f32 %v7824, %v8154
  %v8251 = vmax.f32 %v7829, %v8159
  %v8252 = vmax.f32 %v7832, %v8162
  %v8253 = vmax.f32 %v7837, %v8167
  %v8254 = vmax.f32 %v7840, %v8170
  %v8255 = vmax.f32 %v7845, %v8175
  %v8256 = vmax.f32 %v7848, %v8178
  %v8257 = vmax.f32 %v7853, %v8183
  %v8258 = vmax.f32 %v7856, %v8186
  %v8259 = vmax.f32 %v7861, %v8191
  %v8260 = vmax.f32 %v7864, %v8194
  %vm8261 = vcmask 392192
  %8262 = vst.msk [vmem:[#allocation3] sm:$0xff] %vm8261, %v8197
  %8263 = vst.msk [vmem:[#allocation3 + $0x8] sm:$0xff] %vm8261, %v8198
  %8264 = vst.msk [vmem:[#allocation3 + $0x10] sm:$0xff] %vm8261, %v8199
  %8265 = vst.msk [vmem:[#allocation3 + $0x18] sm:$0xff] %vm8261, %v8200
  %8266 = vst.msk [vmem:[#allocation3 + $0x20] sm:$0xff] %vm8261, %v8201
  %8267 = vst.msk [vmem:[#allocation3 + $0x28] sm:$0xff] %vm8261, %v8202
  %8268 = vst.msk [vmem:[#allocation3 + $0x30] sm:$0xff] %vm8261, %v8203
  %8269 = vst.msk [vmem:[#allocation3 + $0x38] sm:$0xff] %vm8261, %v8204
  %8270 = vst.msk [vmem:[#allocation3 + $0x40] sm:$0xff] %vm8261, %v8205
  %8271 = vst.msk [vmem:[#allocation3 + $0x48] sm:$0xff] %vm8261, %v8206
  %8272 = vst.msk [vmem:[#allocation3 + $0x50] sm:$0xff] %vm8261, %v8207
  %8273 = vst.msk [vmem:[#allocation3 + $0x58] sm:$0xff] %vm8261, %v8208
  %8274 = vst.msk [vmem:[#allocation3 + $0x60] sm:$0xff] %vm8261, %v8209
  %8275 = vst.msk [vmem:[#allocation3 + $0x68] sm:$0xff] %vm8261, %v8210
  %8276 = vst.msk [vmem:[#allocation3 + $0x70] sm:$0xff] %vm8261, %v8211
  %8277 = vst.msk [vmem:[#allocation3 + $0x78] sm:$0xff] %vm8261, %v8212
  %8278 = vst.msk [vmem:[#allocation3 + $0x80] sm:$0xff] %vm8261, %v8213
  %8279 = vst.msk [vmem:[#allocation3 + $0x88] sm:$0xff] %vm8261, %v8214
  %8280 = vst.msk [vmem:[#allocation3 + $0x90] sm:$0xff] %vm8261, %v8215
  %8281 = vst.msk [vmem:[#allocation3 + $0x98] sm:$0xff] %vm8261, %v8216
  %8282 = vst.msk [vmem:[#allocation3 + $0xa0] sm:$0xff] %vm8261, %v8217
  %8283 = vst.msk [vmem:[#allocation3 + $0xa8] sm:$0xff] %vm8261, %v8218
  %8284 = vst.msk [vmem:[#allocation3 + $0xb0] sm:$0xff] %vm8261, %v8219
  %8285 = vst.msk [vmem:[#allocation3 + $0xb8] sm:$0xff] %vm8261, %v8220
  %8286 = vst.msk [vmem:[#allocation3 + $0xc0] sm:$0xff] %vm8261, %v8221
  %8287 = vst.msk [vmem:[#allocation3 + $0xc8] sm:$0xff] %vm8261, %v8222
  %8288 = vst.msk [vmem:[#allocation3 + $0xd0] sm:$0xff] %vm8261, %v8223
  %8289 = vst.msk [vmem:[#allocation3 + $0xd8] sm:$0xff] %vm8261, %v8224
  %8290 = vst.msk [vmem:[#allocation3 + $0xe0] sm:$0xff] %vm8261, %v8225
  %8291 = vst.msk [vmem:[#allocation3 + $0xe8] sm:$0xff] %vm8261, %v8226
  %8292 = vst.msk [vmem:[#allocation3 + $0xf0] sm:$0xff] %vm8261, %v8227
  %8293 = vst.msk [vmem:[#allocation3 + $0xf8] sm:$0xff] %vm8261, %v8228
  %8294 = vst.msk [vmem:[#allocation3 + $0x100] sm:$0xff] %vm8261, %v8229
  %8295 = vst.msk [vmem:[#allocation3 + $0x108] sm:$0xff] %vm8261, %v8230
  %8296 = vst.msk [vmem:[#allocation3 + $0x110] sm:$0xff] %vm8261, %v8231
  %8297 = vst.msk [vmem:[#allocation3 + $0x118] sm:$0xff] %vm8261, %v8232
  %8298 = vst.msk [vmem:[#allocation3 + $0x120] sm:$0xff] %vm8261, %v8233
  %8299 = vst.msk [vmem:[#allocation3 + $0x128] sm:$0xff] %vm8261, %v8234
  %8300 = vst.msk [vmem:[#allocation3 + $0x130] sm:$0xff] %vm8261, %v8235
  %8301 = vst.msk [vmem:[#allocation3 + $0x138] sm:$0xff] %vm8261, %v8236
  %8302 = vst.msk [vmem:[#allocation3 + $0x140] sm:$0xff] %vm8261, %v8237
  %8303 = vst.msk [vmem:[#allocation3 + $0x148] sm:$0xff] %vm8261, %v8238
  %8304 = vst.msk [vmem:[#allocation3 + $0x150] sm:$0xff] %vm8261, %v8239
  %8305 = vst.msk [vmem:[#allocation3 + $0x158] sm:$0xff] %vm8261, %v8240
  %8306 = vst.msk [vmem:[#allocation3 + $0x160] sm:$0xff] %vm8261, %v8241
  %8307 = vst.msk [vmem:[#allocation3 + $0x168] sm:$0xff] %vm8261, %v8242
  %8308 = vst.msk [vmem:[#allocation3 + $0x170] sm:$0xff] %vm8261, %v8243
  %8309 = vst.msk [vmem:[#allocation3 + $0x178] sm:$0xff] %vm8261, %v8244
  %8310 = vst.msk [vmem:[#allocation3 + $0x180] sm:$0xff] %vm8261, %v8245
  %8311 = vst.msk [vmem:[#allocation3 + $0x188] sm:$0xff] %vm8261, %v8246
  %8312 = vst.msk [vmem:[#allocation3 + $0x190] sm:$0xff] %vm8261, %v8247
  %8313 = vst.msk [vmem:[#allocation3 + $0x198] sm:$0xff] %vm8261, %v8248
  %8314 = vst.msk [vmem:[#allocation3 + $0x1a0] sm:$0xff] %vm8261, %v8249
  %8315 = vst.msk [vmem:[#allocation3 + $0x1a8] sm:$0xff] %vm8261, %v8250
  %8316 = vst.msk [vmem:[#allocation3 + $0x1b0] sm:$0xff] %vm8261, %v8251
  %8317 = vst.msk [vmem:[#allocation3 + $0x1b8] sm:$0xff] %vm8261, %v8252
  %8318 = vst.msk [vmem:[#allocation3 + $0x1c0] sm:$0xff] %vm8261, %v8253
  %8319 = vst.msk [vmem:[#allocation3 + $0x1c8] sm:$0xff] %vm8261, %v8254
  %8320 = vst.msk [vmem:[#allocation3 + $0x1d0] sm:$0xff] %vm8261, %v8255
  %8321 = vst.msk [vmem:[#allocation3 + $0x1d8] sm:$0xff] %vm8261, %v8256
  %8322 = vst.msk [vmem:[#allocation3 + $0x1e0] sm:$0xff] %vm8261, %v8257
  %8323 = vst.msk [vmem:[#allocation3 + $0x1e8] sm:$0xff] %vm8261, %v8258
  %8324 = vst.msk [vmem:[#allocation3 + $0x1f0] sm:$0xff] %vm8261, %v8259
  %vm8325 = vcmask 390144
  %8326 = vst.msk [vmem:[#allocation3 + $0x1f8] sm:$0x3f] %vm8325, %v8260
  %v8327 = vld [vmem:[#allocation3] ss:$8 sm:$0xf]
  %v8328 = vld [vmem:[#allocation3] ss:$8 sm:$0xf0]
  %v8329 = vor.u32 %v8327, %v8328
  %s8330 = scalar_lea.vmem [#allocation3], 64
  %v8331 = vld [vmem:[%s8330] ss:$8 sm:$0xf]
  %v8332 = vld [vmem:[%s8330] ss:$8 sm:$0xf0]
  %v8333 = vor.u32 %v8331, %v8332
  %s8334 = scalar_lea.vmem [#allocation3], 128
  %v8335 = vld [vmem:[%s8334] ss:$8 sm:$0xf]
  %v8336 = vld [vmem:[%s8334] ss:$8 sm:$0xf0]
  %v8337 = vor.u32 %v8335, %v8336
  %s8338 = scalar_lea.vmem [#allocation3], 192
  %v8339 = vld [vmem:[%s8338] ss:$8 sm:$0xf]
  %v8340 = vld [vmem:[%s8338] ss:$8 sm:$0xf0]
  %v8341 = vor.u32 %v8339, %v8340
  %s8342 = scalar_lea.vmem [#allocation3], 256
  %v8343 = vld [vmem:[%s8342] ss:$8 sm:$0xf]
  %v8344 = vld [vmem:[%s8342] ss:$8 sm:$0xf0]
  %v8345 = vor.u32 %v8343, %v8344
  %s8346 = scalar_lea.vmem [#allocation3], 320
  %v8347 = vld [vmem:[%s8346] ss:$8 sm:$0xf]
  %v8348 = vld [vmem:[%s8346] ss:$8 sm:$0xf0]
  %v8349 = vor.u32 %v8347, %v8348
  %s8350 = scalar_lea.vmem [#allocation3], 384
  %v8351 = vld [vmem:[%s8350] ss:$8 sm:$0xf]
  %v8352 = vld [vmem:[%s8350] ss:$8 sm:$0xf0]
  %v8353 = vor.u32 %v8351, %v8352
  %s8354 = scalar_lea.vmem [#allocation3], 448
  %v8355 = vld [vmem:[%s8354] ss:$8 sm:$0xf]
  %v8356 = vld [vmem:[%s8354] ss:$8 sm:$0xf0]
  %v8357 = vor.u32 %v8355, %v8356
  %s8358 = scalar_lea.vmem [#allocation3], 1
  %v8359 = vld [vmem:[%s8358] ss:$8 sm:$0xf]
  %v8360 = vld [vmem:[%s8358] ss:$8 sm:$0xf0]
  %v8361 = vor.u32 %v8359, %v8360
  %s8362 = scalar_lea.vmem [#allocation3], 65
  %v8363 = vld [vmem:[%s8362] ss:$8 sm:$0xf]
  %v8364 = vld [vmem:[%s8362] ss:$8 sm:$0xf0]
  %v8365 = vor.u32 %v8363, %v8364
  %s8366 = scalar_lea.vmem [#allocation3], 129
  %v8367 = vld [vmem:[%s8366] ss:$8 sm:$0xf]
  %v8368 = vld [vmem:[%s8366] ss:$8 sm:$0xf0]
  %v8369 = vor.u32 %v8367, %v8368
  %s8370 = scalar_lea.vmem [#allocation3], 193
  %v8371 = vld [vmem:[%s8370] ss:$8 sm:$0xf]
  %v8372 = vld [vmem:[%s8370] ss:$8 sm:$0xf0]
  %v8373 = vor.u32 %v8371, %v8372
  %s8374 = scalar_lea.vmem [#allocation3], 257
  %v8375 = vld [vmem:[%s8374] ss:$8 sm:$0xf]
  %v8376 = vld [vmem:[%s8374] ss:$8 sm:$0xf0]
  %v8377 = vor.u32 %v8375, %v8376
  %s8378 = scalar_lea.vmem [#allocation3], 321
  %v8379 = vld [vmem:[%s8378] ss:$8 sm:$0xf]
  %v8380 = vld [vmem:[%s8378] ss:$8 sm:$0xf0]
  %v8381 = vor.u32 %v8379, %v8380
  %s8382 = scalar_lea.vmem [#allocation3], 385
  %v8383 = vld [vmem:[%s8382] ss:$8 sm:$0xf]
  %v8384 = vld [vmem:[%s8382] ss:$8 sm:$0xf0]
  %v8385 = vor.u32 %v8383, %v8384
  %s8386 = scalar_lea.vmem [#allocation3], 449
  %v8387 = vld [vmem:[%s8386] ss:$8 sm:$0xf]
  %v8388 = vld [vmem:[%s8386] ss:$8 sm:$0xf0]
  %v8389 = vor.u32 %v8387, %v8388
  %s8390 = scalar_lea.vmem [#allocation3], 2
  %v8391 = vld [vmem:[%s8390] ss:$8 sm:$0xf]
  %v8392 = vld [vmem:[%s8390] ss:$8 sm:$0xf0]
  %v8393 = vor.u32 %v8391, %v8392
  %s8394 = scalar_lea.vmem [#allocation3], 66
  %v8395 = vld [vmem:[%s8394] ss:$8 sm:$0xf]
  %v8396 = vld [vmem:[%s8394] ss:$8 sm:$0xf0]
  %v8397 = vor.u32 %v8395, %v8396
  %s8398 = scalar_lea.vmem [#allocation3], 130
  %v8399 = vld [vmem:[%s8398] ss:$8 sm:$0xf]
  %v8400 = vld [vmem:[%s8398] ss:$8 sm:$0xf0]
  %v8401 = vor.u32 %v8399, %v8400
  %s8402 = scalar_lea.vmem [#allocation3], 194
  %v8403 = vld [vmem:[%s8402] ss:$8 sm:$0xf]
  %v8404 = vld [vmem:[%s8402] ss:$8 sm:$0xf0]
  %v8405 = vor.u32 %v8403, %v8404
  %s8406 = scalar_lea.vmem [#allocation3], 258
  %v8407 = vld [vmem:[%s8406] ss:$8 sm:$0xf]
  %v8408 = vld [vmem:[%s8406] ss:$8 sm:$0xf0]
  %v8409 = vor.u32 %v8407, %v8408
  %s8410 = scalar_lea.vmem [#allocation3], 322
  %v8411 = vld [vmem:[%s8410] ss:$8 sm:$0xf]
  %v8412 = vld [vmem:[%s8410] ss:$8 sm:$0xf0]
  %v8413 = vor.u32 %v8411, %v8412
  %s8414 = scalar_lea.vmem [#allocation3], 386
  %v8415 = vld [vmem:[%s8414] ss:$8 sm:$0xf]
  %v8416 = vld [vmem:[%s8414] ss:$8 sm:$0xf0]
  %v8417 = vor.u32 %v8415, %v8416
  %s8418 = scalar_lea.vmem [#allocation3], 450
  %v8419 = vld [vmem:[%s8418] ss:$8 sm:$0xf]
  %v8420 = vld [vmem:[%s8418] ss:$8 sm:$0xf0]
  %v8421 = vor.u32 %v8419, %v8420
  %v8422 = vmax.f32 %v8361, %v8393
  %v8423 = vmax.f32 %v8365, %v8397
  %v8424 = vmax.f32 %v8369, %v8401
  %v8425 = vmax.f32 %v8373, %v8405
  %v8426 = vmax.f32 %v8377, %v8409
  %v8427 = vmax.f32 %v8381, %v8413
  %v8428 = vmax.f32 %v8385, %v8417
  %v8429 = vmax.f32 %v8389, %v8421
  %s8430 = scalar_lea.vmem [#allocation3], 3
  %v8431 = vld [vmem:[%s8430] ss:$8 sm:$0xf]
  %v8432 = vld [vmem:[%s8430] ss:$8 sm:$0xf0]
  %v8433 = vor.u32 %v8431, %v8432
  %s8434 = scalar_lea.vmem [#allocation3], 67
  %v8435 = vld [vmem:[%s8434] ss:$8 sm:$0xf]
  %v8436 = vld [vmem:[%s8434] ss:$8 sm:$0xf0]
  %v8437 = vor.u32 %v8435, %v8436
  %s8438 = scalar_lea.vmem [#allocation3], 131
  %v8439 = vld [vmem:[%s8438] ss:$8 sm:$0xf]
  %v8440 = vld [vmem:[%s8438] ss:$8 sm:$0xf0]
  %v8441 = vor.u32 %v8439, %v8440
  %s8442 = scalar_lea.vmem [#allocation3], 195
  %v8443 = vld [vmem:[%s8442] ss:$8 sm:$0xf]
  %v8444 = vld [vmem:[%s8442] ss:$8 sm:$0xf0]
  %v8445 = vor.u32 %v8443, %v8444
  %s8446 = scalar_lea.vmem [#allocation3], 259
  %v8447 = vld [vmem:[%s8446] ss:$8 sm:$0xf]
  %v8448 = vld [vmem:[%s8446] ss:$8 sm:$0xf0]
  %v8449 = vor.u32 %v8447, %v8448
  %s8450 = scalar_lea.vmem [#allocation3], 323
  %v8451 = vld [vmem:[%s8450] ss:$8 sm:$0xf]
  %v8452 = vld [vmem:[%s8450] ss:$8 sm:$0xf0]
  %v8453 = vor.u32 %v8451, %v8452
  %s8454 = scalar_lea.vmem [#allocation3], 387
  %v8455 = vld [vmem:[%s8454] ss:$8 sm:$0xf]
  %v8456 = vld [vmem:[%s8454] ss:$8 sm:$0xf0]
  %v8457 = vor.u32 %v8455, %v8456
  %s8458 = scalar_lea.vmem [#allocation3], 451
  %v8459 = vld [vmem:[%s8458] ss:$8 sm:$0xf]
  %v8460 = vld [vmem:[%s8458] ss:$8 sm:$0xf0]
  %v8461 = vor.u32 %v8459, %v8460
  %s8462 = scalar_lea.vmem [#allocation3], 4
  %v8463 = vld [vmem:[%s8462] ss:$8 sm:$0xf]
  %v8464 = vld [vmem:[%s8462] ss:$8 sm:$0xf0]
  %v8465 = vor.u32 %v8463, %v8464
  %s8466 = scalar_lea.vmem [#allocation3], 68
  %v8467 = vld [vmem:[%s8466] ss:$8 sm:$0xf]
  %v8468 = vld [vmem:[%s8466] ss:$8 sm:$0xf0]
  %v8469 = vor.u32 %v8467, %v8468
  %s8470 = scalar_lea.vmem [#allocation3], 132
  %v8471 = vld [vmem:[%s8470] ss:$8 sm:$0xf]
  %v8472 = vld [vmem:[%s8470] ss:$8 sm:$0xf0]
  %v8473 = vor.u32 %v8471, %v8472
  %s8474 = scalar_lea.vmem [#allocation3], 196
  %v8475 = vld [vmem:[%s8474] ss:$8 sm:$0xf]
  %v8476 = vld [vmem:[%s8474] ss:$8 sm:$0xf0]
  %v8477 = vor.u32 %v8475, %v8476
  %s8478 = scalar_lea.vmem [#allocation3], 260
  %v8479 = vld [vmem:[%s8478] ss:$8 sm:$0xf]
  %v8480 = vld [vmem:[%s8478] ss:$8 sm:$0xf0]
  %v8481 = vor.u32 %v8479, %v8480
  %s8482 = scalar_lea.vmem [#allocation3], 324
  %v8483 = vld [vmem:[%s8482] ss:$8 sm:$0xf]
  %v8484 = vld [vmem:[%s8482] ss:$8 sm:$0xf0]
  %v8485 = vor.u32 %v8483, %v8484
  %s8486 = scalar_lea.vmem [#allocation3], 388
  %v8487 = vld [vmem:[%s8486] ss:$8 sm:$0xf]
  %v8488 = vld [vmem:[%s8486] ss:$8 sm:$0xf0]
  %v8489 = vor.u32 %v8487, %v8488
  %s8490 = scalar_lea.vmem [#allocation3], 452
  %v8491 = vld [vmem:[%s8490] ss:$8 sm:$0xf]
  %v8492 = vld [vmem:[%s8490] ss:$8 sm:$0xf0]
  %v8493 = vor.u32 %v8491, %v8492
  %v8494 = vmax.f32 %v8433, %v8465
  %v8495 = vmax.f32 %v8437, %v8469
  %v8496 = vmax.f32 %v8441, %v8473
  %v8497 = vmax.f32 %v8445, %v8477
  %v8498 = vmax.f32 %v8449, %v8481
  %v8499 = vmax.f32 %v8453, %v8485
  %v8500 = vmax.f32 %v8457, %v8489
  %v8501 = vmax.f32 %v8461, %v8493
  %v8502 = vpack.c.bf16 %v8333, %v8329
  %v8503 = vpack.c.bf16 %v8341, %v8337
  %v8504 = vpack.c.bf16 %v8349, %v8345
  %v8505 = vpack.c.bf16 %v8357, %v8353
  %v8506 = vld [vmem:[%s7] sm:$0xf]
  %v8507 = vld [vmem:[%s7 + $0x4] sm:$0xf]
  %v8508 = vld [vmem:[%s7 + $0x8] sm:$0xf]
  %v8509 = vld [vmem:[%s7 + $0xc] sm:$0xf]
  %v8510 = vld [vmem:[%s7 + $0x10] sm:$0xf]
  %v8511 = vld [vmem:[%s7 + $0x14] sm:$0xf]
  %v8512 = vpack.c.bf16 %v8423, %v8422
  %v8513 = vpack.c.bf16 %v8425, %v8424
  %v8514 = vpack.c.bf16 %v8427, %v8426
  %v8515 = vpack.c.bf16 %v8429, %v8428
  %s8516 = scalar_lea.vmem %s7, 24
  %v8517 = vld [vmem:[%s8516] sm:$0xf]
  %v8518 = vld [vmem:[%s8516 + $0x4] sm:$0xf]
  %v8519 = vld [vmem:[%s8516 + $0x8] sm:$0xf]
  %v8520 = vld [vmem:[%s8516 + $0xc] sm:$0xf]
  %v8521 = vld [vmem:[%s8516 + $0x10] sm:$0xf]
  %v8522 = vld [vmem:[%s8516 + $0x14] sm:$0xf]
  %v8529 = vunpack.c.l.b16 %v8517
  %v8530 = vunpack.c.l.b16 %v8518
  %v8531 = vunpack.c.l.b16 %v8519
  %v8532 = vunpack.c.l.b16 %v8520
  %v8533 = vunpack.c.l.b16 %v8521
  %v8534 = vunpack.c.l.b16 %v8522
  %v8535 = vpack.c.b16 %v8530, %v8529
  %v8536 = vpack.c.b16 %v8532, %v8531
  %v8537 = vpack.c.b16 %v8534, %v8533
  %v8542 = vsel %vm8261, %v8512, 0
  %v8545 = vsel %vm8261, %v8513, 0
  %v8548 = vsel %vm8261, %v8514, 0
  %v8551 = vsel %vm8261, %v8515, 0
  %8553 = vmatprep.subr.bf16.mxu0 0
  %8554 = vmatpush1.bf16.msra.mxu0 %v8535
  %8555 = vmatprep.subr.bf16.mxu0 0
  %8556 = vmatpush1.bf16.msra.mxu0 %v8536
  %8557 = vmatprep.subr.bf16.mxu0 0
  %8558 = vmatpush1.bf16.msra.mxu0 %v8537
  %8559 = vmatprep.subr.bf16.mxu0 0
  %8560 = vmatpush1.bf16.msra.mxu0 0
  %8561 = vmatprep.subr.bf16.mxu0 0
  %8562 = vmatpush1.bf16.msra.mxu0 0
  %8563 = vmatprep.subr.bf16.mxu0 0
  %8564 = vmatpush1.bf16.msra.mxu0 0
  %8565 = vmatprep.subr.bf16.mxu0 0
  %8566 = vmatpush1.bf16.msra.mxu0 0
  %8567 = vmatprep.subr.bf16.mxu0 0
  %8568 = vmatpush1.bf16.msra.mxu0 0
  %8569 = vmatprep.subr.bf16.mxu0 0
  %8570 = vmatpush1.bf16.msra.mxu0 0
  %8571 = vmatprep.subr.bf16.mxu0 0
  %8572 = vmatpush1.bf16.msra.mxu0 0
  %8573 = vmatprep.subr.bf16.mxu0 0
  %8574 = vmatpush1.bf16.msra.mxu0 0
  %8575 = vmatprep.subr.bf16.mxu0 0
  %8576 = vmatpush1.bf16.msra.mxu0 0
  %8577 = vmatprep.subr.bf16.mxu0 0
  %8578 = vmatpush1.bf16.msra.mxu0 0
  %8579 = vmatprep.subr.bf16.mxu0 0
  %8580 = vmatpush1.bf16.msra.mxu0 0
  %8581 = vmatprep.subr.bf16.mxu0 0
  %8582 = vmatpush1.bf16.msra.mxu0 0
  %8583 = vmatprep.subr.bf16.mxu0 0
  %8584 = vmatpush1.bf16.msra.mxu0 0
  %8585 = vmatprep.mubr.bf16.mxu0 0
  %8586 = vmatmul.mubr.bf16.gmra.mrb[0].mxu0 %v8542
  %v8587 = vpop.f32.mrb[0].mxu0
  %v8588 = vadd.f32 0.0, %v8587
  %v8589 = vpop.f32.mrb[0].mxu0
  %v8590 = vpop.f32.mrb[0].mxu0
  %v8591 = vadd.f32 0.0, %v8590
  %v8592 = vpop.f32.mrb[0].mxu0
  %8593 = vmatprep.mubr.bf16.mxu0 0
  %8594 = vmatmul.mubr.bf16.gmra.mrb[0].mxu0 %v8545
  %v8595 = vpop.f32.mrb[0].mxu0
  %v8596 = vadd.f32 0.0, %v8595
  %v8597 = vpop.f32.mrb[0].mxu0
  %v8598 = vpop.f32.mrb[0].mxu0
  %v8599 = vadd.f32 0.0, %v8598
  %v8600 = vpop.f32.mrb[0].mxu0
  %8601 = vmatprep.mubr.bf16.mxu0 0
  %8602 = vmatmul.mubr.bf16.gmra.mrb[0].mxu0 %v8548
  %v8603 = vpop.f32.mrb[0].mxu0
  %v8604 = vadd.f32 0.0, %v8603
  %v8605 = vpop.f32.mrb[0].mxu0
  %v8606 = vpop.f32.mrb[0].mxu0
  %v8607 = vadd.f32 0.0, %v8606
  %v8608 = vpop.f32.mrb[0].mxu0
  %8609 = vmatprep.mubr.bf16.mxu0 0
  %8610 = vmatmul.mubr.bf16.gmra.mrb[0].mxu0 %v8551
  %v8611 = vpop.f32.mrb[0].mxu0
  %v8612 = vadd.f32 0.0, %v8611
  %v8613 = vpop.f32.mrb[0].mxu0
  %v8614 = vpop.f32.mrb[0].mxu0
  %v8615 = vadd.f32 0.0, %v8614
  %v8616 = vpop.f32.mrb[0].mxu0
  %8617 = vdwg.mxu0
  %v8624 = vunpack.c.l.b16 %v8506
  %v8625 = vunpack.c.l.b16 %v8507
  %v8626 = vunpack.c.l.b16 %v8508
  %v8627 = vunpack.c.l.b16 %v8509
  %v8628 = vunpack.c.l.b16 %v8510
  %v8629 = vunpack.c.l.b16 %v8511
  %v8630 = vpack.c.b16 %v8625, %v8624
  %v8631 = vpack.c.b16 %v8627, %v8626
  %v8632 = vpack.c.b16 %v8629, %v8628
  %v8637 = vsel %vm8261, %v8502, 0
  %v8640 = vsel %vm8261, %v8503, 0
  %v8643 = vsel %vm8261, %v8504, 0
  %v8646 = vsel %vm8261, %v8505, 0
  %8648 = vmatprep.subr.bf16.mxu0 0
  %8649 = vmatpush1.bf16.msra.mxu0 %v8630
  %8650 = vmatprep.subr.bf16.mxu0 0
  %8651 = vmatpush1.bf16.msra.mxu0 %v8631
  %8652 = vmatprep.subr.bf16.mxu0 0
  %8653 = vmatpush1.bf16.msra.mxu0 %v8632
  %8654 = vmatprep.subr.bf16.mxu0 0
  %8655 = vmatpush1.bf16.msra.mxu0 0
  %8656 = vmatprep.subr.bf16.mxu0 0
  %8657 = vmatpush1.bf16.msra.mxu0 0
  %8658 = vmatprep.subr.bf16.mxu0 0
  %8659 = vmatpush1.bf16.msra.mxu0 0
  %8660 = vmatprep.subr.bf16.mxu0 0
  %8661 = vmatpush1.bf16.msra.mxu0 0
  %8662 = vmatprep.subr.bf16.mxu0 0
  %8663 = vmatpush1.bf16.msra.mxu0 0
  %8664 = vmatprep.subr.bf16.mxu0 0
  %8665 = vmatpush1.bf16.msra.mxu0 0
  %8666 = vmatprep.subr.bf16.mxu0 0
  %8667 = vmatpush1.bf16.msra.mxu0 0
  %8668 = vmatprep.subr.bf16.mxu0 0
  %8669 = vmatpush1.bf16.msra.mxu0 0
  %8670 = vmatprep.subr.bf16.mxu0 0
  %8671 = vmatpush1.bf16.msra.mxu0 0
  %8672 = vmatprep.subr.bf16.mxu0 0
  %8673 = vmatpush1.bf16.msra.mxu0 0
  %8674 = vmatprep.subr.bf16.mxu0 0
  %8675 = vmatpush1.bf16.msra.mxu0 0
  %8676 = vmatprep.subr.bf16.mxu0 0
  %8677 = vmatpush1.bf16.msra.mxu0 0
  %8678 = vmatprep.subr.bf16.mxu0 0
  %8679 = vmatpush1.bf16.msra.mxu0 0
  %8680 = vmatprep.mubr.bf16.mxu0 0
  %8681 = vmatmul.mubr.bf16.gmra.mrb[0].mxu0 %v8637
  %v8682 = vpop.f32.mrb[0].mxu0
  %v8683 = vadd.f32 %v8588, %v8682
  %v8684 = vpop.f32.mrb[0].mxu0
  %v8685 = vpop.f32.mrb[0].mxu0
  %v8686 = vadd.f32 %v8591, %v8685
  %v8687 = vpop.f32.mrb[0].mxu0
  %8688 = vmatprep.mubr.bf16.mxu0 0
  %8689 = vmatmul.mubr.bf16.gmra.mrb[0].mxu0 %v8640
  %v8690 = vpop.f32.mrb[0].mxu0
  %v8691 = vadd.f32 %v8596, %v8690
  %v8692 = vpop.f32.mrb[0].mxu0
  %v8693 = vpop.f32.mrb[0].mxu0
  %v8694 = vadd.f32 %v8599, %v8693
  %v8695 = vpop.f32.mrb[0].mxu0
  %8696 = vmatprep.mubr.bf16.mxu0 0
  %8697 = vmatmul.mubr.bf16.gmra.mrb[0].mxu0 %v8643
  %v8698 = vpop.f32.mrb[0].mxu0
  %v8699 = vadd.f32 %v8604, %v8698
  %v8700 = vpop.f32.mrb[0].mxu0
  %v8701 = vpop.f32.mrb[0].mxu0
  %v8702 = vadd.f32 %v8607, %v8701
  %v8703 = vpop.f32.mrb[0].mxu0
  %8704 = vmatprep.mubr.bf16.mxu0 0
  %8705 = vmatmul.mubr.bf16.gmra.mrb[0].mxu0 %v8646
  %v8706 = vpop.f32.mrb[0].mxu0
  %v8707 = vadd.f32 %v8612, %v8706
  %v8708 = vpop.f32.mrb[0].mxu0
  %v8709 = vpop.f32.mrb[0].mxu0
  %v8710 = vadd.f32 %v8615, %v8709
  %v8711 = vpop.f32.mrb[0].mxu0
  %8712 = vdwg.mxu0
  %v8713 = vpack.c.bf16 %v8495, %v8494
  %v8714 = vpack.c.bf16 %v8497, %v8496
  %v8715 = vpack.c.bf16 %v8499, %v8498
  %v8716 = vpack.c.bf16 %v8501, %v8500
  %s8717 = scalar_lea.vmem %s7, 48
  %v8718 = vld [vmem:[%s8717] sm:$0xf]
  %v8719 = vld [vmem:[%s8717 + $0x4] sm:$0xf]
  %v8720 = vld [vmem:[%s8717 + $0x8] sm:$0xf]
  %v8721 = vld [vmem:[%s8717 + $0xc] sm:$0xf]
  %v8722 = vld [vmem:[%s8717 + $0x10] sm:$0xf]
  %v8723 = vld [vmem:[%s8717 + $0x14] sm:$0xf]
  %v8730 = vunpack.c.l.b16 %v8718
  %v8731 = vunpack.c.l.b16 %v8719
  %v8732 = vunpack.c.l.b16 %v8720
  %v8733 = vunpack.c.l.b16 %v8721
  %v8734 = vunpack.c.l.b16 %v8722
  %v8735 = vunpack.c.l.b16 %v8723
  %v8736 = vpack.c.b16 %v8731, %v8730
  %v8737 = vpack.c.b16 %v8733, %v8732
  %v8738 = vpack.c.b16 %v8735, %v8734
  %v8743 = vsel %vm8261, %v8713, 0
  %v8746 = vsel %vm8261, %v8714, 0
  %v8749 = vsel %vm8261, %v8715, 0
  %v8752 = vsel %vm8261, %v8716, 0
  %8754 = vmatprep.subr.bf16.mxu0 0
  %8755 = vmatpush1.bf16.msra.mxu0 %v8736
  %8756 = vmatprep.subr.bf16.mxu0 0
  %8757 = vmatpush1.bf16.msra.mxu0 %v8737
  %8758 = vmatprep.subr.bf16.mxu0 0
  %8759 = vmatpush1.bf16.msra.mxu0 %v8738
  %8760 = vmatprep.subr.bf16.mxu0 0
  %8761 = vmatpush1.bf16.msra.mxu0 0
  %8762 = vmatprep.subr.bf16.mxu0 0
  %8763 = vmatpush1.bf16.msra.mxu0 0
  %8764 = vmatprep.subr.bf16.mxu0 0
  %8765 = vmatpush1.bf16.msra.mxu0 0
  %8766 = vmatprep.subr.bf16.mxu0 0
  %8767 = vmatpush1.bf16.msra.mxu0 0
  %8768 = vmatprep.subr.bf16.mxu0 0
  %8769 = vmatpush1.bf16.msra.mxu0 0
  %8770 = vmatprep.subr.bf16.mxu0 0
  %8771 = vmatpush1.bf16.msra.mxu0 0
  %8772 = vmatprep.subr.bf16.mxu0 0
  %8773 = vmatpush1.bf16.msra.mxu0 0
  %8774 = vmatprep.subr.bf16.mxu0 0
  %8775 = vmatpush1.bf16.msra.mxu0 0
  %8776 = vmatprep.subr.bf16.mxu0 0
  %8777 = vmatpush1.bf16.msra.mxu0 0
  %8778 = vmatprep.subr.bf16.mxu0 0
  %8779 = vmatpush1.bf16.msra.mxu0 0
  %8780 = vmatprep.subr.bf16.mxu0 0
  %8781 = vmatpush1.bf16.msra.mxu0 0
  %8782 = vmatprep.subr.bf16.mxu0 0
  %8783 = vmatpush1.bf16.msra.mxu0 0
  %8784 = vmatprep.subr.bf16.mxu0 0
  %8785 = vmatpush1.bf16.msra.mxu0 0
  %8786 = vmatprep.mubr.bf16.mxu0 0
  %8787 = vmatmul.mubr.bf16.gmra.mrb[0].mxu0 %v8743
  %v8788 = vpop.f32.mrb[0].mxu0
  %v8789 = vadd.f32 0.0, %v8788
  %v8790 = vpop.f32.mrb[0].mxu0
  %v8791 = vpop.f32.mrb[0].mxu0
  %v8792 = vadd.f32 0.0, %v8791
  %v8793 = vpop.f32.mrb[0].mxu0
  %8794 = vmatprep.mubr.bf16.mxu0 0
  %8795 = vmatmul.mubr.bf16.gmra.mrb[0].mxu0 %v8746
  %v8796 = vpop.f32.mrb[0].mxu0
  %v8797 = vadd.f32 0.0, %v8796
  %v8798 = vpop.f32.mrb[0].mxu0
  %v8799 = vpop.f32.mrb[0].mxu0
  %v8800 = vadd.f32 0.0, %v8799
  %v8801 = vpop.f32.mrb[0].mxu0
  %8802 = vmatprep.mubr.bf16.mxu0 0
  %8803 = vmatmul.mubr.bf16.gmra.mrb[0].mxu0 %v8749
  %v8804 = vpop.f32.mrb[0].mxu0
  %v8805 = vadd.f32 0.0, %v8804
  %v8806 = vpop.f32.mrb[0].mxu0
  %v8807 = vpop.f32.mrb[0].mxu0
  %v8808 = vadd.f32 0.0, %v8807
  %v8809 = vpop.f32.mrb[0].mxu0
  %8810 = vmatprep.mubr.bf16.mxu0 0
  %8811 = vmatmul.mubr.bf16.gmra.mrb[0].mxu0 %v8752
  %v8812 = vpop.f32.mrb[0].mxu0
  %v8813 = vadd.f32 0.0, %v8812
  %v8814 = vpop.f32.mrb[0].mxu0
  %v8815 = vpop.f32.mrb[0].mxu0
  %v8816 = vadd.f32 0.0, %v8815
  %v8817 = vpop.f32.mrb[0].mxu0
  %8818 = vdwg.mxu0
  %v8819 = vadd.f32 %v8683, %v8789
  %v8820 = vadd.f32 %v8686, %v8792
  %v8821 = vadd.f32 %v8691, %v8797
  %v8822 = vadd.f32 %v8694, %v8800
  %v8823 = vadd.f32 %v8699, %v8805
  %v8824 = vadd.f32 %v8702, %v8808
  %v8825 = vadd.f32 %v8707, %v8813
  %v8826 = vadd.f32 %v8710, %v8816
  %v8827 = vld [vmem:[%s8] sm:$0x1]
  %v8829 = vlaneseq
  %v8830 = vshrl.u32 %v8829, 7
  %v8831 = vsub.s32 0, %v8830
  %v8832 = vrot.slane %v8827, %v8831
  %v8834 = vadd.f32 %v8819, %v8832
  %v8835 = vadd.f32 %v8820, %v8832
  %v8836 = vadd.f32 %v8821, %v8832
  %v8837 = vadd.f32 %v8822, %v8832
  %v8838 = vadd.f32 %v8823, %v8832
  %v8839 = vadd.f32 %v8824, %v8832
  %v8840 = vadd.f32 %v8825, %v8832
  %v8841 = vadd.f32 %v8826, %v8832
  %v8842 = vmax.f32 %v8834, 0.0
  %v8843 = vmax.f32 %v8835, 0.0
  %v8844 = vmax.f32 %v8836, 0.0
  %v8845 = vmax.f32 %v8837, 0.0
  %v8846 = vmax.f32 %v8838, 0.0
  %v8847 = vmax.f32 %v8839, 0.0
  %v8848 = vmax.f32 %v8840, 0.0
  %v8849 = vmax.f32 %v8841, 0.0
  %v8850 = vpack.c.bf16 %v8843, %v8842
  %v8851 = vpack.c.bf16 %v8845, %v8844
  %v8852 = vpack.c.bf16 %v8847, %v8846
  %v8853 = vpack.c.bf16 %v8849, %v8848
  %v8854 = vld [vmem:[%s9] sm:$0xf]
  %v8855 = vld [vmem:[%s9 + $0x4] sm:$0xf]
  %v8856 = vld [vmem:[%s9 + $0x8] sm:$0xf]
  %v8857 = vld [vmem:[%s9 + $0xc] sm:$0xf]
  %v8858 = vld [vmem:[%s10] sm:$0x1]
  %v8860 = vlaneseq
  %v8861 = vshrl.u32 %v8860, 7
  %v8862 = vsub.s32 0, %v8861
  %v8863 = vrot.slane %v8858, %v8862
  %v8869 = vunpack.c.l.b16 %v8854
  %v8870 = vunpack.c.l.b16 %v8855
  %v8871 = vunpack.c.l.b16 %v8856
  %v8872 = vunpack.c.l.b16 %v8857
  %v8873 = vpack.c.b16 %v8870, %v8869
  %v8874 = vpack.c.b16 %v8872, %v8871
  %vm8877 = vcmask 261120
  %v8879 = vsel %vm8877, %v8850, 0
  %v8882 = vsel %vm8877, %v8851, 0
  %v8885 = vsel %vm8877, %v8852, 0
  %v8888 = vsel %vm8877, %v8853, 0
  %8890 = vmatprep.subr.bf16.mxu0 0
  %8891 = vmatpush1.bf16.msra.mxu0 %v8873
  %8892 = vmatprep.subr.bf16.mxu0 0
  %8893 = vmatpush1.bf16.msra.mxu0 %v8874
  %8894 = vmatprep.subr.bf16.mxu0 0
  %8895 = vmatpush1.bf16.msra.mxu0 0
  %8896 = vmatprep.subr.bf16.mxu0 0
  %8897 = vmatpush1.bf16.msra.mxu0 0
  %8898 = vmatprep.subr.bf16.mxu0 0
  %8899 = vmatpush1.bf16.msra.mxu0 0
  %8900 = vmatprep.subr.bf16.mxu0 0
  %8901 = vmatpush1.bf16.msra.mxu0 0
  %8902 = vmatprep.subr.bf16.mxu0 0
  %8903 = vmatpush1.bf16.msra.mxu0 0
  %8904 = vmatprep.subr.bf16.mxu0 0
  %8905 = vmatpush1.bf16.msra.mxu0 0
  %8906 = vmatprep.subr.bf16.mxu0 0
  %8907 = vmatpush1.bf16.msra.mxu0 0
  %8908 = vmatprep.subr.bf16.mxu0 0
  %8909 = vmatpush1.bf16.msra.mxu0 0
  %8910 = vmatprep.subr.bf16.mxu0 0
  %8911 = vmatpush1.bf16.msra.mxu0 0
  %8912 = vmatprep.subr.bf16.mxu0 0
  %8913 = vmatpush1.bf16.msra.mxu0 0
  %8914 = vmatprep.subr.bf16.mxu0 0
  %8915 = vmatpush1.bf16.msra.mxu0 0
  %8916 = vmatprep.subr.bf16.mxu0 0
  %8917 = vmatpush1.bf16.msra.mxu0 0
  %8918 = vmatprep.subr.bf16.mxu0 0
  %8919 = vmatpush1.bf16.msra.mxu0 0
  %8920 = vmatprep.subr.bf16.mxu0 0
  %8921 = vmatpush1.bf16.msra.mxu0 0
  %8922 = vmatprep.mubr.bf16.mxu0 0
  %8923 = vmatmul.mubr.bf16.gmra.mrb[0].mxu0 %v8879
  %v8924 = vpop.f32.mrb[0].mxu0
  %v8925 = vadd.f32 %v8863, %v8924
  %v8926 = vpop.f32.mrb[0].mxu0
  %v8927 = vpop.f32.mrb[0].mxu0
  %v8928 = vadd.f32 %v8863, %v8927
  %v8929 = vpop.f32.mrb[0].mxu0
  %8930 = vmatprep.mubr.bf16.mxu0 0
  %8931 = vmatmul.mubr.bf16.gmra.mrb[0].mxu0 %v8882
  %v8932 = vpop.f32.mrb[0].mxu0
  %v8933 = vadd.f32 %v8863, %v8932
  %v8934 = vpop.f32.mrb[0].mxu0
  %v8935 = vpop.f32.mrb[0].mxu0
  %v8936 = vadd.f32 %v8863, %v8935
  %v8937 = vpop.f32.mrb[0].mxu0
  %8938 = vmatprep.mubr.bf16.mxu0 0
  %8939 = vmatmul.mubr.bf16.gmra.mrb[0].mxu0 %v8885
  %v8940 = vpop.f32.mrb[0].mxu0
  %v8941 = vadd.f32 %v8863, %v8940
  %v8942 = vpop.f32.mrb[0].mxu0
  %v8943 = vpop.f32.mrb[0].mxu0
  %v8944 = vadd.f32 %v8863, %v8943
  %v8945 = vpop.f32.mrb[0].mxu0
  %8946 = vmatprep.mubr.bf16.mxu0 0
  %8947 = vmatmul.mubr.bf16.gmra.mrb[0].mxu0 %v8888
  %v8948 = vpop.f32.mrb[0].mxu0
  %v8949 = vadd.f32 %v8863, %v8948
  %v8950 = vpop.f32.mrb[0].mxu0
  %v8951 = vpop.f32.mrb[0].mxu0
  %v8952 = vadd.f32 %v8863, %v8951
  %v8953 = vpop.f32.mrb[0].mxu0
  %8954 = vdwg.mxu0
  %8955 = vst [vmem:[%s11] sm:$0xff] %v8925
  %8956 = vst [vmem:[%s11 + $0x8] sm:$0xff] %v8928
  %8957 = vst [vmem:[%s11 + $0x10] sm:$0xff] %v8933
  %8958 = vst [vmem:[%s11 + $0x18] sm:$0xff] %v8936
  %8959 = vst [vmem:[%s11 + $0x20] sm:$0xff] %v8941
  %8960 = vst [vmem:[%s11 + $0x28] sm:$0xff] %v8944
  %8961 = vst [vmem:[%s11 + $0x30] sm:$0xff] %v8949
  %8962 = vst [vmem:[%s11 + $0x38] sm:$0xff] %v8952
  // Predicated region
  $region46: #{convnet_forward.1} parent=0 // pred_check
    _
  $region47: #{convnet_forward.1} parent=0 // pred_check_branch
    %8964 = sbr.rel (0) target = $region49
  $region48: #{convnet_forward.1} parent=0 // pred_region
    _
  $region49: #{convnet_forward.1} parent=0 // pred_fallthru
    _
  // Predicated region
  $region50: #{convnet_forward.1} parent=0 // pred_check
    _
  $region51: #{convnet_forward.1} parent=0 // pred_check_branch
    %8966 = sbr.rel (0) target = $region53
  $region52: #{convnet_forward.1} parent=0 // pred_region
    _
  $region53: #{convnet_forward.1} parent=0 // pred_fallthru
    _

</llo_original>
